<compile_context>
chip_gen: v6e
topology: v6e:2x2x1
jax: 0.10.0
libtpu: 0.0.40
codegen_flags: <defaults>
</compile_context>

<pallas_src>
import functools

import jax
import jax.numpy as jnp
from jax.experimental import pallas as pl
from jax.experimental.pallas import tpu as pltpu


LANES = 128


# ----------------------------- helpers ------------------------------------

def _round_up(n, m):
    return (n + m - 1) // m * m


def _ln(x, g, b, eps):
    """LayerNorm over last dim; x (M, C) f32, g/b (1, C) f32."""
    mu = jnp.mean(x, axis=-1, keepdims=True)
    var = jnp.mean(jnp.square(x - mu), axis=-1, keepdims=True)
    return (x - mu) * jax.lax.rsqrt(var + eps) * g + b


def _stage_vmem_estimate(N, C, K_in, hidden):
    """Rough per-step VMEM working set (bytes) for the fused stage kernel."""
    f32, bf16 = 4, 2
    blocks = (N * K_in * f32 + N * C * f32                      # patches + tokens
              + K_in * C * bf16 + 3 * C * C * bf16 + C * C * bf16
              + 2 * C * hidden * bf16
              + (8 * C + 2 * hidden) * f32)                     # biases / LN params
    work = (N * 3 * C * f32                                     # qkv activations
            + N * N * (f32 + bf16)                              # one head's scores
            + 2 * N * C * f32                                   # head outputs + attn
            + N * hidden * f32)                                 # mlp hidden
    return 2 * blocks + work                                    # double-buffer slack


# ----------------------------- fused stage kernel --------------------------

def _stage_kernel(patches_ref, embw_ref, embb_ref,
                  ln1g_ref, ln1b_ref, qkvw_ref, qkvb_ref,
                  projw_ref, projb_ref, ln2g_ref, ln2b_ref,
                  fc1w_ref, fc1b_ref, fc2w_ref, fc2b_ref,
                  o_ref, *, num_heads, eps):
    """grid = (batch, depth): patch-embed at depth 0, then one block per step.

    The (N, C) token block is the carried residual stream: its output
    BlockSpec index does not depend on the depth coordinate, so it stays
    resident in VMEM for the whole stage.
    """
    d_idx = pl.program_id(1)

    # ---- depth 0: patch embed / patch merge (stride==kernel conv as matmul) ----
    @pl.when(d_idx == 0)
    def _():
        emb = jnp.dot(patches_ref[...].astype(jnp.bfloat16), embw_ref[...],
                      preferred_element_type=jnp.float32) + embb_ref[...]
        o_ref[...] = emb

    x = o_ref[...]                                   # (N, C) f32 residual stream
    n_tok, C = x.shape
    dh = C // num_heads

    # ---- attention branch (pre-norm); 1/sqrt(dh) folded into Q weight cols ----
    h = _ln(x, ln1g_ref[...], ln1b_ref[...], eps)
    qkv = jnp.dot(h.astype(jnp.bfloat16), qkvw_ref[...],
                  preferred_element_type=jnp.float32) + qkvb_ref[...]   # (N, 3C)

    # TODO(synk): at real DAT resolutions (stage-1 N~3136) the full (N, N)
    # per-head scores must be query-tiled (flash-style) to fit v7x's 64 MiB
    # VMEM; at these token counts one head's scores are tiny so the dense
    # path (one head live at a time) is kept.
    head_outs = []
    for hh in range(num_heads):
        q = qkv[:, hh * dh:(hh + 1) * dh].astype(jnp.bfloat16)
        k = qkv[:, C + hh * dh:C + (hh + 1) * dh].astype(jnp.bfloat16)
        v = qkv[:, 2 * C + hh * dh:2 * C + (hh + 1) * dh].astype(jnp.bfloat16)
        s = jax.lax.dot_general(q, k, (((1,), (1,)), ((), ())),
                                preferred_element_type=jnp.float32)     # (N, N)
        m = jnp.max(s, axis=-1, keepdims=True)
        p = jnp.exp(s - m)
        p = p * pl.reciprocal(jnp.sum(p, axis=-1, keepdims=True), approx=True)
        head_outs.append(jnp.dot(p.astype(jnp.bfloat16), v,
                                 preferred_element_type=jnp.float32))   # (N, dh)

    # ONE K=C output projection after the head loop (MXU-friendly), instead of
    # num_heads separate K=dh folded matmuls.
    attn = jnp.concatenate(head_outs, axis=-1)                          # (N, C)
    attn = jnp.dot(attn.astype(jnp.bfloat16), projw_ref[...],
                   preferred_element_type=jnp.float32) + projb_ref[...]
    x = x + attn                                                        # residual

    # ---- MLP branch (pre-norm) ----
    h = _ln(x, ln2g_ref[...], ln2b_ref[...], eps)
    h = jnp.dot(h.astype(jnp.bfloat16), fc1w_ref[...],
                preferred_element_type=jnp.float32) + fc1b_ref[...]
    # TODO(synk): PyTorch nn.GELU default is the exact erf GELU; the tanh
    # approximation is used here for a clean EUP lowering (tiny numeric delta).
    h = jax.nn.gelu(h, approximate=True)
    h = jnp.dot(h.astype(jnp.bfloat16), fc2w_ref[...],
                preferred_element_type=jnp.float32) + fc2b_ref[...]
    o_ref[...] = x + h                                                  # residual


def stage_forward(patches, sp, num_heads, eps=1e-5):
    """patches (B, N, K_in) f32 -> tokens (B, N, C) f32, one fused pallas_call."""
    B, N, K_in = patches.shape
    depth, C, _ = sp["qkv_w"].shape
    hidden = sp["fc1_w"].shape[2]

    kernel = functools.partial(_stage_kernel, num_heads=num_heads, eps=eps)

    def dep(r, c):    # per-block weight, streamed along the depth grid axis
        return pl.BlockSpec((None, r, c), lambda b, d: (d, 0, 0))

    def const(r, c):  # stage-constant weight, resident across the grid
        return pl.BlockSpec((r, c), lambda b, d: (0, 0))

    # Generation-specific VMEM budget (feedback): raise above the scoped
    # default when the fused block needs it, but never above v7x's 64 MiB.
    est = _stage_vmem_estimate(N, C, K_in, hidden)
    vmem_limit = int(min(max(2 * est, 32 * 1024 * 1024), 64 * 1024 * 1024))

    return pl.pallas_call(
        kernel,
        out_shape=jax.ShapeDtypeStruct((B, N, C), jnp.float32),
        grid=(B, depth),
        in_specs=[
            pl.BlockSpec((None, N, K_in), lambda b, d: (b, 0, 0)),  # patches
            const(K_in, C), const(1, C),        # patch embed / merge
            dep(1, C), dep(1, C),               # ln1 gamma/beta
            dep(C, 3 * C), dep(1, 3 * C),       # qkv
            dep(C, C), dep(1, C),               # proj
            dep(1, C), dep(1, C),               # ln2 gamma/beta
            dep(C, hidden), dep(1, hidden),     # fc1
            dep(hidden, C), dep(1, C),          # fc2
        ],
        out_specs=pl.BlockSpec((None, N, C), lambda b, d: (b, 0, 0)),
        compiler_params=pltpu.CompilerParams(
            dimension_semantics=("parallel", "arbitrary"),
            vmem_limit_bytes=vmem_limit),
    )(patches,
      sp["emb_w"], sp["emb_b"],
      sp["ln1_g"], sp["ln1_b"],
      sp["qkv_w"], sp["qkv_b"],
      sp["proj_w"], sp["proj_b"],
      sp["ln2_g"], sp["ln2_b"],
      sp["fc1_w"], sp["fc1_b"],
      sp["fc2_w"], sp["fc2_b"])


# ----------------------------- ClsHead kernel ------------------------------

def _cls_head_kernel(x_ref, g_ref, b_ref, w_ref, hb_ref, o_ref, *, eps):
    """Fused ClsHead: final LayerNorm -> global average pool -> linear."""
    xn = _ln(x_ref[...], g_ref[...], b_ref[...], eps)          # (N, C)
    pooled = jnp.mean(xn, axis=0, keepdims=True)               # (1, C) GAP
    o_ref[...] = jnp.dot(pooled.astype(jnp.bfloat16), w_ref[...],
                         preferred_element_type=jnp.float32) + hb_ref[...]


def cls_head(tokens, gamma, beta, w_pad, b_pad, eps=1e-5):
    """tokens (B, N, C) -> padded logits (B, Kpad); caller slices real classes."""
    B, N, C = tokens.shape
    Kp = w_pad.shape[1]
    kernel = functools.partial(_cls_head_kernel, eps=eps)
    out = pl.pallas_call(
        kernel,
        out_shape=jax.ShapeDtypeStruct((B, 1, Kp), jnp.float32),
        grid=(B,),                                       # both v7x TCs at work
        in_specs=[
            pl.BlockSpec((None, N, C), lambda b: (b, 0, 0)),
            pl.BlockSpec((1, C), lambda b: (0, 0)),
            pl.BlockSpec((1, C), lambda b: (0, 0)),
            pl.BlockSpec((C, Kp), lambda b: (0, 0)),
            pl.BlockSpec((1, Kp), lambda b: (0, 0)),
        ],
        out_specs=pl.BlockSpec((None, 1, Kp), lambda b: (b, 0, 0)),
        compiler_params=pltpu.CompilerParams(
            dimension_semantics=("parallel",)),
    )(tokens, gamma, beta, w_pad, b_pad)
    return out[:, 0, :]


# ------------------------------ model glue --------------------------------

CFG = dict(
    in_chans=3,
    patch_size=4,
    dims=(16, 32, 64, 128),     # DAT-tiny-style hierarchy, shrunk for the test
    depths=(2, 2, 4, 2),
    heads=(1, 2, 4, 8),
    mlp_ratio=4,
    num_classes=1000,
)


def init_params(key, cfg):
    keys = iter(jax.random.split(key, 64))
    dims = cfg["dims"]

    def rnd(shape):
        return jax.random.normal(next(keys), shape, jnp.float32) * 0.02

    params = {"stages": []}
    for si, (dim, depth, nh) in enumerate(zip(dims, cfg["depths"], cfg["heads"])):
        k_in = cfg["patch_size"] ** 2 * cfg["in_chans"] if si == 0 else 4 * dims[si - 1]
        hidden = cfg["mlp_ratio"] * dim
        scale = 1.0 / float(dim // nh) ** 0.5

        # Fold the 1/sqrt(d_head) query scale into the Q columns of the QKV
        # weight (the Q bias is zero here; fold it too when porting real
        # PyTorch weights).  Matmul weights live in bf16; biases/LN stay f32.
        qkv_w = rnd((depth, dim, 3 * dim))
        qkv_w = qkv_w.at[:, :, :dim].multiply(scale)

        params["stages"].append({
            "emb_w": rnd((k_in, dim)).astype(jnp.bfloat16),
            "emb_b": jnp.zeros((1, dim), jnp.float32),
            "ln1_g": jnp.ones((depth, 1, dim), jnp.float32),
            "ln1_b": jnp.zeros((depth, 1, dim), jnp.float32),
            "qkv_w": qkv_w.astype(jnp.bfloat16),
            "qkv_b": jnp.zeros((depth, 1, 3 * dim), jnp.float32),
            "proj_w": rnd((depth, dim, dim)).astype(jnp.bfloat16),
            "proj_b": jnp.zeros((depth, 1, dim), jnp.float32),
            "ln2_g": jnp.ones((depth, 1, dim), jnp.float32),
            "ln2_b": jnp.zeros((depth, 1, dim), jnp.float32),
            "fc1_w": rnd((depth, dim, hidden)).astype(jnp.bfloat16),
            "fc1_b": jnp.zeros((depth, 1, hidden), jnp.float32),
            "fc2_w": rnd((depth, hidden, dim)).astype(jnp.bfloat16),
            "fc2_b": jnp.zeros((depth, 1, dim), jnp.float32),
        })

    c_last = dims[-1]
    params["final_ln_g"] = jnp.ones((1, c_last), jnp.float32)
    params["final_ln_b"] = jnp.zeros((1, c_last), jnp.float32)

    # classifier head, class dim padded lane-dense to a multiple of 128
    nc = cfg["num_classes"]
    ncp = _round_up(nc, LANES)
    hw = rnd((c_last, nc))
    params["head_w"] = jnp.pad(hw, ((0, 0), (0, ncp - nc))).astype(jnp.bfloat16)
    params["head_b"] = jnp.zeros((1, ncp), jnp.float32)
    return params


def _unfold_nonoverlap(x, patch):
    """(B, H, W, C) -> (B, (H/p)*(W/p), p*p*C): stride==kernel conv as matmul."""
    B, H, W, C = x.shape
    x = x.reshape(B, H // patch, patch, W // patch, patch, C)
    x = x.transpose(0, 1, 3, 2, 4, 5)
    return x.reshape(B, (H // patch) * (W // patch), patch * patch * C)


def dat_classifier_forward(params, x_nchw, cfg):
    # NCHW (PyTorch) -> NHWC (kernel layout)
    x = jnp.transpose(x_nchw, (0, 2, 3, 1)).astype(jnp.float32)
    B, H, W, _ = x.shape
    p = cfg["patch_size"]

    Hc, Wc = H // p, W // p
    patches = _unfold_nonoverlap(x, p)                  # (B, Hc*Wc, p*p*C_in)

    tokens = None
    for si, sp in enumerate(params["stages"]):
        if si > 0:
            # patch merging: 2x2 / stride-2 conv as unfold + in-kernel matmul
            c_prev = cfg["dims"][si - 1]
            fmap = tokens.reshape(B, Hc, Wc, c_prev)
            patches = _unfold_nonoverlap(fmap, 2)
            Hc, Wc = Hc // 2, Wc // 2
        tokens = stage_forward(patches, sp, cfg["heads"][si])

    logits = cls_head(tokens, params["final_ln_g"], params["final_ln_b"],
                      params["head_w"], params["head_b"])
    return logits[:, :cfg["num_classes"]]


if __name__ == "__main__":
    key = jax.random.PRNGKey(0)
    k_param, k_input = jax.random.split(key)
    params = init_params(k_param, CFG)

    # small ImageNet-style input: batch=2, 3 channels, 32x32 (NCHW, PyTorch)
    x = jax.random.normal(k_input, (2, 3, 32, 32), dtype=jnp.float32)

    fwd = jax.jit(lambda prm, img: dat_classifier_forward(prm, img, CFG))
    logits = jax.block_until_ready(fwd(params, x))
    assert logits.shape == (2, CFG["num_classes"])
    assert bool(jnp.all(jnp.isfinite(logits)))
    print("KERNEL_OK")
</pallas_src>

<mosaic_0001>
module attributes {stable_mosaic.version = 11 : i64} {
  func.func @_stage_kernel(%arg0: i32, %arg1: i32, %arg2: memref<1x64x48xf32, #tpu.memory_space<vmem>>, %arg3: memref<48x16xbf16, #tpu.memory_space<vmem>>, %arg4: memref<1x16xf32, #tpu.memory_space<vmem>>, %arg5: memref<1x1x16xf32, #tpu.memory_space<vmem>>, %arg6: memref<1x1x16xf32, #tpu.memory_space<vmem>>, %arg7: memref<1x16x48xbf16, #tpu.memory_space<vmem>>, %arg8: memref<1x1x48xf32, #tpu.memory_space<vmem>>, %arg9: memref<1x16x16xbf16, #tpu.memory_space<vmem>>, %arg10: memref<1x1x16xf32, #tpu.memory_space<vmem>>, %arg11: memref<1x1x16xf32, #tpu.memory_space<vmem>>, %arg12: memref<1x1x16xf32, #tpu.memory_space<vmem>>, %arg13: memref<1x16x64xbf16, #tpu.memory_space<vmem>>, %arg14: memref<1x1x64xf32, #tpu.memory_space<vmem>>, %arg15: memref<1x64x16xbf16, #tpu.memory_space<vmem>>, %arg16: memref<1x1x16xf32, #tpu.memory_space<vmem>>, %arg17: memref<1x64x16xf32, #tpu.memory_space<vmem>>) attributes {dimension_semantics = [#tpu.dimension_semantics<parallel>, #tpu.dimension_semantics<arbitrary>], iteration_bounds = array<i64: 2, 2>, scalar_prefetch = 0 : i64, scratch_operands = 0 : i64, tpu.core_type = #tpu.core_type<tc>, window_params = [{transform_indices = @transform_0, window_bounds = array<i64: 1, 64, 48>}, {pipeline_mode = #tpu.pipeline_mode<synchronous>, transform_indices = @transform_1, window_bounds = array<i64: 48, 16>}, {pipeline_mode = #tpu.pipeline_mode<synchronous>, transform_indices = @transform_2, window_bounds = array<i64: 1, 16>}, {transform_indices = @transform_3, window_bounds = array<i64: 1, 1, 16>}, {transform_indices = @transform_4, window_bounds = array<i64: 1, 1, 16>}, {transform_indices = @transform_5, window_bounds = array<i64: 1, 16, 48>}, {transform_indices = @transform_6, window_bounds = array<i64: 1, 1, 48>}, {transform_indices = @transform_7, window_bounds = array<i64: 1, 16, 16>}, {transform_indices = @transform_8, window_bounds = array<i64: 1, 1, 16>}, {transform_indices = @transform_9, window_bounds = array<i64: 1, 1, 16>}, {transform_indices = @transform_10, window_bounds = array<i64: 1, 1, 16>}, {transform_indices = @transform_11, window_bounds = array<i64: 1, 16, 64>}, {transform_indices = @transform_12, window_bounds = array<i64: 1, 1, 64>}, {transform_indices = @transform_13, window_bounds = array<i64: 1, 64, 16>}, {transform_indices = @transform_14, window_bounds = array<i64: 1, 1, 16>}, {transform_indices = @transform_15, window_bounds = array<i64: 1, 64, 16>}]} {
    %c0_i32 = arith.constant 0 : i32
    %0 = arith.cmpi eq, %arg1, %c0_i32 : i32
    %1 = arith.extui %0 : i1 to i32
    %c0_i32_0 = arith.constant 0 : i32
    %2 = arith.cmpi ne, %1, %c0_i32_0 : i32
    scf.if %2 {
      %c0_63 = arith.constant 0 : index
      %c0_64 = arith.constant 0 : index
      %c0_65 = arith.constant 0 : index
      %126 = vector.load %arg2[%c0_63, %c0_64, %c0_65] : memref<1x64x48xf32, #tpu.memory_space<vmem>>, vector<1x64x48xf32>
      %127 = vector.shape_cast %126 : vector<1x64x48xf32> to vector<64x48xf32>
      %128 = arith.truncf %127 : vector<64x48xf32> to vector<64x48xbf16>
      %c0_66 = arith.constant 0 : index
      %c0_67 = arith.constant 0 : index
      %129 = vector.load %arg3[%c0_66, %c0_67] : memref<48x16xbf16, #tpu.memory_space<vmem>>, vector<48x16xbf16>
      %cst_68 = arith.constant dense<0.000000e+00> : vector<64x16xf32>
      %130 = tpu.matmul %128, %129, %cst_68 {dimension_numbers = #tpu.dot_dimension_numbers<[1], [0], [0], [1], [0, 0, 1, 1], [], []>} : vector<64x48xbf16>, vector<48x16xbf16>, vector<64x16xf32> -> vector<64x16xf32>
      %c0_69 = arith.constant 0 : index
      %c0_70 = arith.constant 0 : index
      %131 = vector.load %arg4[%c0_69, %c0_70] : memref<1x16xf32, #tpu.memory_space<vmem>>, vector<1x16xf32>
      %132 = vector.broadcast %131 : vector<1x16xf32> to vector<64x16xf32>
      %133 = arith.addf %130, %132 : vector<64x16xf32>
      %c0_71 = arith.constant 0 : index
      %c0_72 = arith.constant 0 : index
      %c0_73 = arith.constant 0 : index
      %134 = vector.load %arg17[%c0_71, %c0_72, %c0_73] : memref<1x64x16xf32, #tpu.memory_space<vmem>>, vector<1x64x16xf32>
      %135 = vector.shape_cast %134 : vector<1x64x16xf32> to vector<64x16xf32>
      %136 = vector.shape_cast %133 : vector<64x16xf32> to vector<1x64x16xf32>
      tpu.vector_store %arg17[%c0_71, %c0_72, %c0_73], %136 {strides = array<i32>} : memref<1x64x16xf32, #tpu.memory_space<vmem>>, vector<1x64x16xf32>,
    } else {
    }
    %c0 = arith.constant 0 : index
    %c0_1 = arith.constant 0 : index
    %c0_2 = arith.constant 0 : index
    %3 = vector.load %arg17[%c0, %c0_1, %c0_2] : memref<1x64x16xf32, #tpu.memory_space<vmem>>, vector<1x64x16xf32>
    %4 = vector.shape_cast %3 : vector<1x64x16xf32> to vector<64x16xf32>
    %c0_3 = arith.constant 0 : index
    %c0_4 = arith.constant 0 : index
    %c0_5 = arith.constant 0 : index
    %5 = vector.load %arg5[%c0_3, %c0_4, %c0_5] : memref<1x1x16xf32, #tpu.memory_space<vmem>>, vector<1x1x16xf32>
    %6 = vector.shape_cast %5 : vector<1x1x16xf32> to vector<1x16xf32>
    %c0_6 = arith.constant 0 : index
    %c0_7 = arith.constant 0 : index
    %c0_8 = arith.constant 0 : index
    %7 = vector.load %arg6[%c0_6, %c0_7, %c0_8] : memref<1x1x16xf32, #tpu.memory_space<vmem>>, vector<1x1x16xf32>
    %8 = vector.shape_cast %7 : vector<1x1x16xf32> to vector<1x16xf32>
    %cst = arith.constant dense<0.000000e+00> : vector<64xf32>
    %9 = vector.multi_reduction <add>, %4, %cst [1] : vector<64x16xf32> to vector<64xf32>
    %10 = vector.shape_cast %9 : vector<64xf32> to vector<64x1xf32>
    %cst_9 = arith.constant 1.600000e+01 : f32
    %11 = vector.broadcast %cst_9 : f32 to vector<64x1xf32>
    %12 = arith.divf %10, %11 : vector<64x1xf32>
    %13 = vector.broadcast %12 : vector<64x1xf32> to vector<64x16xf32>
    %14 = arith.subf %4, %13 : vector<64x16xf32>
    %15 = arith.mulf %14, %14 : vector<64x16xf32>
    %cst_10 = arith.constant dense<0.000000e+00> : vector<64xf32>
    %16 = vector.multi_reduction <add>, %15, %cst_10 [1] : vector<64x16xf32> to vector<64xf32>
    %17 = vector.shape_cast %16 : vector<64xf32> to vector<64x1xf32>
    %cst_11 = arith.constant 1.600000e+01 : f32
    %18 = vector.broadcast %cst_11 : f32 to vector<64x1xf32>
    %19 = arith.divf %17, %18 : vector<64x1xf32>
    %20 = vector.broadcast %12 : vector<64x1xf32> to vector<64x16xf32>
    %21 = arith.subf %4, %20 : vector<64x16xf32>
    %cst_12 = arith.constant 9.99999974E-6 : f32
    %22 = vector.broadcast %cst_12 : f32 to vector<64x1xf32>
    %23 = arith.addf %19, %22 : vector<64x1xf32>
    %24 = math.rsqrt %23 : vector<64x1xf32>
    %25 = vector.broadcast %24 : vector<64x1xf32> to vector<64x16xf32>
    %26 = arith.mulf %21, %25 : vector<64x16xf32>
    %27 = vector.broadcast %6 : vector<1x16xf32> to vector<64x16xf32>
    %28 = arith.mulf %26, %27 : vector<64x16xf32>
    %29 = vector.broadcast %8 : vector<1x16xf32> to vector<64x16xf32>
    %30 = arith.addf %28, %29 : vector<64x16xf32>
    %31 = arith.truncf %30 : vector<64x16xf32> to vector<64x16xbf16>
    %c0_13 = arith.constant 0 : index
    %c0_14 = arith.constant 0 : index
    %c0_15 = arith.constant 0 : index
    %32 = vector.load %arg7[%c0_13, %c0_14, %c0_15] : memref<1x16x48xbf16, #tpu.memory_space<vmem>>, vector<1x16x48xbf16>
    %33 = vector.shape_cast %32 : vector<1x16x48xbf16> to vector<16x48xbf16>
    %cst_16 = arith.constant dense<0.000000e+00> : vector<64x48xf32>
    %34 = tpu.matmul %31, %33, %cst_16 {dimension_numbers = #tpu.dot_dimension_numbers<[1], [0], [0], [1], [0, 0, 1, 1], [], []>} : vector<64x16xbf16>, vector<16x48xbf16>, vector<64x48xf32> -> vector<64x48xf32>
    %c0_17 = arith.constant 0 : index
    %c0_18 = arith.constant 0 : index
    %c0_19 = arith.constant 0 : index
    %35 = vector.load %arg8[%c0_17, %c0_18, %c0_19] : memref<1x1x48xf32, #tpu.memory_space<vmem>>, vector<1x1x48xf32>
    %36 = vector.shape_cast %35 : vector<1x1x48xf32> to vector<1x48xf32>
    %37 = vector.broadcast %36 : vector<1x48xf32> to vector<64x48xf32>
    %38 = arith.addf %34, %37 : vector<64x48xf32>
    %39 = vector.extract_strided_slice %38 {offsets = [0, 0], sizes = [64, 16], strides = [1, 1]} : vector<64x48xf32> to vector<64x16xf32>
    %40 = arith.truncf %39 : vector<64x16xf32> to vector<64x16xbf16>
    %41 = vector.extract_strided_slice %38 {offsets = [0, 16], sizes = [64, 16], strides = [1, 1]} : vector<64x48xf32> to vector<64x16xf32>
    %42 = arith.truncf %41 : vector<64x16xf32> to vector<64x16xbf16>
    %43 = vector.extract_strided_slice %38 {offsets = [0, 32], sizes = [64, 16], strides = [1, 1]} : vector<64x48xf32> to vector<64x16xf32>
    %44 = arith.truncf %43 : vector<64x16xf32> to vector<64x16xbf16>
    %cst_20 = arith.constant dense<0.000000e+00> : vector<64x64xf32>
    %45 = tpu.matmul %40, %42, %cst_20 {dimension_numbers = #tpu.dot_dimension_numbers<[1], [1], [0], [0], [0, 0, 1, 0], [], []>} : vector<64x16xbf16>, vector<64x16xbf16>, vector<64x64xf32> -> vector<64x64xf32>
    %cst_21 = arith.constant dense<0xFF800000> : vector<64xf32>
    %46 = vector.multi_reduction <maximumf>, %45, %cst_21 [1] : vector<64x64xf32> to vector<64xf32>
    %47 = vector.shape_cast %46 : vector<64xf32> to vector<64x1xf32>
    %48 = vector.broadcast %47 : vector<64x1xf32> to vector<64x64xf32>
    %49 = arith.subf %45, %48 : vector<64x64xf32>
    %50 = math.exp %49 : vector<64x64xf32>
    %cst_22 = arith.constant dense<0.000000e+00> : vector<64xf32>
    %51 = vector.multi_reduction <add>, %50, %cst_22 [1] : vector<64x64xf32> to vector<64xf32>
    %52 = vector.shape_cast %51 : vector<64xf32> to vector<64x1xf32>
    %53 = tpu.reciprocal %52 {approx = true} : vector<64x1xf32> -> vector<64x1xf32>
    %54 = vector.broadcast %53 : vector<64x1xf32> to vector<64x64xf32>
    %55 = arith.mulf %50, %54 : vector<64x64xf32>
    %56 = arith.truncf %55 : vector<64x64xf32> to vector<64x64xbf16>
    %cst_23 = arith.constant dense<0.000000e+00> : vector<64x16xf32>
    %57 = tpu.matmul %56, %44, %cst_23 {dimension_numbers = #tpu.dot_dimension_numbers<[1], [0], [0], [1], [0, 0, 1, 1], [], []>} : vector<64x64xbf16>, vector<64x16xbf16>, vector<64x16xf32> -> vector<64x16xf32>
    %58 = arith.truncf %57 : vector<64x16xf32> to vector<64x16xbf16>
    %c0_24 = arith.constant 0 : index
    %c0_25 = arith.constant 0 : index
    %c0_26 = arith.constant 0 : index
    %59 = vector.load %arg9[%c0_24, %c0_25, %c0_26] : memref<1x16x16xbf16, #tpu.memory_space<vmem>>, vector<1x16x16xbf16>
    %60 = vector.shape_cast %59 : vector<1x16x16xbf16> to vector<16x16xbf16>
    %cst_27 = arith.constant dense<0.000000e+00> : vector<64x16xf32>
    %61 = tpu.matmul %58, %60, %cst_27 {dimension_numbers = #tpu.dot_dimension_numbers<[1], [0], [0], [1], [0, 0, 1, 1], [], []>} : vector<64x16xbf16>, vector<16x16xbf16>, vector<64x16xf32> -> vector<64x16xf32>
    %c0_28 = arith.constant 0 : index
    %c0_29 = arith.constant 0 : index
    %c0_30 = arith.constant 0 : index
    %62 = vector.load %arg10[%c0_28, %c0_29, %c0_30] : memref<1x1x16xf32, #tpu.memory_space<vmem>>, vector<1x1x16xf32>
    %63 = vector.shape_cast %62 : vector<1x1x16xf32> to vector<1x16xf32>
    %64 = vector.broadcast %63 : vector<1x16xf32> to vector<64x16xf32>
    %65 = arith.addf %61, %64 : vector<64x16xf32>
    %66 = arith.addf %4, %65 : vector<64x16xf32>
    %c0_31 = arith.constant 0 : index
    %c0_32 = arith.constant 0 : index
    %c0_33 = arith.constant 0 : index
    %67 = vector.load %arg11[%c0_31, %c0_32, %c0_33] : memref<1x1x16xf32, #tpu.memory_space<vmem>>, vector<1x1x16xf32>
    %68 = vector.shape_cast %67 : vector<1x1x16xf32> to vector<1x16xf32>
    %c0_34 = arith.constant 0 : index
    %c0_35 = arith.constant 0 : index
    %c0_36 = arith.constant 0 : index
    %69 = vector.load %arg12[%c0_34, %c0_35, %c0_36] : memref<1x1x16xf32, #tpu.memory_space<vmem>>, vector<1x1x16xf32>
    %70 = vector.shape_cast %69 : vector<1x1x16xf32> to vector<1x16xf32>
    %cst_37 = arith.constant dense<0.000000e+00> : vector<64xf32>
    %71 = vector.multi_reduction <add>, %66, %cst_37 [1] : vector<64x16xf32> to vector<64xf32>
    %72 = vector.shape_cast %71 : vector<64xf32> to vector<64x1xf32>
    %cst_38 = arith.constant 1.600000e+01 : f32
    %73 = vector.broadcast %cst_38 : f32 to vector<64x1xf32>
    %74 = arith.divf %72, %73 : vector<64x1xf32>
    %75 = vector.broadcast %74 : vector<64x1xf32> to vector<64x16xf32>
    %76 = arith.subf %66, %75 : vector<64x16xf32>
    %77 = arith.mulf %76, %76 : vector<64x16xf32>
    %cst_39 = arith.constant dense<0.000000e+00> : vector<64xf32>
    %78 = vector.multi_reduction <add>, %77, %cst_39 [1] : vector<64x16xf32> to vector<64xf32>
    %79 = vector.shape_cast %78 : vector<64xf32> to vector<64x1xf32>
    %cst_40 = arith.constant 1.600000e+01 : f32
    %80 = vector.broadcast %cst_40 : f32 to vector<64x1xf32>
    %81 = arith.divf %79, %80 : vector<64x1xf32>
    %82 = vector.broadcast %74 : vector<64x1xf32> to vector<64x16xf32>
    %83 = arith.subf %66, %82 : vector<64x16xf32>
    %cst_41 = arith.constant 9.99999974E-6 : f32
    %84 = vector.broadcast %cst_41 : f32 to vector<64x1xf32>
    %85 = arith.addf %81, %84 : vector<64x1xf32>
    %86 = math.rsqrt %85 : vector<64x1xf32>
    %87 = vector.broadcast %86 : vector<64x1xf32> to vector<64x16xf32>
    %88 = arith.mulf %83, %87 : vector<64x16xf32>
    %89 = vector.broadcast %68 : vector<1x16xf32> to vector<64x16xf32>
    %90 = arith.mulf %88, %89 : vector<64x16xf32>
    %91 = vector.broadcast %70 : vector<1x16xf32> to vector<64x16xf32>
    %92 = arith.addf %90, %91 : vector<64x16xf32>
    %93 = arith.truncf %92 : vector<64x16xf32> to vector<64x16xbf16>
    %c0_42 = arith.constant 0 : index
    %c0_43 = arith.constant 0 : index
    %c0_44 = arith.constant 0 : index
    %94 = vector.load %arg13[%c0_42, %c0_43, %c0_44] : memref<1x16x64xbf16, #tpu.memory_space<vmem>>, vector<1x16x64xbf16>
    %95 = vector.shape_cast %94 : vector<1x16x64xbf16> to vector<16x64xbf16>
    %cst_45 = arith.constant dense<0.000000e+00> : vector<64x64xf32>
    %96 = tpu.matmul %93, %95, %cst_45 {dimension_numbers = #tpu.dot_dimension_numbers<[1], [0], [0], [1], [0, 0, 1, 1], [], []>} : vector<64x16xbf16>, vector<16x64xbf16>, vector<64x64xf32> -> vector<64x64xf32>
    %c0_46 = arith.constant 0 : index
    %c0_47 = arith.constant 0 : index
    %c0_48 = arith.constant 0 : index
    %97 = vector.load %arg14[%c0_46, %c0_47, %c0_48] : memref<1x1x64xf32, #tpu.memory_space<vmem>>, vector<1x1x64xf32>
    %98 = vector.shape_cast %97 : vector<1x1x64xf32> to vector<1x64xf32>
    %99 = vector.broadcast %98 : vector<1x64xf32> to vector<64x64xf32>
    %100 = arith.addf %96, %99 : vector<64x64xf32>
    %101 = arith.mulf %100, %100 : vector<64x64xf32>
    %102 = arith.mulf %100, %101 : vector<64x64xf32>
    %cst_49 = arith.constant 4.471500e-02 : f32
    %103 = vector.broadcast %cst_49 : f32 to vector<64x64xf32>
    %104 = arith.mulf %103, %102 : vector<64x64xf32>
    %105 = arith.addf %100, %104 : vector<64x64xf32>
    %cst_50 = arith.constant 0.797884583 : f32
    %106 = vector.broadcast %cst_50 : f32 to vector<64x64xf32>
    %107 = arith.mulf %106, %105 : vector<64x64xf32>
    %108 = math.tanh %107 : vector<64x64xf32>
    %cst_51 = arith.constant 1.000000e+00 : f32
    %109 = vector.broadcast %cst_51 : f32 to vector<64x64xf32>
    %110 = arith.addf %109, %108 : vector<64x64xf32>
    %cst_52 = arith.constant 5.000000e-01 : f32
    %111 = vector.broadcast %cst_52 : f32 to vector<64x64xf32>
    %112 = arith.mulf %111, %110 : vector<64x64xf32>
    %113 = arith.mulf %100, %112 : vector<64x64xf32>
    %114 = arith.truncf %113 : vector<64x64xf32> to vector<64x64xbf16>
    %c0_53 = arith.constant 0 : index
    %c0_54 = arith.constant 0 : index
    %c0_55 = arith.constant 0 : index
    %115 = vector.load %arg15[%c0_53, %c0_54, %c0_55] : memref<1x64x16xbf16, #tpu.memory_space<vmem>>, vector<1x64x16xbf16>
    %116 = vector.shape_cast %115 : vector<1x64x16xbf16> to vector<64x16xbf16>
    %cst_56 = arith.constant dense<0.000000e+00> : vector<64x16xf32>
    %117 = tpu.matmul %114, %116, %cst_56 {dimension_numbers = #tpu.dot_dimension_numbers<[1], [0], [0], [1], [0, 0, 1, 1], [], []>} : vector<64x64xbf16>, vector<64x16xbf16>, vector<64x16xf32> -> vector<64x16xf32>
    %c0_57 = arith.constant 0 : index
    %c0_58 = arith.constant 0 : index
    %c0_59 = arith.constant 0 : index
    %118 = vector.load %arg16[%c0_57, %c0_58, %c0_59] : memref<1x1x16xf32, #tpu.memory_space<vmem>>, vector<1x1x16xf32>
    %119 = vector.shape_cast %118 : vector<1x1x16xf32> to vector<1x16xf32>
    %120 = vector.broadcast %119 : vector<1x16xf32> to vector<64x16xf32>
    %121 = arith.addf %117, %120 : vector<64x16xf32>
    %122 = arith.addf %66, %121 : vector<64x16xf32>
    %c0_60 = arith.constant 0 : index
    %c0_61 = arith.constant 0 : index
    %c0_62 = arith.constant 0 : index
    %123 = vector.load %arg17[%c0_60, %c0_61, %c0_62] : memref<1x64x16xf32, #tpu.memory_space<vmem>>, vector<1x64x16xf32>
    %124 = vector.shape_cast %123 : vector<1x64x16xf32> to vector<64x16xf32>
    %125 = vector.shape_cast %122 : vector<64x16xf32> to vector<1x64x16xf32>
    tpu.vector_store %arg17[%c0_60, %c0_61, %c0_62], %125 {strides = array<i32>} : memref<1x64x16xf32, #tpu.memory_space<vmem>>, vector<1x64x16xf32>,
    return
  }
  func.func @transform_0(%arg0: i32, %arg1: i32) -> (i32, i32, i32) {
    %c0_i32 = arith.constant 0 : i32
    %c0_i32_0 = arith.constant 0 : i32
    %c0_i32_1 = arith.constant 0 : i32
    return %arg0, %c0_i32, %c0_i32_0 : i32, i32, i32
  }
  func.func @transform_1(%arg0: i32, %arg1: i32) -> (i32, i32) {
    %c0_i32 = arith.constant 0 : i32
    %c0_i32_0 = arith.constant 0 : i32
    %c0_i32_1 = arith.constant 0 : i32
    return %c0_i32, %c0_i32_0 : i32, i32
  }
  func.func @transform_2(%arg0: i32, %arg1: i32) -> (i32, i32) {
    %c0_i32 = arith.constant 0 : i32
    %c0_i32_0 = arith.constant 0 : i32
    %c0_i32_1 = arith.constant 0 : i32
    return %c0_i32, %c0_i32_0 : i32, i32
  }
  func.func @transform_3(%arg0: i32, %arg1: i32) -> (i32, i32, i32) {
    %c0_i32 = arith.constant 0 : i32
    %c0_i32_0 = arith.constant 0 : i32
    %c0_i32_1 = arith.constant 0 : i32
    return %arg1, %c0_i32, %c0_i32_0 : i32, i32, i32
  }
  func.func @transform_4(%arg0: i32, %arg1: i32) -> (i32, i32, i32) {
    %c0_i32 = arith.constant 0 : i32
    %c0_i32_0 = arith.constant 0 : i32
    %c0_i32_1 = arith.constant 0 : i32
    return %arg1, %c0_i32, %c0_i32_0 : i32, i32, i32
  }
  func.func @transform_5(%arg0: i32, %arg1: i32) -> (i32, i32, i32) {
    %c0_i32 = arith.constant 0 : i32
    %c0_i32_0 = arith.constant 0 : i32
    %c0_i32_1 = arith.constant 0 : i32
    return %arg1, %c0_i32, %c0_i32_0 : i32, i32, i32
  }
  func.func @transform_6(%arg0: i32, %arg1: i32) -> (i32, i32, i32) {
    %c0_i32 = arith.constant 0 : i32
    %c0_i32_0 = arith.constant 0 : i32
    %c0_i32_1 = arith.constant 0 : i32
    return %arg1, %c0_i32, %c0_i32_0 : i32, i32, i32
  }
  func.func @transform_7(%arg0: i32, %arg1: i32) -> (i32, i32, i32) {
    %c0_i32 = arith.constant 0 : i32
    %c0_i32_0 = arith.constant 0 : i32
    %c0_i32_1 = arith.constant 0 : i32
    return %arg1, %c0_i32, %c0_i32_0 : i32, i32, i32
  }
  func.func @transform_8(%arg0: i32, %arg1: i32) -> (i32, i32, i32) {
    %c0_i32 = arith.constant 0 : i32
    %c0_i32_0 = arith.constant 0 : i32
    %c0_i32_1 = arith.constant 0 : i32
    return %arg1, %c0_i32, %c0_i32_0 : i32, i32, i32
  }
  func.func @transform_9(%arg0: i32, %arg1: i32) -> (i32, i32, i32) {
    %c0_i32 = arith.constant 0 : i32
    %c0_i32_0 = arith.constant 0 : i32
    %c0_i32_1 = arith.constant 0 : i32
    return %arg1, %c0_i32, %c0_i32_0 : i32, i32, i32
  }
  func.func @transform_10(%arg0: i32, %arg1: i32) -> (i32, i32, i32) {
    %c0_i32 = arith.constant 0 : i32
    %c0_i32_0 = arith.constant 0 : i32
    %c0_i32_1 = arith.constant 0 : i32
    return %arg1, %c0_i32, %c0_i32_0 : i32, i32, i32
  }
  func.func @transform_11(%arg0: i32, %arg1: i32) -> (i32, i32, i32) {
    %c0_i32 = arith.constant 0 : i32
    %c0_i32_0 = arith.constant 0 : i32
    %c0_i32_1 = arith.constant 0 : i32
    return %arg1, %c0_i32, %c0_i32_0 : i32, i32, i32
  }
  func.func @transform_12(%arg0: i32, %arg1: i32) -> (i32, i32, i32) {
    %c0_i32 = arith.constant 0 : i32
    %c0_i32_0 = arith.constant 0 : i32
    %c0_i32_1 = arith.constant 0 : i32
    return %arg1, %c0_i32, %c0_i32_0 : i32, i32, i32
  }
  func.func @transform_13(%arg0: i32, %arg1: i32) -> (i32, i32, i32) {
    %c0_i32 = arith.constant 0 : i32
    %c0_i32_0 = arith.constant 0 : i32
    %c0_i32_1 = arith.constant 0 : i32
    return %arg1, %c0_i32, %c0_i32_0 : i32, i32, i32
  }
  func.func @transform_14(%arg0: i32, %arg1: i32) -> (i32, i32, i32) {
    %c0_i32 = arith.constant 0 : i32
    %c0_i32_0 = arith.constant 0 : i32
    %c0_i32_1 = arith.constant 0 : i32
    return %arg1, %c0_i32, %c0_i32_0 : i32, i32, i32
  }
  func.func @transform_15(%arg0: i32, %arg1: i32) -> (i32, i32, i32) {
    %c0_i32 = arith.constant 0 : i32
    %c0_i32_0 = arith.constant 0 : i32
    %c0_i32_1 = arith.constant 0 : i32
    return %arg0, %c0_i32, %c0_i32_0 : i32, i32, i32
  }
}

module attributes {stable_mosaic.version = 11 : i64} {
  func.func @_stage_kernel(%arg0: i32, %arg1: i32, %arg2: memref<1x16x64xf32, #tpu.memory_space<vmem>>, %arg3: memref<64x32xbf16, #tpu.memory_space<vmem>>, %arg4: memref<1x32xf32, #tpu.memory_space<vmem>>, %arg5: memref<1x1x32xf32, #tpu.memory_space<vmem>>, %arg6: memref<1x1x32xf32, #tpu.memory_space<vmem>>, %arg7: memref<1x32x96xbf16, #tpu.memory_space<vmem>>, %arg8: memref<1x1x96xf32, #tpu.memory_space<vmem>>, %arg9: memref<1x32x32xbf16, #tpu.memory_space<vmem>>, %arg10: memref<1x1x32xf32, #tpu.memory_space<vmem>>, %arg11: memref<1x1x32xf32, #tpu.memory_space<vmem>>, %arg12: memref<1x1x32xf32, #tpu.memory_space<vmem>>, %arg13: memref<1x32x128xbf16, #tpu.memory_space<vmem>>, %arg14: memref<1x1x128xf32, #tpu.memory_space<vmem>>, %arg15: memref<1x128x32xbf16, #tpu.memory_space<vmem>>, %arg16: memref<1x1x32xf32, #tpu.memory_space<vmem>>, %arg17: memref<1x16x32xf32, #tpu.memory_space<vmem>>) attributes {dimension_semantics = [#tpu.dimension_semantics<parallel>, #tpu.dimension_semantics<arbitrary>], iteration_bounds = array<i64: 2, 2>, scalar_prefetch = 0 : i64, scratch_operands = 0 : i64, tpu.core_type = #tpu.core_type<tc>, window_params = [{transform_indices = @transform_0, window_bounds = array<i64: 1, 16, 64>}, {pipeline_mode = #tpu.pipeline_mode<synchronous>, transform_indices = @transform_1, window_bounds = array<i64: 64, 32>}, {pipeline_mode = #tpu.pipeline_mode<synchronous>, transform_indices = @transform_2, window_bounds = array<i64: 1, 32>}, {transform_indices = @transform_3, window_bounds = array<i64: 1, 1, 32>}, {transform_indices = @transform_4, window_bounds = array<i64: 1, 1, 32>}, {transform_indices = @transform_5, window_bounds = array<i64: 1, 32, 96>}, {transform_indices = @transform_6, window_bounds = array<i64: 1, 1, 96>}, {transform_indices = @transform_7, window_bounds = array<i64: 1, 32, 32>}, {transform_indices = @transform_8, window_bounds = array<i64: 1, 1, 32>}, {transform_indices = @transform_9, window_bounds = array<i64: 1, 1, 32>}, {transform_indices = @transform_10, window_bounds = array<i64: 1, 1, 32>}, {transform_indices = @transform_11, window_bounds = array<i64: 1, 32, 128>}, {transform_indices = @transform_12, window_bounds = array<i64: 1, 1, 128>}, {transform_indices = @transform_13, window_bounds = array<i64: 1, 128, 32>}, {transform_indices = @transform_14, window_bounds = array<i64: 1, 1, 32>}, {transform_indices = @transform_15, window_bounds = array<i64: 1, 16, 32>}]} {
    %c0_i32 = arith.constant 0 : i32
    %0 = arith.cmpi eq, %arg1, %c0_i32 : i32
    %1 = arith.extui %0 : i1 to i32
    %c0_i32_0 = arith.constant 0 : i32
    %2 = arith.cmpi ne, %1, %c0_i32_0 : i32
    scf.if %2 {
      %c0_67 = arith.constant 0 : index
      %c0_68 = arith.constant 0 : index
      %c0_69 = arith.constant 0 : index
      %146 = vector.load %arg2[%c0_67, %c0_68, %c0_69] : memref<1x16x64xf32, #tpu.memory_space<vmem>>, vector<1x16x64xf32>
      %147 = vector.shape_cast %146 : vector<1x16x64xf32> to vector<16x64xf32>
      %148 = arith.truncf %147 : vector<16x64xf32> to vector<16x64xbf16>
      %c0_70 = arith.constant 0 : index
      %c0_71 = arith.constant 0 : index
      %149 = vector.load %arg3[%c0_70, %c0_71] : memref<64x32xbf16, #tpu.memory_space<vmem>>, vector<64x32xbf16>
      %cst_72 = arith.constant dense<0.000000e+00> : vector<16x32xf32>
      %150 = tpu.matmul %148, %149, %cst_72 {dimension_numbers = #tpu.dot_dimension_numbers<[1], [0], [0], [1], [0, 0, 1, 1], [], []>} : vector<16x64xbf16>, vector<64x32xbf16>, vector<16x32xf32> -> vector<16x32xf32>
      %c0_73 = arith.constant 0 : index
      %c0_74 = arith.constant 0 : index
      %151 = vector.load %arg4[%c0_73, %c0_74] : memref<1x32xf32, #tpu.memory_space<vmem>>, vector<1x32xf32>
      %152 = vector.broadcast %151 : vector<1x32xf32> to vector<16x32xf32>
      %153 = arith.addf %150, %152 : vector<16x32xf32>
      %c0_75 = arith.constant 0 : index
      %c0_76 = arith.constant 0 : index
      %c0_77 = arith.constant 0 : index
      %154 = vector.load %arg17[%c0_75, %c0_76, %c0_77] : memref<1x16x32xf32, #tpu.memory_space<vmem>>, vector<1x16x32xf32>
      %155 = vector.shape_cast %154 : vector<1x16x32xf32> to vector<16x32xf32>
      %156 = vector.shape_cast %153 : vector<16x32xf32> to vector<1x16x32xf32>
      tpu.vector_store %arg17[%c0_75, %c0_76, %c0_77], %156 {strides = array<i32>} : memref<1x16x32xf32, #tpu.memory_space<vmem>>, vector<1x16x32xf32>,
    } else {
    }
    %c0 = arith.constant 0 : index
    %c0_1 = arith.constant 0 : index
    %c0_2 = arith.constant 0 : index
    %3 = vector.load %arg17[%c0, %c0_1, %c0_2] : memref<1x16x32xf32, #tpu.memory_space<vmem>>, vector<1x16x32xf32>
    %4 = vector.shape_cast %3 : vector<1x16x32xf32> to vector<16x32xf32>
    %c0_3 = arith.constant 0 : index
    %c0_4 = arith.constant 0 : index
    %c0_5 = arith.constant 0 : index
    %5 = vector.load %arg5[%c0_3, %c0_4, %c0_5] : memref<1x1x32xf32, #tpu.memory_space<vmem>>, vector<1x1x32xf32>
    %6 = vector.shape_cast %5 : vector<1x1x32xf32> to vector<1x32xf32>
    %c0_6 = arith.constant 0 : index
    %c0_7 = arith.constant 0 : index
    %c0_8 = arith.constant 0 : index
    %7 = vector.load %arg6[%c0_6, %c0_7, %c0_8] : memref<1x1x32xf32, #tpu.memory_space<vmem>>, vector<1x1x32xf32>
    %8 = vector.shape_cast %7 : vector<1x1x32xf32> to vector<1x32xf32>
    %cst = arith.constant dense<0.000000e+00> : vector<16xf32>
    %9 = vector.multi_reduction <add>, %4, %cst [1] : vector<16x32xf32> to vector<16xf32>
    %10 = vector.shape_cast %9 : vector<16xf32> to vector<16x1xf32>
    %cst_9 = arith.constant 3.200000e+01 : f32
    %11 = vector.broadcast %cst_9 : f32 to vector<16x1xf32>
    %12 = arith.divf %10, %11 : vector<16x1xf32>
    %13 = vector.broadcast %12 : vector<16x1xf32> to vector<16x32xf32>
    %14 = arith.subf %4, %13 : vector<16x32xf32>
    %15 = arith.mulf %14, %14 : vector<16x32xf32>
    %cst_10 = arith.constant dense<0.000000e+00> : vector<16xf32>
    %16 = vector.multi_reduction <add>, %15, %cst_10 [1] : vector<16x32xf32> to vector<16xf32>
    %17 = vector.shape_cast %16 : vector<16xf32> to vector<16x1xf32>
    %cst_11 = arith.constant 3.200000e+01 : f32
    %18 = vector.broadcast %cst_11 : f32 to vector<16x1xf32>
    %19 = arith.divf %17, %18 : vector<16x1xf32>
    %20 = vector.broadcast %12 : vector<16x1xf32> to vector<16x32xf32>
    %21 = arith.subf %4, %20 : vector<16x32xf32>
    %cst_12 = arith.constant 9.99999974E-6 : f32
    %22 = vector.broadcast %cst_12 : f32 to vector<16x1xf32>
    %23 = arith.addf %19, %22 : vector<16x1xf32>
    %24 = math.rsqrt %23 : vector<16x1xf32>
    %25 = vector.broadcast %24 : vector<16x1xf32> to vector<16x32xf32>
    %26 = arith.mulf %21, %25 : vector<16x32xf32>
    %27 = vector.broadcast %6 : vector<1x32xf32> to vector<16x32xf32>
    %28 = arith.mulf %26, %27 : vector<16x32xf32>
    %29 = vector.broadcast %8 : vector<1x32xf32> to vector<16x32xf32>
    %30 = arith.addf %28, %29 : vector<16x32xf32>
    %31 = arith.truncf %30 : vector<16x32xf32> to vector<16x32xbf16>
    %c0_13 = arith.constant 0 : index
    %c0_14 = arith.constant 0 : index
    %c0_15 = arith.constant 0 : index
    %32 = vector.load %arg7[%c0_13, %c0_14, %c0_15] : memref<1x32x96xbf16, #tpu.memory_space<vmem>>, vector<1x32x96xbf16>
    %33 = vector.shape_cast %32 : vector<1x32x96xbf16> to vector<32x96xbf16>
    %cst_16 = arith.constant dense<0.000000e+00> : vector<16x96xf32>
    %34 = tpu.matmul %31, %33, %cst_16 {dimension_numbers = #tpu.dot_dimension_numbers<[1], [0], [0], [1], [0, 0, 1, 1], [], []>} : vector<16x32xbf16>, vector<32x96xbf16>, vector<16x96xf32> -> vector<16x96xf32>
    %c0_17 = arith.constant 0 : index
    %c0_18 = arith.constant 0 : index
    %c0_19 = arith.constant 0 : index
    %35 = vector.load %arg8[%c0_17, %c0_18, %c0_19] : memref<1x1x96xf32, #tpu.memory_space<vmem>>, vector<1x1x96xf32>
    %36 = vector.shape_cast %35 : vector<1x1x96xf32> to vector<1x96xf32>
    %37 = vector.broadcast %36 : vector<1x96xf32> to vector<16x96xf32>
    %38 = arith.addf %34, %37 : vector<16x96xf32>
    %39 = vector.extract_strided_slice %38 {offsets = [0, 0], sizes = [16, 16], strides = [1, 1]} : vector<16x96xf32> to vector<16x16xf32>
    %40 = arith.truncf %39 : vector<16x16xf32> to vector<16x16xbf16>
    %41 = vector.extract_strided_slice %38 {offsets = [0, 32], sizes = [16, 16], strides = [1, 1]} : vector<16x96xf32> to vector<16x16xf32>
    %42 = arith.truncf %41 : vector<16x16xf32> to vector<16x16xbf16>
    %43 = vector.extract_strided_slice %38 {offsets = [0, 64], sizes = [16, 16], strides = [1, 1]} : vector<16x96xf32> to vector<16x16xf32>
    %44 = arith.truncf %43 : vector<16x16xf32> to vector<16x16xbf16>
    %cst_20 = arith.constant dense<0.000000e+00> : vector<16x16xf32>
    %45 = tpu.matmul %40, %42, %cst_20 {dimension_numbers = #tpu.dot_dimension_numbers<[1], [1], [0], [0], [0, 0, 1, 0], [], []>} : vector<16x16xbf16>, vector<16x16xbf16>, vector<16x16xf32> -> vector<16x16xf32>
    %cst_21 = arith.constant dense<0xFF800000> : vector<16xf32>
    %46 = vector.multi_reduction <maximumf>, %45, %cst_21 [1] : vector<16x16xf32> to vector<16xf32>
    %47 = vector.shape_cast %46 : vector<16xf32> to vector<16x1xf32>
    %48 = vector.broadcast %47 : vector<16x1xf32> to vector<16x16xf32>
    %49 = arith.subf %45, %48 : vector<16x16xf32>
    %50 = math.exp %49 : vector<16x16xf32>
    %cst_22 = arith.constant dense<0.000000e+00> : vector<16xf32>
    %51 = vector.multi_reduction <add>, %50, %cst_22 [1] : vector<16x16xf32> to vector<16xf32>
    %52 = vector.shape_cast %51 : vector<16xf32> to vector<16x1xf32>
    %53 = tpu.reciprocal %52 {approx = true} : vector<16x1xf32> -> vector<16x1xf32>
    %54 = vector.broadcast %53 : vector<16x1xf32> to vector<16x16xf32>
    %55 = arith.mulf %50, %54 : vector<16x16xf32>
    %56 = arith.truncf %55 : vector<16x16xf32> to vector<16x16xbf16>
    %cst_23 = arith.constant dense<0.000000e+00> : vector<16x16xf32>
    %57 = tpu.matmul %56, %44, %cst_23 {dimension_numbers = #tpu.dot_dimension_numbers<[1], [0], [0], [1], [0, 0, 1, 1], [], []>} : vector<16x16xbf16>, vector<16x16xbf16>, vector<16x16xf32> -> vector<16x16xf32>
    %58 = vector.extract_strided_slice %38 {offsets = [0, 16], sizes = [16, 16], strides = [1, 1]} : vector<16x96xf32> to vector<16x16xf32>
    %59 = arith.truncf %58 : vector<16x16xf32> to vector<16x16xbf16>
    %60 = vector.extract_strided_slice %38 {offsets = [0, 48], sizes = [16, 16], strides = [1, 1]} : vector<16x96xf32> to vector<16x16xf32>
    %61 = arith.truncf %60 : vector<16x16xf32> to vector<16x16xbf16>
    %62 = vector.extract_strided_slice %38 {offsets = [0, 80], sizes = [16, 16], strides = [1, 1]} : vector<16x96xf32> to vector<16x16xf32>
    %63 = arith.truncf %62 : vector<16x16xf32> to vector<16x16xbf16>
    %cst_24 = arith.constant dense<0.000000e+00> : vector<16x16xf32>
    %64 = tpu.matmul %59, %61, %cst_24 {dimension_numbers = #tpu.dot_dimension_numbers<[1], [1], [0], [0], [0, 0, 1, 0], [], []>} : vector<16x16xbf16>, vector<16x16xbf16>, vector<16x16xf32> -> vector<16x16xf32>
    %cst_25 = arith.constant dense<0xFF800000> : vector<16xf32>
    %65 = vector.multi_reduction <maximumf>, %64, %cst_25 [1] : vector<16x16xf32> to vector<16xf32>
    %66 = vector.shape_cast %65 : vector<16xf32> to vector<16x1xf32>
    %67 = vector.broadcast %66 : vector<16x1xf32> to vector<16x16xf32>
    %68 = arith.subf %64, %67 : vector<16x16xf32>
    %69 = math.exp %68 : vector<16x16xf32>
    %cst_26 = arith.constant dense<0.000000e+00> : vector<16xf32>
    %70 = vector.multi_reduction <add>, %69, %cst_26 [1] : vector<16x16xf32> to vector<16xf32>
    %71 = vector.shape_cast %70 : vector<16xf32> to vector<16x1xf32>
    %72 = tpu.reciprocal %71 {approx = true} : vector<16x1xf32> -> vector<16x1xf32>
    %73 = vector.broadcast %72 : vector<16x1xf32> to vector<16x16xf32>
    %74 = arith.mulf %69, %73 : vector<16x16xf32>
    %75 = arith.truncf %74 : vector<16x16xf32> to vector<16x16xbf16>
    %cst_27 = arith.constant dense<0.000000e+00> : vector<16x16xf32>
    %76 = tpu.matmul %75, %63, %cst_27 {dimension_numbers = #tpu.dot_dimension_numbers<[1], [0], [0], [1], [0, 0, 1, 1], [], []>} : vector<16x16xbf16>, vector<16x16xbf16>, vector<16x16xf32> -> vector<16x16xf32>
    %77 = tpu.concatenate %57, %76 in 1 : vector<16x16xf32>, vector<16x16xf32> -> vector<16x32xf32>
    %78 = arith.truncf %77 : vector<16x32xf32> to vector<16x32xbf16>
    %c0_28 = arith.constant 0 : index
    %c0_29 = arith.constant 0 : index
    %c0_30 = arith.constant 0 : index
    %79 = vector.load %arg9[%c0_28, %c0_29, %c0_30] : memref<1x32x32xbf16, #tpu.memory_space<vmem>>, vector<1x32x32xbf16>
    %80 = vector.shape_cast %79 : vector<1x32x32xbf16> to vector<32x32xbf16>
    %cst_31 = arith.constant dense<0.000000e+00> : vector<16x32xf32>
    %81 = tpu.matmul %78, %80, %cst_31 {dimension_numbers = #tpu.dot_dimension_numbers<[1], [0], [0], [1], [0, 0, 1, 1], [], []>} : vector<16x32xbf16>, vector<32x32xbf16>, vector<16x32xf32> -> vector<16x32xf32>
    %c0_32 = arith.constant 0 : index
    %c0_33 = arith.constant 0 : index
    %c0_34 = arith.constant 0 : index
    %82 = vector.load %arg10[%c0_32, %c0_33, %c0_34] : memref<1x1x32xf32, #tpu.memory_space<vmem>>, vector<1x1x32xf32>
    %83 = vector.shape_cast %82 : vector<1x1x32xf32> to vector<1x32xf32>
    %84 = vector.broadcast %83 : vector<1x32xf32> to vector<16x32xf32>
    %85 = arith.addf %81, %84 : vector<16x32xf32>
    %86 = arith.addf %4, %85 : vector<16x32xf32>
    %c0_35 = arith.constant 0 : index
    %c0_36 = arith.constant 0 : index
    %c0_37 = arith.constant 0 : index
    %87 = vector.load %arg11[%c0_35, %c0_36, %c0_37] : memref<1x1x32xf32, #tpu.memory_space<vmem>>, vector<1x1x32xf32>
    %88 = vector.shape_cast %87 : vector<1x1x32xf32> to vector<1x32xf32>
    %c0_38 = arith.constant 0 : index
    %c0_39 = arith.constant 0 : index
    %c0_40 = arith.constant 0 : index
    %89 = vector.load %arg12[%c0_38, %c0_39, %c0_40] : memref<1x1x32xf32, #tpu.memory_space<vmem>>, vector<1x1x32xf32>
    %90 = vector.shape_cast %89 : vector<1x1x32xf32> to vector<1x32xf32>
    %cst_41 = arith.constant dense<0.000000e+00> : vector<16xf32>
    %91 = vector.multi_reduction <add>, %86, %cst_41 [1] : vector<16x32xf32> to vector<16xf32>
    %92 = vector.shape_cast %91 : vector<16xf32> to vector<16x1xf32>
    %cst_42 = arith.constant 3.200000e+01 : f32
    %93 = vector.broadcast %cst_42 : f32 to vector<16x1xf32>
    %94 = arith.divf %92, %93 : vector<16x1xf32>
    %95 = vector.broadcast %94 : vector<16x1xf32> to vector<16x32xf32>
    %96 = arith.subf %86, %95 : vector<16x32xf32>
    %97 = arith.mulf %96, %96 : vector<16x32xf32>
    %cst_43 = arith.constant dense<0.000000e+00> : vector<16xf32>
    %98 = vector.multi_reduction <add>, %97, %cst_43 [1] : vector<16x32xf32> to vector<16xf32>
    %99 = vector.shape_cast %98 : vector<16xf32> to vector<16x1xf32>
    %cst_44 = arith.constant 3.200000e+01 : f32
    %100 = vector.broadcast %cst_44 : f32 to vector<16x1xf32>
    %101 = arith.divf %99, %100 : vector<16x1xf32>
    %102 = vector.broadcast %94 : vector<16x1xf32> to vector<16x32xf32>
    %103 = arith.subf %86, %102 : vector<16x32xf32>
    %cst_45 = arith.constant 9.99999974E-6 : f32
    %104 = vector.broadcast %cst_45 : f32 to vector<16x1xf32>
    %105 = arith.addf %101, %104 : vector<16x1xf32>
    %106 = math.rsqrt %105 : vector<16x1xf32>
    %107 = vector.broadcast %106 : vector<16x1xf32> to vector<16x32xf32>
    %108 = arith.mulf %103, %107 : vector<16x32xf32>
    %109 = vector.broadcast %88 : vector<1x32xf32> to vector<16x32xf32>
    %110 = arith.mulf %108, %109 : vector<16x32xf32>
    %111 = vector.broadcast %90 : vector<1x32xf32> to vector<16x32xf32>
    %112 = arith.addf %110, %111 : vector<16x32xf32>
    %113 = arith.truncf %112 : vector<16x32xf32> to vector<16x32xbf16>
    %c0_46 = arith.constant 0 : index
    %c0_47 = arith.constant 0 : index
    %c0_48 = arith.constant 0 : index
    %114 = vector.load %arg13[%c0_46, %c0_47, %c0_48] : memref<1x32x128xbf16, #tpu.memory_space<vmem>>, vector<1x32x128xbf16>
    %115 = vector.shape_cast %114 : vector<1x32x128xbf16> to vector<32x128xbf16>
    %cst_49 = arith.constant dense<0.000000e+00> : vector<16x128xf32>
    %116 = tpu.matmul %113, %115, %cst_49 {dimension_numbers = #tpu.dot_dimension_numbers<[1], [0], [0], [1], [0, 0, 1, 1], [], []>} : vector<16x32xbf16>, vector<32x128xbf16>, vector<16x128xf32> -> vector<16x128xf32>
    %c0_50 = arith.constant 0 : index
    %c0_51 = arith.constant 0 : index
    %c0_52 = arith.constant 0 : index
    %117 = vector.load %arg14[%c0_50, %c0_51, %c0_52] : memref<1x1x128xf32, #tpu.memory_space<vmem>>, vector<1x1x128xf32>
    %118 = vector.shape_cast %117 : vector<1x1x128xf32> to vector<1x128xf32>
    %119 = vector.broadcast %118 : vector<1x128xf32> to vector<16x128xf32>
    %120 = arith.addf %116, %119 : vector<16x128xf32>
    %121 = arith.mulf %120, %120 : vector<16x128xf32>
    %122 = arith.mulf %120, %121 : vector<16x128xf32>
    %cst_53 = arith.constant 4.471500e-02 : f32
    %123 = vector.broadcast %cst_53 : f32 to vector<16x128xf32>
    %124 = arith.mulf %123, %122 : vector<16x128xf32>
    %125 = arith.addf %120, %124 : vector<16x128xf32>
    %cst_54 = arith.constant 0.797884583 : f32
    %126 = vector.broadcast %cst_54 : f32 to vector<16x128xf32>
    %127 = arith.mulf %126, %125 : vector<16x128xf32>
    %128 = math.tanh %127 : vector<16x128xf32>
    %cst_55 = arith.constant 1.000000e+00 : f32
    %129 = vector.broadcast %cst_55 : f32 to vector<16x128xf32>
    %130 = arith.addf %129, %128 : vector<16x128xf32>
    %cst_56 = arith.constant 5.000000e-01 : f32
    %131 = vector.broadcast %cst_56 : f32 to vector<16x128xf32>
    %132 = arith.mulf %131, %130 : vector<16x128xf32>
    %133 = arith.mulf %120, %132 : vector<16x128xf32>
    %134 = arith.truncf %133 : vector<16x128xf32> to vector<16x128xbf16>
    %c0_57 = arith.constant 0 : index
    %c0_58 = arith.constant 0 : index
    %c0_59 = arith.constant 0 : index
    %135 = vector.load %arg15[%c0_57, %c0_58, %c0_59] : memref<1x128x32xbf16, #tpu.memory_space<vmem>>, vector<1x128x32xbf16>
    %136 = vector.shape_cast %135 : vector<1x128x32xbf16> to vector<128x32xbf16>
    %cst_60 = arith.constant dense<0.000000e+00> : vector<16x32xf32>
    %137 = tpu.matmul %134, %136, %cst_60 {dimension_numbers = #tpu.dot_dimension_numbers<[1], [0], [0], [1], [0, 0, 1, 1], [], []>} : vector<16x128xbf16>, vector<128x32xbf16>, vector<16x32xf32> -> vector<16x32xf32>
    %c0_61 = arith.constant 0 : index
    %c0_62 = arith.constant 0 : index
    %c0_63 = arith.constant 0 : index
    %138 = vector.load %arg16[%c0_61, %c0_62, %c0_63] : memref<1x1x32xf32, #tpu.memory_space<vmem>>, vector<1x1x32xf32>
    %139 = vector.shape_cast %138 : vector<1x1x32xf32> to vector<1x32xf32>
    %140 = vector.broadcast %139 : vector<1x32xf32> to vector<16x32xf32>
    %141 = arith.addf %137, %140 : vector<16x32xf32>
    %142 = arith.addf %86, %141 : vector<16x32xf32>
    %c0_64 = arith.constant 0 : index
    %c0_65 = arith.constant 0 : index
    %c0_66 = arith.constant 0 : index
    %143 = vector.load %arg17[%c0_64, %c0_65, %c0_66] : memref<1x16x32xf32, #tpu.memory_space<vmem>>, vector<1x16x32xf32>
    %144 = vector.shape_cast %143 : vector<1x16x32xf32> to vector<16x32xf32>
    %145 = vector.shape_cast %142 : vector<16x32xf32> to vector<1x16x32xf32>
    tpu.vector_store %arg17[%c0_64, %c0_65, %c0_66], %145 {strides = array<i32>} : memref<1x16x32xf32, #tpu.memory_space<vmem>>, vector<1x16x32xf32>,
    return
  }
  func.func @transform_0(%arg0: i32, %arg1: i32) -> (i32, i32, i32) {
    %c0_i32 = arith.constant 0 : i32
    %c0_i32_0 = arith.constant 0 : i32
    %c0_i32_1 = arith.constant 0 : i32
    return %arg0, %c0_i32, %c0_i32_0 : i32, i32, i32
  }
  func.func @transform_1(%arg0: i32, %arg1: i32) -> (i32, i32) {
    %c0_i32 = arith.constant 0 : i32
    %c0_i32_0 = arith.constant 0 : i32
    %c0_i32_1 = arith.constant 0 : i32
    return %c0_i32, %c0_i32_0 : i32, i32
  }
  func.func @transform_2(%arg0: i32, %arg1: i32) -> (i32, i32) {
    %c0_i32 = arith.constant 0 : i32
    %c0_i32_0 = arith.constant 0 : i32
    %c0_i32_1 = arith.constant 0 : i32
    return %c0_i32, %c0_i32_0 : i32, i32
  }
  func.func @transform_3(%arg0: i32, %arg1: i32) -> (i32, i32, i32) {
    %c0_i32 = arith.constant 0 : i32
    %c0_i32_0 = arith.constant 0 : i32
    %c0_i32_1 = arith.constant 0 : i32
    return %arg1, %c0_i32, %c0_i32_0 : i32, i32, i32
  }
  func.func @transform_4(%arg0: i32, %arg1: i32) -> (i32, i32, i32) {
    %c0_i32 = arith.constant 0 : i32
    %c0_i32_0 = arith.constant 0 : i32
    %c0_i32_1 = arith.constant 0 : i32
    return %arg1, %c0_i32, %c0_i32_0 : i32, i32, i32
  }
  func.func @transform_5(%arg0: i32, %arg1: i32) -> (i32, i32, i32) {
    %c0_i32 = arith.constant 0 : i32
    %c0_i32_0 = arith.constant 0 : i32
    %c0_i32_1 = arith.constant 0 : i32
    return %arg1, %c0_i32, %c0_i32_0 : i32, i32, i32
  }
  func.func @transform_6(%arg0: i32, %arg1: i32) -> (i32, i32, i32) {
    %c0_i32 = arith.constant 0 : i32
    %c0_i32_0 = arith.constant 0 : i32
    %c0_i32_1 = arith.constant 0 : i32
    return %arg1, %c0_i32, %c0_i32_0 : i32, i32, i32
  }
  func.func @transform_7(%arg0: i32, %arg1: i32) -> (i32, i32, i32) {
    %c0_i32 = arith.constant 0 : i32
    %c0_i32_0 = arith.constant 0 : i32
    %c0_i32_1 = arith.constant 0 : i32
    return %arg1, %c0_i32, %c0_i32_0 : i32, i32, i32
  }
  func.func @transform_8(%arg0: i32, %arg1: i32) -> (i32, i32, i32) {
    %c0_i32 = arith.constant 0 : i32
    %c0_i32_0 = arith.constant 0 : i32
    %c0_i32_1 = arith.constant 0 : i32
    return %arg1, %c0_i32, %c0_i32_0 : i32, i32, i32
  }
  func.func @transform_9(%arg0: i32, %arg1: i32) -> (i32, i32, i32) {
    %c0_i32 = arith.constant 0 : i32
    %c0_i32_0 = arith.constant 0 : i32
    %c0_i32_1 = arith.constant 0 : i32
    return %arg1, %c0_i32, %c0_i32_0 : i32, i32, i32
  }
  func.func @transform_10(%arg0: i32, %arg1: i32) -> (i32, i32, i32) {
    %c0_i32 = arith.constant 0 : i32
    %c0_i32_0 = arith.constant 0 : i32
    %c0_i32_1 = arith.constant 0 : i32
    return %arg1, %c0_i32, %c0_i32_0 : i32, i32, i32
  }
  func.func @transform_11(%arg0: i32, %arg1: i32) -> (i32, i32, i32) {
    %c0_i32 = arith.constant 0 : i32
    %c0_i32_0 = arith.constant 0 : i32
    %c0_i32_1 = arith.constant 0 : i32
    return %arg1, %c0_i32, %c0_i32_0 : i32, i32, i32
  }
  func.func @transform_12(%arg0: i32, %arg1: i32) -> (i32, i32, i32) {
    %c0_i32 = arith.constant 0 : i32
    %c0_i32_0 = arith.constant 0 : i32
    %c0_i32_1 = arith.constant 0 : i32
    return %arg1, %c0_i32, %c0_i32_0 : i32, i32, i32
  }
  func.func @transform_13(%arg0: i32, %arg1: i32) -> (i32, i32, i32) {
    %c0_i32 = arith.constant 0 : i32
    %c0_i32_0 = arith.constant 0 : i32
    %c0_i32_1 = arith.constant 0 : i32
    return %arg1, %c0_i32, %c0_i32_0 : i32, i32, i32
  }
  func.func @transform_14(%arg0: i32, %arg1: i32) -> (i32, i32, i32) {
    %c0_i32 = arith.constant 0 : i32
    %c0_i32_0 = arith.constant 0 : i32
    %c0_i32_1 = arith.constant 0 : i32
    return %arg1, %c0_i32, %c0_i32_0 : i32, i32, i32
  }
  func.func @transform_15(%arg0: i32, %arg1: i32) -> (i32, i32, i32) {
    %c0_i32 = arith.constant 0 : i32
    %c0_i32_0 = arith.constant 0 : i32
    %c0_i32_1 = arith.constant 0 : i32
    return %arg0, %c0_i32, %c0_i32_0 : i32, i32, i32
  }
}

module attributes {stable_mosaic.version = 11 : i64} {
  func.func @_stage_kernel(%arg0: i32, %arg1: i32, %arg2: memref<1x4x128xf32, #tpu.memory_space<vmem>>, %arg3: memref<128x64xbf16, #tpu.memory_space<vmem>>, %arg4: memref<1x64xf32, #tpu.memory_space<vmem>>, %arg5: memref<1x1x64xf32, #tpu.memory_space<vmem>>, %arg6: memref<1x1x64xf32, #tpu.memory_space<vmem>>, %arg7: memref<1x64x192xbf16, #tpu.memory_space<vmem>>, %arg8: memref<1x1x192xf32, #tpu.memory_space<vmem>>, %arg9: memref<1x64x64xbf16, #tpu.memory_space<vmem>>, %arg10: memref<1x1x64xf32, #tpu.memory_space<vmem>>, %arg11: memref<1x1x64xf32, #tpu.memory_space<vmem>>, %arg12: memref<1x1x64xf32, #tpu.memory_space<vmem>>, %arg13: memref<1x64x256xbf16, #tpu.memory_space<vmem>>, %arg14: memref<1x1x256xf32, #tpu.memory_space<vmem>>, %arg15: memref<1x256x64xbf16, #tpu.memory_space<vmem>>, %arg16: memref<1x1x64xf32, #tpu.memory_space<vmem>>, %arg17: memref<1x4x64xf32, #tpu.memory_space<vmem>>) attributes {dimension_semantics = [#tpu.dimension_semantics<parallel>, #tpu.dimension_semantics<arbitrary>], iteration_bounds = array<i64: 2, 4>, scalar_prefetch = 0 : i64, scratch_operands = 0 : i64, tpu.core_type = #tpu.core_type<tc>, window_params = [{transform_indices = @transform_0, window_bounds = array<i64: 1, 4, 128>}, {pipeline_mode = #tpu.pipeline_mode<synchronous>, transform_indices = @transform_1, window_bounds = array<i64: 128, 64>}, {pipeline_mode = #tpu.pipeline_mode<synchronous>, transform_indices = @transform_2, window_bounds = array<i64: 1, 64>}, {transform_indices = @transform_3, window_bounds = array<i64: 1, 1, 64>}, {transform_indices = @transform_4, window_bounds = array<i64: 1, 1, 64>}, {transform_indices = @transform_5, window_bounds = array<i64: 1, 64, 192>}, {transform_indices = @transform_6, window_bounds = array<i64: 1, 1, 192>}, {transform_indices = @transform_7, window_bounds = array<i64: 1, 64, 64>}, {transform_indices = @transform_8, window_bounds = array<i64: 1, 1, 64>}, {transform_indices = @transform_9, window_bounds = array<i64: 1, 1, 64>}, {transform_indices = @transform_10, window_bounds = array<i64: 1, 1, 64>}, {transform_indices = @transform_11, window_bounds = array<i64: 1, 64, 256>}, {transform_indices = @transform_12, window_bounds = array<i64: 1, 1, 256>}, {transform_indices = @transform_13, window_bounds = array<i64: 1, 256, 64>}, {transform_indices = @transform_14, window_bounds = array<i64: 1, 1, 64>}, {transform_indices = @transform_15, window_bounds = array<i64: 1, 4, 64>}]} {
    %c0_i32 = arith.constant 0 : i32
    %0 = arith.cmpi eq, %arg1, %c0_i32 : i32
    %1 = arith.extui %0 : i1 to i32
    %c0_i32_0 = arith.constant 0 : i32
    %2 = arith.cmpi ne, %1, %c0_i32_0 : i32
    scf.if %2 {
      %c0_75 = arith.constant 0 : index
      %c0_76 = arith.constant 0 : index
      %c0_77 = arith.constant 0 : index
      %184 = vector.load %arg2[%c0_75, %c0_76, %c0_77] : memref<1x4x128xf32, #tpu.memory_space<vmem>>, vector<1x4x128xf32>
      %185 = vector.shape_cast %184 : vector<1x4x128xf32> to vector<4x128xf32>
      %186 = arith.truncf %185 : vector<4x128xf32> to vector<4x128xbf16>
      %c0_78 = arith.constant 0 : index
      %c0_79 = arith.constant 0 : index
      %187 = vector.load %arg3[%c0_78, %c0_79] : memref<128x64xbf16, #tpu.memory_space<vmem>>, vector<128x64xbf16>
      %cst_80 = arith.constant dense<0.000000e+00> : vector<4x64xf32>
      %188 = tpu.matmul %186, %187, %cst_80 {dimension_numbers = #tpu.dot_dimension_numbers<[1], [0], [0], [1], [0, 0, 1, 1], [], []>} : vector<4x128xbf16>, vector<128x64xbf16>, vector<4x64xf32> -> vector<4x64xf32>
      %c0_81 = arith.constant 0 : index
      %c0_82 = arith.constant 0 : index
      %189 = vector.load %arg4[%c0_81, %c0_82] : memref<1x64xf32, #tpu.memory_space<vmem>>, vector<1x64xf32>
      %190 = vector.broadcast %189 : vector<1x64xf32> to vector<4x64xf32>
      %191 = arith.addf %188, %190 : vector<4x64xf32>
      %c0_83 = arith.constant 0 : index
      %c0_84 = arith.constant 0 : index
      %c0_85 = arith.constant 0 : index
      %192 = vector.load %arg17[%c0_83, %c0_84, %c0_85] : memref<1x4x64xf32, #tpu.memory_space<vmem>>, vector<1x4x64xf32>
      %193 = vector.shape_cast %192 : vector<1x4x64xf32> to vector<4x64xf32>
      %194 = vector.shape_cast %191 : vector<4x64xf32> to vector<1x4x64xf32>
      tpu.vector_store %arg17[%c0_83, %c0_84, %c0_85], %194 {strides = array<i32>} : memref<1x4x64xf32, #tpu.memory_space<vmem>>, vector<1x4x64xf32>,
    } else {
    }
    %c0 = arith.constant 0 : index
    %c0_1 = arith.constant 0 : index
    %c0_2 = arith.constant 0 : index
    %3 = vector.load %arg17[%c0, %c0_1, %c0_2] : memref<1x4x64xf32, #tpu.memory_space<vmem>>, vector<1x4x64xf32>
    %4 = vector.shape_cast %3 : vector<1x4x64xf32> to vector<4x64xf32>
    %c0_3 = arith.constant 0 : index
    %c0_4 = arith.constant 0 : index
    %c0_5 = arith.constant 0 : index
    %5 = vector.load %arg5[%c0_3, %c0_4, %c0_5] : memref<1x1x64xf32, #tpu.memory_space<vmem>>, vector<1x1x64xf32>
    %6 = vector.shape_cast %5 : vector<1x1x64xf32> to vector<1x64xf32>
    %c0_6 = arith.constant 0 : index
    %c0_7 = arith.constant 0 : index
    %c0_8 = arith.constant 0 : index
    %7 = vector.load %arg6[%c0_6, %c0_7, %c0_8] : memref<1x1x64xf32, #tpu.memory_space<vmem>>, vector<1x1x64xf32>
    %8 = vector.shape_cast %7 : vector<1x1x64xf32> to vector<1x64xf32>
    %cst = arith.constant dense<0.000000e+00> : vector<4xf32>
    %9 = vector.multi_reduction <add>, %4, %cst [1] : vector<4x64xf32> to vector<4xf32>
    %10 = vector.shape_cast %9 : vector<4xf32> to vector<4x1xf32>
    %cst_9 = arith.constant 6.400000e+01 : f32
    %11 = vector.broadcast %cst_9 : f32 to vector<4x1xf32>
    %12 = arith.divf %10, %11 : vector<4x1xf32>
    %13 = vector.broadcast %12 : vector<4x1xf32> to vector<4x64xf32>
    %14 = arith.subf %4, %13 : vector<4x64xf32>
    %15 = arith.mulf %14, %14 : vector<4x64xf32>
    %cst_10 = arith.constant dense<0.000000e+00> : vector<4xf32>
    %16 = vector.multi_reduction <add>, %15, %cst_10 [1] : vector<4x64xf32> to vector<4xf32>
    %17 = vector.shape_cast %16 : vector<4xf32> to vector<4x1xf32>
    %cst_11 = arith.constant 6.400000e+01 : f32
    %18 = vector.broadcast %cst_11 : f32 to vector<4x1xf32>
    %19 = arith.divf %17, %18 : vector<4x1xf32>
    %20 = vector.broadcast %12 : vector<4x1xf32> to vector<4x64xf32>
    %21 = arith.subf %4, %20 : vector<4x64xf32>
    %cst_12 = arith.constant 9.99999974E-6 : f32
    %22 = vector.broadcast %cst_12 : f32 to vector<4x1xf32>
    %23 = arith.addf %19, %22 : vector<4x1xf32>
    %24 = math.rsqrt %23 : vector<4x1xf32>
    %25 = vector.broadcast %24 : vector<4x1xf32> to vector<4x64xf32>
    %26 = arith.mulf %21, %25 : vector<4x64xf32>
    %27 = vector.broadcast %6 : vector<1x64xf32> to vector<4x64xf32>
    %28 = arith.mulf %26, %27 : vector<4x64xf32>
    %29 = vector.broadcast %8 : vector<1x64xf32> to vector<4x64xf32>
    %30 = arith.addf %28, %29 : vector<4x64xf32>
    %31 = arith.truncf %30 : vector<4x64xf32> to vector<4x64xbf16>
    %c0_13 = arith.constant 0 : index
    %c0_14 = arith.constant 0 : index
    %c0_15 = arith.constant 0 : index
    %32 = vector.load %arg7[%c0_13, %c0_14, %c0_15] : memref<1x64x192xbf16, #tpu.memory_space<vmem>>, vector<1x64x192xbf16>
    %33 = vector.shape_cast %32 : vector<1x64x192xbf16> to vector<64x192xbf16>
    %cst_16 = arith.constant dense<0.000000e+00> : vector<4x192xf32>
    %34 = tpu.matmul %31, %33, %cst_16 {dimension_numbers = #tpu.dot_dimension_numbers<[1], [0], [0], [1], [0, 0, 1, 1], [], []>} : vector<4x64xbf16>, vector<64x192xbf16>, vector<4x192xf32> -> vector<4x192xf32>
    %c0_17 = arith.constant 0 : index
    %c0_18 = arith.constant 0 : index
    %c0_19 = arith.constant 0 : index
    %35 = vector.load %arg8[%c0_17, %c0_18, %c0_19] : memref<1x1x192xf32, #tpu.memory_space<vmem>>, vector<1x1x192xf32>
    %36 = vector.shape_cast %35 : vector<1x1x192xf32> to vector<1x192xf32>
    %37 = vector.broadcast %36 : vector<1x192xf32> to vector<4x192xf32>
    %38 = arith.addf %34, %37 : vector<4x192xf32>
    %39 = vector.extract_strided_slice %38 {offsets = [0, 0], sizes = [4, 16], strides = [1, 1]} : vector<4x192xf32> to vector<4x16xf32>
    %40 = arith.truncf %39 : vector<4x16xf32> to vector<4x16xbf16>
    %41 = vector.extract_strided_slice %38 {offsets = [0, 64], sizes = [4, 16], strides = [1, 1]} : vector<4x192xf32> to vector<4x16xf32>
    %42 = arith.truncf %41 : vector<4x16xf32> to vector<4x16xbf16>
    %43 = vector.extract_strided_slice %38 {offsets = [0, 128], sizes = [4, 16], strides = [1, 1]} : vector<4x192xf32> to vector<4x16xf32>
    %44 = arith.truncf %43 : vector<4x16xf32> to vector<4x16xbf16>
    %cst_20 = arith.constant dense<0.000000e+00> : vector<4x4xf32>
    %45 = tpu.matmul %40, %42, %cst_20 {dimension_numbers = #tpu.dot_dimension_numbers<[1], [1], [0], [0], [0, 0, 1, 0], [], []>} : vector<4x16xbf16>, vector<4x16xbf16>, vector<4x4xf32> -> vector<4x4xf32>
    %cst_21 = arith.constant dense<0xFF800000> : vector<4xf32>
    %46 = vector.multi_reduction <maximumf>, %45, %cst_21 [1] : vector<4x4xf32> to vector<4xf32>
    %47 = vector.shape_cast %46 : vector<4xf32> to vector<4x1xf32>
    %48 = vector.broadcast %47 : vector<4x1xf32> to vector<4x4xf32>
    %49 = arith.subf %45, %48 : vector<4x4xf32>
    %50 = math.exp %49 : vector<4x4xf32>
    %cst_22 = arith.constant dense<0.000000e+00> : vector<4xf32>
    %51 = vector.multi_reduction <add>, %50, %cst_22 [1] : vector<4x4xf32> to vector<4xf32>
    %52 = vector.shape_cast %51 : vector<4xf32> to vector<4x1xf32>
    %53 = tpu.reciprocal %52 {approx = true} : vector<4x1xf32> -> vector<4x1xf32>
    %54 = vector.broadcast %53 : vector<4x1xf32> to vector<4x4xf32>
    %55 = arith.mulf %50, %54 : vector<4x4xf32>
    %56 = arith.truncf %55 : vector<4x4xf32> to vector<4x4xbf16>
    %cst_23 = arith.constant dense<0.000000e+00> : vector<4x16xf32>
    %57 = tpu.matmul %56, %44, %cst_23 {dimension_numbers = #tpu.dot_dimension_numbers<[1], [0], [0], [1], [0, 0, 1, 1], [], []>} : vector<4x4xbf16>, vector<4x16xbf16>, vector<4x16xf32> -> vector<4x16xf32>
    %58 = vector.extract_strided_slice %38 {offsets = [0, 16], sizes = [4, 16], strides = [1, 1]} : vector<4x192xf32> to vector<4x16xf32>
    %59 = arith.truncf %58 : vector<4x16xf32> to vector<4x16xbf16>
    %60 = vector.extract_strided_slice %38 {offsets = [0, 80], sizes = [4, 16], strides = [1, 1]} : vector<4x192xf32> to vector<4x16xf32>
    %61 = arith.truncf %60 : vector<4x16xf32> to vector<4x16xbf16>
    %62 = vector.extract_strided_slice %38 {offsets = [0, 144], sizes = [4, 16], strides = [1, 1]} : vector<4x192xf32> to vector<4x16xf32>
    %63 = arith.truncf %62 : vector<4x16xf32> to vector<4x16xbf16>
    %cst_24 = arith.constant dense<0.000000e+00> : vector<4x4xf32>
    %64 = tpu.matmul %59, %61, %cst_24 {dimension_numbers = #tpu.dot_dimension_numbers<[1], [1], [0], [0], [0, 0, 1, 0], [], []>} : vector<4x16xbf16>, vector<4x16xbf16>, vector<4x4xf32> -> vector<4x4xf32>
    %cst_25 = arith.constant dense<0xFF800000> : vector<4xf32>
    %65 = vector.multi_reduction <maximumf>, %64, %cst_25 [1] : vector<4x4xf32> to vector<4xf32>
    %66 = vector.shape_cast %65 : vector<4xf32> to vector<4x1xf32>
    %67 = vector.broadcast %66 : vector<4x1xf32> to vector<4x4xf32>
    %68 = arith.subf %64, %67 : vector<4x4xf32>
    %69 = math.exp %68 : vector<4x4xf32>
    %cst_26 = arith.constant dense<0.000000e+00> : vector<4xf32>
    %70 = vector.multi_reduction <add>, %69, %cst_26 [1] : vector<4x4xf32> to vector<4xf32>
    %71 = vector.shape_cast %70 : vector<4xf32> to vector<4x1xf32>
    %72 = tpu.reciprocal %71 {approx = true} : vector<4x1xf32> -> vector<4x1xf32>
    %73 = vector.broadcast %72 : vector<4x1xf32> to vector<4x4xf32>
    %74 = arith.mulf %69, %73 : vector<4x4xf32>
    %75 = arith.truncf %74 : vector<4x4xf32> to vector<4x4xbf16>
    %cst_27 = arith.constant dense<0.000000e+00> : vector<4x16xf32>
    %76 = tpu.matmul %75, %63, %cst_27 {dimension_numbers = #tpu.dot_dimension_numbers<[1], [0], [0], [1], [0, 0, 1, 1], [], []>} : vector<4x4xbf16>, vector<4x16xbf16>, vector<4x16xf32> -> vector<4x16xf32>
    %77 = vector.extract_strided_slice %38 {offsets = [0, 32], sizes = [4, 16], strides = [1, 1]} : vector<4x192xf32> to vector<4x16xf32>
    %78 = arith.truncf %77 : vector<4x16xf32> to vector<4x16xbf16>
    %79 = vector.extract_strided_slice %38 {offsets = [0, 96], sizes = [4, 16], strides = [1, 1]} : vector<4x192xf32> to vector<4x16xf32>
    %80 = arith.truncf %79 : vector<4x16xf32> to vector<4x16xbf16>
    %81 = vector.extract_strided_slice %38 {offsets = [0, 160], sizes = [4, 16], strides = [1, 1]} : vector<4x192xf32> to vector<4x16xf32>
    %82 = arith.truncf %81 : vector<4x16xf32> to vector<4x16xbf16>
    %cst_28 = arith.constant dense<0.000000e+00> : vector<4x4xf32>
    %83 = tpu.matmul %78, %80, %cst_28 {dimension_numbers = #tpu.dot_dimension_numbers<[1], [1], [0], [0], [0, 0, 1, 0], [], []>} : vector<4x16xbf16>, vector<4x16xbf16>, vector<4x4xf32> -> vector<4x4xf32>
    %cst_29 = arith.constant dense<0xFF800000> : vector<4xf32>
    %84 = vector.multi_reduction <maximumf>, %83, %cst_29 [1] : vector<4x4xf32> to vector<4xf32>
    %85 = vector.shape_cast %84 : vector<4xf32> to vector<4x1xf32>
    %86 = vector.broadcast %85 : vector<4x1xf32> to vector<4x4xf32>
    %87 = arith.subf %83, %86 : vector<4x4xf32>
    %88 = math.exp %87 : vector<4x4xf32>
    %cst_30 = arith.constant dense<0.000000e+00> : vector<4xf32>
    %89 = vector.multi_reduction <add>, %88, %cst_30 [1] : vector<4x4xf32> to vector<4xf32>
    %90 = vector.shape_cast %89 : vector<4xf32> to vector<4x1xf32>
    %91 = tpu.reciprocal %90 {approx = true} : vector<4x1xf32> -> vector<4x1xf32>
    %92 = vector.broadcast %91 : vector<4x1xf32> to vector<4x4xf32>
    %93 = arith.mulf %88, %92 : vector<4x4xf32>
    %94 = arith.truncf %93 : vector<4x4xf32> to vector<4x4xbf16>
    %cst_31 = arith.constant dense<0.000000e+00> : vector<4x16xf32>
    %95 = tpu.matmul %94, %82, %cst_31 {dimension_numbers = #tpu.dot_dimension_numbers<[1], [0], [0], [1], [0, 0, 1, 1], [], []>} : vector<4x4xbf16>, vector<4x16xbf16>, vector<4x16xf32> -> vector<4x16xf32>
    %96 = vector.extract_strided_slice %38 {offsets = [0, 48], sizes = [4, 16], strides = [1, 1]} : vector<4x192xf32> to vector<4x16xf32>
    %97 = arith.truncf %96 : vector<4x16xf32> to vector<4x16xbf16>
    %98 = vector.extract_strided_slice %38 {offsets = [0, 112], sizes = [4, 16], strides = [1, 1]} : vector<4x192xf32> to vector<4x16xf32>
    %99 = arith.truncf %98 : vector<4x16xf32> to vector<4x16xbf16>
    %100 = vector.extract_strided_slice %38 {offsets = [0, 176], sizes = [4, 16], strides = [1, 1]} : vector<4x192xf32> to vector<4x16xf32>
    %101 = arith.truncf %100 : vector<4x16xf32> to vector<4x16xbf16>
    %cst_32 = arith.constant dense<0.000000e+00> : vector<4x4xf32>
    %102 = tpu.matmul %97, %99, %cst_32 {dimension_numbers = #tpu.dot_dimension_numbers<[1], [1], [0], [0], [0, 0, 1, 0], [], []>} : vector<4x16xbf16>, vector<4x16xbf16>, vector<4x4xf32> -> vector<4x4xf32>
    %cst_33 = arith.constant dense<0xFF800000> : vector<4xf32>
    %103 = vector.multi_reduction <maximumf>, %102, %cst_33 [1] : vector<4x4xf32> to vector<4xf32>
    %104 = vector.shape_cast %103 : vector<4xf32> to vector<4x1xf32>
    %105 = vector.broadcast %104 : vector<4x1xf32> to vector<4x4xf32>
    %106 = arith.subf %102, %105 : vector<4x4xf32>
    %107 = math.exp %106 : vector<4x4xf32>
    %cst_34 = arith.constant dense<0.000000e+00> : vector<4xf32>
    %108 = vector.multi_reduction <add>, %107, %cst_34 [1] : vector<4x4xf32> to vector<4xf32>
    %109 = vector.shape_cast %108 : vector<4xf32> to vector<4x1xf32>
    %110 = tpu.reciprocal %109 {approx = true} : vector<4x1xf32> -> vector<4x1xf32>
    %111 = vector.broadcast %110 : vector<4x1xf32> to vector<4x4xf32>
    %112 = arith.mulf %107, %111 : vector<4x4xf32>
    %113 = arith.truncf %112 : vector<4x4xf32> to vector<4x4xbf16>
    %cst_35 = arith.constant dense<0.000000e+00> : vector<4x16xf32>
    %114 = tpu.matmul %113, %101, %cst_35 {dimension_numbers = #tpu.dot_dimension_numbers<[1], [0], [0], [1], [0, 0, 1, 1], [], []>} : vector<4x4xbf16>, vector<4x16xbf16>, vector<4x16xf32> -> vector<4x16xf32>
    %115 = tpu.concatenate %57, %76, %95, %114 in 1 : vector<4x16xf32>, vector<4x16xf32>, vector<4x16xf32>, vector<4x16xf32> -> vector<4x64xf32>
    %116 = arith.truncf %115 : vector<4x64xf32> to vector<4x64xbf16>
    %c0_36 = arith.constant 0 : index
    %c0_37 = arith.constant 0 : index
    %c0_38 = arith.constant 0 : index
    %117 = vector.load %arg9[%c0_36, %c0_37, %c0_38] : memref<1x64x64xbf16, #tpu.memory_space<vmem>>, vector<1x64x64xbf16>
    %118 = vector.shape_cast %117 : vector<1x64x64xbf16> to vector<64x64xbf16>
    %cst_39 = arith.constant dense<0.000000e+00> : vector<4x64xf32>
    %119 = tpu.matmul %116, %118, %cst_39 {dimension_numbers = #tpu.dot_dimension_numbers<[1], [0], [0], [1], [0, 0, 1, 1], [], []>} : vector<4x64xbf16>, vector<64x64xbf16>, vector<4x64xf32> -> vector<4x64xf32>
    %c0_40 = arith.constant 0 : index
    %c0_41 = arith.constant 0 : index
    %c0_42 = arith.constant 0 : index
    %120 = vector.load %arg10[%c0_40, %c0_41, %c0_42] : memref<1x1x64xf32, #tpu.memory_space<vmem>>, vector<1x1x64xf32>
    %121 = vector.shape_cast %120 : vector<1x1x64xf32> to vector<1x64xf32>
    %122 = vector.broadcast %121 : vector<1x64xf32> to vector<4x64xf32>
    %123 = arith.addf %119, %122 : vector<4x64xf32>
    %124 = arith.addf %4, %123 : vector<4x64xf32>
    %c0_43 = arith.constant 0 : index
    %c0_44 = arith.constant 0 : index
    %c0_45 = arith.constant 0 : index
    %125 = vector.load %arg11[%c0_43, %c0_44, %c0_45] : memref<1x1x64xf32, #tpu.memory_space<vmem>>, vector<1x1x64xf32>
    %126 = vector.shape_cast %125 : vector<1x1x64xf32> to vector<1x64xf32>
    %c0_46 = arith.constant 0 : index
    %c0_47 = arith.constant 0 : index
    %c0_48 = arith.constant 0 : index
    %127 = vector.load %arg12[%c0_46, %c0_47, %c0_48] : memref<1x1x64xf32, #tpu.memory_space<vmem>>, vector<1x1x64xf32>
    %128 = vector.shape_cast %127 : vector<1x1x64xf32> to vector<1x64xf32>
    %cst_49 = arith.constant dense<0.000000e+00> : vector<4xf32>
    %129 = vector.multi_reduction <add>, %124, %cst_49 [1] : vector<4x64xf32> to vector<4xf32>
    %130 = vector.shape_cast %129 : vector<4xf32> to vector<4x1xf32>
    %cst_50 = arith.constant 6.400000e+01 : f32
    %131 = vector.broadcast %cst_50 : f32 to vector<4x1xf32>
    %132 = arith.divf %130, %131 : vector<4x1xf32>
    %133 = vector.broadcast %132 : vector<4x1xf32> to vector<4x64xf32>
    %134 = arith.subf %124, %133 : vector<4x64xf32>
    %135 = arith.mulf %134, %134 : vector<4x64xf32>
    %cst_51 = arith.constant dense<0.000000e+00> : vector<4xf32>
    %136 = vector.multi_reduction <add>, %135, %cst_51 [1] : vector<4x64xf32> to vector<4xf32>
    %137 = vector.shape_cast %136 : vector<4xf32> to vector<4x1xf32>
    %cst_52 = arith.constant 6.400000e+01 : f32
    %138 = vector.broadcast %cst_52 : f32 to vector<4x1xf32>
    %139 = arith.divf %137, %138 : vector<4x1xf32>
    %140 = vector.broadcast %132 : vector<4x1xf32> to vector<4x64xf32>
    %141 = arith.subf %124, %140 : vector<4x64xf32>
    %cst_53 = arith.constant 9.99999974E-6 : f32
    %142 = vector.broadcast %cst_53 : f32 to vector<4x1xf32>
    %143 = arith.addf %139, %142 : vector<4x1xf32>
    %144 = math.rsqrt %143 : vector<4x1xf32>
    %145 = vector.broadcast %144 : vector<4x1xf32> to vector<4x64xf32>
    %146 = arith.mulf %141, %145 : vector<4x64xf32>
    %147 = vector.broadcast %126 : vector<1x64xf32> to vector<4x64xf32>
    %148 = arith.mulf %146, %147 : vector<4x64xf32>
    %149 = vector.broadcast %128 : vector<1x64xf32> to vector<4x64xf32>
    %150 = arith.addf %148, %149 : vector<4x64xf32>
    %151 = arith.truncf %150 : vector<4x64xf32> to vector<4x64xbf16>
    %c0_54 = arith.constant 0 : index
    %c0_55 = arith.constant 0 : index
    %c0_56 = arith.constant 0 : index
    %152 = vector.load %arg13[%c0_54, %c0_55, %c0_56] : memref<1x64x256xbf16, #tpu.memory_space<vmem>>, vector<1x64x256xbf16>
    %153 = vector.shape_cast %152 : vector<1x64x256xbf16> to vector<64x256xbf16>
    %cst_57 = arith.constant dense<0.000000e+00> : vector<4x256xf32>
    %154 = tpu.matmul %151, %153, %cst_57 {dimension_numbers = #tpu.dot_dimension_numbers<[1], [0], [0], [1], [0, 0, 1, 1], [], []>} : vector<4x64xbf16>, vector<64x256xbf16>, vector<4x256xf32> -> vector<4x256xf32>
    %c0_58 = arith.constant 0 : index
    %c0_59 = arith.constant 0 : index
    %c0_60 = arith.constant 0 : index
    %155 = vector.load %arg14[%c0_58, %c0_59, %c0_60] : memref<1x1x256xf32, #tpu.memory_space<vmem>>, vector<1x1x256xf32>
    %156 = vector.shape_cast %155 : vector<1x1x256xf32> to vector<1x256xf32>
    %157 = vector.broadcast %156 : vector<1x256xf32> to vector<4x256xf32>
    %158 = arith.addf %154, %157 : vector<4x256xf32>
    %159 = arith.mulf %158, %158 : vector<4x256xf32>
    %160 = arith.mulf %158, %159 : vector<4x256xf32>
    %cst_61 = arith.constant 4.471500e-02 : f32
    %161 = vector.broadcast %cst_61 : f32 to vector<4x256xf32>
    %162 = arith.mulf %161, %160 : vector<4x256xf32>
    %163 = arith.addf %158, %162 : vector<4x256xf32>
    %cst_62 = arith.constant 0.797884583 : f32
    %164 = vector.broadcast %cst_62 : f32 to vector<4x256xf32>
    %165 = arith.mulf %164, %163 : vector<4x256xf32>
    %166 = math.tanh %165 : vector<4x256xf32>
    %cst_63 = arith.constant 1.000000e+00 : f32
    %167 = vector.broadcast %cst_63 : f32 to vector<4x256xf32>
    %168 = arith.addf %167, %166 : vector<4x256xf32>
    %cst_64 = arith.constant 5.000000e-01 : f32
    %169 = vector.broadcast %cst_64 : f32 to vector<4x256xf32>
    %170 = arith.mulf %169, %168 : vector<4x256xf32>
    %171 = arith.mulf %158, %170 : vector<4x256xf32>
    %172 = arith.truncf %171 : vector<4x256xf32> to vector<4x256xbf16>
    %c0_65 = arith.constant 0 : index
    %c0_66 = arith.constant 0 : index
    %c0_67 = arith.constant 0 : index
    %173 = vector.load %arg15[%c0_65, %c0_66, %c0_67] : memref<1x256x64xbf16, #tpu.memory_space<vmem>>, vector<1x256x64xbf16>
    %174 = vector.shape_cast %173 : vector<1x256x64xbf16> to vector<256x64xbf16>
    %cst_68 = arith.constant dense<0.000000e+00> : vector<4x64xf32>
    %175 = tpu.matmul %172, %174, %cst_68 {dimension_numbers = #tpu.dot_dimension_numbers<[1], [0], [0], [1], [0, 0, 1, 1], [], []>} : vector<4x256xbf16>, vector<256x64xbf16>, vector<4x64xf32> -> vector<4x64xf32>
    %c0_69 = arith.constant 0 : index
    %c0_70 = arith.constant 0 : index
    %c0_71 = arith.constant 0 : index
    %176 = vector.load %arg16[%c0_69, %c0_70, %c0_71] : memref<1x1x64xf32, #tpu.memory_space<vmem>>, vector<1x1x64xf32>
    %177 = vector.shape_cast %176 : vector<1x1x64xf32> to vector<1x64xf32>
    %178 = vector.broadcast %177 : vector<1x64xf32> to vector<4x64xf32>
    %179 = arith.addf %175, %178 : vector<4x64xf32>
    %180 = arith.addf %124, %179 : vector<4x64xf32>
    %c0_72 = arith.constant 0 : index
    %c0_73 = arith.constant 0 : index
    %c0_74 = arith.constant 0 : index
    %181 = vector.load %arg17[%c0_72, %c0_73, %c0_74] : memref<1x4x64xf32, #tpu.memory_space<vmem>>, vector<1x4x64xf32>
    %182 = vector.shape_cast %181 : vector<1x4x64xf32> to vector<4x64xf32>
    %183 = vector.shape_cast %180 : vector<4x64xf32> to vector<1x4x64xf32>
    tpu.vector_store %arg17[%c0_72, %c0_73, %c0_74], %183 {strides = array<i32>} : memref<1x4x64xf32, #tpu.memory_space<vmem>>, vector<1x4x64xf32>,
    return
  }
  func.func @transform_0(%arg0: i32, %arg1: i32) -> (i32, i32, i32) {
    %c0_i32 = arith.constant 0 : i32
    %c0_i32_0 = arith.constant 0 : i32
    %c0_i32_1 = arith.constant 0 : i32
    return %arg0, %c0_i32, %c0_i32_0 : i32, i32, i32
  }
  func.func @transform_1(%arg0: i32, %arg1: i32) -> (i32, i32) {
    %c0_i32 = arith.constant 0 : i32
    %c0_i32_0 = arith.constant 0 : i32
    %c0_i32_1 = arith.constant 0 : i32
    return %c0_i32, %c0_i32_0 : i32, i32
  }
  func.func @transform_2(%arg0: i32, %arg1: i32) -> (i32, i32) {
    %c0_i32 = arith.constant 0 : i32
    %c0_i32_0 = arith.constant 0 : i32
    %c0_i32_1 = arith.constant 0 : i32
    return %c0_i32, %c0_i32_0 : i32, i32
  }
  func.func @transform_3(%arg0: i32, %arg1: i32) -> (i32, i32, i32) {
    %c0_i32 = arith.constant 0 : i32
    %c0_i32_0 = arith.constant 0 : i32
    %c0_i32_1 = arith.constant 0 : i32
    return %arg1, %c0_i32, %c0_i32_0 : i32, i32, i32
  }
  func.func @transform_4(%arg0: i32, %arg1: i32) -> (i32, i32, i32) {
    %c0_i32 = arith.constant 0 : i32
    %c0_i32_0 = arith.constant 0 : i32
    %c0_i32_1 = arith.constant 0 : i32
    return %arg1, %c0_i32, %c0_i32_0 : i32, i32, i32
  }
  func.func @transform_5(%arg0: i32, %arg1: i32) -> (i32, i32, i32) {
    %c0_i32 = arith.constant 0 : i32
    %c0_i32_0 = arith.constant 0 : i32
    %c0_i32_1 = arith.constant 0 : i32
    return %arg1, %c0_i32, %c0_i32_0 : i32, i32, i32
  }
  func.func @transform_6(%arg0: i32, %arg1: i32) -> (i32, i32, i32) {
    %c0_i32 = arith.constant 0 : i32
    %c0_i32_0 = arith.constant 0 : i32
    %c0_i32_1 = arith.constant 0 : i32
    return %arg1, %c0_i32, %c0_i32_0 : i32, i32, i32
  }
  func.func @transform_7(%arg0: i32, %arg1: i32) -> (i32, i32, i32) {
    %c0_i32 = arith.constant 0 : i32
    %c0_i32_0 = arith.constant 0 : i32
    %c0_i32_1 = arith.constant 0 : i32
    return %arg1, %c0_i32, %c0_i32_0 : i32, i32, i32
  }
  func.func @transform_8(%arg0: i32, %arg1: i32) -> (i32, i32, i32) {
    %c0_i32 = arith.constant 0 : i32
    %c0_i32_0 = arith.constant 0 : i32
    %c0_i32_1 = arith.constant 0 : i32
    return %arg1, %c0_i32, %c0_i32_0 : i32, i32, i32
  }
  func.func @transform_9(%arg0: i32, %arg1: i32) -> (i32, i32, i32) {
    %c0_i32 = arith.constant 0 : i32
    %c0_i32_0 = arith.constant 0 : i32
    %c0_i32_1 = arith.constant 0 : i32
    return %arg1, %c0_i32, %c0_i32_0 : i32, i32, i32
  }
  func.func @transform_10(%arg0: i32, %arg1: i32) -> (i32, i32, i32) {
    %c0_i32 = arith.constant 0 : i32
    %c0_i32_0 = arith.constant 0 : i32
    %c0_i32_1 = arith.constant 0 : i32
    return %arg1, %c0_i32, %c0_i32_0 : i32, i32, i32
  }
  func.func @transform_11(%arg0: i32, %arg1: i32) -> (i32, i32, i32) {
    %c0_i32 = arith.constant 0 : i32
    %c0_i32_0 = arith.constant 0 : i32
    %c0_i32_1 = arith.constant 0 : i32
    return %arg1, %c0_i32, %c0_i32_0 : i32, i32, i32
  }
  func.func @transform_12(%arg0: i32, %arg1: i32) -> (i32, i32, i32) {
    %c0_i32 = arith.constant 0 : i32
    %c0_i32_0 = arith.constant 0 : i32
    %c0_i32_1 = arith.constant 0 : i32
    return %arg1, %c0_i32, %c0_i32_0 : i32, i32, i32
  }
  func.func @transform_13(%arg0: i32, %arg1: i32) -> (i32, i32, i32) {
    %c0_i32 = arith.constant 0 : i32
    %c0_i32_0 = arith.constant 0 : i32
    %c0_i32_1 = arith.constant 0 : i32
    return %arg1, %c0_i32, %c0_i32_0 : i32, i32, i32
  }
  func.func @transform_14(%arg0: i32, %arg1: i32) -> (i32, i32, i32) {
    %c0_i32 = arith.constant 0 : i32
    %c0_i32_0 = arith.constant 0 : i32
    %c0_i32_1 = arith.constant 0 : i32
    return %arg1, %c0_i32, %c0_i32_0 : i32, i32, i32
  }
  func.func @transform_15(%arg0: i32, %arg1: i32) -> (i32, i32, i32) {
    %c0_i32 = arith.constant 0 : i32
    %c0_i32_0 = arith.constant 0 : i32
    %c0_i32_1 = arith.constant 0 : i32
    return %arg0, %c0_i32, %c0_i32_0 : i32, i32, i32
  }
}

module attributes {stable_mosaic.version = 11 : i64} {
  func.func @_stage_kernel(%arg0: i32, %arg1: i32, %arg2: memref<1x1x256xf32, #tpu.memory_space<vmem>>, %arg3: memref<256x128xbf16, #tpu.memory_space<vmem>>, %arg4: memref<1x128xf32, #tpu.memory_space<vmem>>, %arg5: memref<1x1x128xf32, #tpu.memory_space<vmem>>, %arg6: memref<1x1x128xf32, #tpu.memory_space<vmem>>, %arg7: memref<1x128x384xbf16, #tpu.memory_space<vmem>>, %arg8: memref<1x1x384xf32, #tpu.memory_space<vmem>>, %arg9: memref<1x128x128xbf16, #tpu.memory_space<vmem>>, %arg10: memref<1x1x128xf32, #tpu.memory_space<vmem>>, %arg11: memref<1x1x128xf32, #tpu.memory_space<vmem>>, %arg12: memref<1x1x128xf32, #tpu.memory_space<vmem>>, %arg13: memref<1x128x512xbf16, #tpu.memory_space<vmem>>, %arg14: memref<1x1x512xf32, #tpu.memory_space<vmem>>, %arg15: memref<1x512x128xbf16, #tpu.memory_space<vmem>>, %arg16: memref<1x1x128xf32, #tpu.memory_space<vmem>>, %arg17: memref<1x1x128xf32, #tpu.memory_space<vmem>>) attributes {dimension_semantics = [#tpu.dimension_semantics<parallel>, #tpu.dimension_semantics<arbitrary>], iteration_bounds = array<i64: 2, 2>, scalar_prefetch = 0 : i64, scratch_operands = 0 : i64, tpu.core_type = #tpu.core_type<tc>, window_params = [{transform_indices = @transform_0, window_bounds = array<i64: 1, 1, 256>}, {pipeline_mode = #tpu.pipeline_mode<synchronous>, transform_indices = @transform_1, window_bounds = array<i64: 256, 128>}, {pipeline_mode = #tpu.pipeline_mode<synchronous>, transform_indices = @transform_2, window_bounds = array<i64: 1, 128>}, {transform_indices = @transform_3, window_bounds = array<i64: 1, 1, 128>}, {transform_indices = @transform_4, window_bounds = array<i64: 1, 1, 128>}, {transform_indices = @transform_5, window_bounds = array<i64: 1, 128, 384>}, {transform_indices = @transform_6, window_bounds = array<i64: 1, 1, 384>}, {transform_indices = @transform_7, window_bounds = array<i64: 1, 128, 128>}, {transform_indices = @transform_8, window_bounds = array<i64: 1, 1, 128>}, {transform_indices = @transform_9, window_bounds = array<i64: 1, 1, 128>}, {transform_indices = @transform_10, window_bounds = array<i64: 1, 1, 128>}, {transform_indices = @transform_11, window_bounds = array<i64: 1, 128, 512>}, {transform_indices = @transform_12, window_bounds = array<i64: 1, 1, 512>}, {transform_indices = @transform_13, window_bounds = array<i64: 1, 512, 128>}, {transform_indices = @transform_14, window_bounds = array<i64: 1, 1, 128>}, {transform_indices = @transform_15, window_bounds = array<i64: 1, 1, 128>}]} {
    %c0_i32 = arith.constant 0 : i32
    %0 = arith.cmpi eq, %arg1, %c0_i32 : i32
    %1 = arith.extui %0 : i1 to i32
    %c0_i32_0 = arith.constant 0 : i32
    %2 = arith.cmpi ne, %1, %c0_i32_0 : i32
    scf.if %2 {
      %c0_91 = arith.constant 0 : index
      %c0_92 = arith.constant 0 : index
      %c0_93 = arith.constant 0 : index
      %268 = vector.load %arg2[%c0_91, %c0_92, %c0_93] : memref<1x1x256xf32, #tpu.memory_space<vmem>>, vector<1x1x256xf32>
      %269 = vector.shape_cast %268 : vector<1x1x256xf32> to vector<1x256xf32>
      %270 = arith.truncf %269 : vector<1x256xf32> to vector<1x256xbf16>
      %c0_94 = arith.constant 0 : index
      %c0_95 = arith.constant 0 : index
      %271 = vector.load %arg3[%c0_94, %c0_95] : memref<256x128xbf16, #tpu.memory_space<vmem>>, vector<256x128xbf16>
      %cst_96 = arith.constant dense<0.000000e+00> : vector<1x128xf32>
      %272 = tpu.matmul %270, %271, %cst_96 {dimension_numbers = #tpu.dot_dimension_numbers<[1], [0], [0], [1], [0, 0, 1, 1], [], []>} : vector<1x256xbf16>, vector<256x128xbf16>, vector<1x128xf32> -> vector<1x128xf32>
      %c0_97 = arith.constant 0 : index
      %c0_98 = arith.constant 0 : index
      %273 = vector.load %arg4[%c0_97, %c0_98] : memref<1x128xf32, #tpu.memory_space<vmem>>, vector<1x128xf32>
      %274 = arith.addf %272, %273 : vector<1x128xf32>
      %c0_99 = arith.constant 0 : index
      %c0_100 = arith.constant 0 : index
      %c0_101 = arith.constant 0 : index
      %275 = vector.load %arg17[%c0_99, %c0_100, %c0_101] : memref<1x1x128xf32, #tpu.memory_space<vmem>>, vector<1x1x128xf32>
      %276 = vector.shape_cast %275 : vector<1x1x128xf32> to vector<1x128xf32>
      %277 = vector.shape_cast %274 : vector<1x128xf32> to vector<1x1x128xf32>
      tpu.vector_store %arg17[%c0_99, %c0_100, %c0_101], %277 {strides = array<i32>} : memref<1x1x128xf32, #tpu.memory_space<vmem>>, vector<1x1x128xf32>,
    } else {
    }
    %c0 = arith.constant 0 : index
    %c0_1 = arith.constant 0 : index
    %c0_2 = arith.constant 0 : index
    %3 = vector.load %arg17[%c0, %c0_1, %c0_2] : memref<1x1x128xf32, #tpu.memory_space<vmem>>, vector<1x1x128xf32>
    %4 = vector.shape_cast %3 : vector<1x1x128xf32> to vector<1x128xf32>
    %c0_3 = arith.constant 0 : index
    %c0_4 = arith.constant 0 : index
    %c0_5 = arith.constant 0 : index
    %5 = vector.load %arg5[%c0_3, %c0_4, %c0_5] : memref<1x1x128xf32, #tpu.memory_space<vmem>>, vector<1x1x128xf32>
    %6 = vector.shape_cast %5 : vector<1x1x128xf32> to vector<1x128xf32>
    %c0_6 = arith.constant 0 : index
    %c0_7 = arith.constant 0 : index
    %c0_8 = arith.constant 0 : index
    %7 = vector.load %arg6[%c0_6, %c0_7, %c0_8] : memref<1x1x128xf32, #tpu.memory_space<vmem>>, vector<1x1x128xf32>
    %8 = vector.shape_cast %7 : vector<1x1x128xf32> to vector<1x128xf32>
    %cst = arith.constant dense<0.000000e+00> : vector<1xf32>
    %9 = vector.multi_reduction <add>, %4, %cst [1] : vector<1x128xf32> to vector<1xf32>
    %10 = vector.shape_cast %9 : vector<1xf32> to vector<1x1xf32>
    %cst_9 = arith.constant 1.280000e+02 : f32
    %11 = vector.broadcast %cst_9 : f32 to vector<1x1xf32>
    %12 = arith.divf %10, %11 : vector<1x1xf32>
    %13 = vector.broadcast %12 : vector<1x1xf32> to vector<1x128xf32>
    %14 = arith.subf %4, %13 : vector<1x128xf32>
    %15 = arith.mulf %14, %14 : vector<1x128xf32>
    %cst_10 = arith.constant dense<0.000000e+00> : vector<1xf32>
    %16 = vector.multi_reduction <add>, %15, %cst_10 [1] : vector<1x128xf32> to vector<1xf32>
    %17 = vector.shape_cast %16 : vector<1xf32> to vector<1x1xf32>
    %cst_11 = arith.constant 1.280000e+02 : f32
    %18 = vector.broadcast %cst_11 : f32 to vector<1x1xf32>
    %19 = arith.divf %17, %18 : vector<1x1xf32>
    %20 = vector.broadcast %12 : vector<1x1xf32> to vector<1x128xf32>
    %21 = arith.subf %4, %20 : vector<1x128xf32>
    %cst_12 = arith.constant 9.99999974E-6 : f32
    %22 = vector.broadcast %cst_12 : f32 to vector<1x1xf32>
    %23 = arith.addf %19, %22 : vector<1x1xf32>
    %24 = math.rsqrt %23 : vector<1x1xf32>
    %25 = vector.broadcast %24 : vector<1x1xf32> to vector<1x128xf32>
    %26 = arith.mulf %21, %25 : vector<1x128xf32>
    %27 = arith.mulf %26, %6 : vector<1x128xf32>
    %28 = arith.addf %27, %8 : vector<1x128xf32>
    %29 = arith.truncf %28 : vector<1x128xf32> to vector<1x128xbf16>
    %c0_13 = arith.constant 0 : index
    %c0_14 = arith.constant 0 : index
    %c0_15 = arith.constant 0 : index
    %30 = vector.load %arg7[%c0_13, %c0_14, %c0_15] : memref<1x128x384xbf16, #tpu.memory_space<vmem>>, vector<1x128x384xbf16>
    %31 = vector.shape_cast %30 : vector<1x128x384xbf16> to vector<128x384xbf16>
    %cst_16 = arith.constant dense<0.000000e+00> : vector<1x384xf32>
    %32 = tpu.matmul %29, %31, %cst_16 {dimension_numbers = #tpu.dot_dimension_numbers<[1], [0], [0], [1], [0, 0, 1, 1], [], []>} : vector<1x128xbf16>, vector<128x384xbf16>, vector<1x384xf32> -> vector<1x384xf32>
    %c0_17 = arith.constant 0 : index
    %c0_18 = arith.constant 0 : index
    %c0_19 = arith.constant 0 : index
    %33 = vector.load %arg8[%c0_17, %c0_18, %c0_19] : memref<1x1x384xf32, #tpu.memory_space<vmem>>, vector<1x1x384xf32>
    %34 = vector.shape_cast %33 : vector<1x1x384xf32> to vector<1x384xf32>
    %35 = arith.addf %32, %34 : vector<1x384xf32>
    %36 = vector.extract_strided_slice %35 {offsets = [0, 0], sizes = [1, 16], strides = [1, 1]} : vector<1x384xf32> to vector<1x16xf32>
    %37 = arith.truncf %36 : vector<1x16xf32> to vector<1x16xbf16>
    %38 = vector.extract_strided_slice %35 {offsets = [0, 128], sizes = [1, 16], strides = [1, 1]} : vector<1x384xf32> to vector<1x16xf32>
    %39 = arith.truncf %38 : vector<1x16xf32> to vector<1x16xbf16>
    %40 = vector.extract_strided_slice %35 {offsets = [0, 256], sizes = [1, 16], strides = [1, 1]} : vector<1x384xf32> to vector<1x16xf32>
    %41 = arith.truncf %40 : vector<1x16xf32> to vector<1x16xbf16>
    %42 = arith.extf %37 : vector<1x16xbf16> to vector<1x16xf32>
    %43 = arith.extf %39 : vector<1x16xbf16> to vector<1x16xf32>
    %cst_20 = arith.constant dense<0.000000e+00> : vector<1xf32>
    %44 = arith.mulf %42, %43 : vector<1x16xf32>
    %45 = vector.multi_reduction <add>, %44, %cst_20 [1] : vector<1x16xf32> to vector<1xf32>
    %46 = vector.shape_cast %45 : vector<1xf32> to vector<1x1xf32>
    %cst_21 = arith.constant dense<0xFF800000> : vector<1xf32>
    %47 = vector.multi_reduction <maximumf>, %46, %cst_21 [1] : vector<1x1xf32> to vector<1xf32>
    %48 = vector.shape_cast %47 : vector<1xf32> to vector<1x1xf32>
    %49 = arith.subf %46, %48 : vector<1x1xf32>
    %50 = math.exp %49 : vector<1x1xf32>
    %cst_22 = arith.constant dense<0.000000e+00> : vector<1xf32>
    %51 = vector.multi_reduction <add>, %50, %cst_22 [1] : vector<1x1xf32> to vector<1xf32>
    %52 = vector.shape_cast %51 : vector<1xf32> to vector<1x1xf32>
    %53 = tpu.reciprocal %52 {approx = true} : vector<1x1xf32> -> vector<1x1xf32>
    %54 = arith.mulf %50, %53 : vector<1x1xf32>
    %55 = arith.truncf %54 : vector<1x1xf32> to vector<1x1xbf16>
    %cst_23 = arith.constant dense<0.000000e+00> : vector<1x16xf32>
    %56 = tpu.matmul %55, %41, %cst_23 {dimension_numbers = #tpu.dot_dimension_numbers<[1], [0], [0], [1], [0, 0, 1, 1], [], []>} : vector<1x1xbf16>, vector<1x16xbf16>, vector<1x16xf32> -> vector<1x16xf32>
    %57 = vector.extract_strided_slice %35 {offsets = [0, 16], sizes = [1, 16], strides = [1, 1]} : vector<1x384xf32> to vector<1x16xf32>
    %58 = arith.truncf %57 : vector<1x16xf32> to vector<1x16xbf16>
    %59 = vector.extract_strided_slice %35 {offsets = [0, 144], sizes = [1, 16], strides = [1, 1]} : vector<1x384xf32> to vector<1x16xf32>
    %60 = arith.truncf %59 : vector<1x16xf32> to vector<1x16xbf16>
    %61 = vector.extract_strided_slice %35 {offsets = [0, 272], sizes = [1, 16], strides = [1, 1]} : vector<1x384xf32> to vector<1x16xf32>
    %62 = arith.truncf %61 : vector<1x16xf32> to vector<1x16xbf16>
    %63 = arith.extf %58 : vector<1x16xbf16> to vector<1x16xf32>
    %64 = arith.extf %60 : vector<1x16xbf16> to vector<1x16xf32>
    %cst_24 = arith.constant dense<0.000000e+00> : vector<1xf32>
    %65 = arith.mulf %63, %64 : vector<1x16xf32>
    %66 = vector.multi_reduction <add>, %65, %cst_24 [1] : vector<1x16xf32> to vector<1xf32>
    %67 = vector.shape_cast %66 : vector<1xf32> to vector<1x1xf32>
    %cst_25 = arith.constant dense<0xFF800000> : vector<1xf32>
    %68 = vector.multi_reduction <maximumf>, %67, %cst_25 [1] : vector<1x1xf32> to vector<1xf32>
    %69 = vector.shape_cast %68 : vector<1xf32> to vector<1x1xf32>
    %70 = arith.subf %67, %69 : vector<1x1xf32>
    %71 = math.exp %70 : vector<1x1xf32>
    %cst_26 = arith.constant dense<0.000000e+00> : vector<1xf32>
    %72 = vector.multi_reduction <add>, %71, %cst_26 [1] : vector<1x1xf32> to vector<1xf32>
    %73 = vector.shape_cast %72 : vector<1xf32> to vector<1x1xf32>
    %74 = tpu.reciprocal %73 {approx = true} : vector<1x1xf32> -> vector<1x1xf32>
    %75 = arith.mulf %71, %74 : vector<1x1xf32>
    %76 = arith.truncf %75 : vector<1x1xf32> to vector<1x1xbf16>
    %cst_27 = arith.constant dense<0.000000e+00> : vector<1x16xf32>
    %77 = tpu.matmul %76, %62, %cst_27 {dimension_numbers = #tpu.dot_dimension_numbers<[1], [0], [0], [1], [0, 0, 1, 1], [], []>} : vector<1x1xbf16>, vector<1x16xbf16>, vector<1x16xf32> -> vector<1x16xf32>
    %78 = vector.extract_strided_slice %35 {offsets = [0, 32], sizes = [1, 16], strides = [1, 1]} : vector<1x384xf32> to vector<1x16xf32>
    %79 = arith.truncf %78 : vector<1x16xf32> to vector<1x16xbf16>
    %80 = vector.extract_strided_slice %35 {offsets = [0, 160], sizes = [1, 16], strides = [1, 1]} : vector<1x384xf32> to vector<1x16xf32>
    %81 = arith.truncf %80 : vector<1x16xf32> to vector<1x16xbf16>
    %82 = vector.extract_strided_slice %35 {offsets = [0, 288], sizes = [1, 16], strides = [1, 1]} : vector<1x384xf32> to vector<1x16xf32>
    %83 = arith.truncf %82 : vector<1x16xf32> to vector<1x16xbf16>
    %84 = arith.extf %79 : vector<1x16xbf16> to vector<1x16xf32>
    %85 = arith.extf %81 : vector<1x16xbf16> to vector<1x16xf32>
    %cst_28 = arith.constant dense<0.000000e+00> : vector<1xf32>
    %86 = arith.mulf %84, %85 : vector<1x16xf32>
    %87 = vector.multi_reduction <add>, %86, %cst_28 [1] : vector<1x16xf32> to vector<1xf32>
    %88 = vector.shape_cast %87 : vector<1xf32> to vector<1x1xf32>
    %cst_29 = arith.constant dense<0xFF800000> : vector<1xf32>
    %89 = vector.multi_reduction <maximumf>, %88, %cst_29 [1] : vector<1x1xf32> to vector<1xf32>
    %90 = vector.shape_cast %89 : vector<1xf32> to vector<1x1xf32>
    %91 = arith.subf %88, %90 : vector<1x1xf32>
    %92 = math.exp %91 : vector<1x1xf32>
    %cst_30 = arith.constant dense<0.000000e+00> : vector<1xf32>
    %93 = vector.multi_reduction <add>, %92, %cst_30 [1] : vector<1x1xf32> to vector<1xf32>
    %94 = vector.shape_cast %93 : vector<1xf32> to vector<1x1xf32>
    %95 = tpu.reciprocal %94 {approx = true} : vector<1x1xf32> -> vector<1x1xf32>
    %96 = arith.mulf %92, %95 : vector<1x1xf32>
    %97 = arith.truncf %96 : vector<1x1xf32> to vector<1x1xbf16>
    %cst_31 = arith.constant dense<0.000000e+00> : vector<1x16xf32>
    %98 = tpu.matmul %97, %83, %cst_31 {dimension_numbers = #tpu.dot_dimension_numbers<[1], [0], [0], [1], [0, 0, 1, 1], [], []>} : vector<1x1xbf16>, vector<1x16xbf16>, vector<1x16xf32> -> vector<1x16xf32>
    %99 = vector.extract_strided_slice %35 {offsets = [0, 48], sizes = [1, 16], strides = [1, 1]} : vector<1x384xf32> to vector<1x16xf32>
    %100 = arith.truncf %99 : vector<1x16xf32> to vector<1x16xbf16>
    %101 = vector.extract_strided_slice %35 {offsets = [0, 176], sizes = [1, 16], strides = [1, 1]} : vector<1x384xf32> to vector<1x16xf32>
    %102 = arith.truncf %101 : vector<1x16xf32> to vector<1x16xbf16>
    %103 = vector.extract_strided_slice %35 {offsets = [0, 304], sizes = [1, 16], strides = [1, 1]} : vector<1x384xf32> to vector<1x16xf32>
    %104 = arith.truncf %103 : vector<1x16xf32> to vector<1x16xbf16>
    %105 = arith.extf %100 : vector<1x16xbf16> to vector<1x16xf32>
    %106 = arith.extf %102 : vector<1x16xbf16> to vector<1x16xf32>
    %cst_32 = arith.constant dense<0.000000e+00> : vector<1xf32>
    %107 = arith.mulf %105, %106 : vector<1x16xf32>
    %108 = vector.multi_reduction <add>, %107, %cst_32 [1] : vector<1x16xf32> to vector<1xf32>
    %109 = vector.shape_cast %108 : vector<1xf32> to vector<1x1xf32>
    %cst_33 = arith.constant dense<0xFF800000> : vector<1xf32>
    %110 = vector.multi_reduction <maximumf>, %109, %cst_33 [1] : vector<1x1xf32> to vector<1xf32>
    %111 = vector.shape_cast %110 : vector<1xf32> to vector<1x1xf32>
    %112 = arith.subf %109, %111 : vector<1x1xf32>
    %113 = math.exp %112 : vector<1x1xf32>
    %cst_34 = arith.constant dense<0.000000e+00> : vector<1xf32>
    %114 = vector.multi_reduction <add>, %113, %cst_34 [1] : vector<1x1xf32> to vector<1xf32>
    %115 = vector.shape_cast %114 : vector<1xf32> to vector<1x1xf32>
    %116 = tpu.reciprocal %115 {approx = true} : vector<1x1xf32> -> vector<1x1xf32>
    %117 = arith.mulf %113, %116 : vector<1x1xf32>
    %118 = arith.truncf %117 : vector<1x1xf32> to vector<1x1xbf16>
    %cst_35 = arith.constant dense<0.000000e+00> : vector<1x16xf32>
    %119 = tpu.matmul %118, %104, %cst_35 {dimension_numbers = #tpu.dot_dimension_numbers<[1], [0], [0], [1], [0, 0, 1, 1], [], []>} : vector<1x1xbf16>, vector<1x16xbf16>, vector<1x16xf32> -> vector<1x16xf32>
    %120 = vector.extract_strided_slice %35 {offsets = [0, 64], sizes = [1, 16], strides = [1, 1]} : vector<1x384xf32> to vector<1x16xf32>
    %121 = arith.truncf %120 : vector<1x16xf32> to vector<1x16xbf16>
    %122 = vector.extract_strided_slice %35 {offsets = [0, 192], sizes = [1, 16], strides = [1, 1]} : vector<1x384xf32> to vector<1x16xf32>
    %123 = arith.truncf %122 : vector<1x16xf32> to vector<1x16xbf16>
    %124 = vector.extract_strided_slice %35 {offsets = [0, 320], sizes = [1, 16], strides = [1, 1]} : vector<1x384xf32> to vector<1x16xf32>
    %125 = arith.truncf %124 : vector<1x16xf32> to vector<1x16xbf16>
    %126 = arith.extf %121 : vector<1x16xbf16> to vector<1x16xf32>
    %127 = arith.extf %123 : vector<1x16xbf16> to vector<1x16xf32>
    %cst_36 = arith.constant dense<0.000000e+00> : vector<1xf32>
    %128 = arith.mulf %126, %127 : vector<1x16xf32>
    %129 = vector.multi_reduction <add>, %128, %cst_36 [1] : vector<1x16xf32> to vector<1xf32>
    %130 = vector.shape_cast %129 : vector<1xf32> to vector<1x1xf32>
    %cst_37 = arith.constant dense<0xFF800000> : vector<1xf32>
    %131 = vector.multi_reduction <maximumf>, %130, %cst_37 [1] : vector<1x1xf32> to vector<1xf32>
    %132 = vector.shape_cast %131 : vector<1xf32> to vector<1x1xf32>
    %133 = arith.subf %130, %132 : vector<1x1xf32>
    %134 = math.exp %133 : vector<1x1xf32>
    %cst_38 = arith.constant dense<0.000000e+00> : vector<1xf32>
    %135 = vector.multi_reduction <add>, %134, %cst_38 [1] : vector<1x1xf32> to vector<1xf32>
    %136 = vector.shape_cast %135 : vector<1xf32> to vector<1x1xf32>
    %137 = tpu.reciprocal %136 {approx = true} : vector<1x1xf32> -> vector<1x1xf32>
    %138 = arith.mulf %134, %137 : vector<1x1xf32>
    %139 = arith.truncf %138 : vector<1x1xf32> to vector<1x1xbf16>
    %cst_39 = arith.constant dense<0.000000e+00> : vector<1x16xf32>
    %140 = tpu.matmul %139, %125, %cst_39 {dimension_numbers = #tpu.dot_dimension_numbers<[1], [0], [0], [1], [0, 0, 1, 1], [], []>} : vector<1x1xbf16>, vector<1x16xbf16>, vector<1x16xf32> -> vector<1x16xf32>
    %141 = vector.extract_strided_slice %35 {offsets = [0, 80], sizes = [1, 16], strides = [1, 1]} : vector<1x384xf32> to vector<1x16xf32>
    %142 = arith.truncf %141 : vector<1x16xf32> to vector<1x16xbf16>
    %143 = vector.extract_strided_slice %35 {offsets = [0, 208], sizes = [1, 16], strides = [1, 1]} : vector<1x384xf32> to vector<1x16xf32>
    %144 = arith.truncf %143 : vector<1x16xf32> to vector<1x16xbf16>
    %145 = vector.extract_strided_slice %35 {offsets = [0, 336], sizes = [1, 16], strides = [1, 1]} : vector<1x384xf32> to vector<1x16xf32>
    %146 = arith.truncf %145 : vector<1x16xf32> to vector<1x16xbf16>
    %147 = arith.extf %142 : vector<1x16xbf16> to vector<1x16xf32>
    %148 = arith.extf %144 : vector<1x16xbf16> to vector<1x16xf32>
    %cst_40 = arith.constant dense<0.000000e+00> : vector<1xf32>
    %149 = arith.mulf %147, %148 : vector<1x16xf32>
    %150 = vector.multi_reduction <add>, %149, %cst_40 [1] : vector<1x16xf32> to vector<1xf32>
    %151 = vector.shape_cast %150 : vector<1xf32> to vector<1x1xf32>
    %cst_41 = arith.constant dense<0xFF800000> : vector<1xf32>
    %152 = vector.multi_reduction <maximumf>, %151, %cst_41 [1] : vector<1x1xf32> to vector<1xf32>
    %153 = vector.shape_cast %152 : vector<1xf32> to vector<1x1xf32>
    %154 = arith.subf %151, %153 : vector<1x1xf32>
    %155 = math.exp %154 : vector<1x1xf32>
    %cst_42 = arith.constant dense<0.000000e+00> : vector<1xf32>
    %156 = vector.multi_reduction <add>, %155, %cst_42 [1] : vector<1x1xf32> to vector<1xf32>
    %157 = vector.shape_cast %156 : vector<1xf32> to vector<1x1xf32>
    %158 = tpu.reciprocal %157 {approx = true} : vector<1x1xf32> -> vector<1x1xf32>
    %159 = arith.mulf %155, %158 : vector<1x1xf32>
    %160 = arith.truncf %159 : vector<1x1xf32> to vector<1x1xbf16>
    %cst_43 = arith.constant dense<0.000000e+00> : vector<1x16xf32>
    %161 = tpu.matmul %160, %146, %cst_43 {dimension_numbers = #tpu.dot_dimension_numbers<[1], [0], [0], [1], [0, 0, 1, 1], [], []>} : vector<1x1xbf16>, vector<1x16xbf16>, vector<1x16xf32> -> vector<1x16xf32>
    %162 = vector.extract_strided_slice %35 {offsets = [0, 96], sizes = [1, 16], strides = [1, 1]} : vector<1x384xf32> to vector<1x16xf32>
    %163 = arith.truncf %162 : vector<1x16xf32> to vector<1x16xbf16>
    %164 = vector.extract_strided_slice %35 {offsets = [0, 224], sizes = [1, 16], strides = [1, 1]} : vector<1x384xf32> to vector<1x16xf32>
    %165 = arith.truncf %164 : vector<1x16xf32> to vector<1x16xbf16>
    %166 = vector.extract_strided_slice %35 {offsets = [0, 352], sizes = [1, 16], strides = [1, 1]} : vector<1x384xf32> to vector<1x16xf32>
    %167 = arith.truncf %166 : vector<1x16xf32> to vector<1x16xbf16>
    %168 = arith.extf %163 : vector<1x16xbf16> to vector<1x16xf32>
    %169 = arith.extf %165 : vector<1x16xbf16> to vector<1x16xf32>
    %cst_44 = arith.constant dense<0.000000e+00> : vector<1xf32>
    %170 = arith.mulf %168, %169 : vector<1x16xf32>
    %171 = vector.multi_reduction <add>, %170, %cst_44 [1] : vector<1x16xf32> to vector<1xf32>
    %172 = vector.shape_cast %171 : vector<1xf32> to vector<1x1xf32>
    %cst_45 = arith.constant dense<0xFF800000> : vector<1xf32>
    %173 = vector.multi_reduction <maximumf>, %172, %cst_45 [1] : vector<1x1xf32> to vector<1xf32>
    %174 = vector.shape_cast %173 : vector<1xf32> to vector<1x1xf32>
    %175 = arith.subf %172, %174 : vector<1x1xf32>
    %176 = math.exp %175 : vector<1x1xf32>
    %cst_46 = arith.constant dense<0.000000e+00> : vector<1xf32>
    %177 = vector.multi_reduction <add>, %176, %cst_46 [1] : vector<1x1xf32> to vector<1xf32>
    %178 = vector.shape_cast %177 : vector<1xf32> to vector<1x1xf32>
    %179 = tpu.reciprocal %178 {approx = true} : vector<1x1xf32> -> vector<1x1xf32>
    %180 = arith.mulf %176, %179 : vector<1x1xf32>
    %181 = arith.truncf %180 : vector<1x1xf32> to vector<1x1xbf16>
    %cst_47 = arith.constant dense<0.000000e+00> : vector<1x16xf32>
    %182 = tpu.matmul %181, %167, %cst_47 {dimension_numbers = #tpu.dot_dimension_numbers<[1], [0], [0], [1], [0, 0, 1, 1], [], []>} : vector<1x1xbf16>, vector<1x16xbf16>, vector<1x16xf32> -> vector<1x16xf32>
    %183 = vector.extract_strided_slice %35 {offsets = [0, 112], sizes = [1, 16], strides = [1, 1]} : vector<1x384xf32> to vector<1x16xf32>
    %184 = arith.truncf %183 : vector<1x16xf32> to vector<1x16xbf16>
    %185 = vector.extract_strided_slice %35 {offsets = [0, 240], sizes = [1, 16], strides = [1, 1]} : vector<1x384xf32> to vector<1x16xf32>
    %186 = arith.truncf %185 : vector<1x16xf32> to vector<1x16xbf16>
    %187 = vector.extract_strided_slice %35 {offsets = [0, 368], sizes = [1, 16], strides = [1, 1]} : vector<1x384xf32> to vector<1x16xf32>
    %188 = arith.truncf %187 : vector<1x16xf32> to vector<1x16xbf16>
    %189 = arith.extf %184 : vector<1x16xbf16> to vector<1x16xf32>
    %190 = arith.extf %186 : vector<1x16xbf16> to vector<1x16xf32>
    %cst_48 = arith.constant dense<0.000000e+00> : vector<1xf32>
    %191 = arith.mulf %189, %190 : vector<1x16xf32>
    %192 = vector.multi_reduction <add>, %191, %cst_48 [1] : vector<1x16xf32> to vector<1xf32>
    %193 = vector.shape_cast %192 : vector<1xf32> to vector<1x1xf32>
    %cst_49 = arith.constant dense<0xFF800000> : vector<1xf32>
    %194 = vector.multi_reduction <maximumf>, %193, %cst_49 [1] : vector<1x1xf32> to vector<1xf32>
    %195 = vector.shape_cast %194 : vector<1xf32> to vector<1x1xf32>
    %196 = arith.subf %193, %195 : vector<1x1xf32>
    %197 = math.exp %196 : vector<1x1xf32>
    %cst_50 = arith.constant dense<0.000000e+00> : vector<1xf32>
    %198 = vector.multi_reduction <add>, %197, %cst_50 [1] : vector<1x1xf32> to vector<1xf32>
    %199 = vector.shape_cast %198 : vector<1xf32> to vector<1x1xf32>
    %200 = tpu.reciprocal %199 {approx = true} : vector<1x1xf32> -> vector<1x1xf32>
    %201 = arith.mulf %197, %200 : vector<1x1xf32>
    %202 = arith.truncf %201 : vector<1x1xf32> to vector<1x1xbf16>
    %cst_51 = arith.constant dense<0.000000e+00> : vector<1x16xf32>
    %203 = tpu.matmul %202, %188, %cst_51 {dimension_numbers = #tpu.dot_dimension_numbers<[1], [0], [0], [1], [0, 0, 1, 1], [], []>} : vector<1x1xbf16>, vector<1x16xbf16>, vector<1x16xf32> -> vector<1x16xf32>
    %204 = tpu.concatenate %56, %77, %98, %119, %140, %161, %182, %203 in 1 : vector<1x16xf32>, vector<1x16xf32>, vector<1x16xf32>, vector<1x16xf32>, vector<1x16xf32>, vector<1x16xf32>, vector<1x16xf32>, vector<1x16xf32> -> vector<1x128xf32>
    %205 = arith.truncf %204 : vector<1x128xf32> to vector<1x128xbf16>
    %c0_52 = arith.constant 0 : index
    %c0_53 = arith.constant 0 : index
    %c0_54 = arith.constant 0 : index
    %206 = vector.load %arg9[%c0_52, %c0_53, %c0_54] : memref<1x128x128xbf16, #tpu.memory_space<vmem>>, vector<1x128x128xbf16>
    %207 = vector.shape_cast %206 : vector<1x128x128xbf16> to vector<128x128xbf16>
    %cst_55 = arith.constant dense<0.000000e+00> : vector<1x128xf32>
    %208 = tpu.matmul %205, %207, %cst_55 {dimension_numbers = #tpu.dot_dimension_numbers<[1], [0], [0], [1], [0, 0, 1, 1], [], []>} : vector<1x128xbf16>, vector<128x128xbf16>, vector<1x128xf32> -> vector<1x128xf32>
    %c0_56 = arith.constant 0 : index
    %c0_57 = arith.constant 0 : index
    %c0_58 = arith.constant 0 : index
    %209 = vector.load %arg10[%c0_56, %c0_57, %c0_58] : memref<1x1x128xf32, #tpu.memory_space<vmem>>, vector<1x1x128xf32>
    %210 = vector.shape_cast %209 : vector<1x1x128xf32> to vector<1x128xf32>
    %211 = arith.addf %208, %210 : vector<1x128xf32>
    %212 = arith.addf %4, %211 : vector<1x128xf32>
    %c0_59 = arith.constant 0 : index
    %c0_60 = arith.constant 0 : index
    %c0_61 = arith.constant 0 : index
    %213 = vector.load %arg11[%c0_59, %c0_60, %c0_61] : memref<1x1x128xf32, #tpu.memory_space<vmem>>, vector<1x1x128xf32>
    %214 = vector.shape_cast %213 : vector<1x1x128xf32> to vector<1x128xf32>
    %c0_62 = arith.constant 0 : index
    %c0_63 = arith.constant 0 : index
    %c0_64 = arith.constant 0 : index
    %215 = vector.load %arg12[%c0_62, %c0_63, %c0_64] : memref<1x1x128xf32, #tpu.memory_space<vmem>>, vector<1x1x128xf32>
    %216 = vector.shape_cast %215 : vector<1x1x128xf32> to vector<1x128xf32>
    %cst_65 = arith.constant dense<0.000000e+00> : vector<1xf32>
    %217 = vector.multi_reduction <add>, %212, %cst_65 [1] : vector<1x128xf32> to vector<1xf32>
    %218 = vector.shape_cast %217 : vector<1xf32> to vector<1x1xf32>
    %cst_66 = arith.constant 1.280000e+02 : f32
    %219 = vector.broadcast %cst_66 : f32 to vector<1x1xf32>
    %220 = arith.divf %218, %219 : vector<1x1xf32>
    %221 = vector.broadcast %220 : vector<1x1xf32> to vector<1x128xf32>
    %222 = arith.subf %212, %221 : vector<1x128xf32>
    %223 = arith.mulf %222, %222 : vector<1x128xf32>
    %cst_67 = arith.constant dense<0.000000e+00> : vector<1xf32>
    %224 = vector.multi_reduction <add>, %223, %cst_67 [1] : vector<1x128xf32> to vector<1xf32>
    %225 = vector.shape_cast %224 : vector<1xf32> to vector<1x1xf32>
    %cst_68 = arith.constant 1.280000e+02 : f32
    %226 = vector.broadcast %cst_68 : f32 to vector<1x1xf32>
    %227 = arith.divf %225, %226 : vector<1x1xf32>
    %228 = vector.broadcast %220 : vector<1x1xf32> to vector<1x128xf32>
    %229 = arith.subf %212, %228 : vector<1x128xf32>
    %cst_69 = arith.constant 9.99999974E-6 : f32
    %230 = vector.broadcast %cst_69 : f32 to vector<1x1xf32>
    %231 = arith.addf %227, %230 : vector<1x1xf32>
    %232 = math.rsqrt %231 : vector<1x1xf32>
    %233 = vector.broadcast %232 : vector<1x1xf32> to vector<1x128xf32>
    %234 = arith.mulf %229, %233 : vector<1x128xf32>
    %235 = arith.mulf %234, %214 : vector<1x128xf32>
    %236 = arith.addf %235, %216 : vector<1x128xf32>
    %237 = arith.truncf %236 : vector<1x128xf32> to vector<1x128xbf16>
    %c0_70 = arith.constant 0 : index
    %c0_71 = arith.constant 0 : index
    %c0_72 = arith.constant 0 : index
    %238 = vector.load %arg13[%c0_70, %c0_71, %c0_72] : memref<1x128x512xbf16, #tpu.memory_space<vmem>>, vector<1x128x512xbf16>
    %239 = vector.shape_cast %238 : vector<1x128x512xbf16> to vector<128x512xbf16>
    %cst_73 = arith.constant dense<0.000000e+00> : vector<1x512xf32>
    %240 = tpu.matmul %237, %239, %cst_73 {dimension_numbers = #tpu.dot_dimension_numbers<[1], [0], [0], [1], [0, 0, 1, 1], [], []>} : vector<1x128xbf16>, vector<128x512xbf16>, vector<1x512xf32> -> vector<1x512xf32>
    %c0_74 = arith.constant 0 : index
    %c0_75 = arith.constant 0 : index
    %c0_76 = arith.constant 0 : index
    %241 = vector.load %arg14[%c0_74, %c0_75, %c0_76] : memref<1x1x512xf32, #tpu.memory_space<vmem>>, vector<1x1x512xf32>
    %242 = vector.shape_cast %241 : vector<1x1x512xf32> to vector<1x512xf32>
    %243 = arith.addf %240, %242 : vector<1x512xf32>
    %244 = arith.mulf %243, %243 : vector<1x512xf32>
    %245 = arith.mulf %243, %244 : vector<1x512xf32>
    %cst_77 = arith.constant 4.471500e-02 : f32
    %246 = vector.broadcast %cst_77 : f32 to vector<1x512xf32>
    %247 = arith.mulf %246, %245 : vector<1x512xf32>
    %248 = arith.addf %243, %247 : vector<1x512xf32>
    %cst_78 = arith.constant 0.797884583 : f32
    %249 = vector.broadcast %cst_78 : f32 to vector<1x512xf32>
    %250 = arith.mulf %249, %248 : vector<1x512xf32>
    %251 = math.tanh %250 : vector<1x512xf32>
    %cst_79 = arith.constant 1.000000e+00 : f32
    %252 = vector.broadcast %cst_79 : f32 to vector<1x512xf32>
    %253 = arith.addf %252, %251 : vector<1x512xf32>
    %cst_80 = arith.constant 5.000000e-01 : f32
    %254 = vector.broadcast %cst_80 : f32 to vector<1x512xf32>
    %255 = arith.mulf %254, %253 : vector<1x512xf32>
    %256 = arith.mulf %243, %255 : vector<1x512xf32>
    %257 = arith.truncf %256 : vector<1x512xf32> to vector<1x512xbf16>
    %c0_81 = arith.constant 0 : index
    %c0_82 = arith.constant 0 : index
    %c0_83 = arith.constant 0 : index
    %258 = vector.load %arg15[%c0_81, %c0_82, %c0_83] : memref<1x512x128xbf16, #tpu.memory_space<vmem>>, vector<1x512x128xbf16>
    %259 = vector.shape_cast %258 : vector<1x512x128xbf16> to vector<512x128xbf16>
    %cst_84 = arith.constant dense<0.000000e+00> : vector<1x128xf32>
    %260 = tpu.matmul %257, %259, %cst_84 {dimension_numbers = #tpu.dot_dimension_numbers<[1], [0], [0], [1], [0, 0, 1, 1], [], []>} : vector<1x512xbf16>, vector<512x128xbf16>, vector<1x128xf32> -> vector<1x128xf32>
    %c0_85 = arith.constant 0 : index
    %c0_86 = arith.constant 0 : index
    %c0_87 = arith.constant 0 : index
    %261 = vector.load %arg16[%c0_85, %c0_86, %c0_87] : memref<1x1x128xf32, #tpu.memory_space<vmem>>, vector<1x1x128xf32>
    %262 = vector.shape_cast %261 : vector<1x1x128xf32> to vector<1x128xf32>
    %263 = arith.addf %260, %262 : vector<1x128xf32>
    %264 = arith.addf %212, %263 : vector<1x128xf32>
    %c0_88 = arith.constant 0 : index
    %c0_89 = arith.constant 0 : index
    %c0_90 = arith.constant 0 : index
    %265 = vector.load %arg17[%c0_88, %c0_89, %c0_90] : memref<1x1x128xf32, #tpu.memory_space<vmem>>, vector<1x1x128xf32>
    %266 = vector.shape_cast %265 : vector<1x1x128xf32> to vector<1x128xf32>
    %267 = vector.shape_cast %264 : vector<1x128xf32> to vector<1x1x128xf32>
    tpu.vector_store %arg17[%c0_88, %c0_89, %c0_90], %267 {strides = array<i32>} : memref<1x1x128xf32, #tpu.memory_space<vmem>>, vector<1x1x128xf32>,
    return
  }
  func.func @transform_0(%arg0: i32, %arg1: i32) -> (i32, i32, i32) {
    %c0_i32 = arith.constant 0 : i32
    %c0_i32_0 = arith.constant 0 : i32
    %c0_i32_1 = arith.constant 0 : i32
    return %arg0, %c0_i32, %c0_i32_0 : i32, i32, i32
  }
  func.func @transform_1(%arg0: i32, %arg1: i32) -> (i32, i32) {
    %c0_i32 = arith.constant 0 : i32
    %c0_i32_0 = arith.constant 0 : i32
    %c0_i32_1 = arith.constant 0 : i32
    return %c0_i32, %c0_i32_0 : i32, i32
  }
  func.func @transform_2(%arg0: i32, %arg1: i32) -> (i32, i32) {
    %c0_i32 = arith.constant 0 : i32
    %c0_i32_0 = arith.constant 0 : i32
    %c0_i32_1 = arith.constant 0 : i32
    return %c0_i32, %c0_i32_0 : i32, i32
  }
  func.func @transform_3(%arg0: i32, %arg1: i32) -> (i32, i32, i32) {
    %c0_i32 = arith.constant 0 : i32
    %c0_i32_0 = arith.constant 0 : i32
    %c0_i32_1 = arith.constant 0 : i32
    return %arg1, %c0_i32, %c0_i32_0 : i32, i32, i32
  }
  func.func @transform_4(%arg0: i32, %arg1: i32) -> (i32, i32, i32) {
    %c0_i32 = arith.constant 0 : i32
    %c0_i32_0 = arith.constant 0 : i32
    %c0_i32_1 = arith.constant 0 : i32
    return %arg1, %c0_i32, %c0_i32_0 : i32, i32, i32
  }
  func.func @transform_5(%arg0: i32, %arg1: i32) -> (i32, i32, i32) {
    %c0_i32 = arith.constant 0 : i32
    %c0_i32_0 = arith.constant 0 : i32
    %c0_i32_1 = arith.constant 0 : i32
    return %arg1, %c0_i32, %c0_i32_0 : i32, i32, i32
  }
  func.func @transform_6(%arg0: i32, %arg1: i32) -> (i32, i32, i32) {
    %c0_i32 = arith.constant 0 : i32
    %c0_i32_0 = arith.constant 0 : i32
    %c0_i32_1 = arith.constant 0 : i32
    return %arg1, %c0_i32, %c0_i32_0 : i32, i32, i32
  }
  func.func @transform_7(%arg0: i32, %arg1: i32) -> (i32, i32, i32) {
    %c0_i32 = arith.constant 0 : i32
    %c0_i32_0 = arith.constant 0 : i32
    %c0_i32_1 = arith.constant 0 : i32
    return %arg1, %c0_i32, %c0_i32_0 : i32, i32, i32
  }
  func.func @transform_8(%arg0: i32, %arg1: i32) -> (i32, i32, i32) {
    %c0_i32 = arith.constant 0 : i32
    %c0_i32_0 = arith.constant 0 : i32
    %c0_i32_1 = arith.constant 0 : i32
    return %arg1, %c0_i32, %c0_i32_0 : i32, i32, i32
  }
  func.func @transform_9(%arg0: i32, %arg1: i32) -> (i32, i32, i32) {
    %c0_i32 = arith.constant 0 : i32
    %c0_i32_0 = arith.constant 0 : i32
    %c0_i32_1 = arith.constant 0 : i32
    return %arg1, %c0_i32, %c0_i32_0 : i32, i32, i32
  }
  func.func @transform_10(%arg0: i32, %arg1: i32) -> (i32, i32, i32) {
    %c0_i32 = arith.constant 0 : i32
    %c0_i32_0 = arith.constant 0 : i32
    %c0_i32_1 = arith.constant 0 : i32
    return %arg1, %c0_i32, %c0_i32_0 : i32, i32, i32
  }
  func.func @transform_11(%arg0: i32, %arg1: i32) -> (i32, i32, i32) {
    %c0_i32 = arith.constant 0 : i32
    %c0_i32_0 = arith.constant 0 : i32
    %c0_i32_1 = arith.constant 0 : i32
    return %arg1, %c0_i32, %c0_i32_0 : i32, i32, i32
  }
  func.func @transform_12(%arg0: i32, %arg1: i32) -> (i32, i32, i32) {
    %c0_i32 = arith.constant 0 : i32
    %c0_i32_0 = arith.constant 0 : i32
    %c0_i32_1 = arith.constant 0 : i32
    return %arg1, %c0_i32, %c0_i32_0 : i32, i32, i32
  }
  func.func @transform_13(%arg0: i32, %arg1: i32) -> (i32, i32, i32) {
    %c0_i32 = arith.constant 0 : i32
    %c0_i32_0 = arith.constant 0 : i32
    %c0_i32_1 = arith.constant 0 : i32
    return %arg1, %c0_i32, %c0_i32_0 : i32, i32, i32
  }
  func.func @transform_14(%arg0: i32, %arg1: i32) -> (i32, i32, i32) {
    %c0_i32 = arith.constant 0 : i32
    %c0_i32_0 = arith.constant 0 : i32
    %c0_i32_1 = arith.constant 0 : i32
    return %arg1, %c0_i32, %c0_i32_0 : i32, i32, i32
  }
  func.func @transform_15(%arg0: i32, %arg1: i32) -> (i32, i32, i32) {
    %c0_i32 = arith.constant 0 : i32
    %c0_i32_0 = arith.constant 0 : i32
    %c0_i32_1 = arith.constant 0 : i32
    return %arg0, %c0_i32, %c0_i32_0 : i32, i32, i32
  }
}

module attributes {stable_mosaic.version = 11 : i64} {
  func.func @_cls_head_kernel(%arg0: i32, %arg1: memref<1x1x128xf32, #tpu.memory_space<vmem>>, %arg2: memref<1x128xf32, #tpu.memory_space<vmem>>, %arg3: memref<1x128xf32, #tpu.memory_space<vmem>>, %arg4: memref<128x1024xbf16, #tpu.memory_space<vmem>>, %arg5: memref<1x1024xf32, #tpu.memory_space<vmem>>, %arg6: memref<1x1x1024xf32, #tpu.memory_space<vmem>>) attributes {dimension_semantics = [#tpu.dimension_semantics<parallel>], iteration_bounds = array<i64: 2>, scalar_prefetch = 0 : i64, scratch_operands = 0 : i64, tpu.core_type = #tpu.core_type<tc>, window_params = [{transform_indices = @transform_0, window_bounds = array<i64: 1, 1, 128>}, {pipeline_mode = #tpu.pipeline_mode<synchronous>, transform_indices = @transform_1, window_bounds = array<i64: 1, 128>}, {pipeline_mode = #tpu.pipeline_mode<synchronous>, transform_indices = @transform_2, window_bounds = array<i64: 1, 128>}, {pipeline_mode = #tpu.pipeline_mode<synchronous>, transform_indices = @transform_3, window_bounds = array<i64: 128, 1024>}, {pipeline_mode = #tpu.pipeline_mode<synchronous>, transform_indices = @transform_4, window_bounds = array<i64: 1, 1024>}, {transform_indices = @transform_5, window_bounds = array<i64: 1, 1, 1024>}]} {
    %c0 = arith.constant 0 : index
    %c0_0 = arith.constant 0 : index
    %c0_1 = arith.constant 0 : index
    %0 = vector.load %arg1[%c0, %c0_0, %c0_1] : memref<1x1x128xf32, #tpu.memory_space<vmem>>, vector<1x1x128xf32>
    %1 = vector.shape_cast %0 : vector<1x1x128xf32> to vector<1x128xf32>
    %c0_2 = arith.constant 0 : index
    %c0_3 = arith.constant 0 : index
    %2 = vector.load %arg2[%c0_2, %c0_3] : memref<1x128xf32, #tpu.memory_space<vmem>>, vector<1x128xf32>
    %c0_4 = arith.constant 0 : index
    %c0_5 = arith.constant 0 : index
    %3 = vector.load %arg3[%c0_4, %c0_5] : memref<1x128xf32, #tpu.memory_space<vmem>>, vector<1x128xf32>
    %cst = arith.constant dense<0.000000e+00> : vector<1xf32>
    %4 = vector.multi_reduction <add>, %1, %cst [1] : vector<1x128xf32> to vector<1xf32>
    %5 = vector.shape_cast %4 : vector<1xf32> to vector<1x1xf32>
    %cst_6 = arith.constant 1.280000e+02 : f32
    %6 = vector.broadcast %cst_6 : f32 to vector<1x1xf32>
    %7 = arith.divf %5, %6 : vector<1x1xf32>
    %8 = vector.broadcast %7 : vector<1x1xf32> to vector<1x128xf32>
    %9 = arith.subf %1, %8 : vector<1x128xf32>
    %10 = arith.mulf %9, %9 : vector<1x128xf32>
    %cst_7 = arith.constant dense<0.000000e+00> : vector<1xf32>
    %11 = vector.multi_reduction <add>, %10, %cst_7 [1] : vector<1x128xf32> to vector<1xf32>
    %12 = vector.shape_cast %11 : vector<1xf32> to vector<1x1xf32>
    %cst_8 = arith.constant 1.280000e+02 : f32
    %13 = vector.broadcast %cst_8 : f32 to vector<1x1xf32>
    %14 = arith.divf %12, %13 : vector<1x1xf32>
    %15 = vector.broadcast %7 : vector<1x1xf32> to vector<1x128xf32>
    %16 = arith.subf %1, %15 : vector<1x128xf32>
    %cst_9 = arith.constant 9.99999974E-6 : f32
    %17 = vector.broadcast %cst_9 : f32 to vector<1x1xf32>
    %18 = arith.addf %14, %17 : vector<1x1xf32>
    %19 = math.rsqrt %18 : vector<1x1xf32>
    %20 = vector.broadcast %19 : vector<1x1xf32> to vector<1x128xf32>
    %21 = arith.mulf %16, %20 : vector<1x128xf32>
    %22 = arith.mulf %21, %2 : vector<1x128xf32>
    %23 = arith.addf %22, %3 : vector<1x128xf32>
    %cst_10 = arith.constant dense<0.000000e+00> : vector<128xf32>
    %24 = vector.multi_reduction <add>, %23, %cst_10 [0] : vector<1x128xf32> to vector<128xf32>
    %25 = vector.shape_cast %24 : vector<128xf32> to vector<1x128xf32>
    %cst_11 = arith.constant 1.000000e+00 : f32
    %26 = vector.broadcast %cst_11 : f32 to vector<1x128xf32>
    %27 = arith.divf %25, %26 : vector<1x128xf32>
    %28 = arith.truncf %27 : vector<1x128xf32> to vector<1x128xbf16>
    %c0_12 = arith.constant 0 : index
    %c0_13 = arith.constant 0 : index
    %29 = vector.load %arg4[%c0_12, %c0_13] : memref<128x1024xbf16, #tpu.memory_space<vmem>>, vector<128x1024xbf16>
    %cst_14 = arith.constant dense<0.000000e+00> : vector<1x1024xf32>
    %30 = tpu.matmul %28, %29, %cst_14 {dimension_numbers = #tpu.dot_dimension_numbers<[1], [0], [0], [1], [0, 0, 1, 1], [], []>} : vector<1x128xbf16>, vector<128x1024xbf16>, vector<1x1024xf32> -> vector<1x1024xf32>
    %c0_15 = arith.constant 0 : index
    %c0_16 = arith.constant 0 : index
    %31 = vector.load %arg5[%c0_15, %c0_16] : memref<1x1024xf32, #tpu.memory_space<vmem>>, vector<1x1024xf32>
    %32 = arith.addf %30, %31 : vector<1x1024xf32>
    %c0_17 = arith.constant 0 : index
    %c0_18 = arith.constant 0 : index
    %c0_19 = arith.constant 0 : index
    %33 = vector.load %arg6[%c0_17, %c0_18, %c0_19] : memref<1x1x1024xf32, #tpu.memory_space<vmem>>, vector<1x1x1024xf32>
    %34 = vector.shape_cast %33 : vector<1x1x1024xf32> to vector<1x1024xf32>
    %35 = vector.shape_cast %32 : vector<1x1024xf32> to vector<1x1x1024xf32>
    tpu.vector_store %arg6[%c0_17, %c0_18, %c0_19], %35 {strides = array<i32>} : memref<1x1x1024xf32, #tpu.memory_space<vmem>>, vector<1x1x1024xf32>,
    return
  }
  func.func @transform_0(%arg0: i32) -> (i32, i32, i32) {
    %c0_i32 = arith.constant 0 : i32
    %c0_i32_0 = arith.constant 0 : i32
    %c0_i32_1 = arith.constant 0 : i32
    return %arg0, %c0_i32, %c0_i32_0 : i32, i32, i32
  }
  func.func @transform_1(%arg0: i32) -> (i32, i32) {
    %c0_i32 = arith.constant 0 : i32
    %c0_i32_0 = arith.constant 0 : i32
    %c0_i32_1 = arith.constant 0 : i32
    return %c0_i32, %c0_i32_0 : i32, i32
  }
  func.func @transform_2(%arg0: i32) -> (i32, i32) {
    %c0_i32 = arith.constant 0 : i32
    %c0_i32_0 = arith.constant 0 : i32
    %c0_i32_1 = arith.constant 0 : i32
    return %c0_i32, %c0_i32_0 : i32, i32
  }
  func.func @transform_3(%arg0: i32) -> (i32, i32) {
    %c0_i32 = arith.constant 0 : i32
    %c0_i32_0 = arith.constant 0 : i32
    %c0_i32_1 = arith.constant 0 : i32
    return %c0_i32, %c0_i32_0 : i32, i32
  }
  func.func @transform_4(%arg0: i32) -> (i32, i32) {
    %c0_i32 = arith.constant 0 : i32
    %c0_i32_0 = arith.constant 0 : i32
    %c0_i32_1 = arith.constant 0 : i32
    return %c0_i32, %c0_i32_0 : i32, i32
  }
  func.func @transform_5(%arg0: i32) -> (i32, i32, i32) {
    %c0_i32 = arith.constant 0 : i32
    %c0_i32_0 = arith.constant 0 : i32
    %c0_i32_1 = arith.constant 0 : i32
    return %arg0, %c0_i32, %c0_i32_0 : i32, i32, i32
  }
}

</mosaic_0001>

<llo_original>
// kernel: _lambda_.5
$region0: #{_lambda_.5}
  #allocation0 [shape = 'u32[]', space=smem, size = 0x4, offset = 0x4, fixed_abs, tag = 'smem constant byte address 0x4 - core index']
  #allocation1 [shape = 'u32[144,128]{1,0:T(1,128)}', space=vmem, size = 0x12000, scoped, tag = 'internal scratch']
  %s0 = inlined_call_operand.vmem [shape: f32[2,64,48], index: 0, kind: input, shape index: {}]
  %s1 = inlined_call_operand.vmem [shape: bf16[48,16], index: 1, kind: input, shape index: {}]
  %s2 = inlined_call_operand.vmem [shape: f32[1,16], index: 2, kind: input, shape index: {}]
  %s3 = inlined_call_operand.vmem [shape: f32[2,1,16], index: 3, kind: input, shape index: {}]
  %s4 = inlined_call_operand.vmem [shape: f32[2,1,16], index: 4, kind: input, shape index: {}]
  %s5 = inlined_call_operand.vmem [shape: bf16[2,16,48], index: 5, kind: input, shape index: {}]
  %s6 = inlined_call_operand.vmem [shape: f32[2,1,48], index: 6, kind: input, shape index: {}]
  %s7 = inlined_call_operand.vmem [shape: bf16[2,16,16], index: 7, kind: input, shape index: {}]
  %s8 = inlined_call_operand.vmem [shape: f32[2,1,16], index: 8, kind: input, shape index: {}]
  %s9 = inlined_call_operand.vmem [shape: f32[2,1,16], index: 9, kind: input, shape index: {}]
  %s10 = inlined_call_operand.vmem [shape: f32[2,1,16], index: 10, kind: input, shape index: {}]
  %s11 = inlined_call_operand.vmem [shape: bf16[2,16,64], index: 11, kind: input, shape index: {}]
  %s12 = inlined_call_operand.vmem [shape: f32[2,1,64], index: 12, kind: input, shape index: {}]
  %s13 = inlined_call_operand.vmem [shape: bf16[2,64,16], index: 13, kind: input, shape index: {}]
  %s14 = inlined_call_operand.vmem [shape: f32[2,1,16], index: 14, kind: input, shape index: {}]
  %s15 = inlined_call_operand.vmem [shape: f32[2,64,16], index: 15, kind: output, shape index: {}]
  %s16 = sld [smem:[#allocation0]]
  $region97: #{_lambda_.5} parent=0
    _
  %s18 = ssub.s32 1, %s16
  %s19 = scalar_select 0, %s18, %s16
  loop: start=0, step=1, limit=6
  $region2: #{_lambda_.5} parent=0 // loop_pre_header
    _
  $region3: #{_lambda_.5} parent=0 // loop_header
    %s21 = sphi 0, %s25
    %p22 = scmp.ge.s32.totalorder %s21, 6
    %s28 = sphi 0, %s40
    %s29 = sphi 0, %s36
    %s30 = sphi 0, %s28
    %s31 = sphi 0, %s29
    %s32 = sphi 0, %s30
    %s33 = sphi 0, %s31
    %s43 = sphi 0, %s45
    %s46 = sphi 0, %s43
    %s47 = sphi 0, %s46
    %s63 = sphi 0, %s47
    %s67 = sphi 0, %s67
    %s69 = sphi 0, %s67
    %s70 = sphi 0, %s69
    %s84 = sphi 0, %s70
    %s88 = sphi 0, %s88
    %s90 = sphi 0, %s88
    %s91 = sphi 0, %s90
    %s105 = sphi 0, %s91
    %s111 = sphi 0, %s113
    %s114 = sphi 0, %s111
    %s115 = sphi 0, %s114
    %s131 = sphi 0, %s115
    %s137 = sphi 0, %s139
    %s140 = sphi 0, %s137
    %s141 = sphi 0, %s140
    %s157 = sphi 0, %s141
    %s163 = sphi 0, %s165
    %s166 = sphi 0, %s163
    %s167 = sphi 0, %s166
    %s183 = sphi 0, %s167
    %s189 = sphi 0, %s191
    %s192 = sphi 0, %s189
    %s193 = sphi 0, %s192
    %s209 = sphi 0, %s193
    %s215 = sphi 0, %s217
    %s218 = sphi 0, %s215
    %s219 = sphi 0, %s218
    %s235 = sphi 0, %s219
    %s241 = sphi 0, %s243
    %s244 = sphi 0, %s241
    %s245 = sphi 0, %s244
    %s261 = sphi 0, %s245
    %s267 = sphi 0, %s269
    %s270 = sphi 0, %s267
    %s271 = sphi 0, %s270
    %s287 = sphi 0, %s271
    %s293 = sphi 0, %s295
    %s296 = sphi 0, %s293
    %s297 = sphi 0, %s296
    %s313 = sphi 0, %s297
    %s319 = sphi 0, %s321
    %s322 = sphi 0, %s319
    %s323 = sphi 0, %s322
    %s339 = sphi 0, %s323
    %s345 = sphi 0, %s347
    %s348 = sphi 0, %s345
    %s349 = sphi 0, %s348
    %s365 = sphi 0, %s349
    %s371 = sphi 0, %s373
    %s374 = sphi 0, %s371
    %s375 = sphi 0, %s374
    %s391 = sphi 0, %s375
    %s397 = sphi 0, %s399
    %s400 = sphi 0, %s397
    %s401 = sphi 0, %s400
    %s417 = sphi 0, %s401
    %s423 = sphi 0, %s425
    %s426 = sphi 0, %s423
    %s427 = sphi 0, %s426
    %s443 = sphi 0, %s427
  $region4: #{_lambda_.5} parent=0 // loop_header_branch
    %24 = sbr.rel (%p22) target = $region8
  $region5: #{_lambda_.5} parent=0 // loop_body
    %s26 = ssub.s32 %s21, 1
    %s27 = ssub.s32 %s21, 2
    %s34 = sadd.s32 1, %s29
    %p35 = scmp.ge.s32.totalorder %s34, 2
    %s36 = scalar_select %p35, 0, %s34
    %s37 = sadd.s32 1, %s28
    %s38 = scalar_select %p35, %s37, %s28
    %p39 = scmp.ge.s32.totalorder %s38, 2
    %s40 = scalar_select %p39, 0, %s38
    %s41 = ssub.s32 %s28, %s40
    %p42 = scmp.eq.s32.totalorder %s41, 0
    %s44 = sadd.s32 %s43, 1
    %s45 = scalar_select %p42, %s43, %s44
    %p48 = pneg %p42
    %p49 = scmp.eq.s32.totalorder %s21, 3
    %p50 = por %p48, %p49
    %p51 = scmp.ne.s32.totalorder %s43, %s46
    %p52 = scmp.eq.s32.totalorder %s21, 0
    %p53 = por %p51, %p52
    %p54 = scmp.ne.s32.totalorder %s43, %s46
    %p55 = scmp.eq.s32.totalorder %s26, 3
    %p56 = por %p54, %p55
    %p57 = scmp.ne.s32.totalorder %s46, %s47
    %p58 = scmp.eq.s32.totalorder %s26, 0
    %p59 = por %p57, %p58
    %p60 = scmp.ne.s32.totalorder %s46, %s47
    %p61 = scmp.eq.s32.totalorder %s27, 3
    %p62 = por %p60, %p61
    %p64 = scmp.ne.s32.totalorder %s47, %s63
    %p65 = scmp.eq.s32.totalorder %s27, 0
    %p66 = por %p64, %p65
    %s68 = sadd.s32 %s67, 1
    %p71 = scmp.eq.s32.totalorder %s21, 3
    %p72 = scmp.ne.s32.totalorder %s67, %s69
    %p73 = scmp.eq.s32.totalorder %s21, 0
    %p74 = por %p72, %p73
    %p75 = scmp.ne.s32.totalorder %s67, %s69
    %p76 = scmp.eq.s32.totalorder %s26, 3
    %p77 = por %p75, %p76
    %p78 = scmp.ne.s32.totalorder %s69, %s70
    %p79 = scmp.eq.s32.totalorder %s26, 0
    %p80 = por %p78, %p79
    %p81 = scmp.ne.s32.totalorder %s69, %s70
    %p82 = scmp.eq.s32.totalorder %s27, 3
    %p83 = por %p81, %p82
    %p85 = scmp.ne.s32.totalorder %s70, %s84
    %p86 = scmp.eq.s32.totalorder %s27, 0
    %p87 = por %p85, %p86
    %s89 = sadd.s32 %s88, 1
    %p92 = scmp.eq.s32.totalorder %s21, 3
    %p93 = scmp.ne.s32.totalorder %s88, %s90
    %p94 = scmp.eq.s32.totalorder %s21, 0
    %p95 = por %p93, %p94
    %p96 = scmp.ne.s32.totalorder %s88, %s90
    %p97 = scmp.eq.s32.totalorder %s26, 3
    %p98 = por %p96, %p97
    %p99 = scmp.ne.s32.totalorder %s90, %s91
    %p100 = scmp.eq.s32.totalorder %s26, 0
    %p101 = por %p99, %p100
    %p102 = scmp.ne.s32.totalorder %s90, %s91
    %p103 = scmp.eq.s32.totalorder %s27, 3
    %p104 = por %p102, %p103
    %p106 = scmp.ne.s32.totalorder %s91, %s105
    %p107 = scmp.eq.s32.totalorder %s27, 0
    %p108 = por %p106, %p107
    %s109 = ssub.s32 %s29, %s36
    %p110 = scmp.eq.s32.totalorder %s109, 0
    %s112 = sadd.s32 %s111, 1
    %s113 = scalar_select %p110, %s111, %s112
    %p116 = pneg %p110
    %p117 = scmp.eq.s32.totalorder %s21, 3
    %p118 = por %p116, %p117
    %p119 = scmp.ne.s32.totalorder %s111, %s114
    %p120 = scmp.eq.s32.totalorder %s21, 0
    %p121 = por %p119, %p120
    %p122 = scmp.ne.s32.totalorder %s111, %s114
    %p123 = scmp.eq.s32.totalorder %s26, 3
    %p124 = por %p122, %p123
    %p125 = scmp.ne.s32.totalorder %s114, %s115
    %p126 = scmp.eq.s32.totalorder %s26, 0
    %p127 = por %p125, %p126
    %p128 = scmp.ne.s32.totalorder %s114, %s115
    %p129 = scmp.eq.s32.totalorder %s27, 3
    %p130 = por %p128, %p129
    %p132 = scmp.ne.s32.totalorder %s115, %s131
    %p133 = scmp.eq.s32.totalorder %s27, 0
    %p134 = por %p132, %p133
    %s135 = ssub.s32 %s29, %s36
    %p136 = scmp.eq.s32.totalorder %s135, 0
    %s138 = sadd.s32 %s137, 1
    %s139 = scalar_select %p136, %s137, %s138
    %p142 = pneg %p136
    %p143 = scmp.eq.s32.totalorder %s21, 3
    %p144 = por %p142, %p143
    %p145 = scmp.ne.s32.totalorder %s137, %s140
    %p146 = scmp.eq.s32.totalorder %s21, 0
    %p147 = por %p145, %p146
    %p148 = scmp.ne.s32.totalorder %s137, %s140
    %p149 = scmp.eq.s32.totalorder %s26, 3
    %p150 = por %p148, %p149
    %p151 = scmp.ne.s32.totalorder %s140, %s141
    %p152 = scmp.eq.s32.totalorder %s26, 0
    %p153 = por %p151, %p152
    %p154 = scmp.ne.s32.totalorder %s140, %s141
    %p155 = scmp.eq.s32.totalorder %s27, 3
    %p156 = por %p154, %p155
    %p158 = scmp.ne.s32.totalorder %s141, %s157
    %p159 = scmp.eq.s32.totalorder %s27, 0
    %p160 = por %p158, %p159
    %s161 = ssub.s32 %s29, %s36
    %p162 = scmp.eq.s32.totalorder %s161, 0
    %s164 = sadd.s32 %s163, 1
    %s165 = scalar_select %p162, %s163, %s164
    %p168 = pneg %p162
    %p169 = scmp.eq.s32.totalorder %s21, 3
    %p170 = por %p168, %p169
    %p171 = scmp.ne.s32.totalorder %s163, %s166
    %p172 = scmp.eq.s32.totalorder %s21, 0
    %p173 = por %p171, %p172
    %p174 = scmp.ne.s32.totalorder %s163, %s166
    %p175 = scmp.eq.s32.totalorder %s26, 3
    %p176 = por %p174, %p175
    %p177 = scmp.ne.s32.totalorder %s166, %s167
    %p178 = scmp.eq.s32.totalorder %s26, 0
    %p179 = por %p177, %p178
    %p180 = scmp.ne.s32.totalorder %s166, %s167
    %p181 = scmp.eq.s32.totalorder %s27, 3
    %p182 = por %p180, %p181
    %p184 = scmp.ne.s32.totalorder %s167, %s183
    %p185 = scmp.eq.s32.totalorder %s27, 0
    %p186 = por %p184, %p185
    %s187 = ssub.s32 %s29, %s36
    %p188 = scmp.eq.s32.totalorder %s187, 0
    %s190 = sadd.s32 %s189, 1
    %s191 = scalar_select %p188, %s189, %s190
    %p194 = pneg %p188
    %p195 = scmp.eq.s32.totalorder %s21, 3
    %p196 = por %p194, %p195
    %p197 = scmp.ne.s32.totalorder %s189, %s192
    %p198 = scmp.eq.s32.totalorder %s21, 0
    %p199 = por %p197, %p198
    %p200 = scmp.ne.s32.totalorder %s189, %s192
    %p201 = scmp.eq.s32.totalorder %s26, 3
    %p202 = por %p200, %p201
    %p203 = scmp.ne.s32.totalorder %s192, %s193
    %p204 = scmp.eq.s32.totalorder %s26, 0
    %p205 = por %p203, %p204
    %p206 = scmp.ne.s32.totalorder %s192, %s193
    %p207 = scmp.eq.s32.totalorder %s27, 3
    %p208 = por %p206, %p207
    %p210 = scmp.ne.s32.totalorder %s193, %s209
    %p211 = scmp.eq.s32.totalorder %s27, 0
    %p212 = por %p210, %p211
    %s213 = ssub.s32 %s29, %s36
    %p214 = scmp.eq.s32.totalorder %s213, 0
    %s216 = sadd.s32 %s215, 1
    %s217 = scalar_select %p214, %s215, %s216
    %p220 = pneg %p214
    %p221 = scmp.eq.s32.totalorder %s21, 3
    %p222 = por %p220, %p221
    %p223 = scmp.ne.s32.totalorder %s215, %s218
    %p224 = scmp.eq.s32.totalorder %s21, 0
    %p225 = por %p223, %p224
    %p226 = scmp.ne.s32.totalorder %s215, %s218
    %p227 = scmp.eq.s32.totalorder %s26, 3
    %p228 = por %p226, %p227
    %p229 = scmp.ne.s32.totalorder %s218, %s219
    %p230 = scmp.eq.s32.totalorder %s26, 0
    %p231 = por %p229, %p230
    %p232 = scmp.ne.s32.totalorder %s218, %s219
    %p233 = scmp.eq.s32.totalorder %s27, 3
    %p234 = por %p232, %p233
    %p236 = scmp.ne.s32.totalorder %s219, %s235
    %p237 = scmp.eq.s32.totalorder %s27, 0
    %p238 = por %p236, %p237
    %s239 = ssub.s32 %s29, %s36
    %p240 = scmp.eq.s32.totalorder %s239, 0
    %s242 = sadd.s32 %s241, 1
    %s243 = scalar_select %p240, %s241, %s242
    %p246 = pneg %p240
    %p247 = scmp.eq.s32.totalorder %s21, 3
    %p248 = por %p246, %p247
    %p249 = scmp.ne.s32.totalorder %s241, %s244
    %p250 = scmp.eq.s32.totalorder %s21, 0
    %p251 = por %p249, %p250
    %p252 = scmp.ne.s32.totalorder %s241, %s244
    %p253 = scmp.eq.s32.totalorder %s26, 3
    %p254 = por %p252, %p253
    %p255 = scmp.ne.s32.totalorder %s244, %s245
    %p256 = scmp.eq.s32.totalorder %s26, 0
    %p257 = por %p255, %p256
    %p258 = scmp.ne.s32.totalorder %s244, %s245
    %p259 = scmp.eq.s32.totalorder %s27, 3
    %p260 = por %p258, %p259
    %p262 = scmp.ne.s32.totalorder %s245, %s261
    %p263 = scmp.eq.s32.totalorder %s27, 0
    %p264 = por %p262, %p263
    %s265 = ssub.s32 %s29, %s36
    %p266 = scmp.eq.s32.totalorder %s265, 0
    %s268 = sadd.s32 %s267, 1
    %s269 = scalar_select %p266, %s267, %s268
    %p272 = pneg %p266
    %p273 = scmp.eq.s32.totalorder %s21, 3
    %p274 = por %p272, %p273
    %p275 = scmp.ne.s32.totalorder %s267, %s270
    %p276 = scmp.eq.s32.totalorder %s21, 0
    %p277 = por %p275, %p276
    %p278 = scmp.ne.s32.totalorder %s267, %s270
    %p279 = scmp.eq.s32.totalorder %s26, 3
    %p280 = por %p278, %p279
    %p281 = scmp.ne.s32.totalorder %s270, %s271
    %p282 = scmp.eq.s32.totalorder %s26, 0
    %p283 = por %p281, %p282
    %p284 = scmp.ne.s32.totalorder %s270, %s271
    %p285 = scmp.eq.s32.totalorder %s27, 3
    %p286 = por %p284, %p285
    %p288 = scmp.ne.s32.totalorder %s271, %s287
    %p289 = scmp.eq.s32.totalorder %s27, 0
    %p290 = por %p288, %p289
    %s291 = ssub.s32 %s29, %s36
    %p292 = scmp.eq.s32.totalorder %s291, 0
    %s294 = sadd.s32 %s293, 1
    %s295 = scalar_select %p292, %s293, %s294
    %p298 = pneg %p292
    %p299 = scmp.eq.s32.totalorder %s21, 3
    %p300 = por %p298, %p299
    %p301 = scmp.ne.s32.totalorder %s293, %s296
    %p302 = scmp.eq.s32.totalorder %s21, 0
    %p303 = por %p301, %p302
    %p304 = scmp.ne.s32.totalorder %s293, %s296
    %p305 = scmp.eq.s32.totalorder %s26, 3
    %p306 = por %p304, %p305
    %p307 = scmp.ne.s32.totalorder %s296, %s297
    %p308 = scmp.eq.s32.totalorder %s26, 0
    %p309 = por %p307, %p308
    %p310 = scmp.ne.s32.totalorder %s296, %s297
    %p311 = scmp.eq.s32.totalorder %s27, 3
    %p312 = por %p310, %p311
    %p314 = scmp.ne.s32.totalorder %s297, %s313
    %p315 = scmp.eq.s32.totalorder %s27, 0
    %p316 = por %p314, %p315
    %s317 = ssub.s32 %s29, %s36
    %p318 = scmp.eq.s32.totalorder %s317, 0
    %s320 = sadd.s32 %s319, 1
    %s321 = scalar_select %p318, %s319, %s320
    %p324 = pneg %p318
    %p325 = scmp.eq.s32.totalorder %s21, 3
    %p326 = por %p324, %p325
    %p327 = scmp.ne.s32.totalorder %s319, %s322
    %p328 = scmp.eq.s32.totalorder %s21, 0
    %p329 = por %p327, %p328
    %p330 = scmp.ne.s32.totalorder %s319, %s322
    %p331 = scmp.eq.s32.totalorder %s26, 3
    %p332 = por %p330, %p331
    %p333 = scmp.ne.s32.totalorder %s322, %s323
    %p334 = scmp.eq.s32.totalorder %s26, 0
    %p335 = por %p333, %p334
    %p336 = scmp.ne.s32.totalorder %s322, %s323
    %p337 = scmp.eq.s32.totalorder %s27, 3
    %p338 = por %p336, %p337
    %p340 = scmp.ne.s32.totalorder %s323, %s339
    %p341 = scmp.eq.s32.totalorder %s27, 0
    %p342 = por %p340, %p341
    %s343 = ssub.s32 %s29, %s36
    %p344 = scmp.eq.s32.totalorder %s343, 0
    %s346 = sadd.s32 %s345, 1
    %s347 = scalar_select %p344, %s345, %s346
    %p350 = pneg %p344
    %p351 = scmp.eq.s32.totalorder %s21, 3
    %p352 = por %p350, %p351
    %p353 = scmp.ne.s32.totalorder %s345, %s348
    %p354 = scmp.eq.s32.totalorder %s21, 0
    %p355 = por %p353, %p354
    %p356 = scmp.ne.s32.totalorder %s345, %s348
    %p357 = scmp.eq.s32.totalorder %s26, 3
    %p358 = por %p356, %p357
    %p359 = scmp.ne.s32.totalorder %s348, %s349
    %p360 = scmp.eq.s32.totalorder %s26, 0
    %p361 = por %p359, %p360
    %p362 = scmp.ne.s32.totalorder %s348, %s349
    %p363 = scmp.eq.s32.totalorder %s27, 3
    %p364 = por %p362, %p363
    %p366 = scmp.ne.s32.totalorder %s349, %s365
    %p367 = scmp.eq.s32.totalorder %s27, 0
    %p368 = por %p366, %p367
    %s369 = ssub.s32 %s29, %s36
    %p370 = scmp.eq.s32.totalorder %s369, 0
    %s372 = sadd.s32 %s371, 1
    %s373 = scalar_select %p370, %s371, %s372
    %p376 = pneg %p370
    %p377 = scmp.eq.s32.totalorder %s21, 3
    %p378 = por %p376, %p377
    %p379 = scmp.ne.s32.totalorder %s371, %s374
    %p380 = scmp.eq.s32.totalorder %s21, 0
    %p381 = por %p379, %p380
    %p382 = scmp.ne.s32.totalorder %s371, %s374
    %p383 = scmp.eq.s32.totalorder %s26, 3
    %p384 = por %p382, %p383
    %p385 = scmp.ne.s32.totalorder %s374, %s375
    %p386 = scmp.eq.s32.totalorder %s26, 0
    %p387 = por %p385, %p386
    %p388 = scmp.ne.s32.totalorder %s374, %s375
    %p389 = scmp.eq.s32.totalorder %s27, 3
    %p390 = por %p388, %p389
    %p392 = scmp.ne.s32.totalorder %s375, %s391
    %p393 = scmp.eq.s32.totalorder %s27, 0
    %p394 = por %p392, %p393
    %s395 = ssub.s32 %s29, %s36
    %p396 = scmp.eq.s32.totalorder %s395, 0
    %s398 = sadd.s32 %s397, 1
    %s399 = scalar_select %p396, %s397, %s398
    %p402 = pneg %p396
    %p403 = scmp.eq.s32.totalorder %s21, 3
    %p404 = por %p402, %p403
    %p405 = scmp.ne.s32.totalorder %s397, %s400
    %p406 = scmp.eq.s32.totalorder %s21, 0
    %p407 = por %p405, %p406
    %p408 = scmp.ne.s32.totalorder %s397, %s400
    %p409 = scmp.eq.s32.totalorder %s26, 3
    %p410 = por %p408, %p409
    %p411 = scmp.ne.s32.totalorder %s400, %s401
    %p412 = scmp.eq.s32.totalorder %s26, 0
    %p413 = por %p411, %p412
    %p414 = scmp.ne.s32.totalorder %s400, %s401
    %p415 = scmp.eq.s32.totalorder %s27, 3
    %p416 = por %p414, %p415
    %p418 = scmp.ne.s32.totalorder %s401, %s417
    %p419 = scmp.eq.s32.totalorder %s27, 0
    %p420 = por %p418, %p419
    %s421 = ssub.s32 %s28, %s40
    %p422 = scmp.eq.s32.totalorder %s421, 0
    %s424 = sadd.s32 %s423, 1
    %s425 = scalar_select %p422, %s423, %s424
    %p428 = pneg %p422
    %p429 = scmp.eq.s32.totalorder %s21, 3
    %p430 = por %p428, %p429
    %p431 = scmp.ne.s32.totalorder %s423, %s426
    %p432 = scmp.eq.s32.totalorder %s21, 0
    %p433 = por %p431, %p432
    %p434 = scmp.ne.s32.totalorder %s423, %s426
    %p435 = scmp.eq.s32.totalorder %s26, 3
    %p436 = por %p434, %p435
    %p437 = scmp.ne.s32.totalorder %s426, %s427
    %p438 = scmp.eq.s32.totalorder %s26, 0
    %p439 = por %p437, %p438
    %p440 = scmp.ne.s32.totalorder %s426, %s427
    %p441 = scmp.eq.s32.totalorder %s27, 3
    %p442 = por %p440, %p441
    %p444 = scmp.ne.s32.totalorder %s427, %s443
    %p445 = scmp.eq.s32.totalorder %s27, 0
    %p446 = por %p444, %p445
    %p447 = scmp.le.s32.totalorder 1, %s21
    %p448 = scmp.lt.s32.totalorder %s21, 5
    %p449 = pnand %p447, %p448
    %p450 = pneg %p449
    // Predicated region
    $region9: #{_lambda_.5} parent=5 // pred_check
      _
    $region10: #{_lambda_.5} parent=5 // pred_check_branch
      %452 = sbr.rel (%p449) target = $region12
    $region11: #{_lambda_.5} parent=5 // pred_region
      %s453 = ssub.s32 %s21, 1
      // Predicated region
      $region13: #{_lambda_.5} parent=11 // pred_check
        %p454 = pneg %p80
      $region14: #{_lambda_.5} parent=11 // pred_check_branch
        %456 = sbr.rel (%p454) target = $region16
      $region15: #{_lambda_.5} parent=11 // pred_region
        _
      $region16: #{_lambda_.5} parent=11 // pred_fallthru
        _
      // Predicated region
      $region17: #{_lambda_.5} parent=11 // pred_check
        %p457 = pneg %p101
      $region18: #{_lambda_.5} parent=11 // pred_check_branch
        %459 = sbr.rel (%p457) target = $region20
      $region19: #{_lambda_.5} parent=11 // pred_region
        _
      $region20: #{_lambda_.5} parent=11 // pred_fallthru
        _
    $region12: #{_lambda_.5} parent=5 // pred_fallthru
      _
    %p460 = scmp.lt.s32.totalorder %s21, 4
    // Predicated region
    $region21: #{_lambda_.5} parent=5 // pred_check
      %p461 = pneg %p460
    $region22: #{_lambda_.5} parent=5 // pred_check_branch
      %463 = sbr.rel (%p461) target = $region24
    $region23: #{_lambda_.5} parent=5 // pred_region
      // Predicated region
      $region25: #{_lambda_.5} parent=23 // pred_check
        %p464 = pneg %p53
      $region26: #{_lambda_.5} parent=23 // pred_check_branch
        %466 = sbr.rel (%p464) target = $region28
      $region27: #{_lambda_.5} parent=23 // pred_region
        %p467 = scmp.lt.s32.totalorder %s28, 1
        %s468 = scalar_select %p467, %s28, 1
        %s469 = smul.addr %s468, 8
        %s470 = smul.addr %s469, 8
        %s471 = scalar_lea.vmem %s0, %s470
      $region28: #{_lambda_.5} parent=23 // pred_fallthru
        _
      // Predicated region
      $region29: #{_lambda_.5} parent=23 // pred_check
        %p472 = pneg %p121
      $region30: #{_lambda_.5} parent=23 // pred_check_branch
        %474 = sbr.rel (%p472) target = $region32
      $region31: #{_lambda_.5} parent=23 // pred_region
        %p475 = scmp.lt.s32.totalorder %s29, 1
        %s476 = scalar_select %p475, %s29, 1
        %s477 = scalar_lea.vmem %s3, %s476
      $region32: #{_lambda_.5} parent=23 // pred_fallthru
        _
      // Predicated region
      $region33: #{_lambda_.5} parent=23 // pred_check
        %p478 = pneg %p147
      $region34: #{_lambda_.5} parent=23 // pred_check_branch
        %480 = sbr.rel (%p478) target = $region36
      $region35: #{_lambda_.5} parent=23 // pred_region
        %p481 = scmp.lt.s32.totalorder %s29, 1
        %s482 = scalar_select %p481, %s29, 1
        %s483 = scalar_lea.vmem %s4, %s482
      $region36: #{_lambda_.5} parent=23 // pred_fallthru
        _
      // Predicated region
      $region37: #{_lambda_.5} parent=23 // pred_check
        %p484 = pneg %p173
      $region38: #{_lambda_.5} parent=23 // pred_check_branch
        %486 = sbr.rel (%p484) target = $region40
      $region39: #{_lambda_.5} parent=23 // pred_region
        %p487 = scmp.lt.s32.totalorder %s29, 1
        %s488 = scalar_select %p487, %s29, 1
        %s489 = smul.addr %s488, 2
        %s490 = smul.addr %s489, 4
        %s491 = scalar_lea.vmem %s5, %s490
      $region40: #{_lambda_.5} parent=23 // pred_fallthru
        _
      // Predicated region
      $region41: #{_lambda_.5} parent=23 // pred_check
        %p492 = pneg %p199
      $region42: #{_lambda_.5} parent=23 // pred_check_branch
        %494 = sbr.rel (%p492) target = $region44
      $region43: #{_lambda_.5} parent=23 // pred_region
        %p495 = scmp.lt.s32.totalorder %s29, 1
        %s496 = scalar_select %p495, %s29, 1
        %s497 = scalar_lea.vmem %s6, %s496
      $region44: #{_lambda_.5} parent=23 // pred_fallthru
        _
      // Predicated region
      $region45: #{_lambda_.5} parent=23 // pred_check
        %p498 = pneg %p225
      $region46: #{_lambda_.5} parent=23 // pred_check_branch
        %500 = sbr.rel (%p498) target = $region48
      $region47: #{_lambda_.5} parent=23 // pred_region
        %p501 = scmp.lt.s32.totalorder %s29, 1
        %s502 = scalar_select %p501, %s29, 1
        %s503 = smul.addr %s502, 2
        %s504 = smul.addr %s503, 4
        %s505 = scalar_lea.vmem %s7, %s504
      $region48: #{_lambda_.5} parent=23 // pred_fallthru
        _
      // Predicated region
      $region49: #{_lambda_.5} parent=23 // pred_check
        %p506 = pneg %p251
      $region50: #{_lambda_.5} parent=23 // pred_check_branch
        %508 = sbr.rel (%p506) target = $region52
      $region51: #{_lambda_.5} parent=23 // pred_region
        %p509 = scmp.lt.s32.totalorder %s29, 1
        %s510 = scalar_select %p509, %s29, 1
        %s511 = scalar_lea.vmem %s8, %s510
      $region52: #{_lambda_.5} parent=23 // pred_fallthru
        _
      // Predicated region
      $region53: #{_lambda_.5} parent=23 // pred_check
        %p512 = pneg %p277
      $region54: #{_lambda_.5} parent=23 // pred_check_branch
        %514 = sbr.rel (%p512) target = $region56
      $region55: #{_lambda_.5} parent=23 // pred_region
        %p515 = scmp.lt.s32.totalorder %s29, 1
        %s516 = scalar_select %p515, %s29, 1
        %s517 = scalar_lea.vmem %s9, %s516
      $region56: #{_lambda_.5} parent=23 // pred_fallthru
        _
      // Predicated region
      $region57: #{_lambda_.5} parent=23 // pred_check
        %p518 = pneg %p303
      $region58: #{_lambda_.5} parent=23 // pred_check_branch
        %520 = sbr.rel (%p518) target = $region60
      $region59: #{_lambda_.5} parent=23 // pred_region
        %p521 = scmp.lt.s32.totalorder %s29, 1
        %s522 = scalar_select %p521, %s29, 1
        %s523 = scalar_lea.vmem %s10, %s522
      $region60: #{_lambda_.5} parent=23 // pred_fallthru
        _
      // Predicated region
      $region61: #{_lambda_.5} parent=23 // pred_check
        %p524 = pneg %p329
      $region62: #{_lambda_.5} parent=23 // pred_check_branch
        %526 = sbr.rel (%p524) target = $region64
      $region63: #{_lambda_.5} parent=23 // pred_region
        %p527 = scmp.lt.s32.totalorder %s29, 1
        %s528 = scalar_select %p527, %s29, 1
        %s529 = smul.addr %s528, 2
        %s530 = smul.addr %s529, 4
        %s531 = scalar_lea.vmem %s11, %s530
      $region64: #{_lambda_.5} parent=23 // pred_fallthru
        _
      // Predicated region
      $region65: #{_lambda_.5} parent=23 // pred_check
        %p532 = pneg %p355
      $region66: #{_lambda_.5} parent=23 // pred_check_branch
        %534 = sbr.rel (%p532) target = $region68
      $region67: #{_lambda_.5} parent=23 // pred_region
        %p535 = scmp.lt.s32.totalorder %s29, 1
        %s536 = scalar_select %p535, %s29, 1
        %s537 = scalar_lea.vmem %s12, %s536
      $region68: #{_lambda_.5} parent=23 // pred_fallthru
        _
      // Predicated region
      $region69: #{_lambda_.5} parent=23 // pred_check
        %p538 = pneg %p381
      $region70: #{_lambda_.5} parent=23 // pred_check_branch
        %540 = sbr.rel (%p538) target = $region72
      $region71: #{_lambda_.5} parent=23 // pred_region
        %p541 = scmp.lt.s32.totalorder %s29, 1
        %s542 = scalar_select %p541, %s29, 1
        %s543 = smul.addr %s542, 8
        %s544 = smul.addr %s543, 4
        %s545 = scalar_lea.vmem %s13, %s544
      $region72: #{_lambda_.5} parent=23 // pred_fallthru
        _
      // Predicated region
      $region73: #{_lambda_.5} parent=23 // pred_check
        %p546 = pneg %p407
      $region74: #{_lambda_.5} parent=23 // pred_check_branch
        %548 = sbr.rel (%p546) target = $region76
      $region75: #{_lambda_.5} parent=23 // pred_region
        %p549 = scmp.lt.s32.totalorder %s29, 1
        %s550 = scalar_select %p549, %s29, 1
        %s551 = scalar_lea.vmem %s14, %s550
      $region76: #{_lambda_.5} parent=23 // pred_fallthru
        _
    $region24: #{_lambda_.5} parent=5 // pred_fallthru
      _
    %p552 = scmp.le.s32.totalorder 1, %s21
    %p553 = scmp.lt.s32.totalorder %s21, 5
    %p554 = pnand %p552, %p553
    %p555 = pneg %p554
    // Predicated region
    $region77: #{_lambda_.5} parent=5 // pred_check
      _
    $region78: #{_lambda_.5} parent=5 // pred_check_branch
      %557 = sbr.rel (%p554) target = $region80
    $region79: #{_lambda_.5} parent=5 // pred_region
      %s558 = ssub.s32 %s21, 1
      %p559 = scmp.lt.s32.totalorder %s30, 1
      %s560 = scalar_select %p559, %s30, 1
      %s561 = smul.addr %s560, 8
      %s562 = smul.addr %s561, 8
      %s563 = scalar_lea.vmem %s0, %s562
      %p564 = pneg %p59
      %p565 = pneg %p56
      %p566 = pneg %p80
      %p567 = pneg %p77
      %p568 = pneg %p101
      %p569 = pneg %p98
      %p570 = scmp.lt.s32.totalorder %s31, 1
      %s571 = scalar_select %p570, %s31, 1
      %s572 = scalar_lea.vmem %s3, %s571
      %p573 = pneg %p127
      %p574 = pneg %p124
      %p575 = scmp.lt.s32.totalorder %s31, 1
      %s576 = scalar_select %p575, %s31, 1
      %s577 = scalar_lea.vmem %s4, %s576
      %p578 = pneg %p153
      %p579 = pneg %p150
      %p580 = scmp.lt.s32.totalorder %s31, 1
      %s581 = scalar_select %p580, %s31, 1
      %s582 = smul.addr %s581, 2
      %s583 = smul.addr %s582, 4
      %s584 = scalar_lea.vmem %s5, %s583
      %p585 = pneg %p179
      %p586 = pneg %p176
      %p587 = scmp.lt.s32.totalorder %s31, 1
      %s588 = scalar_select %p587, %s31, 1
      %s589 = scalar_lea.vmem %s6, %s588
      %p590 = pneg %p205
      %p591 = pneg %p202
      %p592 = scmp.lt.s32.totalorder %s31, 1
      %s593 = scalar_select %p592, %s31, 1
      %s594 = smul.addr %s593, 2
      %s595 = smul.addr %s594, 4
      %s596 = scalar_lea.vmem %s7, %s595
      %p597 = pneg %p231
      %p598 = pneg %p228
      %p599 = scmp.lt.s32.totalorder %s31, 1
      %s600 = scalar_select %p599, %s31, 1
      %s601 = scalar_lea.vmem %s8, %s600
      %p602 = pneg %p257
      %p603 = pneg %p254
      %p604 = scmp.lt.s32.totalorder %s31, 1
      %s605 = scalar_select %p604, %s31, 1
      %s606 = scalar_lea.vmem %s9, %s605
      %p607 = pneg %p283
      %p608 = pneg %p280
      %p609 = scmp.lt.s32.totalorder %s31, 1
      %s610 = scalar_select %p609, %s31, 1
      %s611 = scalar_lea.vmem %s10, %s610
      %p612 = pneg %p309
      %p613 = pneg %p306
      %p614 = scmp.lt.s32.totalorder %s31, 1
      %s615 = scalar_select %p614, %s31, 1
      %s616 = smul.addr %s615, 2
      %s617 = smul.addr %s616, 4
      %s618 = scalar_lea.vmem %s11, %s617
      %p619 = pneg %p335
      %p620 = pneg %p332
      %p621 = scmp.lt.s32.totalorder %s31, 1
      %s622 = scalar_select %p621, %s31, 1
      %s623 = scalar_lea.vmem %s12, %s622
      %p624 = pneg %p361
      %p625 = pneg %p358
      %p626 = scmp.lt.s32.totalorder %s31, 1
      %s627 = scalar_select %p626, %s31, 1
      %s628 = smul.addr %s627, 8
      %s629 = smul.addr %s628, 4
      %s630 = scalar_lea.vmem %s13, %s629
      %p631 = pneg %p387
      %p632 = pneg %p384
      %p633 = scmp.lt.s32.totalorder %s31, 1
      %s634 = scalar_select %p633, %s31, 1
      %s635 = scalar_lea.vmem %s14, %s634
      %p636 = pneg %p413
      %p637 = pneg %p410
      %p638 = pneg %p439
      %p639 = pneg %p436
      %p640 = scmp.lt.s32.totalorder %s30, 1
      %s641 = scalar_select %p640, %s30, 1
      %s642 = smul.addr %s641, 8
      %s643 = smul.addr %s642, 8
      %s644 = scalar_lea.vmem %s15, %s643
      %p645 = scmp.lt.s32.totalorder %s30, 1
      %s646 = scalar_select %p645, %s30, 1
      %s647 = smul.addr %s646, 8
      %s648 = smul.addr %s647, 8
      %s649 = scalar_lea.vmem %s0, %s648
      %p650 = scmp.lt.s32.totalorder %s31, 1
      %s651 = scalar_select %p650, %s31, 1
      %s652 = scalar_lea.vmem %s3, %s651
      %p653 = scmp.lt.s32.totalorder %s31, 1
      %s654 = scalar_select %p653, %s31, 1
      %s655 = scalar_lea.vmem %s4, %s654
      %p656 = scmp.lt.s32.totalorder %s31, 1
      %s657 = scalar_select %p656, %s31, 1
      %s658 = smul.addr %s657, 2
      %s659 = smul.addr %s658, 4
      %s660 = scalar_lea.vmem %s5, %s659
      %p661 = scmp.lt.s32.totalorder %s31, 1
      %s662 = scalar_select %p661, %s31, 1
      %s663 = scalar_lea.vmem %s6, %s662
      %p664 = scmp.lt.s32.totalorder %s31, 1
      %s665 = scalar_select %p664, %s31, 1
      %s666 = smul.addr %s665, 2
      %s667 = smul.addr %s666, 4
      %s668 = scalar_lea.vmem %s7, %s667
      %p669 = scmp.lt.s32.totalorder %s31, 1
      %s670 = scalar_select %p669, %s31, 1
      %s671 = scalar_lea.vmem %s8, %s670
      %p672 = scmp.lt.s32.totalorder %s31, 1
      %s673 = scalar_select %p672, %s31, 1
      %s674 = scalar_lea.vmem %s9, %s673
      %p675 = scmp.lt.s32.totalorder %s31, 1
      %s676 = scalar_select %p675, %s31, 1
      %s677 = scalar_lea.vmem %s10, %s676
      %p678 = scmp.lt.s32.totalorder %s31, 1
      %s679 = scalar_select %p678, %s31, 1
      %s680 = smul.addr %s679, 2
      %s681 = smul.addr %s680, 4
      %s682 = scalar_lea.vmem %s11, %s681
      %p683 = scmp.lt.s32.totalorder %s31, 1
      %s684 = scalar_select %p683, %s31, 1
      %s685 = scalar_lea.vmem %s12, %s684
      %p686 = scmp.lt.s32.totalorder %s31, 1
      %s687 = scalar_select %p686, %s31, 1
      %s688 = smul.addr %s687, 8
      %s689 = smul.addr %s688, 4
      %s690 = scalar_lea.vmem %s13, %s689
      %p691 = scmp.lt.s32.totalorder %s31, 1
      %s692 = scalar_select %p691, %s31, 1
      %s693 = scalar_lea.vmem %s14, %s692
      %p694 = scmp.lt.s32.totalorder %s30, 1
      %s695 = scalar_select %p694, %s30, 1
      %s696 = smul.addr %s695, 8
      %s697 = smul.addr %s696, 8
      %s698 = scalar_lea.vmem %s15, %s697
      %p700 = scmp.eq.s32.totalorder %s31, 0
      // Predicated region
      $region81: #{_lambda_.5} parent=79 // pred_check
        %p701 = pneg %p700
      $region82: #{_lambda_.5} parent=79 // pred_check_branch
        %703 = sbr.rel (%p701) target = $region84
      $region83: #{_lambda_.5} parent=79 // pred_region
        %v704 = vld [vmem:[%s649] sm:$0xff]
        %v705 = vld [vmem:[%s649 + $0x8] sm:$0xff]
        %v706 = vld [vmem:[%s649 + $0x10] sm:$0xff]
        %v707 = vld [vmem:[%s649 + $0x18] sm:$0xff]
        %v708 = vld [vmem:[%s649 + $0x20] sm:$0xff]
        %v709 = vld [vmem:[%s649 + $0x28] sm:$0xff]
        %v710 = vld [vmem:[%s649 + $0x30] sm:$0xff]
        %v711 = vld [vmem:[%s649 + $0x38] sm:$0xff]
        %v712 = vpack.c.bf16 %v705, %v704
        %v713 = vpack.c.bf16 %v707, %v706
        %v714 = vpack.c.bf16 %v709, %v708
        %v715 = vpack.c.bf16 %v711, %v710
        %v716 = vld [vmem:[%s1] sm:$0xf]
        %v717 = vld [vmem:[%s1 + $0x4] sm:$0xf]
        %v718 = vld [vmem:[%s1 + $0x8] sm:$0xf]
        %v719 = vld [vmem:[%s1 + $0xc] sm:$0xf]
        %v720 = vld [vmem:[%s1 + $0x10] sm:$0xf]
        %v721 = vld [vmem:[%s1 + $0x14] sm:$0xf]
        %v722 = vld [vmem:[%s2] sm:$0x1]
        %v724 = vlaneseq
        %v725 = vshrl.u32 %v724, 7
        %v726 = vsub.s32 0, %v725
        %v727 = vrot.slane %v722, %v726
        %v735 = vunpack.c.l.b16 %v716
        %v736 = vunpack.c.l.b16 %v717
        %v737 = vunpack.c.l.b16 %v718
        %v738 = vunpack.c.l.b16 %v719
        %v739 = vunpack.c.l.b16 %v720
        %v740 = vunpack.c.l.b16 %v721
        %v741 = vpack.c.b16 %v736, %v735
        %v742 = vpack.c.b16 %v738, %v737
        %v743 = vpack.c.b16 %v740, %v739
        %vm747 = vcmask 392192
        %v749 = vsel %vm747, %v712, 0
        %v752 = vsel %vm747, %v713, 0
        %v755 = vsel %vm747, %v714, 0
        %v758 = vsel %vm747, %v715, 0
        %760 = vmatprep.subr.bf16.mxu0 0
        %761 = vmatpush1.bf16.msra.mxu0 0
        %762 = vmatprep.subr.bf16.mxu0 0
        %763 = vmatpush1.bf16.msra.mxu0 0
        %764 = vmatprep.subr.bf16.mxu0 0
        %765 = vmatpush1.bf16.msra.mxu0 0
        %766 = vmatprep.subr.bf16.mxu0 0
        %767 = vmatpush1.bf16.msra.mxu0 0
        %768 = vmatprep.subr.bf16.mxu0 0
        %769 = vmatpush1.bf16.msra.mxu0 0
        %770 = vmatprep.subr.bf16.mxu0 0
        %771 = vmatpush1.bf16.msra.mxu0 %v743
        %772 = vmatprep.subr.bf16.mxu0 0
        %773 = vmatpush1.bf16.msra.mxu0 %v742
        %774 = vmatprep.subr.bf16.mxu0 0
        %775 = vmatpush1.bf16.msra.mxu0 %v741
        %776 = vmatprep.subr.bf16.mxu0 0
        %777 = vmatpush2.bf16.msra.mxu0 0
        %778 = vmatprep.subr.bf16.mxu0 0
        %779 = vmatpush2.bf16.msra.mxu0 0
        %780 = vmatprep.subr.bf16.mxu0 0
        %781 = vmatpush2.bf16.msra.mxu0 0
        %782 = vmatprep.subr.bf16.mxu0 0
        %783 = vmatpush2.bf16.msra.mxu0 0
        %784 = vmatprep.subr.bf16.mxu0 0
        %785 = vmatpush2.bf16.msra.mxu0 0
        %786 = vmatprep.subr.bf16.mxu0 0
        %787 = vmatpush2.bf16.msra.mxu0 0
        %788 = vmatprep.subr.bf16.mxu0 0
        %789 = vmatpush2.bf16.msra.mxu0 0
        %790 = vmatprep.subr.bf16.mxu0 0
        %791 = vmatpush2.bf16.msra.mxu0 0
        %792 = vmatprep.mubr.bf16.mxu0 0
        %793 = vmatmul.mubr.bf16.gmra.mxu0 %v749
        %v794 = vpop.f32.mrf.mxu0
        %v795 = vadd.f32 %v727, %v794
        %v796 = vpop.f32.mrf.mxu0
        %v797 = vpop.f32.mrf.mxu0
        %v798 = vadd.f32 %v727, %v797
        %v799 = vpop.f32.mrf.mxu0
        %800 = vmatprep.mubr.bf16.mxu0 0
        %801 = vmatmul.mubr.bf16.gmra.mxu0 %v752
        %v802 = vpop.f32.mrf.mxu0
        %v803 = vadd.f32 %v727, %v802
        %v804 = vpop.f32.mrf.mxu0
        %v805 = vpop.f32.mrf.mxu0
        %v806 = vadd.f32 %v727, %v805
        %v807 = vpop.f32.mrf.mxu0
        %808 = vmatprep.mubr.bf16.mxu0 0
        %809 = vmatmul.mubr.bf16.gmra.mxu0 %v755
        %v810 = vpop.f32.mrf.mxu0
        %v811 = vadd.f32 %v727, %v810
        %v812 = vpop.f32.mrf.mxu0
        %v813 = vpop.f32.mrf.mxu0
        %v814 = vadd.f32 %v727, %v813
        %v815 = vpop.f32.mrf.mxu0
        %816 = vmatprep.mubr.bf16.mxu0 0
        %817 = vmatmul.mubr.bf16.gmra.mxu0 %v758
        %v818 = vpop.f32.mrf.mxu0
        %v819 = vadd.f32 %v727, %v818
        %v820 = vpop.f32.mrf.mxu0
        %v821 = vpop.f32.mrf.mxu0
        %v822 = vadd.f32 %v727, %v821
        %v823 = vpop.f32.mrf.mxu0
        %824 = vdwg.mxu0
        %vm825 = vcmask 130048
        %826 = vst.msk [vmem:[%s698] sm:$0xff] %vm825, %v795
        %827 = vst.msk [vmem:[%s698 + $0x8] sm:$0xff] %vm825, %v798
        %828 = vst.msk [vmem:[%s698 + $0x10] sm:$0xff] %vm825, %v803
        %829 = vst.msk [vmem:[%s698 + $0x18] sm:$0xff] %vm825, %v806
        %830 = vst.msk [vmem:[%s698 + $0x20] sm:$0xff] %vm825, %v811
        %831 = vst.msk [vmem:[%s698 + $0x28] sm:$0xff] %vm825, %v814
        %832 = vst.msk [vmem:[%s698 + $0x30] sm:$0xff] %vm825, %v819
        %833 = vst.msk [vmem:[%s698 + $0x38] sm:$0xff] %vm825, %v822
      $region84: #{_lambda_.5} parent=79 // pred_fallthru
        _
      %v834 = vld [vmem:[%s698] sm:$0xff]
      %v835 = vld [vmem:[%s698 + $0x8] sm:$0xff]
      %v836 = vld [vmem:[%s698 + $0x10] sm:$0xff]
      %v837 = vld [vmem:[%s698 + $0x18] sm:$0xff]
      %v838 = vld [vmem:[%s698 + $0x20] sm:$0xff]
      %v839 = vld [vmem:[%s698 + $0x28] sm:$0xff]
      %v840 = vld [vmem:[%s698 + $0x30] sm:$0xff]
      %v841 = vld [vmem:[%s698 + $0x38] sm:$0xff]
      %v842 = vld [vmem:[%s652] sm:$0x1]
      %v843 = vld [vmem:[%s655] sm:$0x1]
      %vm844 = vcmask 130048
      %v845 = vsel %vm844, %v834, 0.0
      %846 = vadd.xlane.f32.xlu0 %v845
      %v847 = vpop.xlane.xlu0 %846
      %v848 = vsel %vm844, %v835, 0.0
      %849 = vadd.xlane.f32.xlu0 %v848
      %v850 = vpop.xlane.xlu0 %849
      %v851 = vsel %vm844, %v836, 0.0
      %852 = vadd.xlane.f32.xlu0 %v851
      %v853 = vpop.xlane.xlu0 %852
      %v854 = vsel %vm844, %v837, 0.0
      %855 = vadd.xlane.f32.xlu0 %v854
      %v856 = vpop.xlane.xlu0 %855
      %v857 = vsel %vm844, %v838, 0.0
      %858 = vadd.xlane.f32.xlu0 %v857
      %v859 = vpop.xlane.xlu0 %858
      %v860 = vsel %vm844, %v839, 0.0
      %861 = vadd.xlane.f32.xlu0 %v860
      %v862 = vpop.xlane.xlu0 %861
      %v863 = vsel %vm844, %v840, 0.0
      %864 = vadd.xlane.f32.xlu0 %v863
      %v865 = vpop.xlane.xlu0 %864
      %v866 = vsel %vm844, %v841, 0.0
      %867 = vadd.xlane.f32.xlu0 %v866
      %v868 = vpop.xlane.xlu0 %867
      %v869 = vrcp.pop 16.0
      %v870 = vmul.f32 %v847, %v869
      %v871 = vmul.f32 %v850, %v869
      %v872 = vmul.f32 %v853, %v869
      %v873 = vmul.f32 %v856, %v869
      %v874 = vmul.f32 %v859, %v869
      %v875 = vmul.f32 %v862, %v869
      %v876 = vmul.f32 %v865, %v869
      %v877 = vmul.f32 %v868, %v869
      %v878 = vsub.f32 %v834, %v870
      %v879 = vsub.f32 %v835, %v871
      %v880 = vsub.f32 %v836, %v872
      %v881 = vsub.f32 %v837, %v873
      %v882 = vsub.f32 %v838, %v874
      %v883 = vsub.f32 %v839, %v875
      %v884 = vsub.f32 %v840, %v876
      %v885 = vsub.f32 %v841, %v877
      %v886 = vmul.f32 %v878, %v878
      %v887 = vmul.f32 %v879, %v879
      %v888 = vmul.f32 %v880, %v880
      %v889 = vmul.f32 %v881, %v881
      %v890 = vmul.f32 %v882, %v882
      %v891 = vmul.f32 %v883, %v883
      %v892 = vmul.f32 %v884, %v884
      %v893 = vmul.f32 %v885, %v885
      %v894 = vsel %vm844, %v886, 0.0
      %895 = vadd.xlane.f32.xlu0 %v894
      %v896 = vpop.xlane.xlu0 %895
      %v897 = vsel %vm844, %v887, 0.0
      %898 = vadd.xlane.f32.xlu0 %v897
      %v899 = vpop.xlane.xlu0 %898
      %v900 = vsel %vm844, %v888, 0.0
      %901 = vadd.xlane.f32.xlu0 %v900
      %v902 = vpop.xlane.xlu0 %901
      %v903 = vsel %vm844, %v889, 0.0
      %904 = vadd.xlane.f32.xlu0 %v903
      %v905 = vpop.xlane.xlu0 %904
      %v906 = vsel %vm844, %v890, 0.0
      %907 = vadd.xlane.f32.xlu0 %v906
      %v908 = vpop.xlane.xlu0 %907
      %v909 = vsel %vm844, %v891, 0.0
      %910 = vadd.xlane.f32.xlu0 %v909
      %v911 = vpop.xlane.xlu0 %910
      %v912 = vsel %vm844, %v892, 0.0
      %913 = vadd.xlane.f32.xlu0 %v912
      %v914 = vpop.xlane.xlu0 %913
      %v915 = vsel %vm844, %v893, 0.0
      %916 = vadd.xlane.f32.xlu0 %v915
      %v917 = vpop.xlane.xlu0 %916
      %v918 = vmul.f32 %v896, %v869
      %v919 = vmul.f32 %v899, %v869
      %v920 = vmul.f32 %v902, %v869
      %v921 = vmul.f32 %v905, %v869
      %v922 = vmul.f32 %v908, %v869
      %v923 = vmul.f32 %v911, %v869
      %v924 = vmul.f32 %v914, %v869
      %v925 = vmul.f32 %v917, %v869
      %v926 = vadd.f32 %v918, 1e-05
      %v927 = vadd.f32 %v919, 1e-05
      %v928 = vadd.f32 %v920, 1e-05
      %v929 = vadd.f32 %v921, 1e-05
      %v930 = vadd.f32 %v922, 1e-05
      %v931 = vadd.f32 %v923, 1e-05
      %v932 = vadd.f32 %v924, 1e-05
      %v933 = vadd.f32 %v925, 1e-05
      %v934 = vrsqrt.pop %v926
      %v935 = vrsqrt.pop %v927
      %v936 = vrsqrt.pop %v928
      %v937 = vrsqrt.pop %v929
      %v938 = vrsqrt.pop %v930
      %v939 = vrsqrt.pop %v931
      %v940 = vrsqrt.pop %v932
      %v941 = vrsqrt.pop %v933
      %v942 = vmul.f32 %v878, %v934
      %v943 = vmul.f32 %v879, %v935
      %v944 = vmul.f32 %v880, %v936
      %v945 = vmul.f32 %v881, %v937
      %v946 = vmul.f32 %v882, %v938
      %v947 = vmul.f32 %v883, %v939
      %v948 = vmul.f32 %v884, %v940
      %v949 = vmul.f32 %v885, %v941
      %v951 = vlaneseq
      %v952 = vshrl.u32 %v951, 7
      %v953 = vsub.s32 0, %v952
      %v954 = vrot.slane %v842, %v953
      %v956 = vmul.f32 %v942, %v954
      %v957 = vmul.f32 %v943, %v954
      %v958 = vmul.f32 %v944, %v954
      %v959 = vmul.f32 %v945, %v954
      %v960 = vmul.f32 %v946, %v954
      %v961 = vmul.f32 %v947, %v954
      %v962 = vmul.f32 %v948, %v954
      %v963 = vmul.f32 %v949, %v954
      %v965 = vlaneseq
      %v966 = vshrl.u32 %v965, 7
      %v967 = vsub.s32 0, %v966
      %v968 = vrot.slane %v843, %v967
      %v970 = vadd.f32 %v956, %v968
      %v971 = vadd.f32 %v957, %v968
      %v972 = vadd.f32 %v958, %v968
      %v973 = vadd.f32 %v959, %v968
      %v974 = vadd.f32 %v960, %v968
      %v975 = vadd.f32 %v961, %v968
      %v976 = vadd.f32 %v962, %v968
      %v977 = vadd.f32 %v963, %v968
      %v978 = vpack.c.bf16 %v971, %v970
      %v979 = vpack.c.bf16 %v973, %v972
      %v980 = vpack.c.bf16 %v975, %v974
      %v981 = vpack.c.bf16 %v977, %v976
      %v982 = vld [vmem:[%s660] sm:$0xf]
      %v983 = vld [vmem:[%s660 + $0x4] sm:$0xf]
      %v984 = vld [vmem:[%s663] sm:$0x1]
      %v986 = vlaneseq
      %v987 = vshrl.u32 %v986, 7
      %v988 = vsub.s32 0, %v987
      %v989 = vrot.slane %v984, %v988
      %v993 = vunpack.c.l.b16 %v982
      %v994 = vunpack.c.l.b16 %v983
      %v995 = vpack.c.b16 %v994, %v993
      %v998 = vsel %vm844, %v978, 0
      %v1001 = vsel %vm844, %v979, 0
      %v1004 = vsel %vm844, %v980, 0
      %v1007 = vsel %vm844, %v981, 0
      %1009 = vmatprep.subr.bf16.mxu0 0
      %1010 = vmatpush1.bf16.msra.mxu0 0
      %1011 = vmatprep.subr.bf16.mxu0 0
      %1012 = vmatpush1.bf16.msra.mxu0 0
      %1013 = vmatprep.subr.bf16.mxu0 0
      %1014 = vmatpush1.bf16.msra.mxu0 0
      %1015 = vmatprep.subr.bf16.mxu0 0
      %1016 = vmatpush1.bf16.msra.mxu0 0
      %1017 = vmatprep.subr.bf16.mxu0 0
      %1018 = vmatpush1.bf16.msra.mxu0 0
      %1019 = vmatprep.subr.bf16.mxu0 0
      %1020 = vmatpush1.bf16.msra.mxu0 0
      %1021 = vmatprep.subr.bf16.mxu0 0
      %1022 = vmatpush1.bf16.msra.mxu0 0
      %1023 = vmatprep.subr.bf16.mxu0 0
      %1024 = vmatpush1.bf16.msra.mxu0 %v995
      %1025 = vmatprep.subr.bf16.mxu0 0
      %1026 = vmatpush2.bf16.msra.mxu0 0
      %1027 = vmatprep.subr.bf16.mxu0 0
      %1028 = vmatpush2.bf16.msra.mxu0 0
      %1029 = vmatprep.subr.bf16.mxu0 0
      %1030 = vmatpush2.bf16.msra.mxu0 0
      %1031 = vmatprep.subr.bf16.mxu0 0
      %1032 = vmatpush2.bf16.msra.mxu0 0
      %1033 = vmatprep.subr.bf16.mxu0 0
      %1034 = vmatpush2.bf16.msra.mxu0 0
      %1035 = vmatprep.subr.bf16.mxu0 0
      %1036 = vmatpush2.bf16.msra.mxu0 0
      %1037 = vmatprep.subr.bf16.mxu0 0
      %1038 = vmatpush2.bf16.msra.mxu0 0
      %1039 = vmatprep.subr.bf16.mxu0 0
      %1040 = vmatpush2.bf16.msra.mxu0 0
      %1041 = vmatprep.mubr.bf16.mxu0 0
      %1042 = vmatmul.mubr.bf16.gmra.mxu0 %v998
      %v1043 = vpop.f32.mrf.mxu0
      %v1044 = vadd.f32 %v989, %v1043
      %v1045 = vpop.f32.mrf.mxu0
      %v1046 = vpop.f32.mrf.mxu0
      %v1047 = vadd.f32 %v989, %v1046
      %v1048 = vpop.f32.mrf.mxu0
      %1049 = vmatprep.mubr.bf16.mxu0 0
      %1050 = vmatmul.mubr.bf16.gmra.mxu0 %v1001
      %v1051 = vpop.f32.mrf.mxu0
      %v1052 = vadd.f32 %v989, %v1051
      %v1053 = vpop.f32.mrf.mxu0
      %v1054 = vpop.f32.mrf.mxu0
      %v1055 = vadd.f32 %v989, %v1054
      %v1056 = vpop.f32.mrf.mxu0
      %1057 = vmatprep.mubr.bf16.mxu0 0
      %1058 = vmatmul.mubr.bf16.gmra.mxu0 %v1004
      %v1059 = vpop.f32.mrf.mxu0
      %v1060 = vadd.f32 %v989, %v1059
      %v1061 = vpop.f32.mrf.mxu0
      %v1062 = vpop.f32.mrf.mxu0
      %v1063 = vadd.f32 %v989, %v1062
      %v1064 = vpop.f32.mrf.mxu0
      %1065 = vmatprep.mubr.bf16.mxu0 0
      %1066 = vmatmul.mubr.bf16.gmra.mxu0 %v1007
      %v1067 = vpop.f32.mrf.mxu0
      %v1068 = vadd.f32 %v989, %v1067
      %v1069 = vpop.f32.mrf.mxu0
      %v1070 = vpop.f32.mrf.mxu0
      %v1071 = vadd.f32 %v989, %v1070
      %v1072 = vpop.f32.mrf.mxu0
      %1073 = vdwg.mxu0
      %v1074 = vpack.c.bf16 %v1047, %v1044
      %v1075 = vpack.c.bf16 %v1055, %v1052
      %v1076 = vpack.c.bf16 %v1063, %v1060
      %v1077 = vpack.c.bf16 %v1071, %v1068
      %1082 = vrot.lane.b32.xlu0 %v1074, 112
      %v1083 = vpop.permute.xlu0 %1082
      %1084 = vrot.lane.b32.xlu0 %v1075, 112
      %v1085 = vpop.permute.xlu0 %1084
      %1086 = vrot.lane.b32.xlu0 %v1076, 112
      %v1087 = vpop.permute.xlu0 %1086
      %1088 = vrot.lane.b32.xlu0 %v1077, 112
      %v1089 = vpop.permute.xlu0 %1088
      %v1091 = vsel %vm844, %v1074, 0
      %v1094 = vsel %vm844, %v1075, 0
      %v1097 = vsel %vm844, %v1076, 0
      %v1100 = vsel %vm844, %v1077, 0
      %v1103 = vsel %vm844, %v1083, 0
      %v1106 = vsel %vm844, %v1085, 0
      %v1109 = vsel %vm844, %v1087, 0
      %v1112 = vsel %vm844, %v1089, 0
      %1114 = vmatprep.subr.bf16.mxu0 0
      %1115 = vmatpush1.bf16.xpose.msra.mxu0 0
      %1116 = vmatprep.subr.bf16.mxu0 0
      %1117 = vmatpush1.bf16.xpose.msra.mxu0 0
      %1118 = vmatprep.subr.bf16.mxu0 0
      %1119 = vmatpush1.bf16.xpose.msra.mxu0 0
      %1120 = vmatprep.subr.bf16.mxu0 0
      %1121 = vmatpush1.bf16.xpose.msra.mxu0 0
      %1122 = vmatprep.subr.bf16.mxu0 0
      %1123 = vmatpush1.bf16.xpose.msra.mxu0 %v1112
      %1124 = vmatprep.subr.bf16.mxu0 0
      %1125 = vmatpush1.bf16.xpose.msra.mxu0 %v1109
      %1126 = vmatprep.subr.bf16.mxu0 0
      %1127 = vmatpush1.bf16.xpose.msra.mxu0 %v1106
      %1128 = vmatprep.subr.bf16.mxu0 0
      %1129 = vmatpush1.bf16.xpose.msra.mxu0 %v1103
      %1130 = vmatprep.subr.bf16.mxu0 0
      %1131 = vmatpush2.bf16.xpose.msra.mxu0 0
      %1132 = vmatprep.subr.bf16.mxu0 0
      %1133 = vmatpush2.bf16.xpose.msra.mxu0 0
      %1134 = vmatprep.subr.bf16.mxu0 0
      %1135 = vmatpush2.bf16.xpose.msra.mxu0 0
      %1136 = vmatprep.subr.bf16.mxu0 0
      %1137 = vmatpush2.bf16.xpose.msra.mxu0 0
      %1138 = vmatprep.subr.bf16.mxu0 0
      %1139 = vmatpush2.bf16.xpose.msra.mxu0 0
      %1140 = vmatprep.subr.bf16.mxu0 0
      %1141 = vmatpush2.bf16.xpose.msra.mxu0 0
      %1142 = vmatprep.subr.bf16.mxu0 0
      %1143 = vmatpush2.bf16.xpose.msra.mxu0 0
      %1144 = vmatprep.subr.bf16.mxu0 0
      %1145 = vmatpush2.bf16.xpose.msra.mxu0 0
      %1146 = vmatprep.mubr.bf16.mxu0 0
      %1147 = vmatmul.mubr.bf16.gmra.mxu0 %v1091
      %v1148 = vpop.f32.mrf.mxu0
      %v1149 = vadd.f32 0.0, %v1148
      %v1150 = vpop.f32.mrf.mxu0
      %v1151 = vpop.f32.mrf.mxu0
      %v1152 = vadd.f32 0.0, %v1151
      %v1153 = vpop.f32.mrf.mxu0
      %1154 = vmatprep.mubr.bf16.mxu0 0
      %1155 = vmatmul.mubr.bf16.gmra.mxu0 %v1094
      %v1156 = vpop.f32.mrf.mxu0
      %v1157 = vadd.f32 0.0, %v1156
      %v1158 = vpop.f32.mrf.mxu0
      %v1159 = vpop.f32.mrf.mxu0
      %v1160 = vadd.f32 0.0, %v1159
      %v1161 = vpop.f32.mrf.mxu0
      %1162 = vmatprep.mubr.bf16.mxu0 0
      %1163 = vmatmul.mubr.bf16.gmra.mxu0 %v1097
      %v1164 = vpop.f32.mrf.mxu0
      %v1165 = vadd.f32 0.0, %v1164
      %v1166 = vpop.f32.mrf.mxu0
      %v1167 = vpop.f32.mrf.mxu0
      %v1168 = vadd.f32 0.0, %v1167
      %v1169 = vpop.f32.mrf.mxu0
      %1170 = vmatprep.mubr.bf16.mxu0 0
      %1171 = vmatmul.mubr.bf16.gmra.mxu0 %v1100
      %v1172 = vpop.f32.mrf.mxu0
      %v1173 = vadd.f32 0.0, %v1172
      %v1174 = vpop.f32.mrf.mxu0
      %v1175 = vpop.f32.mrf.mxu0
      %v1176 = vadd.f32 0.0, %v1175
      %v1177 = vpop.f32.mrf.mxu0
      %1178 = vdwg.mxu0
      %vm1179 = vcmask 523264
      %v1180 = vsel %vm1179, %v1149, -inf
      %1181 = vmax.xlane.f32.xlu0 %v1180
      %v1182 = vpop.xlane.xlu0 %1181
      %v1183 = vsel %vm1179, %v1152, -inf
      %1184 = vmax.xlane.f32.xlu0 %v1183
      %v1185 = vpop.xlane.xlu0 %1184
      %v1186 = vsel %vm1179, %v1157, -inf
      %1187 = vmax.xlane.f32.xlu0 %v1186
      %v1188 = vpop.xlane.xlu0 %1187
      %v1189 = vsel %vm1179, %v1160, -inf
      %1190 = vmax.xlane.f32.xlu0 %v1189
      %v1191 = vpop.xlane.xlu0 %1190
      %v1192 = vsel %vm1179, %v1165, -inf
      %1193 = vmax.xlane.f32.xlu0 %v1192
      %v1194 = vpop.xlane.xlu0 %1193
      %v1195 = vsel %vm1179, %v1168, -inf
      %1196 = vmax.xlane.f32.xlu0 %v1195
      %v1197 = vpop.xlane.xlu0 %1196
      %v1198 = vsel %vm1179, %v1173, -inf
      %1199 = vmax.xlane.f32.xlu0 %v1198
      %v1200 = vpop.xlane.xlu0 %1199
      %v1201 = vsel %vm1179, %v1176, -inf
      %1202 = vmax.xlane.f32.xlu0 %v1201
      %v1203 = vpop.xlane.xlu0 %1202
      %v1204 = vsub.f32 %v1149, %v1182
      %v1205 = vsub.f32 %v1152, %v1185
      %v1206 = vsub.f32 %v1157, %v1188
      %v1207 = vsub.f32 %v1160, %v1191
      %v1208 = vsub.f32 %v1165, %v1194
      %v1209 = vsub.f32 %v1168, %v1197
      %v1210 = vsub.f32 %v1173, %v1200
      %v1211 = vsub.f32 %v1176, %v1203
      %v1212 = vmul.f32 %v1204, 1.442695
      %v1213 = vpow.pop %v1212
      %v1214 = vmul.f32 %v1205, 1.442695
      %v1215 = vpow.pop %v1214
      %v1216 = vmul.f32 %v1206, 1.442695
      %v1217 = vpow.pop %v1216
      %v1218 = vmul.f32 %v1207, 1.442695
      %v1219 = vpow.pop %v1218
      %v1220 = vmul.f32 %v1208, 1.442695
      %v1221 = vpow.pop %v1220
      %v1222 = vmul.f32 %v1209, 1.442695
      %v1223 = vpow.pop %v1222
      %v1224 = vmul.f32 %v1210, 1.442695
      %v1225 = vpow.pop %v1224
      %v1226 = vmul.f32 %v1211, 1.442695
      %v1227 = vpow.pop %v1226
      %v1228 = vsel %vm1179, %v1213, 0.0
      %1229 = vadd.xlane.f32.xlu0 %v1228
      %v1230 = vpop.xlane.xlu0 %1229
      %v1231 = vsel %vm1179, %v1215, 0.0
      %1232 = vadd.xlane.f32.xlu0 %v1231
      %v1233 = vpop.xlane.xlu0 %1232
      %v1234 = vsel %vm1179, %v1217, 0.0
      %1235 = vadd.xlane.f32.xlu0 %v1234
      %v1236 = vpop.xlane.xlu0 %1235
      %v1237 = vsel %vm1179, %v1219, 0.0
      %1238 = vadd.xlane.f32.xlu0 %v1237
      %v1239 = vpop.xlane.xlu0 %1238
      %v1240 = vsel %vm1179, %v1221, 0.0
      %1241 = vadd.xlane.f32.xlu0 %v1240
      %v1242 = vpop.xlane.xlu0 %1241
      %v1243 = vsel %vm1179, %v1223, 0.0
      %1244 = vadd.xlane.f32.xlu0 %v1243
      %v1245 = vpop.xlane.xlu0 %1244
      %v1246 = vsel %vm1179, %v1225, 0.0
      %1247 = vadd.xlane.f32.xlu0 %v1246
      %v1248 = vpop.xlane.xlu0 %1247
      %v1249 = vsel %vm1179, %v1227, 0.0
      %1250 = vadd.xlane.f32.xlu0 %v1249
      %v1251 = vpop.xlane.xlu0 %1250
      %v1252 = vrcp.pop %v1230
      %v1253 = vrcp.pop %v1233
      %v1254 = vrcp.pop %v1236
      %v1255 = vrcp.pop %v1239
      %v1256 = vrcp.pop %v1242
      %v1257 = vrcp.pop %v1245
      %v1258 = vrcp.pop %v1248
      %v1259 = vrcp.pop %v1251
      %v1260 = vmul.f32 %v1213, %v1252
      %v1261 = vmul.f32 %v1215, %v1253
      %v1262 = vmul.f32 %v1217, %v1254
      %v1263 = vmul.f32 %v1219, %v1255
      %v1264 = vmul.f32 %v1221, %v1256
      %v1265 = vmul.f32 %v1223, %v1257
      %v1266 = vmul.f32 %v1225, %v1258
      %v1267 = vmul.f32 %v1227, %v1259
      %v1268 = vpack.c.bf16 %v1261, %v1260
      %v1269 = vpack.c.bf16 %v1263, %v1262
      %v1270 = vpack.c.bf16 %v1265, %v1264
      %v1271 = vpack.c.bf16 %v1267, %v1266
      %1272 = vrot.lane.b32.xlu0 %v1074, 96
      %v1273 = vpop.permute.xlu0 %1272
      %1274 = vrot.lane.b32.xlu0 %v1075, 96
      %v1275 = vpop.permute.xlu0 %1274
      %1276 = vrot.lane.b32.xlu0 %v1076, 96
      %v1277 = vpop.permute.xlu0 %1276
      %1278 = vrot.lane.b32.xlu0 %v1077, 96
      %v1279 = vpop.permute.xlu0 %1278
      %v1285 = vsel %vm1179, %v1268, 0
      %v1288 = vsel %vm1179, %v1269, 0
      %v1291 = vsel %vm1179, %v1270, 0
      %v1294 = vsel %vm1179, %v1271, 0
      %1296 = vmatprep.subr.bf16.mxu0 0
      %1297 = vmatpush1.bf16.msra.mxu0 0
      %1298 = vmatprep.subr.bf16.mxu0 0
      %1299 = vmatpush1.bf16.msra.mxu0 0
      %1300 = vmatprep.subr.bf16.mxu0 0
      %1301 = vmatpush1.bf16.msra.mxu0 0
      %1302 = vmatprep.subr.bf16.mxu0 0
      %1303 = vmatpush1.bf16.msra.mxu0 0
      %1304 = vmatprep.subr.bf16.mxu0 0
      %1305 = vmatpush1.bf16.msra.mxu0 %v1279
      %1306 = vmatprep.subr.bf16.mxu0 0
      %1307 = vmatpush1.bf16.msra.mxu0 %v1277
      %1308 = vmatprep.subr.bf16.mxu0 0
      %1309 = vmatpush1.bf16.msra.mxu0 %v1275
      %1310 = vmatprep.subr.bf16.mxu0 0
      %1311 = vmatpush1.bf16.msra.mxu0 %v1273
      %1312 = vmatprep.subr.bf16.mxu0 0
      %1313 = vmatpush2.bf16.msra.mxu0 0
      %1314 = vmatprep.subr.bf16.mxu0 0
      %1315 = vmatpush2.bf16.msra.mxu0 0
      %1316 = vmatprep.subr.bf16.mxu0 0
      %1317 = vmatpush2.bf16.msra.mxu0 0
      %1318 = vmatprep.subr.bf16.mxu0 0
      %1319 = vmatpush2.bf16.msra.mxu0 0
      %1320 = vmatprep.subr.bf16.mxu0 0
      %1321 = vmatpush2.bf16.msra.mxu0 0
      %1322 = vmatprep.subr.bf16.mxu0 0
      %1323 = vmatpush2.bf16.msra.mxu0 0
      %1324 = vmatprep.subr.bf16.mxu0 0
      %1325 = vmatpush2.bf16.msra.mxu0 0
      %1326 = vmatprep.subr.bf16.mxu0 0
      %1327 = vmatpush2.bf16.msra.mxu0 0
      %1328 = vmatprep.mubr.bf16.mxu0 0
      %1329 = vmatmul.mubr.bf16.gmra.mxu0 %v1285
      %v1330 = vpop.f32.mrf.mxu0
      %v1331 = vadd.f32 0.0, %v1330
      %v1332 = vpop.f32.mrf.mxu0
      %v1333 = vpop.f32.mrf.mxu0
      %v1334 = vadd.f32 0.0, %v1333
      %v1335 = vpop.f32.mrf.mxu0
      %1336 = vmatprep.mubr.bf16.mxu0 0
      %1337 = vmatmul.mubr.bf16.gmra.mxu0 %v1288
      %v1338 = vpop.f32.mrf.mxu0
      %v1339 = vadd.f32 0.0, %v1338
      %v1340 = vpop.f32.mrf.mxu0
      %v1341 = vpop.f32.mrf.mxu0
      %v1342 = vadd.f32 0.0, %v1341
      %v1343 = vpop.f32.mrf.mxu0
      %1344 = vmatprep.mubr.bf16.mxu0 0
      %1345 = vmatmul.mubr.bf16.gmra.mxu0 %v1291
      %v1346 = vpop.f32.mrf.mxu0
      %v1347 = vadd.f32 0.0, %v1346
      %v1348 = vpop.f32.mrf.mxu0
      %v1349 = vpop.f32.mrf.mxu0
      %v1350 = vadd.f32 0.0, %v1349
      %v1351 = vpop.f32.mrf.mxu0
      %1352 = vmatprep.mubr.bf16.mxu0 0
      %1353 = vmatmul.mubr.bf16.gmra.mxu0 %v1294
      %v1354 = vpop.f32.mrf.mxu0
      %v1355 = vadd.f32 0.0, %v1354
      %v1356 = vpop.f32.mrf.mxu0
      %v1357 = vpop.f32.mrf.mxu0
      %v1358 = vadd.f32 0.0, %v1357
      %v1359 = vpop.f32.mrf.mxu0
      %1360 = vdwg.mxu0
      %v1361 = vpack.c.bf16 %v1334, %v1331
      %v1362 = vpack.c.bf16 %v1342, %v1339
      %v1363 = vpack.c.bf16 %v1350, %v1347
      %v1364 = vpack.c.bf16 %v1358, %v1355
      %v1365 = vld [vmem:[%s668] sm:$0xf]
      %v1366 = vld [vmem:[%s668 + $0x4] sm:$0xf]
      %v1367 = vld [vmem:[%s671] sm:$0x1]
      %v1369 = vlaneseq
      %v1370 = vshrl.u32 %v1369, 7
      %v1371 = vsub.s32 0, %v1370
      %v1372 = vrot.slane %v1367, %v1371
      %v1376 = vunpack.c.l.b16 %v1365
      %v1377 = vunpack.c.l.b16 %v1366
      %v1378 = vpack.c.b16 %v1377, %v1376
      %v1381 = vsel %vm844, %v1361, 0
      %v1384 = vsel %vm844, %v1362, 0
      %v1387 = vsel %vm844, %v1363, 0
      %v1390 = vsel %vm844, %v1364, 0
      %1392 = vmatprep.subr.bf16.mxu0 0
      %1393 = vmatpush1.bf16.msra.mxu0 0
      %1394 = vmatprep.subr.bf16.mxu0 0
      %1395 = vmatpush1.bf16.msra.mxu0 0
      %1396 = vmatprep.subr.bf16.mxu0 0
      %1397 = vmatpush1.bf16.msra.mxu0 0
      %1398 = vmatprep.subr.bf16.mxu0 0
      %1399 = vmatpush1.bf16.msra.mxu0 0
      %1400 = vmatprep.subr.bf16.mxu0 0
      %1401 = vmatpush1.bf16.msra.mxu0 0
      %1402 = vmatprep.subr.bf16.mxu0 0
      %1403 = vmatpush1.bf16.msra.mxu0 0
      %1404 = vmatprep.subr.bf16.mxu0 0
      %1405 = vmatpush1.bf16.msra.mxu0 0
      %1406 = vmatprep.subr.bf16.mxu0 0
      %1407 = vmatpush1.bf16.msra.mxu0 %v1378
      %1408 = vmatprep.subr.bf16.mxu0 0
      %1409 = vmatpush2.bf16.msra.mxu0 0
      %1410 = vmatprep.subr.bf16.mxu0 0
      %1411 = vmatpush2.bf16.msra.mxu0 0
      %1412 = vmatprep.subr.bf16.mxu0 0
      %1413 = vmatpush2.bf16.msra.mxu0 0
      %1414 = vmatprep.subr.bf16.mxu0 0
      %1415 = vmatpush2.bf16.msra.mxu0 0
      %1416 = vmatprep.subr.bf16.mxu0 0
      %1417 = vmatpush2.bf16.msra.mxu0 0
      %1418 = vmatprep.subr.bf16.mxu0 0
      %1419 = vmatpush2.bf16.msra.mxu0 0
      %1420 = vmatprep.subr.bf16.mxu0 0
      %1421 = vmatpush2.bf16.msra.mxu0 0
      %1422 = vmatprep.subr.bf16.mxu0 0
      %1423 = vmatpush2.bf16.msra.mxu0 0
      %1424 = vmatprep.mubr.bf16.mxu0 0
      %1425 = vmatmul.mubr.bf16.gmra.mxu0 %v1381
      %v1426 = vpop.f32.mrf.mxu0
      %v1427 = vadd.f32 %v1372, %v1426
      %v1428 = vpop.f32.mrf.mxu0
      %v1429 = vpop.f32.mrf.mxu0
      %v1430 = vadd.f32 %v1372, %v1429
      %v1431 = vpop.f32.mrf.mxu0
      %1432 = vmatprep.mubr.bf16.mxu0 0
      %1433 = vmatmul.mubr.bf16.gmra.mxu0 %v1384
      %v1434 = vpop.f32.mrf.mxu0
      %v1435 = vadd.f32 %v1372, %v1434
      %v1436 = vpop.f32.mrf.mxu0
      %v1437 = vpop.f32.mrf.mxu0
      %v1438 = vadd.f32 %v1372, %v1437
      %v1439 = vpop.f32.mrf.mxu0
      %1440 = vmatprep.mubr.bf16.mxu0 0
      %1441 = vmatmul.mubr.bf16.gmra.mxu0 %v1387
      %v1442 = vpop.f32.mrf.mxu0
      %v1443 = vadd.f32 %v1372, %v1442
      %v1444 = vpop.f32.mrf.mxu0
      %v1445 = vpop.f32.mrf.mxu0
      %v1446 = vadd.f32 %v1372, %v1445
      %v1447 = vpop.f32.mrf.mxu0
      %1448 = vmatprep.mubr.bf16.mxu0 0
      %1449 = vmatmul.mubr.bf16.gmra.mxu0 %v1390
      %v1450 = vpop.f32.mrf.mxu0
      %v1451 = vadd.f32 %v1372, %v1450
      %v1452 = vpop.f32.mrf.mxu0
      %v1453 = vpop.f32.mrf.mxu0
      %v1454 = vadd.f32 %v1372, %v1453
      %v1455 = vpop.f32.mrf.mxu0
      %1456 = vdwg.mxu0
      %v1457 = vadd.f32 %v834, %v1427
      %v1458 = vadd.f32 %v835, %v1430
      %v1459 = vadd.f32 %v836, %v1435
      %v1460 = vadd.f32 %v837, %v1438
      %v1461 = vadd.f32 %v838, %v1443
      %v1462 = vadd.f32 %v839, %v1446
      %v1463 = vadd.f32 %v840, %v1451
      %v1464 = vadd.f32 %v841, %v1454
      %v1465 = vld [vmem:[%s674] sm:$0x1]
      %v1466 = vld [vmem:[%s677] sm:$0x1]
      %v1467 = vsel %vm844, %v1457, 0.0
      %1468 = vadd.xlane.f32.xlu0 %v1467
      %v1469 = vpop.xlane.xlu0 %1468
      %v1470 = vsel %vm844, %v1458, 0.0
      %1471 = vadd.xlane.f32.xlu0 %v1470
      %v1472 = vpop.xlane.xlu0 %1471
      %v1473 = vsel %vm844, %v1459, 0.0
      %1474 = vadd.xlane.f32.xlu0 %v1473
      %v1475 = vpop.xlane.xlu0 %1474
      %v1476 = vsel %vm844, %v1460, 0.0
      %1477 = vadd.xlane.f32.xlu0 %v1476
      %v1478 = vpop.xlane.xlu0 %1477
      %v1479 = vsel %vm844, %v1461, 0.0
      %1480 = vadd.xlane.f32.xlu0 %v1479
      %v1481 = vpop.xlane.xlu0 %1480
      %v1482 = vsel %vm844, %v1462, 0.0
      %1483 = vadd.xlane.f32.xlu0 %v1482
      %v1484 = vpop.xlane.xlu0 %1483
      %v1485 = vsel %vm844, %v1463, 0.0
      %1486 = vadd.xlane.f32.xlu0 %v1485
      %v1487 = vpop.xlane.xlu0 %1486
      %v1488 = vsel %vm844, %v1464, 0.0
      %1489 = vadd.xlane.f32.xlu0 %v1488
      %v1490 = vpop.xlane.xlu0 %1489
      %v1491 = vmul.f32 %v1469, %v869
      %v1492 = vmul.f32 %v1472, %v869
      %v1493 = vmul.f32 %v1475, %v869
      %v1494 = vmul.f32 %v1478, %v869
      %v1495 = vmul.f32 %v1481, %v869
      %v1496 = vmul.f32 %v1484, %v869
      %v1497 = vmul.f32 %v1487, %v869
      %v1498 = vmul.f32 %v1490, %v869
      %v1499 = vsub.f32 %v1457, %v1491
      %v1500 = vsub.f32 %v1458, %v1492
      %v1501 = vsub.f32 %v1459, %v1493
      %v1502 = vsub.f32 %v1460, %v1494
      %v1503 = vsub.f32 %v1461, %v1495
      %v1504 = vsub.f32 %v1462, %v1496
      %v1505 = vsub.f32 %v1463, %v1497
      %v1506 = vsub.f32 %v1464, %v1498
      %v1507 = vmul.f32 %v1499, %v1499
      %v1508 = vmul.f32 %v1500, %v1500
      %v1509 = vmul.f32 %v1501, %v1501
      %v1510 = vmul.f32 %v1502, %v1502
      %v1511 = vmul.f32 %v1503, %v1503
      %v1512 = vmul.f32 %v1504, %v1504
      %v1513 = vmul.f32 %v1505, %v1505
      %v1514 = vmul.f32 %v1506, %v1506
      %v1515 = vsel %vm844, %v1507, 0.0
      %1516 = vadd.xlane.f32.xlu0 %v1515
      %v1517 = vpop.xlane.xlu0 %1516
      %v1518 = vsel %vm844, %v1508, 0.0
      %1519 = vadd.xlane.f32.xlu0 %v1518
      %v1520 = vpop.xlane.xlu0 %1519
      %v1521 = vsel %vm844, %v1509, 0.0
      %1522 = vadd.xlane.f32.xlu0 %v1521
      %v1523 = vpop.xlane.xlu0 %1522
      %v1524 = vsel %vm844, %v1510, 0.0
      %1525 = vadd.xlane.f32.xlu0 %v1524
      %v1526 = vpop.xlane.xlu0 %1525
      %v1527 = vsel %vm844, %v1511, 0.0
      %1528 = vadd.xlane.f32.xlu0 %v1527
      %v1529 = vpop.xlane.xlu0 %1528
      %v1530 = vsel %vm844, %v1512, 0.0
      %1531 = vadd.xlane.f32.xlu0 %v1530
      %v1532 = vpop.xlane.xlu0 %1531
      %v1533 = vsel %vm844, %v1513, 0.0
      %1534 = vadd.xlane.f32.xlu0 %v1533
      %v1535 = vpop.xlane.xlu0 %1534
      %v1536 = vsel %vm844, %v1514, 0.0
      %1537 = vadd.xlane.f32.xlu0 %v1536
      %v1538 = vpop.xlane.xlu0 %1537
      %v1539 = vmul.f32 %v1517, %v869
      %v1540 = vmul.f32 %v1520, %v869
      %v1541 = vmul.f32 %v1523, %v869
      %v1542 = vmul.f32 %v1526, %v869
      %v1543 = vmul.f32 %v1529, %v869
      %v1544 = vmul.f32 %v1532, %v869
      %v1545 = vmul.f32 %v1535, %v869
      %v1546 = vmul.f32 %v1538, %v869
      %v1547 = vadd.f32 %v1539, 1e-05
      %v1548 = vadd.f32 %v1540, 1e-05
      %v1549 = vadd.f32 %v1541, 1e-05
      %v1550 = vadd.f32 %v1542, 1e-05
      %v1551 = vadd.f32 %v1543, 1e-05
      %v1552 = vadd.f32 %v1544, 1e-05
      %v1553 = vadd.f32 %v1545, 1e-05
      %v1554 = vadd.f32 %v1546, 1e-05
      %v1555 = vrsqrt.pop %v1547
      %v1556 = vrsqrt.pop %v1548
      %v1557 = vrsqrt.pop %v1549
      %v1558 = vrsqrt.pop %v1550
      %v1559 = vrsqrt.pop %v1551
      %v1560 = vrsqrt.pop %v1552
      %v1561 = vrsqrt.pop %v1553
      %v1562 = vrsqrt.pop %v1554
      %v1563 = vmul.f32 %v1499, %v1555
      %v1564 = vmul.f32 %v1500, %v1556
      %v1565 = vmul.f32 %v1501, %v1557
      %v1566 = vmul.f32 %v1502, %v1558
      %v1567 = vmul.f32 %v1503, %v1559
      %v1568 = vmul.f32 %v1504, %v1560
      %v1569 = vmul.f32 %v1505, %v1561
      %v1570 = vmul.f32 %v1506, %v1562
      %v1572 = vlaneseq
      %v1573 = vshrl.u32 %v1572, 7
      %v1574 = vsub.s32 0, %v1573
      %v1575 = vrot.slane %v1465, %v1574
      %v1577 = vmul.f32 %v1563, %v1575
      %v1578 = vmul.f32 %v1564, %v1575
      %v1579 = vmul.f32 %v1565, %v1575
      %v1580 = vmul.f32 %v1566, %v1575
      %v1581 = vmul.f32 %v1567, %v1575
      %v1582 = vmul.f32 %v1568, %v1575
      %v1583 = vmul.f32 %v1569, %v1575
      %v1584 = vmul.f32 %v1570, %v1575
      %v1586 = vlaneseq
      %v1587 = vshrl.u32 %v1586, 7
      %v1588 = vsub.s32 0, %v1587
      %v1589 = vrot.slane %v1466, %v1588
      %v1591 = vadd.f32 %v1577, %v1589
      %v1592 = vadd.f32 %v1578, %v1589
      %v1593 = vadd.f32 %v1579, %v1589
      %v1594 = vadd.f32 %v1580, %v1589
      %v1595 = vadd.f32 %v1581, %v1589
      %v1596 = vadd.f32 %v1582, %v1589
      %v1597 = vadd.f32 %v1583, %v1589
      %v1598 = vadd.f32 %v1584, %v1589
      %v1599 = vpack.c.bf16 %v1592, %v1591
      %v1600 = vpack.c.bf16 %v1594, %v1593
      %v1601 = vpack.c.bf16 %v1596, %v1595
      %v1602 = vpack.c.bf16 %v1598, %v1597
      %v1603 = vld [vmem:[%s682] sm:$0xf]
      %v1604 = vld [vmem:[%s682 + $0x4] sm:$0xf]
      %v1605 = vld [vmem:[%s685] sm:$0x1]
      %v1607 = vlaneseq
      %v1608 = vshrl.u32 %v1607, 7
      %v1609 = vsub.s32 0, %v1608
      %v1610 = vrot.slane %v1605, %v1609
      %v1614 = vunpack.c.l.b16 %v1603
      %v1615 = vunpack.c.l.b16 %v1604
      %v1616 = vpack.c.b16 %v1615, %v1614
      %v1619 = vsel %vm844, %v1599, 0
      %v1622 = vsel %vm844, %v1600, 0
      %v1625 = vsel %vm844, %v1601, 0
      %v1628 = vsel %vm844, %v1602, 0
      %1630 = vmatprep.subr.bf16.mxu0 0
      %1631 = vmatpush1.bf16.msra.mxu0 0
      %1632 = vmatprep.subr.bf16.mxu0 0
      %1633 = vmatpush1.bf16.msra.mxu0 0
      %1634 = vmatprep.subr.bf16.mxu0 0
      %1635 = vmatpush1.bf16.msra.mxu0 0
      %1636 = vmatprep.subr.bf16.mxu0 0
      %1637 = vmatpush1.bf16.msra.mxu0 0
      %1638 = vmatprep.subr.bf16.mxu0 0
      %1639 = vmatpush1.bf16.msra.mxu0 0
      %1640 = vmatprep.subr.bf16.mxu0 0
      %1641 = vmatpush1.bf16.msra.mxu0 0
      %1642 = vmatprep.subr.bf16.mxu0 0
      %1643 = vmatpush1.bf16.msra.mxu0 0
      %1644 = vmatprep.subr.bf16.mxu0 0
      %1645 = vmatpush1.bf16.msra.mxu0 %v1616
      %1646 = vmatprep.subr.bf16.mxu0 0
      %1647 = vmatpush2.bf16.msra.mxu0 0
      %1648 = vmatprep.subr.bf16.mxu0 0
      %1649 = vmatpush2.bf16.msra.mxu0 0
      %1650 = vmatprep.subr.bf16.mxu0 0
      %1651 = vmatpush2.bf16.msra.mxu0 0
      %1652 = vmatprep.subr.bf16.mxu0 0
      %1653 = vmatpush2.bf16.msra.mxu0 0
      %1654 = vmatprep.subr.bf16.mxu0 0
      %1655 = vmatpush2.bf16.msra.mxu0 0
      %1656 = vmatprep.subr.bf16.mxu0 0
      %1657 = vmatpush2.bf16.msra.mxu0 0
      %1658 = vmatprep.subr.bf16.mxu0 0
      %1659 = vmatpush2.bf16.msra.mxu0 0
      %1660 = vmatprep.subr.bf16.mxu0 0
      %1661 = vmatpush2.bf16.msra.mxu0 0
      %1662 = vmatprep.mubr.bf16.mxu0 0
      %1663 = vmatmul.mubr.bf16.gmra.mxu0 %v1619
      %v1664 = vpop.f32.mrf.mxu0
      %v1665 = vadd.f32 %v1610, %v1664
      %v1666 = vpop.f32.mrf.mxu0
      %v1667 = vpop.f32.mrf.mxu0
      %v1668 = vadd.f32 %v1610, %v1667
      %v1669 = vpop.f32.mrf.mxu0
      %1670 = vmatprep.mubr.bf16.mxu0 0
      %1671 = vmatmul.mubr.bf16.gmra.mxu0 %v1622
      %v1672 = vpop.f32.mrf.mxu0
      %v1673 = vadd.f32 %v1610, %v1672
      %v1674 = vpop.f32.mrf.mxu0
      %v1675 = vpop.f32.mrf.mxu0
      %v1676 = vadd.f32 %v1610, %v1675
      %v1677 = vpop.f32.mrf.mxu0
      %1678 = vmatprep.mubr.bf16.mxu0 0
      %1679 = vmatmul.mubr.bf16.gmra.mxu0 %v1625
      %v1680 = vpop.f32.mrf.mxu0
      %v1681 = vadd.f32 %v1610, %v1680
      %v1682 = vpop.f32.mrf.mxu0
      %v1683 = vpop.f32.mrf.mxu0
      %v1684 = vadd.f32 %v1610, %v1683
      %v1685 = vpop.f32.mrf.mxu0
      %1686 = vmatprep.mubr.bf16.mxu0 0
      %1687 = vmatmul.mubr.bf16.gmra.mxu0 %v1628
      %v1688 = vpop.f32.mrf.mxu0
      %v1689 = vadd.f32 %v1610, %v1688
      %v1690 = vpop.f32.mrf.mxu0
      %v1691 = vpop.f32.mrf.mxu0
      %v1692 = vadd.f32 %v1610, %v1691
      %v1693 = vpop.f32.mrf.mxu0
      %1694 = vdwg.mxu0
      %v1695 = vmul.f32 %v1665, %v1665
      %v1696 = vmul.f32 %v1668, %v1668
      %v1697 = vmul.f32 %v1673, %v1673
      %v1698 = vmul.f32 %v1676, %v1676
      %v1699 = vmul.f32 %v1681, %v1681
      %v1700 = vmul.f32 %v1684, %v1684
      %v1701 = vmul.f32 %v1689, %v1689
      %v1702 = vmul.f32 %v1692, %v1692
      %v1703 = vmul.f32 %v1665, %v1695
      %v1704 = vmul.f32 %v1668, %v1696
      %v1705 = vmul.f32 %v1673, %v1697
      %v1706 = vmul.f32 %v1676, %v1698
      %v1707 = vmul.f32 %v1681, %v1699
      %v1708 = vmul.f32 %v1684, %v1700
      %v1709 = vmul.f32 %v1689, %v1701
      %v1710 = vmul.f32 %v1692, %v1702
      %v1711 = vmul.f32 %v1703, 0.044715
      %v1712 = vmul.f32 %v1704, 0.044715
      %v1713 = vmul.f32 %v1705, 0.044715
      %v1714 = vmul.f32 %v1706, 0.044715
      %v1715 = vmul.f32 %v1707, 0.044715
      %v1716 = vmul.f32 %v1708, 0.044715
      %v1717 = vmul.f32 %v1709, 0.044715
      %v1718 = vmul.f32 %v1710, 0.044715
      %v1719 = vadd.f32 %v1665, %v1711
      %v1720 = vadd.f32 %v1668, %v1712
      %v1721 = vadd.f32 %v1673, %v1713
      %v1722 = vadd.f32 %v1676, %v1714
      %v1723 = vadd.f32 %v1681, %v1715
      %v1724 = vadd.f32 %v1684, %v1716
      %v1725 = vadd.f32 %v1689, %v1717
      %v1726 = vadd.f32 %v1692, %v1718
      %v1727 = vmul.f32 %v1719, 0.7978846
      %v1728 = vmul.f32 %v1720, 0.7978846
      %v1729 = vmul.f32 %v1721, 0.7978846
      %v1730 = vmul.f32 %v1722, 0.7978846
      %v1731 = vmul.f32 %v1723, 0.7978846
      %v1732 = vmul.f32 %v1724, 0.7978846
      %v1733 = vmul.f32 %v1725, 0.7978846
      %v1734 = vmul.f32 %v1726, 0.7978846
      %v1735 = vtanh.pop %v1727
      %v1736 = vtanh.pop %v1728
      %v1737 = vtanh.pop %v1729
      %v1738 = vtanh.pop %v1730
      %v1739 = vtanh.pop %v1731
      %v1740 = vtanh.pop %v1732
      %v1741 = vtanh.pop %v1733
      %v1742 = vtanh.pop %v1734
      %v1743 = vadd.f32 %v1735, 1.0
      %v1744 = vadd.f32 %v1736, 1.0
      %v1745 = vadd.f32 %v1737, 1.0
      %v1746 = vadd.f32 %v1738, 1.0
      %v1747 = vadd.f32 %v1739, 1.0
      %v1748 = vadd.f32 %v1740, 1.0
      %v1749 = vadd.f32 %v1741, 1.0
      %v1750 = vadd.f32 %v1742, 1.0
      %v1751 = vmul.f32 %v1743, 0.5
      %v1752 = vmul.f32 %v1744, 0.5
      %v1753 = vmul.f32 %v1745, 0.5
      %v1754 = vmul.f32 %v1746, 0.5
      %v1755 = vmul.f32 %v1747, 0.5
      %v1756 = vmul.f32 %v1748, 0.5
      %v1757 = vmul.f32 %v1749, 0.5
      %v1758 = vmul.f32 %v1750, 0.5
      %v1759 = vmul.f32 %v1665, %v1751
      %v1760 = vmul.f32 %v1668, %v1752
      %v1761 = vmul.f32 %v1673, %v1753
      %v1762 = vmul.f32 %v1676, %v1754
      %v1763 = vmul.f32 %v1681, %v1755
      %v1764 = vmul.f32 %v1684, %v1756
      %v1765 = vmul.f32 %v1689, %v1757
      %v1766 = vmul.f32 %v1692, %v1758
      %v1767 = vpack.c.bf16 %v1760, %v1759
      %v1768 = vpack.c.bf16 %v1762, %v1761
      %v1769 = vpack.c.bf16 %v1764, %v1763
      %v1770 = vpack.c.bf16 %v1766, %v1765
      %v1771 = vld [vmem:[%s690] sm:$0xf]
      %v1772 = vld [vmem:[%s690 + $0x4] sm:$0xf]
      %v1773 = vld [vmem:[%s690 + $0x8] sm:$0xf]
      %v1774 = vld [vmem:[%s690 + $0xc] sm:$0xf]
      %v1775 = vld [vmem:[%s690 + $0x10] sm:$0xf]
      %v1776 = vld [vmem:[%s690 + $0x14] sm:$0xf]
      %v1777 = vld [vmem:[%s690 + $0x18] sm:$0xf]
      %v1778 = vld [vmem:[%s690 + $0x1c] sm:$0xf]
      %v1779 = vld [vmem:[%s693] sm:$0x1]
      %v1781 = vlaneseq
      %v1782 = vshrl.u32 %v1781, 7
      %v1783 = vsub.s32 0, %v1782
      %v1784 = vrot.slane %v1779, %v1783
      %v1794 = vunpack.c.l.b16 %v1771
      %v1795 = vunpack.c.l.b16 %v1772
      %v1796 = vunpack.c.l.b16 %v1773
      %v1797 = vunpack.c.l.b16 %v1774
      %v1798 = vunpack.c.l.b16 %v1775
      %v1799 = vunpack.c.l.b16 %v1776
      %v1800 = vunpack.c.l.b16 %v1777
      %v1801 = vunpack.c.l.b16 %v1778
      %v1802 = vpack.c.b16 %v1795, %v1794
      %v1803 = vpack.c.b16 %v1797, %v1796
      %v1804 = vpack.c.b16 %v1799, %v1798
      %v1805 = vpack.c.b16 %v1801, %v1800
      %v1811 = vsel %vm1179, %v1767, 0
      %v1814 = vsel %vm1179, %v1768, 0
      %v1817 = vsel %vm1179, %v1769, 0
      %v1820 = vsel %vm1179, %v1770, 0
      %1822 = vmatprep.subr.bf16.mxu0 0
      %1823 = vmatpush1.bf16.msra.mxu0 0
      %1824 = vmatprep.subr.bf16.mxu0 0
      %1825 = vmatpush1.bf16.msra.mxu0 0
      %1826 = vmatprep.subr.bf16.mxu0 0
      %1827 = vmatpush1.bf16.msra.mxu0 0
      %1828 = vmatprep.subr.bf16.mxu0 0
      %1829 = vmatpush1.bf16.msra.mxu0 0
      %1830 = vmatprep.subr.bf16.mxu0 0
      %1831 = vmatpush1.bf16.msra.mxu0 %v1805
      %1832 = vmatprep.subr.bf16.mxu0 0
      %1833 = vmatpush1.bf16.msra.mxu0 %v1804
      %1834 = vmatprep.subr.bf16.mxu0 0
      %1835 = vmatpush1.bf16.msra.mxu0 %v1803
      %1836 = vmatprep.subr.bf16.mxu0 0
      %1837 = vmatpush1.bf16.msra.mxu0 %v1802
      %1838 = vmatprep.subr.bf16.mxu0 0
      %1839 = vmatpush2.bf16.msra.mxu0 0
      %1840 = vmatprep.subr.bf16.mxu0 0
      %1841 = vmatpush2.bf16.msra.mxu0 0
      %1842 = vmatprep.subr.bf16.mxu0 0
      %1843 = vmatpush2.bf16.msra.mxu0 0
      %1844 = vmatprep.subr.bf16.mxu0 0
      %1845 = vmatpush2.bf16.msra.mxu0 0
      %1846 = vmatprep.subr.bf16.mxu0 0
      %1847 = vmatpush2.bf16.msra.mxu0 0
      %1848 = vmatprep.subr.bf16.mxu0 0
      %1849 = vmatpush2.bf16.msra.mxu0 0
      %1850 = vmatprep.subr.bf16.mxu0 0
      %1851 = vmatpush2.bf16.msra.mxu0 0
      %1852 = vmatprep.subr.bf16.mxu0 0
      %1853 = vmatpush2.bf16.msra.mxu0 0
      %1854 = vmatprep.mubr.bf16.mxu0 0
      %1855 = vmatmul.mubr.bf16.gmra.mxu0 %v1811
      %v1856 = vpop.f32.mrf.mxu0
      %v1857 = vadd.f32 %v1784, %v1856
      %v1858 = vpop.f32.mrf.mxu0
      %v1859 = vpop.f32.mrf.mxu0
      %v1860 = vadd.f32 %v1784, %v1859
      %v1861 = vpop.f32.mrf.mxu0
      %1862 = vmatprep.mubr.bf16.mxu0 0
      %1863 = vmatmul.mubr.bf16.gmra.mxu0 %v1814
      %v1864 = vpop.f32.mrf.mxu0
      %v1865 = vadd.f32 %v1784, %v1864
      %v1866 = vpop.f32.mrf.mxu0
      %v1867 = vpop.f32.mrf.mxu0
      %v1868 = vadd.f32 %v1784, %v1867
      %v1869 = vpop.f32.mrf.mxu0
      %1870 = vmatprep.mubr.bf16.mxu0 0
      %1871 = vmatmul.mubr.bf16.gmra.mxu0 %v1817
      %v1872 = vpop.f32.mrf.mxu0
      %v1873 = vadd.f32 %v1784, %v1872
      %v1874 = vpop.f32.mrf.mxu0
      %v1875 = vpop.f32.mrf.mxu0
      %v1876 = vadd.f32 %v1784, %v1875
      %v1877 = vpop.f32.mrf.mxu0
      %1878 = vmatprep.mubr.bf16.mxu0 0
      %1879 = vmatmul.mubr.bf16.gmra.mxu0 %v1820
      %v1880 = vpop.f32.mrf.mxu0
      %v1881 = vadd.f32 %v1784, %v1880
      %v1882 = vpop.f32.mrf.mxu0
      %v1883 = vpop.f32.mrf.mxu0
      %v1884 = vadd.f32 %v1784, %v1883
      %v1885 = vpop.f32.mrf.mxu0
      %1886 = vdwg.mxu0
      %v1887 = vadd.f32 %v1457, %v1857
      %v1888 = vadd.f32 %v1458, %v1860
      %v1889 = vadd.f32 %v1459, %v1865
      %v1890 = vadd.f32 %v1460, %v1868
      %v1891 = vadd.f32 %v1461, %v1873
      %v1892 = vadd.f32 %v1462, %v1876
      %v1893 = vadd.f32 %v1463, %v1881
      %v1894 = vadd.f32 %v1464, %v1884
      %1895 = vst.msk [vmem:[%s698] sm:$0xff] %vm844, %v1887
      %1896 = vst.msk [vmem:[%s698 + $0x8] sm:$0xff] %vm844, %v1888
      %1897 = vst.msk [vmem:[%s698 + $0x10] sm:$0xff] %vm844, %v1889
      %1898 = vst.msk [vmem:[%s698 + $0x18] sm:$0xff] %vm844, %v1890
      %1899 = vst.msk [vmem:[%s698 + $0x20] sm:$0xff] %vm844, %v1891
      %1900 = vst.msk [vmem:[%s698 + $0x28] sm:$0xff] %vm844, %v1892
      %1901 = vst.msk [vmem:[%s698 + $0x30] sm:$0xff] %vm844, %v1893
      %1902 = vst.msk [vmem:[%s698 + $0x38] sm:$0xff] %vm844, %v1894
      %p1903 = scmp.lt.s32.totalorder %s30, 1
      %s1904 = scalar_select %p1903, %s30, 1
      %s1905 = smul.addr %s1904, 8
      %s1906 = smul.addr %s1905, 8
      %s1907 = scalar_lea.vmem %s15, %s1906
      // Predicated region
      $region85: #{_lambda_.5} parent=79 // pred_check
        %p1908 = pneg %p436
      $region86: #{_lambda_.5} parent=79 // pred_check_branch
        %1910 = sbr.rel (%p1908) target = $region88
      $region87: #{_lambda_.5} parent=79 // pred_region
        _
      $region88: #{_lambda_.5} parent=79 // pred_fallthru
        _
    $region80: #{_lambda_.5} parent=5 // pred_fallthru
      _
    %p1911 = scmp.le.s32.totalorder 2, %s21
    // Predicated region
    $region89: #{_lambda_.5} parent=5 // pred_check
      %p1912 = pneg %p1911
    $region90: #{_lambda_.5} parent=5 // pred_check_branch
      %1914 = sbr.rel (%p1912) target = $region92
    $region91: #{_lambda_.5} parent=5 // pred_region
      %s1915 = ssub.s32 %s21, 2
      // Predicated region
      $region93: #{_lambda_.5} parent=91 // pred_check
        %p1916 = pneg %p442
      $region94: #{_lambda_.5} parent=91 // pred_check_branch
        %1918 = sbr.rel (%p1916) target = $region96
      $region95: #{_lambda_.5} parent=91 // pred_region
        %p1919 = scmp.lt.s32.totalorder %s32, 1
        %s1920 = scalar_select %p1919, %s32, 1
        %s1921 = smul.addr %s1920, 8
        %s1922 = smul.addr %s1921, 8
        %s1923 = scalar_lea.vmem %s15, %s1922
      $region96: #{_lambda_.5} parent=91 // pred_fallthru
        _
    $region92: #{_lambda_.5} parent=5 // pred_fallthru
      _
  $region6: #{_lambda_.5} parent=0 // loop_footer
    %s25 = sadd.s32 1, %s21
  $region7: #{_lambda_.5} parent=0 // loop_footer_branch
    %20 = sbr.rel target = $region3
  $region8: #{_lambda_.5} parent=0 // loop_exit
    _

// kernel: _lambda_.6
$region0: #{_lambda_.6}
  #allocation0 [shape = 'u32[]', space=smem, size = 0x4, offset = 0x4, fixed_abs, tag = 'smem constant byte address 0x4 - core index']
  #allocation1 [shape = 'u32[144,128]{1,0:T(1,128)}', space=vmem, size = 0x12000, scoped, tag = 'internal scratch']
  %s0 = inlined_call_operand.vmem [shape: f32[2,16,64], index: 0, kind: input, shape index: {}]
  %s1 = inlined_call_operand.vmem [shape: bf16[64,32], index: 1, kind: input, shape index: {}]
  %s2 = inlined_call_operand.vmem [shape: f32[1,32], index: 2, kind: input, shape index: {}]
  %s3 = inlined_call_operand.vmem [shape: f32[2,1,32], index: 3, kind: input, shape index: {}]
  %s4 = inlined_call_operand.vmem [shape: f32[2,1,32], index: 4, kind: input, shape index: {}]
  %s5 = inlined_call_operand.vmem [shape: bf16[2,32,96], index: 5, kind: input, shape index: {}]
  %s6 = inlined_call_operand.vmem [shape: f32[2,1,96], index: 6, kind: input, shape index: {}]
  %s7 = inlined_call_operand.vmem [shape: bf16[2,32,32], index: 7, kind: input, shape index: {}]
  %s8 = inlined_call_operand.vmem [shape: f32[2,1,32], index: 8, kind: input, shape index: {}]
  %s9 = inlined_call_operand.vmem [shape: f32[2,1,32], index: 9, kind: input, shape index: {}]
  %s10 = inlined_call_operand.vmem [shape: f32[2,1,32], index: 10, kind: input, shape index: {}]
  %s11 = inlined_call_operand.vmem [shape: bf16[2,32,128], index: 11, kind: input, shape index: {}]
  %s12 = inlined_call_operand.vmem [shape: f32[2,1,128], index: 12, kind: input, shape index: {}]
  %s13 = inlined_call_operand.vmem [shape: bf16[2,128,32], index: 13, kind: input, shape index: {}]
  %s14 = inlined_call_operand.vmem [shape: f32[2,1,32], index: 14, kind: input, shape index: {}]
  %s15 = inlined_call_operand.vmem [shape: f32[2,16,32], index: 15, kind: output, shape index: {}]
  %s16 = sld [smem:[#allocation0]]
  $region97: #{_lambda_.6} parent=0
    _
  %s18 = ssub.s32 1, %s16
  %s19 = scalar_select 0, %s18, %s16
  loop: start=0, step=1, limit=6
  $region2: #{_lambda_.6} parent=0 // loop_pre_header
    _
  $region3: #{_lambda_.6} parent=0 // loop_header
    %s21 = sphi 0, %s25
    %p22 = scmp.ge.s32.totalorder %s21, 6
    %s28 = sphi 0, %s40
    %s29 = sphi 0, %s36
    %s30 = sphi 0, %s28
    %s31 = sphi 0, %s29
    %s32 = sphi 0, %s30
    %s33 = sphi 0, %s31
    %s43 = sphi 0, %s45
    %s46 = sphi 0, %s43
    %s47 = sphi 0, %s46
    %s63 = sphi 0, %s47
    %s67 = sphi 0, %s67
    %s69 = sphi 0, %s67
    %s70 = sphi 0, %s69
    %s84 = sphi 0, %s70
    %s88 = sphi 0, %s88
    %s90 = sphi 0, %s88
    %s91 = sphi 0, %s90
    %s105 = sphi 0, %s91
    %s111 = sphi 0, %s113
    %s114 = sphi 0, %s111
    %s115 = sphi 0, %s114
    %s131 = sphi 0, %s115
    %s137 = sphi 0, %s139
    %s140 = sphi 0, %s137
    %s141 = sphi 0, %s140
    %s157 = sphi 0, %s141
    %s163 = sphi 0, %s165
    %s166 = sphi 0, %s163
    %s167 = sphi 0, %s166
    %s183 = sphi 0, %s167
    %s189 = sphi 0, %s191
    %s192 = sphi 0, %s189
    %s193 = sphi 0, %s192
    %s209 = sphi 0, %s193
    %s215 = sphi 0, %s217
    %s218 = sphi 0, %s215
    %s219 = sphi 0, %s218
    %s235 = sphi 0, %s219
    %s241 = sphi 0, %s243
    %s244 = sphi 0, %s241
    %s245 = sphi 0, %s244
    %s261 = sphi 0, %s245
    %s267 = sphi 0, %s269
    %s270 = sphi 0, %s267
    %s271 = sphi 0, %s270
    %s287 = sphi 0, %s271
    %s293 = sphi 0, %s295
    %s296 = sphi 0, %s293
    %s297 = sphi 0, %s296
    %s313 = sphi 0, %s297
    %s319 = sphi 0, %s321
    %s322 = sphi 0, %s319
    %s323 = sphi 0, %s322
    %s339 = sphi 0, %s323
    %s345 = sphi 0, %s347
    %s348 = sphi 0, %s345
    %s349 = sphi 0, %s348
    %s365 = sphi 0, %s349
    %s371 = sphi 0, %s373
    %s374 = sphi 0, %s371
    %s375 = sphi 0, %s374
    %s391 = sphi 0, %s375
    %s397 = sphi 0, %s399
    %s400 = sphi 0, %s397
    %s401 = sphi 0, %s400
    %s417 = sphi 0, %s401
    %s423 = sphi 0, %s425
    %s426 = sphi 0, %s423
    %s427 = sphi 0, %s426
    %s443 = sphi 0, %s427
  $region4: #{_lambda_.6} parent=0 // loop_header_branch
    %24 = sbr.rel (%p22) target = $region8
  $region5: #{_lambda_.6} parent=0 // loop_body
    %s26 = ssub.s32 %s21, 1
    %s27 = ssub.s32 %s21, 2
    %s34 = sadd.s32 1, %s29
    %p35 = scmp.ge.s32.totalorder %s34, 2
    %s36 = scalar_select %p35, 0, %s34
    %s37 = sadd.s32 1, %s28
    %s38 = scalar_select %p35, %s37, %s28
    %p39 = scmp.ge.s32.totalorder %s38, 2
    %s40 = scalar_select %p39, 0, %s38
    %s41 = ssub.s32 %s28, %s40
    %p42 = scmp.eq.s32.totalorder %s41, 0
    %s44 = sadd.s32 %s43, 1
    %s45 = scalar_select %p42, %s43, %s44
    %p48 = pneg %p42
    %p49 = scmp.eq.s32.totalorder %s21, 3
    %p50 = por %p48, %p49
    %p51 = scmp.ne.s32.totalorder %s43, %s46
    %p52 = scmp.eq.s32.totalorder %s21, 0
    %p53 = por %p51, %p52
    %p54 = scmp.ne.s32.totalorder %s43, %s46
    %p55 = scmp.eq.s32.totalorder %s26, 3
    %p56 = por %p54, %p55
    %p57 = scmp.ne.s32.totalorder %s46, %s47
    %p58 = scmp.eq.s32.totalorder %s26, 0
    %p59 = por %p57, %p58
    %p60 = scmp.ne.s32.totalorder %s46, %s47
    %p61 = scmp.eq.s32.totalorder %s27, 3
    %p62 = por %p60, %p61
    %p64 = scmp.ne.s32.totalorder %s47, %s63
    %p65 = scmp.eq.s32.totalorder %s27, 0
    %p66 = por %p64, %p65
    %s68 = sadd.s32 %s67, 1
    %p71 = scmp.eq.s32.totalorder %s21, 3
    %p72 = scmp.ne.s32.totalorder %s67, %s69
    %p73 = scmp.eq.s32.totalorder %s21, 0
    %p74 = por %p72, %p73
    %p75 = scmp.ne.s32.totalorder %s67, %s69
    %p76 = scmp.eq.s32.totalorder %s26, 3
    %p77 = por %p75, %p76
    %p78 = scmp.ne.s32.totalorder %s69, %s70
    %p79 = scmp.eq.s32.totalorder %s26, 0
    %p80 = por %p78, %p79
    %p81 = scmp.ne.s32.totalorder %s69, %s70
    %p82 = scmp.eq.s32.totalorder %s27, 3
    %p83 = por %p81, %p82
    %p85 = scmp.ne.s32.totalorder %s70, %s84
    %p86 = scmp.eq.s32.totalorder %s27, 0
    %p87 = por %p85, %p86
    %s89 = sadd.s32 %s88, 1
    %p92 = scmp.eq.s32.totalorder %s21, 3
    %p93 = scmp.ne.s32.totalorder %s88, %s90
    %p94 = scmp.eq.s32.totalorder %s21, 0
    %p95 = por %p93, %p94
    %p96 = scmp.ne.s32.totalorder %s88, %s90
    %p97 = scmp.eq.s32.totalorder %s26, 3
    %p98 = por %p96, %p97
    %p99 = scmp.ne.s32.totalorder %s90, %s91
    %p100 = scmp.eq.s32.totalorder %s26, 0
    %p101 = por %p99, %p100
    %p102 = scmp.ne.s32.totalorder %s90, %s91
    %p103 = scmp.eq.s32.totalorder %s27, 3
    %p104 = por %p102, %p103
    %p106 = scmp.ne.s32.totalorder %s91, %s105
    %p107 = scmp.eq.s32.totalorder %s27, 0
    %p108 = por %p106, %p107
    %s109 = ssub.s32 %s29, %s36
    %p110 = scmp.eq.s32.totalorder %s109, 0
    %s112 = sadd.s32 %s111, 1
    %s113 = scalar_select %p110, %s111, %s112
    %p116 = pneg %p110
    %p117 = scmp.eq.s32.totalorder %s21, 3
    %p118 = por %p116, %p117
    %p119 = scmp.ne.s32.totalorder %s111, %s114
    %p120 = scmp.eq.s32.totalorder %s21, 0
    %p121 = por %p119, %p120
    %p122 = scmp.ne.s32.totalorder %s111, %s114
    %p123 = scmp.eq.s32.totalorder %s26, 3
    %p124 = por %p122, %p123
    %p125 = scmp.ne.s32.totalorder %s114, %s115
    %p126 = scmp.eq.s32.totalorder %s26, 0
    %p127 = por %p125, %p126
    %p128 = scmp.ne.s32.totalorder %s114, %s115
    %p129 = scmp.eq.s32.totalorder %s27, 3
    %p130 = por %p128, %p129
    %p132 = scmp.ne.s32.totalorder %s115, %s131
    %p133 = scmp.eq.s32.totalorder %s27, 0
    %p134 = por %p132, %p133
    %s135 = ssub.s32 %s29, %s36
    %p136 = scmp.eq.s32.totalorder %s135, 0
    %s138 = sadd.s32 %s137, 1
    %s139 = scalar_select %p136, %s137, %s138
    %p142 = pneg %p136
    %p143 = scmp.eq.s32.totalorder %s21, 3
    %p144 = por %p142, %p143
    %p145 = scmp.ne.s32.totalorder %s137, %s140
    %p146 = scmp.eq.s32.totalorder %s21, 0
    %p147 = por %p145, %p146
    %p148 = scmp.ne.s32.totalorder %s137, %s140
    %p149 = scmp.eq.s32.totalorder %s26, 3
    %p150 = por %p148, %p149
    %p151 = scmp.ne.s32.totalorder %s140, %s141
    %p152 = scmp.eq.s32.totalorder %s26, 0
    %p153 = por %p151, %p152
    %p154 = scmp.ne.s32.totalorder %s140, %s141
    %p155 = scmp.eq.s32.totalorder %s27, 3
    %p156 = por %p154, %p155
    %p158 = scmp.ne.s32.totalorder %s141, %s157
    %p159 = scmp.eq.s32.totalorder %s27, 0
    %p160 = por %p158, %p159
    %s161 = ssub.s32 %s29, %s36
    %p162 = scmp.eq.s32.totalorder %s161, 0
    %s164 = sadd.s32 %s163, 1
    %s165 = scalar_select %p162, %s163, %s164
    %p168 = pneg %p162
    %p169 = scmp.eq.s32.totalorder %s21, 3
    %p170 = por %p168, %p169
    %p171 = scmp.ne.s32.totalorder %s163, %s166
    %p172 = scmp.eq.s32.totalorder %s21, 0
    %p173 = por %p171, %p172
    %p174 = scmp.ne.s32.totalorder %s163, %s166
    %p175 = scmp.eq.s32.totalorder %s26, 3
    %p176 = por %p174, %p175
    %p177 = scmp.ne.s32.totalorder %s166, %s167
    %p178 = scmp.eq.s32.totalorder %s26, 0
    %p179 = por %p177, %p178
    %p180 = scmp.ne.s32.totalorder %s166, %s167
    %p181 = scmp.eq.s32.totalorder %s27, 3
    %p182 = por %p180, %p181
    %p184 = scmp.ne.s32.totalorder %s167, %s183
    %p185 = scmp.eq.s32.totalorder %s27, 0
    %p186 = por %p184, %p185
    %s187 = ssub.s32 %s29, %s36
    %p188 = scmp.eq.s32.totalorder %s187, 0
    %s190 = sadd.s32 %s189, 1
    %s191 = scalar_select %p188, %s189, %s190
    %p194 = pneg %p188
    %p195 = scmp.eq.s32.totalorder %s21, 3
    %p196 = por %p194, %p195
    %p197 = scmp.ne.s32.totalorder %s189, %s192
    %p198 = scmp.eq.s32.totalorder %s21, 0
    %p199 = por %p197, %p198
    %p200 = scmp.ne.s32.totalorder %s189, %s192
    %p201 = scmp.eq.s32.totalorder %s26, 3
    %p202 = por %p200, %p201
    %p203 = scmp.ne.s32.totalorder %s192, %s193
    %p204 = scmp.eq.s32.totalorder %s26, 0
    %p205 = por %p203, %p204
    %p206 = scmp.ne.s32.totalorder %s192, %s193
    %p207 = scmp.eq.s32.totalorder %s27, 3
    %p208 = por %p206, %p207
    %p210 = scmp.ne.s32.totalorder %s193, %s209
    %p211 = scmp.eq.s32.totalorder %s27, 0
    %p212 = por %p210, %p211
    %s213 = ssub.s32 %s29, %s36
    %p214 = scmp.eq.s32.totalorder %s213, 0
    %s216 = sadd.s32 %s215, 1
    %s217 = scalar_select %p214, %s215, %s216
    %p220 = pneg %p214
    %p221 = scmp.eq.s32.totalorder %s21, 3
    %p222 = por %p220, %p221
    %p223 = scmp.ne.s32.totalorder %s215, %s218
    %p224 = scmp.eq.s32.totalorder %s21, 0
    %p225 = por %p223, %p224
    %p226 = scmp.ne.s32.totalorder %s215, %s218
    %p227 = scmp.eq.s32.totalorder %s26, 3
    %p228 = por %p226, %p227
    %p229 = scmp.ne.s32.totalorder %s218, %s219
    %p230 = scmp.eq.s32.totalorder %s26, 0
    %p231 = por %p229, %p230
    %p232 = scmp.ne.s32.totalorder %s218, %s219
    %p233 = scmp.eq.s32.totalorder %s27, 3
    %p234 = por %p232, %p233
    %p236 = scmp.ne.s32.totalorder %s219, %s235
    %p237 = scmp.eq.s32.totalorder %s27, 0
    %p238 = por %p236, %p237
    %s239 = ssub.s32 %s29, %s36
    %p240 = scmp.eq.s32.totalorder %s239, 0
    %s242 = sadd.s32 %s241, 1
    %s243 = scalar_select %p240, %s241, %s242
    %p246 = pneg %p240
    %p247 = scmp.eq.s32.totalorder %s21, 3
    %p248 = por %p246, %p247
    %p249 = scmp.ne.s32.totalorder %s241, %s244
    %p250 = scmp.eq.s32.totalorder %s21, 0
    %p251 = por %p249, %p250
    %p252 = scmp.ne.s32.totalorder %s241, %s244
    %p253 = scmp.eq.s32.totalorder %s26, 3
    %p254 = por %p252, %p253
    %p255 = scmp.ne.s32.totalorder %s244, %s245
    %p256 = scmp.eq.s32.totalorder %s26, 0
    %p257 = por %p255, %p256
    %p258 = scmp.ne.s32.totalorder %s244, %s245
    %p259 = scmp.eq.s32.totalorder %s27, 3
    %p260 = por %p258, %p259
    %p262 = scmp.ne.s32.totalorder %s245, %s261
    %p263 = scmp.eq.s32.totalorder %s27, 0
    %p264 = por %p262, %p263
    %s265 = ssub.s32 %s29, %s36
    %p266 = scmp.eq.s32.totalorder %s265, 0
    %s268 = sadd.s32 %s267, 1
    %s269 = scalar_select %p266, %s267, %s268
    %p272 = pneg %p266
    %p273 = scmp.eq.s32.totalorder %s21, 3
    %p274 = por %p272, %p273
    %p275 = scmp.ne.s32.totalorder %s267, %s270
    %p276 = scmp.eq.s32.totalorder %s21, 0
    %p277 = por %p275, %p276
    %p278 = scmp.ne.s32.totalorder %s267, %s270
    %p279 = scmp.eq.s32.totalorder %s26, 3
    %p280 = por %p278, %p279
    %p281 = scmp.ne.s32.totalorder %s270, %s271
    %p282 = scmp.eq.s32.totalorder %s26, 0
    %p283 = por %p281, %p282
    %p284 = scmp.ne.s32.totalorder %s270, %s271
    %p285 = scmp.eq.s32.totalorder %s27, 3
    %p286 = por %p284, %p285
    %p288 = scmp.ne.s32.totalorder %s271, %s287
    %p289 = scmp.eq.s32.totalorder %s27, 0
    %p290 = por %p288, %p289
    %s291 = ssub.s32 %s29, %s36
    %p292 = scmp.eq.s32.totalorder %s291, 0
    %s294 = sadd.s32 %s293, 1
    %s295 = scalar_select %p292, %s293, %s294
    %p298 = pneg %p292
    %p299 = scmp.eq.s32.totalorder %s21, 3
    %p300 = por %p298, %p299
    %p301 = scmp.ne.s32.totalorder %s293, %s296
    %p302 = scmp.eq.s32.totalorder %s21, 0
    %p303 = por %p301, %p302
    %p304 = scmp.ne.s32.totalorder %s293, %s296
    %p305 = scmp.eq.s32.totalorder %s26, 3
    %p306 = por %p304, %p305
    %p307 = scmp.ne.s32.totalorder %s296, %s297
    %p308 = scmp.eq.s32.totalorder %s26, 0
    %p309 = por %p307, %p308
    %p310 = scmp.ne.s32.totalorder %s296, %s297
    %p311 = scmp.eq.s32.totalorder %s27, 3
    %p312 = por %p310, %p311
    %p314 = scmp.ne.s32.totalorder %s297, %s313
    %p315 = scmp.eq.s32.totalorder %s27, 0
    %p316 = por %p314, %p315
    %s317 = ssub.s32 %s29, %s36
    %p318 = scmp.eq.s32.totalorder %s317, 0
    %s320 = sadd.s32 %s319, 1
    %s321 = scalar_select %p318, %s319, %s320
    %p324 = pneg %p318
    %p325 = scmp.eq.s32.totalorder %s21, 3
    %p326 = por %p324, %p325
    %p327 = scmp.ne.s32.totalorder %s319, %s322
    %p328 = scmp.eq.s32.totalorder %s21, 0
    %p329 = por %p327, %p328
    %p330 = scmp.ne.s32.totalorder %s319, %s322
    %p331 = scmp.eq.s32.totalorder %s26, 3
    %p332 = por %p330, %p331
    %p333 = scmp.ne.s32.totalorder %s322, %s323
    %p334 = scmp.eq.s32.totalorder %s26, 0
    %p335 = por %p333, %p334
    %p336 = scmp.ne.s32.totalorder %s322, %s323
    %p337 = scmp.eq.s32.totalorder %s27, 3
    %p338 = por %p336, %p337
    %p340 = scmp.ne.s32.totalorder %s323, %s339
    %p341 = scmp.eq.s32.totalorder %s27, 0
    %p342 = por %p340, %p341
    %s343 = ssub.s32 %s29, %s36
    %p344 = scmp.eq.s32.totalorder %s343, 0
    %s346 = sadd.s32 %s345, 1
    %s347 = scalar_select %p344, %s345, %s346
    %p350 = pneg %p344
    %p351 = scmp.eq.s32.totalorder %s21, 3
    %p352 = por %p350, %p351
    %p353 = scmp.ne.s32.totalorder %s345, %s348
    %p354 = scmp.eq.s32.totalorder %s21, 0
    %p355 = por %p353, %p354
    %p356 = scmp.ne.s32.totalorder %s345, %s348
    %p357 = scmp.eq.s32.totalorder %s26, 3
    %p358 = por %p356, %p357
    %p359 = scmp.ne.s32.totalorder %s348, %s349
    %p360 = scmp.eq.s32.totalorder %s26, 0
    %p361 = por %p359, %p360
    %p362 = scmp.ne.s32.totalorder %s348, %s349
    %p363 = scmp.eq.s32.totalorder %s27, 3
    %p364 = por %p362, %p363
    %p366 = scmp.ne.s32.totalorder %s349, %s365
    %p367 = scmp.eq.s32.totalorder %s27, 0
    %p368 = por %p366, %p367
    %s369 = ssub.s32 %s29, %s36
    %p370 = scmp.eq.s32.totalorder %s369, 0
    %s372 = sadd.s32 %s371, 1
    %s373 = scalar_select %p370, %s371, %s372
    %p376 = pneg %p370
    %p377 = scmp.eq.s32.totalorder %s21, 3
    %p378 = por %p376, %p377
    %p379 = scmp.ne.s32.totalorder %s371, %s374
    %p380 = scmp.eq.s32.totalorder %s21, 0
    %p381 = por %p379, %p380
    %p382 = scmp.ne.s32.totalorder %s371, %s374
    %p383 = scmp.eq.s32.totalorder %s26, 3
    %p384 = por %p382, %p383
    %p385 = scmp.ne.s32.totalorder %s374, %s375
    %p386 = scmp.eq.s32.totalorder %s26, 0
    %p387 = por %p385, %p386
    %p388 = scmp.ne.s32.totalorder %s374, %s375
    %p389 = scmp.eq.s32.totalorder %s27, 3
    %p390 = por %p388, %p389
    %p392 = scmp.ne.s32.totalorder %s375, %s391
    %p393 = scmp.eq.s32.totalorder %s27, 0
    %p394 = por %p392, %p393
    %s395 = ssub.s32 %s29, %s36
    %p396 = scmp.eq.s32.totalorder %s395, 0
    %s398 = sadd.s32 %s397, 1
    %s399 = scalar_select %p396, %s397, %s398
    %p402 = pneg %p396
    %p403 = scmp.eq.s32.totalorder %s21, 3
    %p404 = por %p402, %p403
    %p405 = scmp.ne.s32.totalorder %s397, %s400
    %p406 = scmp.eq.s32.totalorder %s21, 0
    %p407 = por %p405, %p406
    %p408 = scmp.ne.s32.totalorder %s397, %s400
    %p409 = scmp.eq.s32.totalorder %s26, 3
    %p410 = por %p408, %p409
    %p411 = scmp.ne.s32.totalorder %s400, %s401
    %p412 = scmp.eq.s32.totalorder %s26, 0
    %p413 = por %p411, %p412
    %p414 = scmp.ne.s32.totalorder %s400, %s401
    %p415 = scmp.eq.s32.totalorder %s27, 3
    %p416 = por %p414, %p415
    %p418 = scmp.ne.s32.totalorder %s401, %s417
    %p419 = scmp.eq.s32.totalorder %s27, 0
    %p420 = por %p418, %p419
    %s421 = ssub.s32 %s28, %s40
    %p422 = scmp.eq.s32.totalorder %s421, 0
    %s424 = sadd.s32 %s423, 1
    %s425 = scalar_select %p422, %s423, %s424
    %p428 = pneg %p422
    %p429 = scmp.eq.s32.totalorder %s21, 3
    %p430 = por %p428, %p429
    %p431 = scmp.ne.s32.totalorder %s423, %s426
    %p432 = scmp.eq.s32.totalorder %s21, 0
    %p433 = por %p431, %p432
    %p434 = scmp.ne.s32.totalorder %s423, %s426
    %p435 = scmp.eq.s32.totalorder %s26, 3
    %p436 = por %p434, %p435
    %p437 = scmp.ne.s32.totalorder %s426, %s427
    %p438 = scmp.eq.s32.totalorder %s26, 0
    %p439 = por %p437, %p438
    %p440 = scmp.ne.s32.totalorder %s426, %s427
    %p441 = scmp.eq.s32.totalorder %s27, 3
    %p442 = por %p440, %p441
    %p444 = scmp.ne.s32.totalorder %s427, %s443
    %p445 = scmp.eq.s32.totalorder %s27, 0
    %p446 = por %p444, %p445
    %p447 = scmp.le.s32.totalorder 1, %s21
    %p448 = scmp.lt.s32.totalorder %s21, 5
    %p449 = pnand %p447, %p448
    %p450 = pneg %p449
    // Predicated region
    $region9: #{_lambda_.6} parent=5 // pred_check
      _
    $region10: #{_lambda_.6} parent=5 // pred_check_branch
      %452 = sbr.rel (%p449) target = $region12
    $region11: #{_lambda_.6} parent=5 // pred_region
      %s453 = ssub.s32 %s21, 1
      // Predicated region
      $region13: #{_lambda_.6} parent=11 // pred_check
        %p454 = pneg %p80
      $region14: #{_lambda_.6} parent=11 // pred_check_branch
        %456 = sbr.rel (%p454) target = $region16
      $region15: #{_lambda_.6} parent=11 // pred_region
        _
      $region16: #{_lambda_.6} parent=11 // pred_fallthru
        _
      // Predicated region
      $region17: #{_lambda_.6} parent=11 // pred_check
        %p457 = pneg %p101
      $region18: #{_lambda_.6} parent=11 // pred_check_branch
        %459 = sbr.rel (%p457) target = $region20
      $region19: #{_lambda_.6} parent=11 // pred_region
        _
      $region20: #{_lambda_.6} parent=11 // pred_fallthru
        _
    $region12: #{_lambda_.6} parent=5 // pred_fallthru
      _
    %p460 = scmp.lt.s32.totalorder %s21, 4
    // Predicated region
    $region21: #{_lambda_.6} parent=5 // pred_check
      %p461 = pneg %p460
    $region22: #{_lambda_.6} parent=5 // pred_check_branch
      %463 = sbr.rel (%p461) target = $region24
    $region23: #{_lambda_.6} parent=5 // pred_region
      // Predicated region
      $region25: #{_lambda_.6} parent=23 // pred_check
        %p464 = pneg %p53
      $region26: #{_lambda_.6} parent=23 // pred_check_branch
        %466 = sbr.rel (%p464) target = $region28
      $region27: #{_lambda_.6} parent=23 // pred_region
        %p467 = scmp.lt.s32.totalorder %s28, 1
        %s468 = scalar_select %p467, %s28, 1
        %s469 = smul.addr %s468, 2
        %s470 = smul.addr %s469, 8
        %s471 = scalar_lea.vmem %s0, %s470
      $region28: #{_lambda_.6} parent=23 // pred_fallthru
        _
      // Predicated region
      $region29: #{_lambda_.6} parent=23 // pred_check
        %p472 = pneg %p121
      $region30: #{_lambda_.6} parent=23 // pred_check_branch
        %474 = sbr.rel (%p472) target = $region32
      $region31: #{_lambda_.6} parent=23 // pred_region
        %p475 = scmp.lt.s32.totalorder %s29, 1
        %s476 = scalar_select %p475, %s29, 1
        %s477 = scalar_lea.vmem %s3, %s476
      $region32: #{_lambda_.6} parent=23 // pred_fallthru
        _
      // Predicated region
      $region33: #{_lambda_.6} parent=23 // pred_check
        %p478 = pneg %p147
      $region34: #{_lambda_.6} parent=23 // pred_check_branch
        %480 = sbr.rel (%p478) target = $region36
      $region35: #{_lambda_.6} parent=23 // pred_region
        %p481 = scmp.lt.s32.totalorder %s29, 1
        %s482 = scalar_select %p481, %s29, 1
        %s483 = scalar_lea.vmem %s4, %s482
      $region36: #{_lambda_.6} parent=23 // pred_fallthru
        _
      // Predicated region
      $region37: #{_lambda_.6} parent=23 // pred_check
        %p484 = pneg %p173
      $region38: #{_lambda_.6} parent=23 // pred_check_branch
        %486 = sbr.rel (%p484) target = $region40
      $region39: #{_lambda_.6} parent=23 // pred_region
        %p487 = scmp.lt.s32.totalorder %s29, 1
        %s488 = scalar_select %p487, %s29, 1
        %s489 = smul.addr %s488, 4
        %s490 = smul.addr %s489, 4
        %s491 = scalar_lea.vmem %s5, %s490
      $region40: #{_lambda_.6} parent=23 // pred_fallthru
        _
      // Predicated region
      $region41: #{_lambda_.6} parent=23 // pred_check
        %p492 = pneg %p199
      $region42: #{_lambda_.6} parent=23 // pred_check_branch
        %494 = sbr.rel (%p492) target = $region44
      $region43: #{_lambda_.6} parent=23 // pred_region
        %p495 = scmp.lt.s32.totalorder %s29, 1
        %s496 = scalar_select %p495, %s29, 1
        %s497 = scalar_lea.vmem %s6, %s496
      $region44: #{_lambda_.6} parent=23 // pred_fallthru
        _
      // Predicated region
      $region45: #{_lambda_.6} parent=23 // pred_check
        %p498 = pneg %p225
      $region46: #{_lambda_.6} parent=23 // pred_check_branch
        %500 = sbr.rel (%p498) target = $region48
      $region47: #{_lambda_.6} parent=23 // pred_region
        %p501 = scmp.lt.s32.totalorder %s29, 1
        %s502 = scalar_select %p501, %s29, 1
        %s503 = smul.addr %s502, 4
        %s504 = smul.addr %s503, 4
        %s505 = scalar_lea.vmem %s7, %s504
      $region48: #{_lambda_.6} parent=23 // pred_fallthru
        _
      // Predicated region
      $region49: #{_lambda_.6} parent=23 // pred_check
        %p506 = pneg %p251
      $region50: #{_lambda_.6} parent=23 // pred_check_branch
        %508 = sbr.rel (%p506) target = $region52
      $region51: #{_lambda_.6} parent=23 // pred_region
        %p509 = scmp.lt.s32.totalorder %s29, 1
        %s510 = scalar_select %p509, %s29, 1
        %s511 = scalar_lea.vmem %s8, %s510
      $region52: #{_lambda_.6} parent=23 // pred_fallthru
        _
      // Predicated region
      $region53: #{_lambda_.6} parent=23 // pred_check
        %p512 = pneg %p277
      $region54: #{_lambda_.6} parent=23 // pred_check_branch
        %514 = sbr.rel (%p512) target = $region56
      $region55: #{_lambda_.6} parent=23 // pred_region
        %p515 = scmp.lt.s32.totalorder %s29, 1
        %s516 = scalar_select %p515, %s29, 1
        %s517 = scalar_lea.vmem %s9, %s516
      $region56: #{_lambda_.6} parent=23 // pred_fallthru
        _
      // Predicated region
      $region57: #{_lambda_.6} parent=23 // pred_check
        %p518 = pneg %p303
      $region58: #{_lambda_.6} parent=23 // pred_check_branch
        %520 = sbr.rel (%p518) target = $region60
      $region59: #{_lambda_.6} parent=23 // pred_region
        %p521 = scmp.lt.s32.totalorder %s29, 1
        %s522 = scalar_select %p521, %s29, 1
        %s523 = scalar_lea.vmem %s10, %s522
      $region60: #{_lambda_.6} parent=23 // pred_fallthru
        _
      // Predicated region
      $region61: #{_lambda_.6} parent=23 // pred_check
        %p524 = pneg %p329
      $region62: #{_lambda_.6} parent=23 // pred_check_branch
        %526 = sbr.rel (%p524) target = $region64
      $region63: #{_lambda_.6} parent=23 // pred_region
        %p527 = scmp.lt.s32.totalorder %s29, 1
        %s528 = scalar_select %p527, %s29, 1
        %s529 = smul.addr %s528, 4
        %s530 = smul.addr %s529, 4
        %s531 = scalar_lea.vmem %s11, %s530
      $region64: #{_lambda_.6} parent=23 // pred_fallthru
        _
      // Predicated region
      $region65: #{_lambda_.6} parent=23 // pred_check
        %p532 = pneg %p355
      $region66: #{_lambda_.6} parent=23 // pred_check_branch
        %534 = sbr.rel (%p532) target = $region68
      $region67: #{_lambda_.6} parent=23 // pred_region
        %p535 = scmp.lt.s32.totalorder %s29, 1
        %s536 = scalar_select %p535, %s29, 1
        %s537 = scalar_lea.vmem %s12, %s536
      $region68: #{_lambda_.6} parent=23 // pred_fallthru
        _
      // Predicated region
      $region69: #{_lambda_.6} parent=23 // pred_check
        %p538 = pneg %p381
      $region70: #{_lambda_.6} parent=23 // pred_check_branch
        %540 = sbr.rel (%p538) target = $region72
      $region71: #{_lambda_.6} parent=23 // pred_region
        %p541 = scmp.lt.s32.totalorder %s29, 1
        %s542 = scalar_select %p541, %s29, 1
        %s543 = smul.addr %s542, 16
        %s544 = smul.addr %s543, 4
        %s545 = scalar_lea.vmem %s13, %s544
      $region72: #{_lambda_.6} parent=23 // pred_fallthru
        _
      // Predicated region
      $region73: #{_lambda_.6} parent=23 // pred_check
        %p546 = pneg %p407
      $region74: #{_lambda_.6} parent=23 // pred_check_branch
        %548 = sbr.rel (%p546) target = $region76
      $region75: #{_lambda_.6} parent=23 // pred_region
        %p549 = scmp.lt.s32.totalorder %s29, 1
        %s550 = scalar_select %p549, %s29, 1
        %s551 = scalar_lea.vmem %s14, %s550
      $region76: #{_lambda_.6} parent=23 // pred_fallthru
        _
    $region24: #{_lambda_.6} parent=5 // pred_fallthru
      _
    %p552 = scmp.le.s32.totalorder 1, %s21
    %p553 = scmp.lt.s32.totalorder %s21, 5
    %p554 = pnand %p552, %p553
    %p555 = pneg %p554
    // Predicated region
    $region77: #{_lambda_.6} parent=5 // pred_check
      _
    $region78: #{_lambda_.6} parent=5 // pred_check_branch
      %557 = sbr.rel (%p554) target = $region80
    $region79: #{_lambda_.6} parent=5 // pred_region
      %s558 = ssub.s32 %s21, 1
      %p559 = scmp.lt.s32.totalorder %s30, 1
      %s560 = scalar_select %p559, %s30, 1
      %s561 = smul.addr %s560, 2
      %s562 = smul.addr %s561, 8
      %s563 = scalar_lea.vmem %s0, %s562
      %p564 = pneg %p59
      %p565 = pneg %p56
      %p566 = pneg %p80
      %p567 = pneg %p77
      %p568 = pneg %p101
      %p569 = pneg %p98
      %p570 = scmp.lt.s32.totalorder %s31, 1
      %s571 = scalar_select %p570, %s31, 1
      %s572 = scalar_lea.vmem %s3, %s571
      %p573 = pneg %p127
      %p574 = pneg %p124
      %p575 = scmp.lt.s32.totalorder %s31, 1
      %s576 = scalar_select %p575, %s31, 1
      %s577 = scalar_lea.vmem %s4, %s576
      %p578 = pneg %p153
      %p579 = pneg %p150
      %p580 = scmp.lt.s32.totalorder %s31, 1
      %s581 = scalar_select %p580, %s31, 1
      %s582 = smul.addr %s581, 4
      %s583 = smul.addr %s582, 4
      %s584 = scalar_lea.vmem %s5, %s583
      %p585 = pneg %p179
      %p586 = pneg %p176
      %p587 = scmp.lt.s32.totalorder %s31, 1
      %s588 = scalar_select %p587, %s31, 1
      %s589 = scalar_lea.vmem %s6, %s588
      %p590 = pneg %p205
      %p591 = pneg %p202
      %p592 = scmp.lt.s32.totalorder %s31, 1
      %s593 = scalar_select %p592, %s31, 1
      %s594 = smul.addr %s593, 4
      %s595 = smul.addr %s594, 4
      %s596 = scalar_lea.vmem %s7, %s595
      %p597 = pneg %p231
      %p598 = pneg %p228
      %p599 = scmp.lt.s32.totalorder %s31, 1
      %s600 = scalar_select %p599, %s31, 1
      %s601 = scalar_lea.vmem %s8, %s600
      %p602 = pneg %p257
      %p603 = pneg %p254
      %p604 = scmp.lt.s32.totalorder %s31, 1
      %s605 = scalar_select %p604, %s31, 1
      %s606 = scalar_lea.vmem %s9, %s605
      %p607 = pneg %p283
      %p608 = pneg %p280
      %p609 = scmp.lt.s32.totalorder %s31, 1
      %s610 = scalar_select %p609, %s31, 1
      %s611 = scalar_lea.vmem %s10, %s610
      %p612 = pneg %p309
      %p613 = pneg %p306
      %p614 = scmp.lt.s32.totalorder %s31, 1
      %s615 = scalar_select %p614, %s31, 1
      %s616 = smul.addr %s615, 4
      %s617 = smul.addr %s616, 4
      %s618 = scalar_lea.vmem %s11, %s617
      %p619 = pneg %p335
      %p620 = pneg %p332
      %p621 = scmp.lt.s32.totalorder %s31, 1
      %s622 = scalar_select %p621, %s31, 1
      %s623 = scalar_lea.vmem %s12, %s622
      %p624 = pneg %p361
      %p625 = pneg %p358
      %p626 = scmp.lt.s32.totalorder %s31, 1
      %s627 = scalar_select %p626, %s31, 1
      %s628 = smul.addr %s627, 16
      %s629 = smul.addr %s628, 4
      %s630 = scalar_lea.vmem %s13, %s629
      %p631 = pneg %p387
      %p632 = pneg %p384
      %p633 = scmp.lt.s32.totalorder %s31, 1
      %s634 = scalar_select %p633, %s31, 1
      %s635 = scalar_lea.vmem %s14, %s634
      %p636 = pneg %p413
      %p637 = pneg %p410
      %p638 = pneg %p439
      %p639 = pneg %p436
      %p640 = scmp.lt.s32.totalorder %s30, 1
      %s641 = scalar_select %p640, %s30, 1
      %s642 = smul.addr %s641, 2
      %s643 = smul.addr %s642, 8
      %s644 = scalar_lea.vmem %s15, %s643
      %p645 = scmp.lt.s32.totalorder %s30, 1
      %s646 = scalar_select %p645, %s30, 1
      %s647 = smul.addr %s646, 2
      %s648 = smul.addr %s647, 8
      %s649 = scalar_lea.vmem %s0, %s648
      %p650 = scmp.lt.s32.totalorder %s31, 1
      %s651 = scalar_select %p650, %s31, 1
      %s652 = scalar_lea.vmem %s3, %s651
      %p653 = scmp.lt.s32.totalorder %s31, 1
      %s654 = scalar_select %p653, %s31, 1
      %s655 = scalar_lea.vmem %s4, %s654
      %p656 = scmp.lt.s32.totalorder %s31, 1
      %s657 = scalar_select %p656, %s31, 1
      %s658 = smul.addr %s657, 4
      %s659 = smul.addr %s658, 4
      %s660 = scalar_lea.vmem %s5, %s659
      %p661 = scmp.lt.s32.totalorder %s31, 1
      %s662 = scalar_select %p661, %s31, 1
      %s663 = scalar_lea.vmem %s6, %s662
      %p664 = scmp.lt.s32.totalorder %s31, 1
      %s665 = scalar_select %p664, %s31, 1
      %s666 = smul.addr %s665, 4
      %s667 = smul.addr %s666, 4
      %s668 = scalar_lea.vmem %s7, %s667
      %p669 = scmp.lt.s32.totalorder %s31, 1
      %s670 = scalar_select %p669, %s31, 1
      %s671 = scalar_lea.vmem %s8, %s670
      %p672 = scmp.lt.s32.totalorder %s31, 1
      %s673 = scalar_select %p672, %s31, 1
      %s674 = scalar_lea.vmem %s9, %s673
      %p675 = scmp.lt.s32.totalorder %s31, 1
      %s676 = scalar_select %p675, %s31, 1
      %s677 = scalar_lea.vmem %s10, %s676
      %p678 = scmp.lt.s32.totalorder %s31, 1
      %s679 = scalar_select %p678, %s31, 1
      %s680 = smul.addr %s679, 4
      %s681 = smul.addr %s680, 4
      %s682 = scalar_lea.vmem %s11, %s681
      %p683 = scmp.lt.s32.totalorder %s31, 1
      %s684 = scalar_select %p683, %s31, 1
      %s685 = scalar_lea.vmem %s12, %s684
      %p686 = scmp.lt.s32.totalorder %s31, 1
      %s687 = scalar_select %p686, %s31, 1
      %s688 = smul.addr %s687, 16
      %s689 = smul.addr %s688, 4
      %s690 = scalar_lea.vmem %s13, %s689
      %p691 = scmp.lt.s32.totalorder %s31, 1
      %s692 = scalar_select %p691, %s31, 1
      %s693 = scalar_lea.vmem %s14, %s692
      %p694 = scmp.lt.s32.totalorder %s30, 1
      %s695 = scalar_select %p694, %s30, 1
      %s696 = smul.addr %s695, 2
      %s697 = smul.addr %s696, 8
      %s698 = scalar_lea.vmem %s15, %s697
      %p700 = scmp.eq.s32.totalorder %s31, 0
      // Predicated region
      $region81: #{_lambda_.6} parent=79 // pred_check
        %p701 = pneg %p700
      $region82: #{_lambda_.6} parent=79 // pred_check_branch
        %703 = sbr.rel (%p701) target = $region84
      $region83: #{_lambda_.6} parent=79 // pred_region
        %v704 = vld [vmem:[%s649] sm:$0xff]
        %v705 = vld [vmem:[%s649 + $0x8] sm:$0xff]
        %v706 = vpack.c.bf16 %v705, %v704
        %v707 = vld [vmem:[%s1] sm:$0xf]
        %v708 = vld [vmem:[%s1 + $0x4] sm:$0xf]
        %v709 = vld [vmem:[%s1 + $0x8] sm:$0xf]
        %v710 = vld [vmem:[%s1 + $0xc] sm:$0xf]
        %v711 = vld [vmem:[%s1 + $0x10] sm:$0xf]
        %v712 = vld [vmem:[%s1 + $0x14] sm:$0xf]
        %v713 = vld [vmem:[%s1 + $0x18] sm:$0xf]
        %v714 = vld [vmem:[%s1 + $0x1c] sm:$0xf]
        %v715 = vld [vmem:[%s2] sm:$0x1]
        %v717 = vlaneseq
        %v718 = vshrl.u32 %v717, 7
        %v719 = vsub.s32 0, %v718
        %v720 = vrot.slane %v715, %v719
        %v730 = vunpack.c.l.b16 %v707
        %v731 = vunpack.c.l.b16 %v708
        %v732 = vunpack.c.l.b16 %v709
        %v733 = vunpack.c.l.b16 %v710
        %v734 = vunpack.c.l.b16 %v711
        %v735 = vunpack.c.l.b16 %v712
        %v736 = vunpack.c.l.b16 %v713
        %v737 = vunpack.c.l.b16 %v714
        %v738 = vpack.c.b16 %v731, %v730
        %v739 = vpack.c.b16 %v733, %v732
        %v740 = vpack.c.b16 %v735, %v734
        %v741 = vpack.c.b16 %v737, %v736
        %vm746 = vcmask 523264
        %v748 = vsel %vm746, %v706, 0
        %750 = vmatprep.subr.bf16.mxu0 0
        %751 = vmatpush1.bf16.msra.mxu0 0
        %752 = vmatprep.subr.bf16.mxu0 0
        %753 = vmatpush1.bf16.msra.mxu0 0
        %754 = vmatprep.subr.bf16.mxu0 0
        %755 = vmatpush1.bf16.msra.mxu0 0
        %756 = vmatprep.subr.bf16.mxu0 0
        %757 = vmatpush1.bf16.msra.mxu0 0
        %758 = vmatprep.subr.bf16.mxu0 0
        %759 = vmatpush1.bf16.msra.mxu0 %v741
        %760 = vmatprep.subr.bf16.mxu0 0
        %761 = vmatpush1.bf16.msra.mxu0 %v740
        %762 = vmatprep.subr.bf16.mxu0 0
        %763 = vmatpush1.bf16.msra.mxu0 %v739
        %764 = vmatprep.subr.bf16.mxu0 0
        %765 = vmatpush1.bf16.msra.mxu0 %v738
        %766 = vmatprep.subr.bf16.mxu0 0
        %767 = vmatpush2.bf16.msra.mxu0 0
        %768 = vmatprep.subr.bf16.mxu0 0
        %769 = vmatpush2.bf16.msra.mxu0 0
        %770 = vmatprep.subr.bf16.mxu0 0
        %771 = vmatpush2.bf16.msra.mxu0 0
        %772 = vmatprep.subr.bf16.mxu0 0
        %773 = vmatpush2.bf16.msra.mxu0 0
        %774 = vmatprep.subr.bf16.mxu0 0
        %775 = vmatpush2.bf16.msra.mxu0 0
        %776 = vmatprep.subr.bf16.mxu0 0
        %777 = vmatpush2.bf16.msra.mxu0 0
        %778 = vmatprep.subr.bf16.mxu0 0
        %779 = vmatpush2.bf16.msra.mxu0 0
        %780 = vmatprep.subr.bf16.mxu0 0
        %781 = vmatpush2.bf16.msra.mxu0 0
        %782 = vmatprep.mubr.bf16.mxu0 0
        %783 = vmatmul.mubr.bf16.gmra.mxu0 %v748
        %v784 = vpop.f32.mrf.mxu0
        %v785 = vadd.f32 %v720, %v784
        %v786 = vpop.f32.mrf.mxu0
        %v787 = vpop.f32.mrf.mxu0
        %v788 = vadd.f32 %v720, %v787
        %v789 = vpop.f32.mrf.mxu0
        %790 = vdwg.mxu0
        %vm791 = vcmask 261120
        %792 = vst.msk [vmem:[%s698] sm:$0xff] %vm791, %v785
        %793 = vst.msk [vmem:[%s698 + $0x8] sm:$0xff] %vm791, %v788
      $region84: #{_lambda_.6} parent=79 // pred_fallthru
        _
      %v794 = vld [vmem:[%s698] sm:$0xff]
      %v795 = vld [vmem:[%s698 + $0x8] sm:$0xff]
      %v796 = vld [vmem:[%s652] sm:$0x1]
      %v797 = vld [vmem:[%s655] sm:$0x1]
      %vm798 = vcmask 261120
      %v799 = vsel %vm798, %v794, 0.0
      %800 = vadd.xlane.f32.xlu0 %v799
      %v801 = vpop.xlane.xlu0 %800
      %v802 = vsel %vm798, %v795, 0.0
      %803 = vadd.xlane.f32.xlu0 %v802
      %v804 = vpop.xlane.xlu0 %803
      %v805 = vrcp.pop 32.0
      %v806 = vmul.f32 %v801, %v805
      %v807 = vmul.f32 %v804, %v805
      %v808 = vsub.f32 %v794, %v806
      %v809 = vsub.f32 %v795, %v807
      %v810 = vmul.f32 %v808, %v808
      %v811 = vmul.f32 %v809, %v809
      %v812 = vsel %vm798, %v810, 0.0
      %813 = vadd.xlane.f32.xlu0 %v812
      %v814 = vpop.xlane.xlu0 %813
      %v815 = vsel %vm798, %v811, 0.0
      %816 = vadd.xlane.f32.xlu0 %v815
      %v817 = vpop.xlane.xlu0 %816
      %v818 = vmul.f32 %v814, %v805
      %v819 = vmul.f32 %v817, %v805
      %v820 = vadd.f32 %v818, 1e-05
      %v821 = vadd.f32 %v819, 1e-05
      %v822 = vrsqrt.pop %v820
      %v823 = vrsqrt.pop %v821
      %v824 = vmul.f32 %v808, %v822
      %v825 = vmul.f32 %v809, %v823
      %v827 = vlaneseq
      %v828 = vshrl.u32 %v827, 7
      %v829 = vsub.s32 0, %v828
      %v830 = vrot.slane %v796, %v829
      %v832 = vmul.f32 %v824, %v830
      %v833 = vmul.f32 %v825, %v830
      %v835 = vlaneseq
      %v836 = vshrl.u32 %v835, 7
      %v837 = vsub.s32 0, %v836
      %v838 = vrot.slane %v797, %v837
      %v840 = vadd.f32 %v832, %v838
      %v841 = vadd.f32 %v833, %v838
      %v842 = vpack.c.bf16 %v841, %v840
      %v843 = vld [vmem:[%s660] sm:$0xf]
      %v844 = vld [vmem:[%s660 + $0x4] sm:$0xf]
      %v845 = vld [vmem:[%s660 + $0x8] sm:$0xf]
      %v846 = vld [vmem:[%s660 + $0xc] sm:$0xf]
      %v847 = vld [vmem:[%s663] sm:$0x1]
      %v849 = vlaneseq
      %v850 = vshrl.u32 %v849, 7
      %v851 = vsub.s32 0, %v850
      %v852 = vrot.slane %v847, %v851
      %v858 = vunpack.c.l.b16 %v843
      %v859 = vunpack.c.l.b16 %v844
      %v860 = vunpack.c.l.b16 %v845
      %v861 = vunpack.c.l.b16 %v846
      %v862 = vpack.c.b16 %v859, %v858
      %v863 = vpack.c.b16 %v861, %v860
      %v867 = vsel %vm798, %v842, 0
      %869 = vmatprep.subr.bf16.mxu0 0
      %870 = vmatpush1.bf16.msra.mxu0 0
      %871 = vmatprep.subr.bf16.mxu0 0
      %872 = vmatpush1.bf16.msra.mxu0 0
      %873 = vmatprep.subr.bf16.mxu0 0
      %874 = vmatpush1.bf16.msra.mxu0 0
      %875 = vmatprep.subr.bf16.mxu0 0
      %876 = vmatpush1.bf16.msra.mxu0 0
      %877 = vmatprep.subr.bf16.mxu0 0
      %878 = vmatpush1.bf16.msra.mxu0 0
      %879 = vmatprep.subr.bf16.mxu0 0
      %880 = vmatpush1.bf16.msra.mxu0 0
      %881 = vmatprep.subr.bf16.mxu0 0
      %882 = vmatpush1.bf16.msra.mxu0 %v863
      %883 = vmatprep.subr.bf16.mxu0 0
      %884 = vmatpush1.bf16.msra.mxu0 %v862
      %885 = vmatprep.subr.bf16.mxu0 0
      %886 = vmatpush2.bf16.msra.mxu0 0
      %887 = vmatprep.subr.bf16.mxu0 0
      %888 = vmatpush2.bf16.msra.mxu0 0
      %889 = vmatprep.subr.bf16.mxu0 0
      %890 = vmatpush2.bf16.msra.mxu0 0
      %891 = vmatprep.subr.bf16.mxu0 0
      %892 = vmatpush2.bf16.msra.mxu0 0
      %893 = vmatprep.subr.bf16.mxu0 0
      %894 = vmatpush2.bf16.msra.mxu0 0
      %895 = vmatprep.subr.bf16.mxu0 0
      %896 = vmatpush2.bf16.msra.mxu0 0
      %897 = vmatprep.subr.bf16.mxu0 0
      %898 = vmatpush2.bf16.msra.mxu0 0
      %899 = vmatprep.subr.bf16.mxu0 0
      %900 = vmatpush2.bf16.msra.mxu0 0
      %901 = vmatprep.mubr.bf16.mxu0 0
      %902 = vmatmul.mubr.bf16.gmra.mxu0 %v867
      %v903 = vpop.f32.mrf.mxu0
      %v904 = vadd.f32 %v852, %v903
      %v905 = vpop.f32.mrf.mxu0
      %v906 = vpop.f32.mrf.mxu0
      %v907 = vadd.f32 %v852, %v906
      %v908 = vpop.f32.mrf.mxu0
      %909 = vdwg.mxu0
      %v910 = vpack.c.bf16 %v907, %v904
      %912 = vrot.lane.b32.xlu0 %v910, 96
      %v913 = vpop.permute.xlu0 %912
      %vm914 = vcmask 130048
      %v916 = vsel %vm914, %v910, 0
      %v919 = vsel %vm914, %v913, 0
      %921 = vmatprep.subr.bf16.mxu0 0
      %922 = vmatpush1.bf16.xpose.msra.mxu0 0
      %923 = vmatprep.subr.bf16.mxu0 0
      %924 = vmatpush1.bf16.xpose.msra.mxu0 0
      %925 = vmatprep.subr.bf16.mxu0 0
      %926 = vmatpush1.bf16.xpose.msra.mxu0 0
      %927 = vmatprep.subr.bf16.mxu0 0
      %928 = vmatpush1.bf16.xpose.msra.mxu0 0
      %929 = vmatprep.subr.bf16.mxu0 0
      %930 = vmatpush1.bf16.xpose.msra.mxu0 0
      %931 = vmatprep.subr.bf16.mxu0 0
      %932 = vmatpush1.bf16.xpose.msra.mxu0 0
      %933 = vmatprep.subr.bf16.mxu0 0
      %934 = vmatpush1.bf16.xpose.msra.mxu0 0
      %935 = vmatprep.subr.bf16.mxu0 0
      %936 = vmatpush1.bf16.xpose.msra.mxu0 %v919
      %937 = vmatprep.subr.bf16.mxu0 0
      %938 = vmatpush2.bf16.xpose.msra.mxu0 0
      %939 = vmatprep.subr.bf16.mxu0 0
      %940 = vmatpush2.bf16.xpose.msra.mxu0 0
      %941 = vmatprep.subr.bf16.mxu0 0
      %942 = vmatpush2.bf16.xpose.msra.mxu0 0
      %943 = vmatprep.subr.bf16.mxu0 0
      %944 = vmatpush2.bf16.xpose.msra.mxu0 0
      %945 = vmatprep.subr.bf16.mxu0 0
      %946 = vmatpush2.bf16.xpose.msra.mxu0 0
      %947 = vmatprep.subr.bf16.mxu0 0
      %948 = vmatpush2.bf16.xpose.msra.mxu0 0
      %949 = vmatprep.subr.bf16.mxu0 0
      %950 = vmatpush2.bf16.xpose.msra.mxu0 0
      %951 = vmatprep.subr.bf16.mxu0 0
      %952 = vmatpush2.bf16.xpose.msra.mxu0 0
      %953 = vmatprep.mubr.bf16.mxu0 0
      %954 = vmatmul.mubr.bf16.gmra.mxu0 %v916
      %v955 = vpop.f32.mrf.mxu0
      %v956 = vadd.f32 0.0, %v955
      %v957 = vpop.f32.mrf.mxu0
      %v958 = vpop.f32.mrf.mxu0
      %v959 = vadd.f32 0.0, %v958
      %v960 = vpop.f32.mrf.mxu0
      %961 = vdwg.mxu0
      %v962 = vsel %vm914, %v956, -inf
      %963 = vmax.xlane.f32.xlu0 %v962
      %v964 = vpop.xlane.xlu0 %963
      %v965 = vsel %vm914, %v959, -inf
      %966 = vmax.xlane.f32.xlu0 %v965
      %v967 = vpop.xlane.xlu0 %966
      %v968 = vsub.f32 %v956, %v964
      %v969 = vsub.f32 %v959, %v967
      %v970 = vmul.f32 %v968, 1.442695
      %v971 = vpow.pop %v970
      %v972 = vmul.f32 %v969, 1.442695
      %v973 = vpow.pop %v972
      %v974 = vsel %vm914, %v971, 0.0
      %975 = vadd.xlane.f32.xlu0 %v974
      %v976 = vpop.xlane.xlu0 %975
      %v977 = vsel %vm914, %v973, 0.0
      %978 = vadd.xlane.f32.xlu0 %v977
      %v979 = vpop.xlane.xlu0 %978
      %v980 = vrcp.pop %v976
      %v981 = vrcp.pop %v979
      %v982 = vmul.f32 %v971, %v980
      %v983 = vmul.f32 %v973, %v981
      %v984 = vpack.c.bf16 %v983, %v982
      %985 = vrot.lane.b32.xlu0 %v910, 64
      %v986 = vpop.permute.xlu0 %985
      %v989 = vsel %vm914, %v984, 0
      %991 = vmatprep.subr.bf16.mxu0 0
      %992 = vmatpush1.bf16.msra.mxu0 0
      %993 = vmatprep.subr.bf16.mxu0 0
      %994 = vmatpush1.bf16.msra.mxu0 0
      %995 = vmatprep.subr.bf16.mxu0 0
      %996 = vmatpush1.bf16.msra.mxu0 0
      %997 = vmatprep.subr.bf16.mxu0 0
      %998 = vmatpush1.bf16.msra.mxu0 0
      %999 = vmatprep.subr.bf16.mxu0 0
      %1000 = vmatpush1.bf16.msra.mxu0 0
      %1001 = vmatprep.subr.bf16.mxu0 0
      %1002 = vmatpush1.bf16.msra.mxu0 0
      %1003 = vmatprep.subr.bf16.mxu0 0
      %1004 = vmatpush1.bf16.msra.mxu0 0
      %1005 = vmatprep.subr.bf16.mxu0 0
      %1006 = vmatpush1.bf16.msra.mxu0 %v986
      %1007 = vmatprep.subr.bf16.mxu0 0
      %1008 = vmatpush2.bf16.msra.mxu0 0
      %1009 = vmatprep.subr.bf16.mxu0 0
      %1010 = vmatpush2.bf16.msra.mxu0 0
      %1011 = vmatprep.subr.bf16.mxu0 0
      %1012 = vmatpush2.bf16.msra.mxu0 0
      %1013 = vmatprep.subr.bf16.mxu0 0
      %1014 = vmatpush2.bf16.msra.mxu0 0
      %1015 = vmatprep.subr.bf16.mxu0 0
      %1016 = vmatpush2.bf16.msra.mxu0 0
      %1017 = vmatprep.subr.bf16.mxu0 0
      %1018 = vmatpush2.bf16.msra.mxu0 0
      %1019 = vmatprep.subr.bf16.mxu0 0
      %1020 = vmatpush2.bf16.msra.mxu0 0
      %1021 = vmatprep.subr.bf16.mxu0 0
      %1022 = vmatpush2.bf16.msra.mxu0 0
      %1023 = vmatprep.mubr.bf16.mxu0 0
      %1024 = vmatmul.mubr.bf16.gmra.mxu0 %v989
      %v1025 = vpop.f32.mrf.mxu0
      %v1026 = vadd.f32 0.0, %v1025
      %v1027 = vpop.f32.mrf.mxu0
      %v1028 = vpop.f32.mrf.mxu0
      %v1029 = vadd.f32 0.0, %v1028
      %v1030 = vpop.f32.mrf.mxu0
      %1031 = vdwg.mxu0
      %1032 = vrot.lane.b32.xlu0 %v910, 112
      %v1033 = vpop.permute.xlu0 %1032
      %1034 = vrot.lane.b32.xlu0 %v910, 80
      %v1035 = vpop.permute.xlu0 %1034
      %v1037 = vsel %vm914, %v1033, 0
      %v1040 = vsel %vm914, %v1035, 0
      %1042 = vmatprep.subr.bf16.mxu0 0
      %1043 = vmatpush1.bf16.xpose.msra.mxu0 0
      %1044 = vmatprep.subr.bf16.mxu0 0
      %1045 = vmatpush1.bf16.xpose.msra.mxu0 0
      %1046 = vmatprep.subr.bf16.mxu0 0
      %1047 = vmatpush1.bf16.xpose.msra.mxu0 0
      %1048 = vmatprep.subr.bf16.mxu0 0
      %1049 = vmatpush1.bf16.xpose.msra.mxu0 0
      %1050 = vmatprep.subr.bf16.mxu0 0
      %1051 = vmatpush1.bf16.xpose.msra.mxu0 0
      %1052 = vmatprep.subr.bf16.mxu0 0
      %1053 = vmatpush1.bf16.xpose.msra.mxu0 0
      %1054 = vmatprep.subr.bf16.mxu0 0
      %1055 = vmatpush1.bf16.xpose.msra.mxu0 0
      %1056 = vmatprep.subr.bf16.mxu0 0
      %1057 = vmatpush1.bf16.xpose.msra.mxu0 %v1040
      %1058 = vmatprep.subr.bf16.mxu0 0
      %1059 = vmatpush2.bf16.xpose.msra.mxu0 0
      %1060 = vmatprep.subr.bf16.mxu0 0
      %1061 = vmatpush2.bf16.xpose.msra.mxu0 0
      %1062 = vmatprep.subr.bf16.mxu0 0
      %1063 = vmatpush2.bf16.xpose.msra.mxu0 0
      %1064 = vmatprep.subr.bf16.mxu0 0
      %1065 = vmatpush2.bf16.xpose.msra.mxu0 0
      %1066 = vmatprep.subr.bf16.mxu0 0
      %1067 = vmatpush2.bf16.xpose.msra.mxu0 0
      %1068 = vmatprep.subr.bf16.mxu0 0
      %1069 = vmatpush2.bf16.xpose.msra.mxu0 0
      %1070 = vmatprep.subr.bf16.mxu0 0
      %1071 = vmatpush2.bf16.xpose.msra.mxu0 0
      %1072 = vmatprep.subr.bf16.mxu0 0
      %1073 = vmatpush2.bf16.xpose.msra.mxu0 0
      %1074 = vmatprep.mubr.bf16.mxu0 0
      %1075 = vmatmul.mubr.bf16.gmra.mxu0 %v1037
      %v1076 = vpop.f32.mrf.mxu0
      %v1077 = vadd.f32 0.0, %v1076
      %v1078 = vpop.f32.mrf.mxu0
      %v1079 = vpop.f32.mrf.mxu0
      %v1080 = vadd.f32 0.0, %v1079
      %v1081 = vpop.f32.mrf.mxu0
      %1082 = vdwg.mxu0
      %v1083 = vsel %vm914, %v1077, -inf
      %1084 = vmax.xlane.f32.xlu0 %v1083
      %v1085 = vpop.xlane.xlu0 %1084
      %v1086 = vsel %vm914, %v1080, -inf
      %1087 = vmax.xlane.f32.xlu0 %v1086
      %v1088 = vpop.xlane.xlu0 %1087
      %v1089 = vsub.f32 %v1077, %v1085
      %v1090 = vsub.f32 %v1080, %v1088
      %v1091 = vmul.f32 %v1089, 1.442695
      %v1092 = vpow.pop %v1091
      %v1093 = vmul.f32 %v1090, 1.442695
      %v1094 = vpow.pop %v1093
      %v1095 = vsel %vm914, %v1092, 0.0
      %1096 = vadd.xlane.f32.xlu0 %v1095
      %v1097 = vpop.xlane.xlu0 %1096
      %v1098 = vsel %vm914, %v1094, 0.0
      %1099 = vadd.xlane.f32.xlu0 %v1098
      %v1100 = vpop.xlane.xlu0 %1099
      %v1101 = vrcp.pop %v1097
      %v1102 = vrcp.pop %v1100
      %v1103 = vmul.f32 %v1092, %v1101
      %v1104 = vmul.f32 %v1094, %v1102
      %v1105 = vpack.c.bf16 %v1104, %v1103
      %1106 = vrot.lane.b32.xlu0 %v910, 48
      %v1107 = vpop.permute.xlu0 %1106
      %v1110 = vsel %vm914, %v1105, 0
      %1112 = vmatprep.subr.bf16.mxu0 0
      %1113 = vmatpush1.bf16.msra.mxu0 0
      %1114 = vmatprep.subr.bf16.mxu0 0
      %1115 = vmatpush1.bf16.msra.mxu0 0
      %1116 = vmatprep.subr.bf16.mxu0 0
      %1117 = vmatpush1.bf16.msra.mxu0 0
      %1118 = vmatprep.subr.bf16.mxu0 0
      %1119 = vmatpush1.bf16.msra.mxu0 0
      %1120 = vmatprep.subr.bf16.mxu0 0
      %1121 = vmatpush1.bf16.msra.mxu0 0
      %1122 = vmatprep.subr.bf16.mxu0 0
      %1123 = vmatpush1.bf16.msra.mxu0 0
      %1124 = vmatprep.subr.bf16.mxu0 0
      %1125 = vmatpush1.bf16.msra.mxu0 0
      %1126 = vmatprep.subr.bf16.mxu0 0
      %1127 = vmatpush1.bf16.msra.mxu0 %v1107
      %1128 = vmatprep.subr.bf16.mxu0 0
      %1129 = vmatpush2.bf16.msra.mxu0 0
      %1130 = vmatprep.subr.bf16.mxu0 0
      %1131 = vmatpush2.bf16.msra.mxu0 0
      %1132 = vmatprep.subr.bf16.mxu0 0
      %1133 = vmatpush2.bf16.msra.mxu0 0
      %1134 = vmatprep.subr.bf16.mxu0 0
      %1135 = vmatpush2.bf16.msra.mxu0 0
      %1136 = vmatprep.subr.bf16.mxu0 0
      %1137 = vmatpush2.bf16.msra.mxu0 0
      %1138 = vmatprep.subr.bf16.mxu0 0
      %1139 = vmatpush2.bf16.msra.mxu0 0
      %1140 = vmatprep.subr.bf16.mxu0 0
      %1141 = vmatpush2.bf16.msra.mxu0 0
      %1142 = vmatprep.subr.bf16.mxu0 0
      %1143 = vmatpush2.bf16.msra.mxu0 0
      %1144 = vmatprep.mubr.bf16.mxu0 0
      %1145 = vmatmul.mubr.bf16.gmra.mxu0 %v1110
      %v1146 = vpop.f32.mrf.mxu0
      %v1147 = vadd.f32 0.0, %v1146
      %v1148 = vpop.f32.mrf.mxu0
      %v1149 = vpop.f32.mrf.mxu0
      %v1150 = vadd.f32 0.0, %v1149
      %v1151 = vpop.f32.mrf.mxu0
      %1152 = vdwg.mxu0
      %1155 = vrot.lane.b32.xlu0 %v1147, 16
      %v1156 = vpop.permute.xlu0 %1155
      %1157 = vrot.lane.b32.xlu0 %v1150, 16
      %v1158 = vpop.permute.xlu0 %1157
      %v1161 = vsel %vm914, %v1026, %v1156
      %v1162 = vsel %vm914, %v1029, %v1158
      %v1163 = vpack.c.bf16 %v1162, %v1161
      %v1164 = vld [vmem:[%s668] sm:$0xf]
      %v1165 = vld [vmem:[%s668 + $0x4] sm:$0xf]
      %v1166 = vld [vmem:[%s668 + $0x8] sm:$0xf]
      %v1167 = vld [vmem:[%s668 + $0xc] sm:$0xf]
      %v1168 = vld [vmem:[%s671] sm:$0x1]
      %v1170 = vlaneseq
      %v1171 = vshrl.u32 %v1170, 7
      %v1172 = vsub.s32 0, %v1171
      %v1173 = vrot.slane %v1168, %v1172
      %v1179 = vunpack.c.l.b16 %v1164
      %v1180 = vunpack.c.l.b16 %v1165
      %v1181 = vunpack.c.l.b16 %v1166
      %v1182 = vunpack.c.l.b16 %v1167
      %v1183 = vpack.c.b16 %v1180, %v1179
      %v1184 = vpack.c.b16 %v1182, %v1181
      %v1188 = vsel %vm798, %v1163, 0
      %1190 = vmatprep.subr.bf16.mxu0 0
      %1191 = vmatpush1.bf16.msra.mxu0 0
      %1192 = vmatprep.subr.bf16.mxu0 0
      %1193 = vmatpush1.bf16.msra.mxu0 0
      %1194 = vmatprep.subr.bf16.mxu0 0
      %1195 = vmatpush1.bf16.msra.mxu0 0
      %1196 = vmatprep.subr.bf16.mxu0 0
      %1197 = vmatpush1.bf16.msra.mxu0 0
      %1198 = vmatprep.subr.bf16.mxu0 0
      %1199 = vmatpush1.bf16.msra.mxu0 0
      %1200 = vmatprep.subr.bf16.mxu0 0
      %1201 = vmatpush1.bf16.msra.mxu0 0
      %1202 = vmatprep.subr.bf16.mxu0 0
      %1203 = vmatpush1.bf16.msra.mxu0 %v1184
      %1204 = vmatprep.subr.bf16.mxu0 0
      %1205 = vmatpush1.bf16.msra.mxu0 %v1183
      %1206 = vmatprep.subr.bf16.mxu0 0
      %1207 = vmatpush2.bf16.msra.mxu0 0
      %1208 = vmatprep.subr.bf16.mxu0 0
      %1209 = vmatpush2.bf16.msra.mxu0 0
      %1210 = vmatprep.subr.bf16.mxu0 0
      %1211 = vmatpush2.bf16.msra.mxu0 0
      %1212 = vmatprep.subr.bf16.mxu0 0
      %1213 = vmatpush2.bf16.msra.mxu0 0
      %1214 = vmatprep.subr.bf16.mxu0 0
      %1215 = vmatpush2.bf16.msra.mxu0 0
      %1216 = vmatprep.subr.bf16.mxu0 0
      %1217 = vmatpush2.bf16.msra.mxu0 0
      %1218 = vmatprep.subr.bf16.mxu0 0
      %1219 = vmatpush2.bf16.msra.mxu0 0
      %1220 = vmatprep.subr.bf16.mxu0 0
      %1221 = vmatpush2.bf16.msra.mxu0 0
      %1222 = vmatprep.mubr.bf16.mxu0 0
      %1223 = vmatmul.mubr.bf16.gmra.mxu0 %v1188
      %v1224 = vpop.f32.mrf.mxu0
      %v1225 = vadd.f32 %v1173, %v1224
      %v1226 = vpop.f32.mrf.mxu0
      %v1227 = vpop.f32.mrf.mxu0
      %v1228 = vadd.f32 %v1173, %v1227
      %v1229 = vpop.f32.mrf.mxu0
      %1230 = vdwg.mxu0
      %v1231 = vadd.f32 %v794, %v1225
      %v1232 = vadd.f32 %v795, %v1228
      %v1233 = vld [vmem:[%s674] sm:$0x1]
      %v1234 = vld [vmem:[%s677] sm:$0x1]
      %v1235 = vsel %vm798, %v1231, 0.0
      %1236 = vadd.xlane.f32.xlu0 %v1235
      %v1237 = vpop.xlane.xlu0 %1236
      %v1238 = vsel %vm798, %v1232, 0.0
      %1239 = vadd.xlane.f32.xlu0 %v1238
      %v1240 = vpop.xlane.xlu0 %1239
      %v1241 = vmul.f32 %v1237, %v805
      %v1242 = vmul.f32 %v1240, %v805
      %v1243 = vsub.f32 %v1231, %v1241
      %v1244 = vsub.f32 %v1232, %v1242
      %v1245 = vmul.f32 %v1243, %v1243
      %v1246 = vmul.f32 %v1244, %v1244
      %v1247 = vsel %vm798, %v1245, 0.0
      %1248 = vadd.xlane.f32.xlu0 %v1247
      %v1249 = vpop.xlane.xlu0 %1248
      %v1250 = vsel %vm798, %v1246, 0.0
      %1251 = vadd.xlane.f32.xlu0 %v1250
      %v1252 = vpop.xlane.xlu0 %1251
      %v1253 = vmul.f32 %v1249, %v805
      %v1254 = vmul.f32 %v1252, %v805
      %v1255 = vadd.f32 %v1253, 1e-05
      %v1256 = vadd.f32 %v1254, 1e-05
      %v1257 = vrsqrt.pop %v1255
      %v1258 = vrsqrt.pop %v1256
      %v1259 = vmul.f32 %v1243, %v1257
      %v1260 = vmul.f32 %v1244, %v1258
      %v1262 = vlaneseq
      %v1263 = vshrl.u32 %v1262, 7
      %v1264 = vsub.s32 0, %v1263
      %v1265 = vrot.slane %v1233, %v1264
      %v1267 = vmul.f32 %v1259, %v1265
      %v1268 = vmul.f32 %v1260, %v1265
      %v1270 = vlaneseq
      %v1271 = vshrl.u32 %v1270, 7
      %v1272 = vsub.s32 0, %v1271
      %v1273 = vrot.slane %v1234, %v1272
      %v1275 = vadd.f32 %v1267, %v1273
      %v1276 = vadd.f32 %v1268, %v1273
      %v1277 = vpack.c.bf16 %v1276, %v1275
      %v1278 = vld [vmem:[%s682] sm:$0xf]
      %v1279 = vld [vmem:[%s682 + $0x4] sm:$0xf]
      %v1280 = vld [vmem:[%s682 + $0x8] sm:$0xf]
      %v1281 = vld [vmem:[%s682 + $0xc] sm:$0xf]
      %v1282 = vld [vmem:[%s685] sm:$0x1]
      %v1284 = vlaneseq
      %v1285 = vshrl.u32 %v1284, 7
      %v1286 = vsub.s32 0, %v1285
      %v1287 = vrot.slane %v1282, %v1286
      %v1293 = vunpack.c.l.b16 %v1278
      %v1294 = vunpack.c.l.b16 %v1279
      %v1295 = vunpack.c.l.b16 %v1280
      %v1296 = vunpack.c.l.b16 %v1281
      %v1297 = vpack.c.b16 %v1294, %v1293
      %v1298 = vpack.c.b16 %v1296, %v1295
      %v1302 = vsel %vm798, %v1277, 0
      %1304 = vmatprep.subr.bf16.mxu0 0
      %1305 = vmatpush1.bf16.msra.mxu0 0
      %1306 = vmatprep.subr.bf16.mxu0 0
      %1307 = vmatpush1.bf16.msra.mxu0 0
      %1308 = vmatprep.subr.bf16.mxu0 0
      %1309 = vmatpush1.bf16.msra.mxu0 0
      %1310 = vmatprep.subr.bf16.mxu0 0
      %1311 = vmatpush1.bf16.msra.mxu0 0
      %1312 = vmatprep.subr.bf16.mxu0 0
      %1313 = vmatpush1.bf16.msra.mxu0 0
      %1314 = vmatprep.subr.bf16.mxu0 0
      %1315 = vmatpush1.bf16.msra.mxu0 0
      %1316 = vmatprep.subr.bf16.mxu0 0
      %1317 = vmatpush1.bf16.msra.mxu0 %v1298
      %1318 = vmatprep.subr.bf16.mxu0 0
      %1319 = vmatpush1.bf16.msra.mxu0 %v1297
      %1320 = vmatprep.subr.bf16.mxu0 0
      %1321 = vmatpush2.bf16.msra.mxu0 0
      %1322 = vmatprep.subr.bf16.mxu0 0
      %1323 = vmatpush2.bf16.msra.mxu0 0
      %1324 = vmatprep.subr.bf16.mxu0 0
      %1325 = vmatpush2.bf16.msra.mxu0 0
      %1326 = vmatprep.subr.bf16.mxu0 0
      %1327 = vmatpush2.bf16.msra.mxu0 0
      %1328 = vmatprep.subr.bf16.mxu0 0
      %1329 = vmatpush2.bf16.msra.mxu0 0
      %1330 = vmatprep.subr.bf16.mxu0 0
      %1331 = vmatpush2.bf16.msra.mxu0 0
      %1332 = vmatprep.subr.bf16.mxu0 0
      %1333 = vmatpush2.bf16.msra.mxu0 0
      %1334 = vmatprep.subr.bf16.mxu0 0
      %1335 = vmatpush2.bf16.msra.mxu0 0
      %1336 = vmatprep.mubr.bf16.mxu0 0
      %1337 = vmatmul.mubr.bf16.gmra.mxu0 %v1302
      %v1338 = vpop.f32.mrf.mxu0
      %v1339 = vadd.f32 %v1287, %v1338
      %v1340 = vpop.f32.mrf.mxu0
      %v1341 = vpop.f32.mrf.mxu0
      %v1342 = vadd.f32 %v1287, %v1341
      %v1343 = vpop.f32.mrf.mxu0
      %1344 = vdwg.mxu0
      %v1345 = vmul.f32 %v1339, %v1339
      %v1346 = vmul.f32 %v1342, %v1342
      %v1347 = vmul.f32 %v1339, %v1345
      %v1348 = vmul.f32 %v1342, %v1346
      %v1349 = vmul.f32 %v1347, 0.044715
      %v1350 = vmul.f32 %v1348, 0.044715
      %v1351 = vadd.f32 %v1339, %v1349
      %v1352 = vadd.f32 %v1342, %v1350
      %v1353 = vmul.f32 %v1351, 0.7978846
      %v1354 = vmul.f32 %v1352, 0.7978846
      %v1355 = vtanh.pop %v1353
      %v1356 = vtanh.pop %v1354
      %v1357 = vadd.f32 %v1355, 1.0
      %v1358 = vadd.f32 %v1356, 1.0
      %v1359 = vmul.f32 %v1357, 0.5
      %v1360 = vmul.f32 %v1358, 0.5
      %v1361 = vmul.f32 %v1339, %v1359
      %v1362 = vmul.f32 %v1342, %v1360
      %v1363 = vpack.c.bf16 %v1362, %v1361
      %v1364 = vld [vmem:[%s690] sm:$0xf]
      %v1365 = vld [vmem:[%s690 + $0x4] sm:$0xf]
      %v1366 = vld [vmem:[%s690 + $0x8] sm:$0xf]
      %v1367 = vld [vmem:[%s690 + $0xc] sm:$0xf]
      %v1368 = vld [vmem:[%s690 + $0x10] sm:$0xf]
      %v1369 = vld [vmem:[%s690 + $0x14] sm:$0xf]
      %v1370 = vld [vmem:[%s690 + $0x18] sm:$0xf]
      %v1371 = vld [vmem:[%s690 + $0x1c] sm:$0xf]
      %v1372 = vld [vmem:[%s690 + $0x20] sm:$0xf]
      %v1373 = vld [vmem:[%s690 + $0x24] sm:$0xf]
      %v1374 = vld [vmem:[%s690 + $0x28] sm:$0xf]
      %v1375 = vld [vmem:[%s690 + $0x2c] sm:$0xf]
      %v1376 = vld [vmem:[%s690 + $0x30] sm:$0xf]
      %v1377 = vld [vmem:[%s690 + $0x34] sm:$0xf]
      %v1378 = vld [vmem:[%s690 + $0x38] sm:$0xf]
      %v1379 = vld [vmem:[%s690 + $0x3c] sm:$0xf]
      %v1380 = vld [vmem:[%s693] sm:$0x1]
      %v1382 = vlaneseq
      %v1383 = vshrl.u32 %v1382, 7
      %v1384 = vsub.s32 0, %v1383
      %v1385 = vrot.slane %v1380, %v1384
      %v1403 = vunpack.c.l.b16 %v1364
      %v1404 = vunpack.c.l.b16 %v1365
      %v1405 = vunpack.c.l.b16 %v1366
      %v1406 = vunpack.c.l.b16 %v1367
      %v1407 = vunpack.c.l.b16 %v1368
      %v1408 = vunpack.c.l.b16 %v1369
      %v1409 = vunpack.c.l.b16 %v1370
      %v1410 = vunpack.c.l.b16 %v1371
      %v1411 = vunpack.c.l.b16 %v1372
      %v1412 = vunpack.c.l.b16 %v1373
      %v1413 = vunpack.c.l.b16 %v1374
      %v1414 = vunpack.c.l.b16 %v1375
      %v1415 = vunpack.c.l.b16 %v1376
      %v1416 = vunpack.c.l.b16 %v1377
      %v1417 = vunpack.c.l.b16 %v1378
      %v1418 = vunpack.c.l.b16 %v1379
      %v1419 = vpack.c.b16 %v1404, %v1403
      %v1420 = vpack.c.b16 %v1406, %v1405
      %v1421 = vpack.c.b16 %v1408, %v1407
      %v1422 = vpack.c.b16 %v1410, %v1409
      %v1423 = vpack.c.b16 %v1412, %v1411
      %v1424 = vpack.c.b16 %v1414, %v1413
      %v1425 = vpack.c.b16 %v1416, %v1415
      %v1426 = vpack.c.b16 %v1418, %v1417
      %1435 = vmatprep.subr.bf16.mxu0 0
      %1436 = vmatpush1.bf16.msra.mxu0 %v1426
      %1437 = vmatprep.subr.bf16.mxu0 0
      %1438 = vmatpush1.bf16.msra.mxu0 %v1425
      %1439 = vmatprep.subr.bf16.mxu0 0
      %1440 = vmatpush1.bf16.msra.mxu0 %v1424
      %1441 = vmatprep.subr.bf16.mxu0 0
      %1442 = vmatpush1.bf16.msra.mxu0 %v1423
      %1443 = vmatprep.subr.bf16.mxu0 0
      %1444 = vmatpush1.bf16.msra.mxu0 %v1422
      %1445 = vmatprep.subr.bf16.mxu0 0
      %1446 = vmatpush1.bf16.msra.mxu0 %v1421
      %1447 = vmatprep.subr.bf16.mxu0 0
      %1448 = vmatpush1.bf16.msra.mxu0 %v1420
      %1449 = vmatprep.subr.bf16.mxu0 0
      %1450 = vmatpush1.bf16.msra.mxu0 %v1419
      %1451 = vmatprep.subr.bf16.mxu0 0
      %1452 = vmatpush2.bf16.msra.mxu0 0
      %1453 = vmatprep.subr.bf16.mxu0 0
      %1454 = vmatpush2.bf16.msra.mxu0 0
      %1455 = vmatprep.subr.bf16.mxu0 0
      %1456 = vmatpush2.bf16.msra.mxu0 0
      %1457 = vmatprep.subr.bf16.mxu0 0
      %1458 = vmatpush2.bf16.msra.mxu0 0
      %1459 = vmatprep.subr.bf16.mxu0 0
      %1460 = vmatpush2.bf16.msra.mxu0 0
      %1461 = vmatprep.subr.bf16.mxu0 0
      %1462 = vmatpush2.bf16.msra.mxu0 0
      %1463 = vmatprep.subr.bf16.mxu0 0
      %1464 = vmatpush2.bf16.msra.mxu0 0
      %1465 = vmatprep.subr.bf16.mxu0 0
      %1466 = vmatpush2.bf16.msra.mxu0 0
      %1467 = vmatprep.mubr.bf16.mxu0 0
      %1468 = vmatmul.mubr.bf16.gmra.mxu0 %v1363
      %v1469 = vpop.f32.mrf.mxu0
      %v1470 = vadd.f32 %v1385, %v1469
      %v1471 = vpop.f32.mrf.mxu0
      %v1472 = vpop.f32.mrf.mxu0
      %v1473 = vadd.f32 %v1385, %v1472
      %v1474 = vpop.f32.mrf.mxu0
      %1475 = vdwg.mxu0
      %v1476 = vadd.f32 %v1231, %v1470
      %v1477 = vadd.f32 %v1232, %v1473
      %1478 = vst.msk [vmem:[%s698] sm:$0xff] %vm798, %v1476
      %1479 = vst.msk [vmem:[%s698 + $0x8] sm:$0xff] %vm798, %v1477
      %p1480 = scmp.lt.s32.totalorder %s30, 1
      %s1481 = scalar_select %p1480, %s30, 1
      %s1482 = smul.addr %s1481, 2
      %s1483 = smul.addr %s1482, 8
      %s1484 = scalar_lea.vmem %s15, %s1483
      // Predicated region
      $region85: #{_lambda_.6} parent=79 // pred_check
        %p1485 = pneg %p436
      $region86: #{_lambda_.6} parent=79 // pred_check_branch
        %1487 = sbr.rel (%p1485) target = $region88
      $region87: #{_lambda_.6} parent=79 // pred_region
        _
      $region88: #{_lambda_.6} parent=79 // pred_fallthru
        _
    $region80: #{_lambda_.6} parent=5 // pred_fallthru
      _
    %p1488 = scmp.le.s32.totalorder 2, %s21
    // Predicated region
    $region89: #{_lambda_.6} parent=5 // pred_check
      %p1489 = pneg %p1488
    $region90: #{_lambda_.6} parent=5 // pred_check_branch
      %1491 = sbr.rel (%p1489) target = $region92
    $region91: #{_lambda_.6} parent=5 // pred_region
      %s1492 = ssub.s32 %s21, 2
      // Predicated region
      $region93: #{_lambda_.6} parent=91 // pred_check
        %p1493 = pneg %p442
      $region94: #{_lambda_.6} parent=91 // pred_check_branch
        %1495 = sbr.rel (%p1493) target = $region96
      $region95: #{_lambda_.6} parent=91 // pred_region
        %p1496 = scmp.lt.s32.totalorder %s32, 1
        %s1497 = scalar_select %p1496, %s32, 1
        %s1498 = smul.addr %s1497, 2
        %s1499 = smul.addr %s1498, 8
        %s1500 = scalar_lea.vmem %s15, %s1499
      $region96: #{_lambda_.6} parent=91 // pred_fallthru
        _
    $region92: #{_lambda_.6} parent=5 // pred_fallthru
      _
  $region6: #{_lambda_.6} parent=0 // loop_footer
    %s25 = sadd.s32 1, %s21
  $region7: #{_lambda_.6} parent=0 // loop_footer_branch
    %20 = sbr.rel target = $region3
  $region8: #{_lambda_.6} parent=0 // loop_exit
    _

// kernel: _lambda_.7
$region0: #{_lambda_.7}
  #allocation0 [shape = 'u32[]', space=smem, size = 0x4, offset = 0x4, fixed_abs, tag = 'smem constant byte address 0x4 - core index']
  #allocation1 [shape = 'u32[144,128]{1,0:T(1,128)}', space=vmem, size = 0x12000, scoped, tag = 'internal scratch']
  %s0 = inlined_call_operand.vmem [shape: f32[2,4,128], index: 0, kind: input, shape index: {}]
  %s1 = inlined_call_operand.vmem [shape: bf16[128,64], index: 1, kind: input, shape index: {}]
  %s2 = inlined_call_operand.vmem [shape: f32[1,64], index: 2, kind: input, shape index: {}]
  %s3 = inlined_call_operand.vmem [shape: f32[4,1,64], index: 3, kind: input, shape index: {}]
  %s4 = inlined_call_operand.vmem [shape: f32[4,1,64], index: 4, kind: input, shape index: {}]
  %s5 = inlined_call_operand.vmem [shape: bf16[4,64,192], index: 5, kind: input, shape index: {}]
  %s6 = inlined_call_operand.vmem [shape: f32[4,1,192], index: 6, kind: input, shape index: {}]
  %s7 = inlined_call_operand.vmem [shape: bf16[4,64,64], index: 7, kind: input, shape index: {}]
  %s8 = inlined_call_operand.vmem [shape: f32[4,1,64], index: 8, kind: input, shape index: {}]
  %s9 = inlined_call_operand.vmem [shape: f32[4,1,64], index: 9, kind: input, shape index: {}]
  %s10 = inlined_call_operand.vmem [shape: f32[4,1,64], index: 10, kind: input, shape index: {}]
  %s11 = inlined_call_operand.vmem [shape: bf16[4,64,256], index: 11, kind: input, shape index: {}]
  %s12 = inlined_call_operand.vmem [shape: f32[4,1,256], index: 12, kind: input, shape index: {}]
  %s13 = inlined_call_operand.vmem [shape: bf16[4,256,64], index: 13, kind: input, shape index: {}]
  %s14 = inlined_call_operand.vmem [shape: f32[4,1,64], index: 14, kind: input, shape index: {}]
  %s15 = inlined_call_operand.vmem [shape: f32[2,4,64], index: 15, kind: output, shape index: {}]
  %s16 = sld [smem:[#allocation0]]
  $region97: #{_lambda_.7} parent=0
    _
  %s18 = ssub.s32 1, %s16
  %s19 = scalar_select 0, %s18, %s16
  loop: start=0, step=1, limit=10
  $region2: #{_lambda_.7} parent=0 // loop_pre_header
    _
  $region3: #{_lambda_.7} parent=0 // loop_header
    %s21 = sphi 0, %s25
    %p22 = scmp.ge.s32.totalorder %s21, 10
    %s28 = sphi 0, %s40
    %s29 = sphi 0, %s36
    %s30 = sphi 0, %s28
    %s31 = sphi 0, %s29
    %s32 = sphi 0, %s30
    %s33 = sphi 0, %s31
    %s43 = sphi 0, %s45
    %s46 = sphi 0, %s43
    %s47 = sphi 0, %s46
    %s63 = sphi 0, %s47
    %s67 = sphi 0, %s67
    %s69 = sphi 0, %s67
    %s70 = sphi 0, %s69
    %s84 = sphi 0, %s70
    %s88 = sphi 0, %s88
    %s90 = sphi 0, %s88
    %s91 = sphi 0, %s90
    %s105 = sphi 0, %s91
    %s111 = sphi 0, %s113
    %s114 = sphi 0, %s111
    %s115 = sphi 0, %s114
    %s131 = sphi 0, %s115
    %s137 = sphi 0, %s139
    %s140 = sphi 0, %s137
    %s141 = sphi 0, %s140
    %s157 = sphi 0, %s141
    %s163 = sphi 0, %s165
    %s166 = sphi 0, %s163
    %s167 = sphi 0, %s166
    %s183 = sphi 0, %s167
    %s189 = sphi 0, %s191
    %s192 = sphi 0, %s189
    %s193 = sphi 0, %s192
    %s209 = sphi 0, %s193
    %s215 = sphi 0, %s217
    %s218 = sphi 0, %s215
    %s219 = sphi 0, %s218
    %s235 = sphi 0, %s219
    %s241 = sphi 0, %s243
    %s244 = sphi 0, %s241
    %s245 = sphi 0, %s244
    %s261 = sphi 0, %s245
    %s267 = sphi 0, %s269
    %s270 = sphi 0, %s267
    %s271 = sphi 0, %s270
    %s287 = sphi 0, %s271
    %s293 = sphi 0, %s295
    %s296 = sphi 0, %s293
    %s297 = sphi 0, %s296
    %s313 = sphi 0, %s297
    %s319 = sphi 0, %s321
    %s322 = sphi 0, %s319
    %s323 = sphi 0, %s322
    %s339 = sphi 0, %s323
    %s345 = sphi 0, %s347
    %s348 = sphi 0, %s345
    %s349 = sphi 0, %s348
    %s365 = sphi 0, %s349
    %s371 = sphi 0, %s373
    %s374 = sphi 0, %s371
    %s375 = sphi 0, %s374
    %s391 = sphi 0, %s375
    %s397 = sphi 0, %s399
    %s400 = sphi 0, %s397
    %s401 = sphi 0, %s400
    %s417 = sphi 0, %s401
    %s423 = sphi 0, %s425
    %s426 = sphi 0, %s423
    %s427 = sphi 0, %s426
    %s443 = sphi 0, %s427
  $region4: #{_lambda_.7} parent=0 // loop_header_branch
    %24 = sbr.rel (%p22) target = $region8
  $region5: #{_lambda_.7} parent=0 // loop_body
    %s26 = ssub.s32 %s21, 1
    %s27 = ssub.s32 %s21, 2
    %s34 = sadd.s32 1, %s29
    %p35 = scmp.ge.s32.totalorder %s34, 4
    %s36 = scalar_select %p35, 0, %s34
    %s37 = sadd.s32 1, %s28
    %s38 = scalar_select %p35, %s37, %s28
    %p39 = scmp.ge.s32.totalorder %s38, 2
    %s40 = scalar_select %p39, 0, %s38
    %s41 = ssub.s32 %s28, %s40
    %p42 = scmp.eq.s32.totalorder %s41, 0
    %s44 = sadd.s32 %s43, 1
    %s45 = scalar_select %p42, %s43, %s44
    %p48 = pneg %p42
    %p49 = scmp.eq.s32.totalorder %s21, 7
    %p50 = por %p48, %p49
    %p51 = scmp.ne.s32.totalorder %s43, %s46
    %p52 = scmp.eq.s32.totalorder %s21, 0
    %p53 = por %p51, %p52
    %p54 = scmp.ne.s32.totalorder %s43, %s46
    %p55 = scmp.eq.s32.totalorder %s26, 7
    %p56 = por %p54, %p55
    %p57 = scmp.ne.s32.totalorder %s46, %s47
    %p58 = scmp.eq.s32.totalorder %s26, 0
    %p59 = por %p57, %p58
    %p60 = scmp.ne.s32.totalorder %s46, %s47
    %p61 = scmp.eq.s32.totalorder %s27, 7
    %p62 = por %p60, %p61
    %p64 = scmp.ne.s32.totalorder %s47, %s63
    %p65 = scmp.eq.s32.totalorder %s27, 0
    %p66 = por %p64, %p65
    %s68 = sadd.s32 %s67, 1
    %p71 = scmp.eq.s32.totalorder %s21, 7
    %p72 = scmp.ne.s32.totalorder %s67, %s69
    %p73 = scmp.eq.s32.totalorder %s21, 0
    %p74 = por %p72, %p73
    %p75 = scmp.ne.s32.totalorder %s67, %s69
    %p76 = scmp.eq.s32.totalorder %s26, 7
    %p77 = por %p75, %p76
    %p78 = scmp.ne.s32.totalorder %s69, %s70
    %p79 = scmp.eq.s32.totalorder %s26, 0
    %p80 = por %p78, %p79
    %p81 = scmp.ne.s32.totalorder %s69, %s70
    %p82 = scmp.eq.s32.totalorder %s27, 7
    %p83 = por %p81, %p82
    %p85 = scmp.ne.s32.totalorder %s70, %s84
    %p86 = scmp.eq.s32.totalorder %s27, 0
    %p87 = por %p85, %p86
    %s89 = sadd.s32 %s88, 1
    %p92 = scmp.eq.s32.totalorder %s21, 7
    %p93 = scmp.ne.s32.totalorder %s88, %s90
    %p94 = scmp.eq.s32.totalorder %s21, 0
    %p95 = por %p93, %p94
    %p96 = scmp.ne.s32.totalorder %s88, %s90
    %p97 = scmp.eq.s32.totalorder %s26, 7
    %p98 = por %p96, %p97
    %p99 = scmp.ne.s32.totalorder %s90, %s91
    %p100 = scmp.eq.s32.totalorder %s26, 0
    %p101 = por %p99, %p100
    %p102 = scmp.ne.s32.totalorder %s90, %s91
    %p103 = scmp.eq.s32.totalorder %s27, 7
    %p104 = por %p102, %p103
    %p106 = scmp.ne.s32.totalorder %s91, %s105
    %p107 = scmp.eq.s32.totalorder %s27, 0
    %p108 = por %p106, %p107
    %s109 = ssub.s32 %s29, %s36
    %p110 = scmp.eq.s32.totalorder %s109, 0
    %s112 = sadd.s32 %s111, 1
    %s113 = scalar_select %p110, %s111, %s112
    %p116 = pneg %p110
    %p117 = scmp.eq.s32.totalorder %s21, 7
    %p118 = por %p116, %p117
    %p119 = scmp.ne.s32.totalorder %s111, %s114
    %p120 = scmp.eq.s32.totalorder %s21, 0
    %p121 = por %p119, %p120
    %p122 = scmp.ne.s32.totalorder %s111, %s114
    %p123 = scmp.eq.s32.totalorder %s26, 7
    %p124 = por %p122, %p123
    %p125 = scmp.ne.s32.totalorder %s114, %s115
    %p126 = scmp.eq.s32.totalorder %s26, 0
    %p127 = por %p125, %p126
    %p128 = scmp.ne.s32.totalorder %s114, %s115
    %p129 = scmp.eq.s32.totalorder %s27, 7
    %p130 = por %p128, %p129
    %p132 = scmp.ne.s32.totalorder %s115, %s131
    %p133 = scmp.eq.s32.totalorder %s27, 0
    %p134 = por %p132, %p133
    %s135 = ssub.s32 %s29, %s36
    %p136 = scmp.eq.s32.totalorder %s135, 0
    %s138 = sadd.s32 %s137, 1
    %s139 = scalar_select %p136, %s137, %s138
    %p142 = pneg %p136
    %p143 = scmp.eq.s32.totalorder %s21, 7
    %p144 = por %p142, %p143
    %p145 = scmp.ne.s32.totalorder %s137, %s140
    %p146 = scmp.eq.s32.totalorder %s21, 0
    %p147 = por %p145, %p146
    %p148 = scmp.ne.s32.totalorder %s137, %s140
    %p149 = scmp.eq.s32.totalorder %s26, 7
    %p150 = por %p148, %p149
    %p151 = scmp.ne.s32.totalorder %s140, %s141
    %p152 = scmp.eq.s32.totalorder %s26, 0
    %p153 = por %p151, %p152
    %p154 = scmp.ne.s32.totalorder %s140, %s141
    %p155 = scmp.eq.s32.totalorder %s27, 7
    %p156 = por %p154, %p155
    %p158 = scmp.ne.s32.totalorder %s141, %s157
    %p159 = scmp.eq.s32.totalorder %s27, 0
    %p160 = por %p158, %p159
    %s161 = ssub.s32 %s29, %s36
    %p162 = scmp.eq.s32.totalorder %s161, 0
    %s164 = sadd.s32 %s163, 1
    %s165 = scalar_select %p162, %s163, %s164
    %p168 = pneg %p162
    %p169 = scmp.eq.s32.totalorder %s21, 7
    %p170 = por %p168, %p169
    %p171 = scmp.ne.s32.totalorder %s163, %s166
    %p172 = scmp.eq.s32.totalorder %s21, 0
    %p173 = por %p171, %p172
    %p174 = scmp.ne.s32.totalorder %s163, %s166
    %p175 = scmp.eq.s32.totalorder %s26, 7
    %p176 = por %p174, %p175
    %p177 = scmp.ne.s32.totalorder %s166, %s167
    %p178 = scmp.eq.s32.totalorder %s26, 0
    %p179 = por %p177, %p178
    %p180 = scmp.ne.s32.totalorder %s166, %s167
    %p181 = scmp.eq.s32.totalorder %s27, 7
    %p182 = por %p180, %p181
    %p184 = scmp.ne.s32.totalorder %s167, %s183
    %p185 = scmp.eq.s32.totalorder %s27, 0
    %p186 = por %p184, %p185
    %s187 = ssub.s32 %s29, %s36
    %p188 = scmp.eq.s32.totalorder %s187, 0
    %s190 = sadd.s32 %s189, 1
    %s191 = scalar_select %p188, %s189, %s190
    %p194 = pneg %p188
    %p195 = scmp.eq.s32.totalorder %s21, 7
    %p196 = por %p194, %p195
    %p197 = scmp.ne.s32.totalorder %s189, %s192
    %p198 = scmp.eq.s32.totalorder %s21, 0
    %p199 = por %p197, %p198
    %p200 = scmp.ne.s32.totalorder %s189, %s192
    %p201 = scmp.eq.s32.totalorder %s26, 7
    %p202 = por %p200, %p201
    %p203 = scmp.ne.s32.totalorder %s192, %s193
    %p204 = scmp.eq.s32.totalorder %s26, 0
    %p205 = por %p203, %p204
    %p206 = scmp.ne.s32.totalorder %s192, %s193
    %p207 = scmp.eq.s32.totalorder %s27, 7
    %p208 = por %p206, %p207
    %p210 = scmp.ne.s32.totalorder %s193, %s209
    %p211 = scmp.eq.s32.totalorder %s27, 0
    %p212 = por %p210, %p211
    %s213 = ssub.s32 %s29, %s36
    %p214 = scmp.eq.s32.totalorder %s213, 0
    %s216 = sadd.s32 %s215, 1
    %s217 = scalar_select %p214, %s215, %s216
    %p220 = pneg %p214
    %p221 = scmp.eq.s32.totalorder %s21, 7
    %p222 = por %p220, %p221
    %p223 = scmp.ne.s32.totalorder %s215, %s218
    %p224 = scmp.eq.s32.totalorder %s21, 0
    %p225 = por %p223, %p224
    %p226 = scmp.ne.s32.totalorder %s215, %s218
    %p227 = scmp.eq.s32.totalorder %s26, 7
    %p228 = por %p226, %p227
    %p229 = scmp.ne.s32.totalorder %s218, %s219
    %p230 = scmp.eq.s32.totalorder %s26, 0
    %p231 = por %p229, %p230
    %p232 = scmp.ne.s32.totalorder %s218, %s219
    %p233 = scmp.eq.s32.totalorder %s27, 7
    %p234 = por %p232, %p233
    %p236 = scmp.ne.s32.totalorder %s219, %s235
    %p237 = scmp.eq.s32.totalorder %s27, 0
    %p238 = por %p236, %p237
    %s239 = ssub.s32 %s29, %s36
    %p240 = scmp.eq.s32.totalorder %s239, 0
    %s242 = sadd.s32 %s241, 1
    %s243 = scalar_select %p240, %s241, %s242
    %p246 = pneg %p240
    %p247 = scmp.eq.s32.totalorder %s21, 7
    %p248 = por %p246, %p247
    %p249 = scmp.ne.s32.totalorder %s241, %s244
    %p250 = scmp.eq.s32.totalorder %s21, 0
    %p251 = por %p249, %p250
    %p252 = scmp.ne.s32.totalorder %s241, %s244
    %p253 = scmp.eq.s32.totalorder %s26, 7
    %p254 = por %p252, %p253
    %p255 = scmp.ne.s32.totalorder %s244, %s245
    %p256 = scmp.eq.s32.totalorder %s26, 0
    %p257 = por %p255, %p256
    %p258 = scmp.ne.s32.totalorder %s244, %s245
    %p259 = scmp.eq.s32.totalorder %s27, 7
    %p260 = por %p258, %p259
    %p262 = scmp.ne.s32.totalorder %s245, %s261
    %p263 = scmp.eq.s32.totalorder %s27, 0
    %p264 = por %p262, %p263
    %s265 = ssub.s32 %s29, %s36
    %p266 = scmp.eq.s32.totalorder %s265, 0
    %s268 = sadd.s32 %s267, 1
    %s269 = scalar_select %p266, %s267, %s268
    %p272 = pneg %p266
    %p273 = scmp.eq.s32.totalorder %s21, 7
    %p274 = por %p272, %p273
    %p275 = scmp.ne.s32.totalorder %s267, %s270
    %p276 = scmp.eq.s32.totalorder %s21, 0
    %p277 = por %p275, %p276
    %p278 = scmp.ne.s32.totalorder %s267, %s270
    %p279 = scmp.eq.s32.totalorder %s26, 7
    %p280 = por %p278, %p279
    %p281 = scmp.ne.s32.totalorder %s270, %s271
    %p282 = scmp.eq.s32.totalorder %s26, 0
    %p283 = por %p281, %p282
    %p284 = scmp.ne.s32.totalorder %s270, %s271
    %p285 = scmp.eq.s32.totalorder %s27, 7
    %p286 = por %p284, %p285
    %p288 = scmp.ne.s32.totalorder %s271, %s287
    %p289 = scmp.eq.s32.totalorder %s27, 0
    %p290 = por %p288, %p289
    %s291 = ssub.s32 %s29, %s36
    %p292 = scmp.eq.s32.totalorder %s291, 0
    %s294 = sadd.s32 %s293, 1
    %s295 = scalar_select %p292, %s293, %s294
    %p298 = pneg %p292
    %p299 = scmp.eq.s32.totalorder %s21, 7
    %p300 = por %p298, %p299
    %p301 = scmp.ne.s32.totalorder %s293, %s296
    %p302 = scmp.eq.s32.totalorder %s21, 0
    %p303 = por %p301, %p302
    %p304 = scmp.ne.s32.totalorder %s293, %s296
    %p305 = scmp.eq.s32.totalorder %s26, 7
    %p306 = por %p304, %p305
    %p307 = scmp.ne.s32.totalorder %s296, %s297
    %p308 = scmp.eq.s32.totalorder %s26, 0
    %p309 = por %p307, %p308
    %p310 = scmp.ne.s32.totalorder %s296, %s297
    %p311 = scmp.eq.s32.totalorder %s27, 7
    %p312 = por %p310, %p311
    %p314 = scmp.ne.s32.totalorder %s297, %s313
    %p315 = scmp.eq.s32.totalorder %s27, 0
    %p316 = por %p314, %p315
    %s317 = ssub.s32 %s29, %s36
    %p318 = scmp.eq.s32.totalorder %s317, 0
    %s320 = sadd.s32 %s319, 1
    %s321 = scalar_select %p318, %s319, %s320
    %p324 = pneg %p318
    %p325 = scmp.eq.s32.totalorder %s21, 7
    %p326 = por %p324, %p325
    %p327 = scmp.ne.s32.totalorder %s319, %s322
    %p328 = scmp.eq.s32.totalorder %s21, 0
    %p329 = por %p327, %p328
    %p330 = scmp.ne.s32.totalorder %s319, %s322
    %p331 = scmp.eq.s32.totalorder %s26, 7
    %p332 = por %p330, %p331
    %p333 = scmp.ne.s32.totalorder %s322, %s323
    %p334 = scmp.eq.s32.totalorder %s26, 0
    %p335 = por %p333, %p334
    %p336 = scmp.ne.s32.totalorder %s322, %s323
    %p337 = scmp.eq.s32.totalorder %s27, 7
    %p338 = por %p336, %p337
    %p340 = scmp.ne.s32.totalorder %s323, %s339
    %p341 = scmp.eq.s32.totalorder %s27, 0
    %p342 = por %p340, %p341
    %s343 = ssub.s32 %s29, %s36
    %p344 = scmp.eq.s32.totalorder %s343, 0
    %s346 = sadd.s32 %s345, 1
    %s347 = scalar_select %p344, %s345, %s346
    %p350 = pneg %p344
    %p351 = scmp.eq.s32.totalorder %s21, 7
    %p352 = por %p350, %p351
    %p353 = scmp.ne.s32.totalorder %s345, %s348
    %p354 = scmp.eq.s32.totalorder %s21, 0
    %p355 = por %p353, %p354
    %p356 = scmp.ne.s32.totalorder %s345, %s348
    %p357 = scmp.eq.s32.totalorder %s26, 7
    %p358 = por %p356, %p357
    %p359 = scmp.ne.s32.totalorder %s348, %s349
    %p360 = scmp.eq.s32.totalorder %s26, 0
    %p361 = por %p359, %p360
    %p362 = scmp.ne.s32.totalorder %s348, %s349
    %p363 = scmp.eq.s32.totalorder %s27, 7
    %p364 = por %p362, %p363
    %p366 = scmp.ne.s32.totalorder %s349, %s365
    %p367 = scmp.eq.s32.totalorder %s27, 0
    %p368 = por %p366, %p367
    %s369 = ssub.s32 %s29, %s36
    %p370 = scmp.eq.s32.totalorder %s369, 0
    %s372 = sadd.s32 %s371, 1
    %s373 = scalar_select %p370, %s371, %s372
    %p376 = pneg %p370
    %p377 = scmp.eq.s32.totalorder %s21, 7
    %p378 = por %p376, %p377
    %p379 = scmp.ne.s32.totalorder %s371, %s374
    %p380 = scmp.eq.s32.totalorder %s21, 0
    %p381 = por %p379, %p380
    %p382 = scmp.ne.s32.totalorder %s371, %s374
    %p383 = scmp.eq.s32.totalorder %s26, 7
    %p384 = por %p382, %p383
    %p385 = scmp.ne.s32.totalorder %s374, %s375
    %p386 = scmp.eq.s32.totalorder %s26, 0
    %p387 = por %p385, %p386
    %p388 = scmp.ne.s32.totalorder %s374, %s375
    %p389 = scmp.eq.s32.totalorder %s27, 7
    %p390 = por %p388, %p389
    %p392 = scmp.ne.s32.totalorder %s375, %s391
    %p393 = scmp.eq.s32.totalorder %s27, 0
    %p394 = por %p392, %p393
    %s395 = ssub.s32 %s29, %s36
    %p396 = scmp.eq.s32.totalorder %s395, 0
    %s398 = sadd.s32 %s397, 1
    %s399 = scalar_select %p396, %s397, %s398
    %p402 = pneg %p396
    %p403 = scmp.eq.s32.totalorder %s21, 7
    %p404 = por %p402, %p403
    %p405 = scmp.ne.s32.totalorder %s397, %s400
    %p406 = scmp.eq.s32.totalorder %s21, 0
    %p407 = por %p405, %p406
    %p408 = scmp.ne.s32.totalorder %s397, %s400
    %p409 = scmp.eq.s32.totalorder %s26, 7
    %p410 = por %p408, %p409
    %p411 = scmp.ne.s32.totalorder %s400, %s401
    %p412 = scmp.eq.s32.totalorder %s26, 0
    %p413 = por %p411, %p412
    %p414 = scmp.ne.s32.totalorder %s400, %s401
    %p415 = scmp.eq.s32.totalorder %s27, 7
    %p416 = por %p414, %p415
    %p418 = scmp.ne.s32.totalorder %s401, %s417
    %p419 = scmp.eq.s32.totalorder %s27, 0
    %p420 = por %p418, %p419
    %s421 = ssub.s32 %s28, %s40
    %p422 = scmp.eq.s32.totalorder %s421, 0
    %s424 = sadd.s32 %s423, 1
    %s425 = scalar_select %p422, %s423, %s424
    %p428 = pneg %p422
    %p429 = scmp.eq.s32.totalorder %s21, 7
    %p430 = por %p428, %p429
    %p431 = scmp.ne.s32.totalorder %s423, %s426
    %p432 = scmp.eq.s32.totalorder %s21, 0
    %p433 = por %p431, %p432
    %p434 = scmp.ne.s32.totalorder %s423, %s426
    %p435 = scmp.eq.s32.totalorder %s26, 7
    %p436 = por %p434, %p435
    %p437 = scmp.ne.s32.totalorder %s426, %s427
    %p438 = scmp.eq.s32.totalorder %s26, 0
    %p439 = por %p437, %p438
    %p440 = scmp.ne.s32.totalorder %s426, %s427
    %p441 = scmp.eq.s32.totalorder %s27, 7
    %p442 = por %p440, %p441
    %p444 = scmp.ne.s32.totalorder %s427, %s443
    %p445 = scmp.eq.s32.totalorder %s27, 0
    %p446 = por %p444, %p445
    %p447 = scmp.le.s32.totalorder 1, %s21
    %p448 = scmp.lt.s32.totalorder %s21, 9
    %p449 = pnand %p447, %p448
    %p450 = pneg %p449
    // Predicated region
    $region9: #{_lambda_.7} parent=5 // pred_check
      _
    $region10: #{_lambda_.7} parent=5 // pred_check_branch
      %452 = sbr.rel (%p449) target = $region12
    $region11: #{_lambda_.7} parent=5 // pred_region
      %s453 = ssub.s32 %s21, 1
      // Predicated region
      $region13: #{_lambda_.7} parent=11 // pred_check
        %p454 = pneg %p80
      $region14: #{_lambda_.7} parent=11 // pred_check_branch
        %456 = sbr.rel (%p454) target = $region16
      $region15: #{_lambda_.7} parent=11 // pred_region
        _
      $region16: #{_lambda_.7} parent=11 // pred_fallthru
        _
      // Predicated region
      $region17: #{_lambda_.7} parent=11 // pred_check
        %p457 = pneg %p101
      $region18: #{_lambda_.7} parent=11 // pred_check_branch
        %459 = sbr.rel (%p457) target = $region20
      $region19: #{_lambda_.7} parent=11 // pred_region
        _
      $region20: #{_lambda_.7} parent=11 // pred_fallthru
        _
    $region12: #{_lambda_.7} parent=5 // pred_fallthru
      _
    %p460 = scmp.lt.s32.totalorder %s21, 8
    // Predicated region
    $region21: #{_lambda_.7} parent=5 // pred_check
      %p461 = pneg %p460
    $region22: #{_lambda_.7} parent=5 // pred_check_branch
      %463 = sbr.rel (%p461) target = $region24
    $region23: #{_lambda_.7} parent=5 // pred_region
      // Predicated region
      $region25: #{_lambda_.7} parent=23 // pred_check
        %p464 = pneg %p53
      $region26: #{_lambda_.7} parent=23 // pred_check_branch
        %466 = sbr.rel (%p464) target = $region28
      $region27: #{_lambda_.7} parent=23 // pred_region
        %p467 = scmp.lt.s32.totalorder %s28, 1
        %s468 = scalar_select %p467, %s28, 1
        %s469 = smul.addr %s468, 4
        %s470 = scalar_lea.vmem %s0, %s469
      $region28: #{_lambda_.7} parent=23 // pred_fallthru
        _
      // Predicated region
      $region29: #{_lambda_.7} parent=23 // pred_check
        %p471 = pneg %p121
      $region30: #{_lambda_.7} parent=23 // pred_check_branch
        %473 = sbr.rel (%p471) target = $region32
      $region31: #{_lambda_.7} parent=23 // pred_region
        %p474 = scmp.lt.s32.totalorder %s29, 3
        %s475 = scalar_select %p474, %s29, 3
        %s476 = scalar_lea.vmem %s3, %s475
      $region32: #{_lambda_.7} parent=23 // pred_fallthru
        _
      // Predicated region
      $region33: #{_lambda_.7} parent=23 // pred_check
        %p477 = pneg %p147
      $region34: #{_lambda_.7} parent=23 // pred_check_branch
        %479 = sbr.rel (%p477) target = $region36
      $region35: #{_lambda_.7} parent=23 // pred_region
        %p480 = scmp.lt.s32.totalorder %s29, 3
        %s481 = scalar_select %p480, %s29, 3
        %s482 = scalar_lea.vmem %s4, %s481
      $region36: #{_lambda_.7} parent=23 // pred_fallthru
        _
      // Predicated region
      $region37: #{_lambda_.7} parent=23 // pred_check
        %p483 = pneg %p173
      $region38: #{_lambda_.7} parent=23 // pred_check_branch
        %485 = sbr.rel (%p483) target = $region40
      $region39: #{_lambda_.7} parent=23 // pred_region
        %p486 = scmp.lt.s32.totalorder %s29, 3
        %s487 = scalar_select %p486, %s29, 3
        %s488 = smul.addr %s487, 16
        %s489 = smul.addr %s488, 4
        %s490 = scalar_lea.vmem %s5, %s489
      $region40: #{_lambda_.7} parent=23 // pred_fallthru
        _
      // Predicated region
      $region41: #{_lambda_.7} parent=23 // pred_check
        %p491 = pneg %p199
      $region42: #{_lambda_.7} parent=23 // pred_check_branch
        %493 = sbr.rel (%p491) target = $region44
      $region43: #{_lambda_.7} parent=23 // pred_region
        %p494 = scmp.lt.s32.totalorder %s29, 3
        %s495 = scalar_select %p494, %s29, 3
        %s496 = smul.addr %s495, 2
        %s497 = scalar_lea.vmem %s6, %s496
      $region44: #{_lambda_.7} parent=23 // pred_fallthru
        _
      // Predicated region
      $region45: #{_lambda_.7} parent=23 // pred_check
        %p498 = pneg %p225
      $region46: #{_lambda_.7} parent=23 // pred_check_branch
        %500 = sbr.rel (%p498) target = $region48
      $region47: #{_lambda_.7} parent=23 // pred_region
        %p501 = scmp.lt.s32.totalorder %s29, 3
        %s502 = scalar_select %p501, %s29, 3
        %s503 = smul.addr %s502, 8
        %s504 = smul.addr %s503, 4
        %s505 = scalar_lea.vmem %s7, %s504
      $region48: #{_lambda_.7} parent=23 // pred_fallthru
        _
      // Predicated region
      $region49: #{_lambda_.7} parent=23 // pred_check
        %p506 = pneg %p251
      $region50: #{_lambda_.7} parent=23 // pred_check_branch
        %508 = sbr.rel (%p506) target = $region52
      $region51: #{_lambda_.7} parent=23 // pred_region
        %p509 = scmp.lt.s32.totalorder %s29, 3
        %s510 = scalar_select %p509, %s29, 3
        %s511 = scalar_lea.vmem %s8, %s510
      $region52: #{_lambda_.7} parent=23 // pred_fallthru
        _
      // Predicated region
      $region53: #{_lambda_.7} parent=23 // pred_check
        %p512 = pneg %p277
      $region54: #{_lambda_.7} parent=23 // pred_check_branch
        %514 = sbr.rel (%p512) target = $region56
      $region55: #{_lambda_.7} parent=23 // pred_region
        %p515 = scmp.lt.s32.totalorder %s29, 3
        %s516 = scalar_select %p515, %s29, 3
        %s517 = scalar_lea.vmem %s9, %s516
      $region56: #{_lambda_.7} parent=23 // pred_fallthru
        _
      // Predicated region
      $region57: #{_lambda_.7} parent=23 // pred_check
        %p518 = pneg %p303
      $region58: #{_lambda_.7} parent=23 // pred_check_branch
        %520 = sbr.rel (%p518) target = $region60
      $region59: #{_lambda_.7} parent=23 // pred_region
        %p521 = scmp.lt.s32.totalorder %s29, 3
        %s522 = scalar_select %p521, %s29, 3
        %s523 = scalar_lea.vmem %s10, %s522
      $region60: #{_lambda_.7} parent=23 // pred_fallthru
        _
      // Predicated region
      $region61: #{_lambda_.7} parent=23 // pred_check
        %p524 = pneg %p329
      $region62: #{_lambda_.7} parent=23 // pred_check_branch
        %526 = sbr.rel (%p524) target = $region64
      $region63: #{_lambda_.7} parent=23 // pred_region
        %p527 = scmp.lt.s32.totalorder %s29, 3
        %s528 = scalar_select %p527, %s29, 3
        %s529 = smul.addr %s528, 16
        %s530 = smul.addr %s529, 4
        %s531 = scalar_lea.vmem %s11, %s530
      $region64: #{_lambda_.7} parent=23 // pred_fallthru
        _
      // Predicated region
      $region65: #{_lambda_.7} parent=23 // pred_check
        %p532 = pneg %p355
      $region66: #{_lambda_.7} parent=23 // pred_check_branch
        %534 = sbr.rel (%p532) target = $region68
      $region67: #{_lambda_.7} parent=23 // pred_region
        %p535 = scmp.lt.s32.totalorder %s29, 3
        %s536 = scalar_select %p535, %s29, 3
        %s537 = smul.addr %s536, 2
        %s538 = scalar_lea.vmem %s12, %s537
      $region68: #{_lambda_.7} parent=23 // pred_fallthru
        _
      // Predicated region
      $region69: #{_lambda_.7} parent=23 // pred_check
        %p539 = pneg %p381
      $region70: #{_lambda_.7} parent=23 // pred_check_branch
        %541 = sbr.rel (%p539) target = $region72
      $region71: #{_lambda_.7} parent=23 // pred_region
        %p542 = scmp.lt.s32.totalorder %s29, 3
        %s543 = scalar_select %p542, %s29, 3
        %s544 = smul.addr %s543, 32
        %s545 = smul.addr %s544, 4
        %s546 = scalar_lea.vmem %s13, %s545
      $region72: #{_lambda_.7} parent=23 // pred_fallthru
        _
      // Predicated region
      $region73: #{_lambda_.7} parent=23 // pred_check
        %p547 = pneg %p407
      $region74: #{_lambda_.7} parent=23 // pred_check_branch
        %549 = sbr.rel (%p547) target = $region76
      $region75: #{_lambda_.7} parent=23 // pred_region
        %p550 = scmp.lt.s32.totalorder %s29, 3
        %s551 = scalar_select %p550, %s29, 3
        %s552 = scalar_lea.vmem %s14, %s551
      $region76: #{_lambda_.7} parent=23 // pred_fallthru
        _
    $region24: #{_lambda_.7} parent=5 // pred_fallthru
      _
    %p553 = scmp.le.s32.totalorder 1, %s21
    %p554 = scmp.lt.s32.totalorder %s21, 9
    %p555 = pnand %p553, %p554
    %p556 = pneg %p555
    // Predicated region
    $region77: #{_lambda_.7} parent=5 // pred_check
      _
    $region78: #{_lambda_.7} parent=5 // pred_check_branch
      %558 = sbr.rel (%p555) target = $region80
    $region79: #{_lambda_.7} parent=5 // pred_region
      %s559 = ssub.s32 %s21, 1
      %p560 = scmp.lt.s32.totalorder %s30, 1
      %s561 = scalar_select %p560, %s30, 1
      %s562 = smul.addr %s561, 4
      %s563 = scalar_lea.vmem %s0, %s562
      %p564 = pneg %p59
      %p565 = pneg %p56
      %p566 = pneg %p80
      %p567 = pneg %p77
      %p568 = pneg %p101
      %p569 = pneg %p98
      %p570 = scmp.lt.s32.totalorder %s31, 3
      %s571 = scalar_select %p570, %s31, 3
      %s572 = scalar_lea.vmem %s3, %s571
      %p573 = pneg %p127
      %p574 = pneg %p124
      %p575 = scmp.lt.s32.totalorder %s31, 3
      %s576 = scalar_select %p575, %s31, 3
      %s577 = scalar_lea.vmem %s4, %s576
      %p578 = pneg %p153
      %p579 = pneg %p150
      %p580 = scmp.lt.s32.totalorder %s31, 3
      %s581 = scalar_select %p580, %s31, 3
      %s582 = smul.addr %s581, 16
      %s583 = smul.addr %s582, 4
      %s584 = scalar_lea.vmem %s5, %s583
      %p585 = pneg %p179
      %p586 = pneg %p176
      %p587 = scmp.lt.s32.totalorder %s31, 3
      %s588 = scalar_select %p587, %s31, 3
      %s589 = smul.addr %s588, 2
      %s590 = scalar_lea.vmem %s6, %s589
      %p591 = pneg %p205
      %p592 = pneg %p202
      %p593 = scmp.lt.s32.totalorder %s31, 3
      %s594 = scalar_select %p593, %s31, 3
      %s595 = smul.addr %s594, 8
      %s596 = smul.addr %s595, 4
      %s597 = scalar_lea.vmem %s7, %s596
      %p598 = pneg %p231
      %p599 = pneg %p228
      %p600 = scmp.lt.s32.totalorder %s31, 3
      %s601 = scalar_select %p600, %s31, 3
      %s602 = scalar_lea.vmem %s8, %s601
      %p603 = pneg %p257
      %p604 = pneg %p254
      %p605 = scmp.lt.s32.totalorder %s31, 3
      %s606 = scalar_select %p605, %s31, 3
      %s607 = scalar_lea.vmem %s9, %s606
      %p608 = pneg %p283
      %p609 = pneg %p280
      %p610 = scmp.lt.s32.totalorder %s31, 3
      %s611 = scalar_select %p610, %s31, 3
      %s612 = scalar_lea.vmem %s10, %s611
      %p613 = pneg %p309
      %p614 = pneg %p306
      %p615 = scmp.lt.s32.totalorder %s31, 3
      %s616 = scalar_select %p615, %s31, 3
      %s617 = smul.addr %s616, 16
      %s618 = smul.addr %s617, 4
      %s619 = scalar_lea.vmem %s11, %s618
      %p620 = pneg %p335
      %p621 = pneg %p332
      %p622 = scmp.lt.s32.totalorder %s31, 3
      %s623 = scalar_select %p622, %s31, 3
      %s624 = smul.addr %s623, 2
      %s625 = scalar_lea.vmem %s12, %s624
      %p626 = pneg %p361
      %p627 = pneg %p358
      %p628 = scmp.lt.s32.totalorder %s31, 3
      %s629 = scalar_select %p628, %s31, 3
      %s630 = smul.addr %s629, 32
      %s631 = smul.addr %s630, 4
      %s632 = scalar_lea.vmem %s13, %s631
      %p633 = pneg %p387
      %p634 = pneg %p384
      %p635 = scmp.lt.s32.totalorder %s31, 3
      %s636 = scalar_select %p635, %s31, 3
      %s637 = scalar_lea.vmem %s14, %s636
      %p638 = pneg %p413
      %p639 = pneg %p410
      %p640 = pneg %p439
      %p641 = pneg %p436
      %p642 = scmp.lt.s32.totalorder %s30, 1
      %s643 = scalar_select %p642, %s30, 1
      %s644 = smul.addr %s643, 4
      %s645 = scalar_lea.vmem %s15, %s644
      %p646 = scmp.lt.s32.totalorder %s30, 1
      %s647 = scalar_select %p646, %s30, 1
      %s648 = smul.addr %s647, 4
      %s649 = scalar_lea.vmem %s0, %s648
      %p650 = scmp.lt.s32.totalorder %s31, 3
      %s651 = scalar_select %p650, %s31, 3
      %s652 = scalar_lea.vmem %s3, %s651
      %p653 = scmp.lt.s32.totalorder %s31, 3
      %s654 = scalar_select %p653, %s31, 3
      %s655 = scalar_lea.vmem %s4, %s654
      %p656 = scmp.lt.s32.totalorder %s31, 3
      %s657 = scalar_select %p656, %s31, 3
      %s658 = smul.addr %s657, 16
      %s659 = smul.addr %s658, 4
      %s660 = scalar_lea.vmem %s5, %s659
      %p661 = scmp.lt.s32.totalorder %s31, 3
      %s662 = scalar_select %p661, %s31, 3
      %s663 = smul.addr %s662, 2
      %s664 = scalar_lea.vmem %s6, %s663
      %p665 = scmp.lt.s32.totalorder %s31, 3
      %s666 = scalar_select %p665, %s31, 3
      %s667 = smul.addr %s666, 8
      %s668 = smul.addr %s667, 4
      %s669 = scalar_lea.vmem %s7, %s668
      %p670 = scmp.lt.s32.totalorder %s31, 3
      %s671 = scalar_select %p670, %s31, 3
      %s672 = scalar_lea.vmem %s8, %s671
      %p673 = scmp.lt.s32.totalorder %s31, 3
      %s674 = scalar_select %p673, %s31, 3
      %s675 = scalar_lea.vmem %s9, %s674
      %p676 = scmp.lt.s32.totalorder %s31, 3
      %s677 = scalar_select %p676, %s31, 3
      %s678 = scalar_lea.vmem %s10, %s677
      %p679 = scmp.lt.s32.totalorder %s31, 3
      %s680 = scalar_select %p679, %s31, 3
      %s681 = smul.addr %s680, 16
      %s682 = smul.addr %s681, 4
      %s683 = scalar_lea.vmem %s11, %s682
      %p684 = scmp.lt.s32.totalorder %s31, 3
      %s685 = scalar_select %p684, %s31, 3
      %s686 = smul.addr %s685, 2
      %s687 = scalar_lea.vmem %s12, %s686
      %p688 = scmp.lt.s32.totalorder %s31, 3
      %s689 = scalar_select %p688, %s31, 3
      %s690 = smul.addr %s689, 32
      %s691 = smul.addr %s690, 4
      %s692 = scalar_lea.vmem %s13, %s691
      %p693 = scmp.lt.s32.totalorder %s31, 3
      %s694 = scalar_select %p693, %s31, 3
      %s695 = scalar_lea.vmem %s14, %s694
      %p696 = scmp.lt.s32.totalorder %s30, 1
      %s697 = scalar_select %p696, %s30, 1
      %s698 = smul.addr %s697, 4
      %s699 = scalar_lea.vmem %s15, %s698
      %p701 = scmp.eq.s32.totalorder %s31, 0
      // Predicated region
      $region81: #{_lambda_.7} parent=79 // pred_check
        %p702 = pneg %p701
      $region82: #{_lambda_.7} parent=79 // pred_check_branch
        %704 = sbr.rel (%p702) target = $region84
      $region83: #{_lambda_.7} parent=79 // pred_region
        %v705 = vld [vmem:[%s649] sm:$0xf]
        %v706 = vpack.c.bf16 %v705, %v705
        %v707 = vld [vmem:[%s1] sm:$0xf]
        %v708 = vld [vmem:[%s1 + $0x4] sm:$0xf]
        %v709 = vld [vmem:[%s1 + $0x8] sm:$0xf]
        %v710 = vld [vmem:[%s1 + $0xc] sm:$0xf]
        %v711 = vld [vmem:[%s1 + $0x10] sm:$0xf]
        %v712 = vld [vmem:[%s1 + $0x14] sm:$0xf]
        %v713 = vld [vmem:[%s1 + $0x18] sm:$0xf]
        %v714 = vld [vmem:[%s1 + $0x1c] sm:$0xf]
        %v715 = vld [vmem:[%s1 + $0x20] sm:$0xf]
        %v716 = vld [vmem:[%s1 + $0x24] sm:$0xf]
        %v717 = vld [vmem:[%s1 + $0x28] sm:$0xf]
        %v718 = vld [vmem:[%s1 + $0x2c] sm:$0xf]
        %v719 = vld [vmem:[%s1 + $0x30] sm:$0xf]
        %v720 = vld [vmem:[%s1 + $0x34] sm:$0xf]
        %v721 = vld [vmem:[%s1 + $0x38] sm:$0xf]
        %v722 = vld [vmem:[%s1 + $0x3c] sm:$0xf]
        %v723 = vld [vmem:[%s2] sm:$0x1]
        %v725 = vlaneseq
        %v726 = vshrl.u32 %v725, 7
        %v727 = vsub.s32 0, %v726
        %v728 = vrot.slane %v723, %v727
        %v746 = vunpack.c.l.b16 %v707
        %v747 = vunpack.c.l.b16 %v708
        %v748 = vunpack.c.l.b16 %v709
        %v749 = vunpack.c.l.b16 %v710
        %v750 = vunpack.c.l.b16 %v711
        %v751 = vunpack.c.l.b16 %v712
        %v752 = vunpack.c.l.b16 %v713
        %v753 = vunpack.c.l.b16 %v714
        %v754 = vunpack.c.l.b16 %v715
        %v755 = vunpack.c.l.b16 %v716
        %v756 = vunpack.c.l.b16 %v717
        %v757 = vunpack.c.l.b16 %v718
        %v758 = vunpack.c.l.b16 %v719
        %v759 = vunpack.c.l.b16 %v720
        %v760 = vunpack.c.l.b16 %v721
        %v761 = vunpack.c.l.b16 %v722
        %v762 = vpack.c.b16 %v747, %v746
        %v763 = vpack.c.b16 %v749, %v748
        %v764 = vpack.c.b16 %v751, %v750
        %v765 = vpack.c.b16 %v753, %v752
        %v766 = vpack.c.b16 %v755, %v754
        %v767 = vpack.c.b16 %v757, %v756
        %v768 = vpack.c.b16 %v759, %v758
        %v769 = vpack.c.b16 %v761, %v760
        %778 = vmatprep.subr.bf16.mxu0 0
        %779 = vmatpush1.bf16.msra.mxu0 %v769
        %780 = vmatprep.subr.bf16.mxu0 0
        %781 = vmatpush1.bf16.msra.mxu0 %v768
        %782 = vmatprep.subr.bf16.mxu0 0
        %783 = vmatpush1.bf16.msra.mxu0 %v767
        %784 = vmatprep.subr.bf16.mxu0 0
        %785 = vmatpush1.bf16.msra.mxu0 %v766
        %786 = vmatprep.subr.bf16.mxu0 0
        %787 = vmatpush1.bf16.msra.mxu0 %v765
        %788 = vmatprep.subr.bf16.mxu0 0
        %789 = vmatpush1.bf16.msra.mxu0 %v764
        %790 = vmatprep.subr.bf16.mxu0 0
        %791 = vmatpush1.bf16.msra.mxu0 %v763
        %792 = vmatprep.subr.bf16.mxu0 0
        %793 = vmatpush1.bf16.msra.mxu0 %v762
        %794 = vmatprep.subr.bf16.mxu0 0
        %795 = vmatpush2.bf16.msra.mxu0 0
        %796 = vmatprep.subr.bf16.mxu0 0
        %797 = vmatpush2.bf16.msra.mxu0 0
        %798 = vmatprep.subr.bf16.mxu0 0
        %799 = vmatpush2.bf16.msra.mxu0 0
        %800 = vmatprep.subr.bf16.mxu0 0
        %801 = vmatpush2.bf16.msra.mxu0 0
        %802 = vmatprep.subr.bf16.mxu0 0
        %803 = vmatpush2.bf16.msra.mxu0 0
        %804 = vmatprep.subr.bf16.mxu0 0
        %805 = vmatpush2.bf16.msra.mxu0 0
        %806 = vmatprep.subr.bf16.mxu0 0
        %807 = vmatpush2.bf16.msra.mxu0 0
        %808 = vmatprep.subr.bf16.mxu0 0
        %809 = vmatpush2.bf16.msra.mxu0 0
        %810 = vmatprep.mubr.bf16.mxu0 0
        %811 = vmatmul.mubr.bf16.gmra.mxu0 %v706
        %v812 = vpop.f32.mrf.mxu0
        %v813 = vadd.f32 %v728, %v812
        %v814 = vpop.f32.mrf.mxu0
        %v815 = vpop.f32.mrf.mxu0
        %v816 = vpop.f32.mrf.mxu0
        %817 = vdwg.mxu0
        %vm818 = vcmask 519168
        %819 = vst.msk [vmem:[%s699] sm:$0xf] %vm818, %v813
      $region84: #{_lambda_.7} parent=79 // pred_fallthru
        _
      %v820 = vld [vmem:[%s699] sm:$0xf]
      %v821 = vld [vmem:[%s652] sm:$0x1]
      %v822 = vld [vmem:[%s655] sm:$0x1]
      %vm823 = vcmask 519168
      %v824 = vsel %vm823, %v820, 0.0
      %825 = vadd.xlane.f32.xlu0 %v824
      %v826 = vpop.xlane.xlu0 %825
      %v827 = vrcp.pop 64.0
      %v828 = vmul.f32 %v826, %v827
      %v829 = vsub.f32 %v820, %v828
      %v830 = vmul.f32 %v829, %v829
      %v831 = vsel %vm823, %v830, 0.0
      %832 = vadd.xlane.f32.xlu0 %v831
      %v833 = vpop.xlane.xlu0 %832
      %v834 = vmul.f32 %v833, %v827
      %v835 = vadd.f32 %v834, 1e-05
      %v836 = vrsqrt.pop %v835
      %v837 = vmul.f32 %v829, %v836
      %v839 = vlaneseq
      %v840 = vshrl.u32 %v839, 7
      %v841 = vsub.s32 0, %v840
      %v842 = vrot.slane %v821, %v841
      %v844 = vmul.f32 %v837, %v842
      %v846 = vlaneseq
      %v847 = vshrl.u32 %v846, 7
      %v848 = vsub.s32 0, %v847
      %v849 = vrot.slane %v822, %v848
      %v851 = vadd.f32 %v844, %v849
      %v852 = vpack.c.bf16 %v851, %v851
      %v853 = vld [vmem:[%s660] sm:$0xff]
      %v854 = vld [vmem:[%s660 + $0x8] sm:$0xff]
      %v855 = vld [vmem:[%s660 + $0x10] sm:$0xff]
      %v856 = vld [vmem:[%s660 + $0x18] sm:$0xff]
      %v857 = vld [vmem:[%s660 + $0x20] sm:$0xff]
      %v858 = vld [vmem:[%s660 + $0x28] sm:$0xff]
      %v859 = vld [vmem:[%s660 + $0x30] sm:$0xff]
      %v860 = vld [vmem:[%s660 + $0x38] sm:$0xff]
      %v861 = vld [vmem:[%s664] sm:$0x3]
      %v863 = vlaneseq
      %v864 = vshrl.u32 %v863, 7
      %v865 = vsub.s32 0, %v864
      %v866 = vrot.slane %v861, %v865
      %v867 = vlaneseq
      %v868 = vshrl.u32 %v867, 7
      %v869 = vsub.s32 1, %v868
      %v870 = vrot.slane %v861, %v869
      %v881 = vunpack.c.l.b16 %v853
      %v882 = vunpack.c.h.b16 %v853
      %v883 = vunpack.c.l.b16 %v854
      %v884 = vunpack.c.h.b16 %v854
      %v885 = vunpack.c.l.b16 %v855
      %v886 = vunpack.c.h.b16 %v855
      %v887 = vunpack.c.l.b16 %v856
      %v888 = vunpack.c.h.b16 %v856
      %v889 = vunpack.c.l.b16 %v857
      %v890 = vunpack.c.h.b16 %v857
      %v891 = vunpack.c.l.b16 %v858
      %v892 = vunpack.c.h.b16 %v858
      %v893 = vunpack.c.l.b16 %v859
      %v894 = vunpack.c.h.b16 %v859
      %v895 = vunpack.c.l.b16 %v860
      %v896 = vunpack.c.h.b16 %v860
      %v897 = vpack.c.b16 %v883, %v881
      %v898 = vpack.c.b16 %v884, %v882
      %v899 = vpack.c.b16 %v887, %v885
      %v900 = vpack.c.b16 %v888, %v886
      %v901 = vpack.c.b16 %v891, %v889
      %v902 = vpack.c.b16 %v892, %v890
      %v903 = vpack.c.b16 %v895, %v893
      %v904 = vpack.c.b16 %v896, %v894
      %vm913 = vcmask 523264
      %v915 = vsel %vm913, %v852, 0
      %917 = vmatprep.subr.bf16.mxu0 0
      %918 = vmatpush1.bf16.msra.mxu0 0
      %919 = vmatprep.subr.bf16.mxu0 0
      %920 = vmatpush1.bf16.msra.mxu0 0
      %921 = vmatprep.subr.bf16.mxu0 0
      %922 = vmatpush1.bf16.msra.mxu0 0
      %923 = vmatprep.subr.bf16.mxu0 0
      %924 = vmatpush1.bf16.msra.mxu0 0
      %925 = vmatprep.subr.bf16.mxu0 %v904
      %926 = vmatpush1.bf16.msra.mxu0 %v903
      %927 = vmatprep.subr.bf16.mxu0 %v902
      %928 = vmatpush1.bf16.msra.mxu0 %v901
      %929 = vmatprep.subr.bf16.mxu0 %v900
      %930 = vmatpush1.bf16.msra.mxu0 %v899
      %931 = vmatprep.subr.bf16.mxu0 %v898
      %932 = vmatpush1.bf16.msra.mxu0 %v897
      %933 = vmatprep.subr.bf16.mxu0 0
      %934 = vmatpush2.bf16.msra.mxu0 0
      %935 = vmatprep.subr.bf16.mxu0 0
      %936 = vmatpush2.bf16.msra.mxu0 0
      %937 = vmatprep.subr.bf16.mxu0 0
      %938 = vmatpush2.bf16.msra.mxu0 0
      %939 = vmatprep.subr.bf16.mxu0 0
      %940 = vmatpush2.bf16.msra.mxu0 0
      %941 = vmatprep.subr.bf16.mxu0 0
      %942 = vmatpush2.bf16.msra.mxu0 0
      %943 = vmatprep.subr.bf16.mxu0 0
      %944 = vmatpush2.bf16.msra.mxu0 0
      %945 = vmatprep.subr.bf16.mxu0 0
      %946 = vmatpush2.bf16.msra.mxu0 0
      %947 = vmatprep.subr.bf16.mxu0 0
      %948 = vmatpush2.bf16.msra.mxu0 0
      %949 = vmatprep.mubr.bf16.mxu0 0
      %950 = vmatmul.mubr.bf16.gmra.mxu0 %v915
      %v951 = vpop.f32.mrf.mxu0
      %v952 = vadd.f32 %v866, %v951
      %v953 = vpop.f32.mrf.mxu0
      %v954 = vadd.f32 %v870, %v953
      %v955 = vpop.f32.mrf.mxu0
      %v956 = vpop.f32.mrf.mxu0
      %957 = vdwg.mxu0
      %v958 = vpack.c.bf16 %v952, %v952
      %v959 = vpack.c.bf16 %v954, %v954
      %961 = vrot.lane.b32.xlu0 %v958, 64
      %v962 = vpop.permute.xlu0 %961
      %vm963 = vcmask 130048
      %v965 = vsel %vm963, %v958, 0
      %v968 = vsel %vm963, %v962, 0
      %970 = vmatprep.subr.bf16.mxu0 0
      %971 = vmatpush1.bf16.xpose.msra.mxu0 0
      %972 = vmatprep.subr.bf16.mxu0 0
      %973 = vmatpush1.bf16.xpose.msra.mxu0 0
      %974 = vmatprep.subr.bf16.mxu0 0
      %975 = vmatpush1.bf16.xpose.msra.mxu0 0
      %976 = vmatprep.subr.bf16.mxu0 0
      %977 = vmatpush1.bf16.xpose.msra.mxu0 0
      %978 = vmatprep.subr.bf16.mxu0 0
      %979 = vmatpush1.bf16.xpose.msra.mxu0 0
      %980 = vmatprep.subr.bf16.mxu0 0
      %981 = vmatpush1.bf16.xpose.msra.mxu0 0
      %982 = vmatprep.subr.bf16.mxu0 0
      %983 = vmatpush1.bf16.xpose.msra.mxu0 0
      %984 = vmatprep.subr.bf16.mxu0 0
      %985 = vmatpush1.bf16.xpose.msra.mxu0 %v968
      %986 = vmatprep.subr.bf16.mxu0 0
      %987 = vmatpush2.bf16.xpose.msra.mxu0 0
      %988 = vmatprep.subr.bf16.mxu0 0
      %989 = vmatpush2.bf16.xpose.msra.mxu0 0
      %990 = vmatprep.subr.bf16.mxu0 0
      %991 = vmatpush2.bf16.xpose.msra.mxu0 0
      %992 = vmatprep.subr.bf16.mxu0 0
      %993 = vmatpush2.bf16.xpose.msra.mxu0 0
      %994 = vmatprep.subr.bf16.mxu0 0
      %995 = vmatpush2.bf16.xpose.msra.mxu0 0
      %996 = vmatprep.subr.bf16.mxu0 0
      %997 = vmatpush2.bf16.xpose.msra.mxu0 0
      %998 = vmatprep.subr.bf16.mxu0 0
      %999 = vmatpush2.bf16.xpose.msra.mxu0 0
      %1000 = vmatprep.subr.bf16.mxu0 0
      %1001 = vmatpush2.bf16.xpose.msra.mxu0 0
      %1002 = vmatprep.mubr.bf16.mxu0 0
      %1003 = vmatmul.mubr.bf16.gmra.mxu0 %v965
      %v1004 = vpop.f32.mrf.mxu0
      %v1005 = vadd.f32 0.0, %v1004
      %v1006 = vpop.f32.mrf.mxu0
      %v1007 = vpop.f32.mrf.mxu0
      %v1008 = vpop.f32.mrf.mxu0
      %1009 = vdwg.mxu0
      %vm1010 = vcmask 27648
      %v1011 = vsel %vm1010, %v1005, -inf
      %1012 = vmax.xlane.f32.xlu0 %v1011
      %v1013 = vpop.xlane.xlu0 %1012
      %v1014 = vsub.f32 %v1005, %v1013
      %v1015 = vmul.f32 %v1014, 1.442695
      %v1016 = vpow.pop %v1015
      %v1017 = vsel %vm1010, %v1016, 0.0
      %1018 = vadd.xlane.f32.xlu0 %v1017
      %v1019 = vpop.xlane.xlu0 %1018
      %v1020 = vrcp.pop %v1019
      %v1021 = vmul.f32 %v1016, %v1020
      %v1022 = vpack.c.bf16 %v1021, %v1021
      %vm1023 = vcmask 31744
      %v1025 = vsel %vm1023, %v1022, 0
      %vm1027 = vcmask 1041408
      %v1029 = vsel %vm1027, %v959, 0
      %1031 = vmatprep.subr.bf16.mxu0 0
      %1032 = vmatpush1.bf16.msra.mxu0 0
      %1033 = vmatprep.subr.bf16.mxu0 0
      %1034 = vmatpush1.bf16.msra.mxu0 0
      %1035 = vmatprep.subr.bf16.mxu0 0
      %1036 = vmatpush1.bf16.msra.mxu0 0
      %1037 = vmatprep.subr.bf16.mxu0 0
      %1038 = vmatpush1.bf16.msra.mxu0 0
      %1039 = vmatprep.subr.bf16.mxu0 0
      %1040 = vmatpush1.bf16.msra.mxu0 0
      %1041 = vmatprep.subr.bf16.mxu0 0
      %1042 = vmatpush1.bf16.msra.mxu0 0
      %1043 = vmatprep.subr.bf16.mxu0 0
      %1044 = vmatpush1.bf16.msra.mxu0 0
      %1045 = vmatprep.subr.bf16.mxu0 0
      %1046 = vmatpush1.bf16.msra.mxu0 %v1029
      %1047 = vmatprep.subr.bf16.mxu0 0
      %1048 = vmatpush2.bf16.msra.mxu0 0
      %1049 = vmatprep.subr.bf16.mxu0 0
      %1050 = vmatpush2.bf16.msra.mxu0 0
      %1051 = vmatprep.subr.bf16.mxu0 0
      %1052 = vmatpush2.bf16.msra.mxu0 0
      %1053 = vmatprep.subr.bf16.mxu0 0
      %1054 = vmatpush2.bf16.msra.mxu0 0
      %1055 = vmatprep.subr.bf16.mxu0 0
      %1056 = vmatpush2.bf16.msra.mxu0 0
      %1057 = vmatprep.subr.bf16.mxu0 0
      %1058 = vmatpush2.bf16.msra.mxu0 0
      %1059 = vmatprep.subr.bf16.mxu0 0
      %1060 = vmatpush2.bf16.msra.mxu0 0
      %1061 = vmatprep.subr.bf16.mxu0 0
      %1062 = vmatpush2.bf16.msra.mxu0 0
      %1063 = vmatprep.mubr.bf16.mxu0 0
      %1064 = vmatmul.mubr.bf16.gmra.mxu0 %v1025
      %v1065 = vpop.f32.mrf.mxu0
      %v1066 = vadd.f32 0.0, %v1065
      %v1067 = vpop.f32.mrf.mxu0
      %v1068 = vpop.f32.mrf.mxu0
      %v1069 = vpop.f32.mrf.mxu0
      %1070 = vdwg.mxu0
      %1071 = vrot.lane.b32.xlu0 %v958, 112
      %v1072 = vpop.permute.xlu0 %1071
      %1073 = vrot.lane.b32.xlu0 %v958, 48
      %v1074 = vpop.permute.xlu0 %1073
      %v1076 = vsel %vm963, %v1072, 0
      %v1079 = vsel %vm963, %v1074, 0
      %1081 = vmatprep.subr.bf16.mxu0 0
      %1082 = vmatpush1.bf16.xpose.msra.mxu0 0
      %1083 = vmatprep.subr.bf16.mxu0 0
      %1084 = vmatpush1.bf16.xpose.msra.mxu0 0
      %1085 = vmatprep.subr.bf16.mxu0 0
      %1086 = vmatpush1.bf16.xpose.msra.mxu0 0
      %1087 = vmatprep.subr.bf16.mxu0 0
      %1088 = vmatpush1.bf16.xpose.msra.mxu0 0
      %1089 = vmatprep.subr.bf16.mxu0 0
      %1090 = vmatpush1.bf16.xpose.msra.mxu0 0
      %1091 = vmatprep.subr.bf16.mxu0 0
      %1092 = vmatpush1.bf16.xpose.msra.mxu0 0
      %1093 = vmatprep.subr.bf16.mxu0 0
      %1094 = vmatpush1.bf16.xpose.msra.mxu0 0
      %1095 = vmatprep.subr.bf16.mxu0 0
      %1096 = vmatpush1.bf16.xpose.msra.mxu0 %v1079
      %1097 = vmatprep.subr.bf16.mxu0 0
      %1098 = vmatpush2.bf16.xpose.msra.mxu0 0
      %1099 = vmatprep.subr.bf16.mxu0 0
      %1100 = vmatpush2.bf16.xpose.msra.mxu0 0
      %1101 = vmatprep.subr.bf16.mxu0 0
      %1102 = vmatpush2.bf16.xpose.msra.mxu0 0
      %1103 = vmatprep.subr.bf16.mxu0 0
      %1104 = vmatpush2.bf16.xpose.msra.mxu0 0
      %1105 = vmatprep.subr.bf16.mxu0 0
      %1106 = vmatpush2.bf16.xpose.msra.mxu0 0
      %1107 = vmatprep.subr.bf16.mxu0 0
      %1108 = vmatpush2.bf16.xpose.msra.mxu0 0
      %1109 = vmatprep.subr.bf16.mxu0 0
      %1110 = vmatpush2.bf16.xpose.msra.mxu0 0
      %1111 = vmatprep.subr.bf16.mxu0 0
      %1112 = vmatpush2.bf16.xpose.msra.mxu0 0
      %1113 = vmatprep.mubr.bf16.mxu0 0
      %1114 = vmatmul.mubr.bf16.gmra.mxu0 %v1076
      %v1115 = vpop.f32.mrf.mxu0
      %v1116 = vadd.f32 0.0, %v1115
      %v1117 = vpop.f32.mrf.mxu0
      %v1118 = vpop.f32.mrf.mxu0
      %v1119 = vpop.f32.mrf.mxu0
      %1120 = vdwg.mxu0
      %v1121 = vsel %vm1010, %v1116, -inf
      %1122 = vmax.xlane.f32.xlu0 %v1121
      %v1123 = vpop.xlane.xlu0 %1122
      %v1124 = vsub.f32 %v1116, %v1123
      %v1125 = vmul.f32 %v1124, 1.442695
      %v1126 = vpow.pop %v1125
      %v1127 = vsel %vm1010, %v1126, 0.0
      %1128 = vadd.xlane.f32.xlu0 %v1127
      %v1129 = vpop.xlane.xlu0 %1128
      %v1130 = vrcp.pop %v1129
      %v1131 = vmul.f32 %v1126, %v1130
      %v1132 = vpack.c.bf16 %v1131, %v1131
      %1134 = vrot.lane.b32.xlu0 %v959, 112
      %v1135 = vpop.permute.xlu0 %1134
      %v1137 = vsel %vm1023, %v1132, 0
      %v1140 = vsel %vm1027, %v1135, 0
      %1142 = vmatprep.subr.bf16.mxu0 0
      %1143 = vmatpush1.bf16.msra.mxu0 0
      %1144 = vmatprep.subr.bf16.mxu0 0
      %1145 = vmatpush1.bf16.msra.mxu0 0
      %1146 = vmatprep.subr.bf16.mxu0 0
      %1147 = vmatpush1.bf16.msra.mxu0 0
      %1148 = vmatprep.subr.bf16.mxu0 0
      %1149 = vmatpush1.bf16.msra.mxu0 0
      %1150 = vmatprep.subr.bf16.mxu0 0
      %1151 = vmatpush1.bf16.msra.mxu0 0
      %1152 = vmatprep.subr.bf16.mxu0 0
      %1153 = vmatpush1.bf16.msra.mxu0 0
      %1154 = vmatprep.subr.bf16.mxu0 0
      %1155 = vmatpush1.bf16.msra.mxu0 0
      %1156 = vmatprep.subr.bf16.mxu0 0
      %1157 = vmatpush1.bf16.msra.mxu0 %v1140
      %1158 = vmatprep.subr.bf16.mxu0 0
      %1159 = vmatpush2.bf16.msra.mxu0 0
      %1160 = vmatprep.subr.bf16.mxu0 0
      %1161 = vmatpush2.bf16.msra.mxu0 0
      %1162 = vmatprep.subr.bf16.mxu0 0
      %1163 = vmatpush2.bf16.msra.mxu0 0
      %1164 = vmatprep.subr.bf16.mxu0 0
      %1165 = vmatpush2.bf16.msra.mxu0 0
      %1166 = vmatprep.subr.bf16.mxu0 0
      %1167 = vmatpush2.bf16.msra.mxu0 0
      %1168 = vmatprep.subr.bf16.mxu0 0
      %1169 = vmatpush2.bf16.msra.mxu0 0
      %1170 = vmatprep.subr.bf16.mxu0 0
      %1171 = vmatpush2.bf16.msra.mxu0 0
      %1172 = vmatprep.subr.bf16.mxu0 0
      %1173 = vmatpush2.bf16.msra.mxu0 0
      %1174 = vmatprep.mubr.bf16.mxu0 0
      %1175 = vmatmul.mubr.bf16.gmra.mxu0 %v1137
      %v1176 = vpop.f32.mrf.mxu0
      %v1177 = vadd.f32 0.0, %v1176
      %v1178 = vpop.f32.mrf.mxu0
      %v1179 = vpop.f32.mrf.mxu0
      %v1180 = vpop.f32.mrf.mxu0
      %1181 = vdwg.mxu0
      %1182 = vrot.lane.b32.xlu0 %v958, 96
      %v1183 = vpop.permute.xlu0 %1182
      %1184 = vrot.lane.b32.xlu0 %v958, 32
      %v1185 = vpop.permute.xlu0 %1184
      %v1187 = vsel %vm963, %v1183, 0
      %v1190 = vsel %vm963, %v1185, 0
      %1192 = vmatprep.subr.bf16.mxu0 0
      %1193 = vmatpush1.bf16.xpose.msra.mxu0 0
      %1194 = vmatprep.subr.bf16.mxu0 0
      %1195 = vmatpush1.bf16.xpose.msra.mxu0 0
      %1196 = vmatprep.subr.bf16.mxu0 0
      %1197 = vmatpush1.bf16.xpose.msra.mxu0 0
      %1198 = vmatprep.subr.bf16.mxu0 0
      %1199 = vmatpush1.bf16.xpose.msra.mxu0 0
      %1200 = vmatprep.subr.bf16.mxu0 0
      %1201 = vmatpush1.bf16.xpose.msra.mxu0 0
      %1202 = vmatprep.subr.bf16.mxu0 0
      %1203 = vmatpush1.bf16.xpose.msra.mxu0 0
      %1204 = vmatprep.subr.bf16.mxu0 0
      %1205 = vmatpush1.bf16.xpose.msra.mxu0 0
      %1206 = vmatprep.subr.bf16.mxu0 0
      %1207 = vmatpush1.bf16.xpose.msra.mxu0 %v1190
      %1208 = vmatprep.subr.bf16.mxu0 0
      %1209 = vmatpush2.bf16.xpose.msra.mxu0 0
      %1210 = vmatprep.subr.bf16.mxu0 0
      %1211 = vmatpush2.bf16.xpose.msra.mxu0 0
      %1212 = vmatprep.subr.bf16.mxu0 0
      %1213 = vmatpush2.bf16.xpose.msra.mxu0 0
      %1214 = vmatprep.subr.bf16.mxu0 0
      %1215 = vmatpush2.bf16.xpose.msra.mxu0 0
      %1216 = vmatprep.subr.bf16.mxu0 0
      %1217 = vmatpush2.bf16.xpose.msra.mxu0 0
      %1218 = vmatprep.subr.bf16.mxu0 0
      %1219 = vmatpush2.bf16.xpose.msra.mxu0 0
      %1220 = vmatprep.subr.bf16.mxu0 0
      %1221 = vmatpush2.bf16.xpose.msra.mxu0 0
      %1222 = vmatprep.subr.bf16.mxu0 0
      %1223 = vmatpush2.bf16.xpose.msra.mxu0 0
      %1224 = vmatprep.mubr.bf16.mxu0 0
      %1225 = vmatmul.mubr.bf16.gmra.mxu0 %v1187
      %v1226 = vpop.f32.mrf.mxu0
      %v1227 = vadd.f32 0.0, %v1226
      %v1228 = vpop.f32.mrf.mxu0
      %v1229 = vpop.f32.mrf.mxu0
      %v1230 = vpop.f32.mrf.mxu0
      %1231 = vdwg.mxu0
      %v1232 = vsel %vm1010, %v1227, -inf
      %1233 = vmax.xlane.f32.xlu0 %v1232
      %v1234 = vpop.xlane.xlu0 %1233
      %v1235 = vsub.f32 %v1227, %v1234
      %v1236 = vmul.f32 %v1235, 1.442695
      %v1237 = vpow.pop %v1236
      %v1238 = vsel %vm1010, %v1237, 0.0
      %1239 = vadd.xlane.f32.xlu0 %v1238
      %v1240 = vpop.xlane.xlu0 %1239
      %v1241 = vrcp.pop %v1240
      %v1242 = vmul.f32 %v1237, %v1241
      %v1243 = vpack.c.bf16 %v1242, %v1242
      %1244 = vrot.lane.b32.xlu0 %v959, 96
      %v1245 = vpop.permute.xlu0 %1244
      %v1247 = vsel %vm1023, %v1243, 0
      %v1250 = vsel %vm1027, %v1245, 0
      %1252 = vmatprep.subr.bf16.mxu0 0
      %1253 = vmatpush1.bf16.msra.mxu0 0
      %1254 = vmatprep.subr.bf16.mxu0 0
      %1255 = vmatpush1.bf16.msra.mxu0 0
      %1256 = vmatprep.subr.bf16.mxu0 0
      %1257 = vmatpush1.bf16.msra.mxu0 0
      %1258 = vmatprep.subr.bf16.mxu0 0
      %1259 = vmatpush1.bf16.msra.mxu0 0
      %1260 = vmatprep.subr.bf16.mxu0 0
      %1261 = vmatpush1.bf16.msra.mxu0 0
      %1262 = vmatprep.subr.bf16.mxu0 0
      %1263 = vmatpush1.bf16.msra.mxu0 0
      %1264 = vmatprep.subr.bf16.mxu0 0
      %1265 = vmatpush1.bf16.msra.mxu0 0
      %1266 = vmatprep.subr.bf16.mxu0 0
      %1267 = vmatpush1.bf16.msra.mxu0 %v1250
      %1268 = vmatprep.subr.bf16.mxu0 0
      %1269 = vmatpush2.bf16.msra.mxu0 0
      %1270 = vmatprep.subr.bf16.mxu0 0
      %1271 = vmatpush2.bf16.msra.mxu0 0
      %1272 = vmatprep.subr.bf16.mxu0 0
      %1273 = vmatpush2.bf16.msra.mxu0 0
      %1274 = vmatprep.subr.bf16.mxu0 0
      %1275 = vmatpush2.bf16.msra.mxu0 0
      %1276 = vmatprep.subr.bf16.mxu0 0
      %1277 = vmatpush2.bf16.msra.mxu0 0
      %1278 = vmatprep.subr.bf16.mxu0 0
      %1279 = vmatpush2.bf16.msra.mxu0 0
      %1280 = vmatprep.subr.bf16.mxu0 0
      %1281 = vmatpush2.bf16.msra.mxu0 0
      %1282 = vmatprep.subr.bf16.mxu0 0
      %1283 = vmatpush2.bf16.msra.mxu0 0
      %1284 = vmatprep.mubr.bf16.mxu0 0
      %1285 = vmatmul.mubr.bf16.gmra.mxu0 %v1247
      %v1286 = vpop.f32.mrf.mxu0
      %v1287 = vadd.f32 0.0, %v1286
      %v1288 = vpop.f32.mrf.mxu0
      %v1289 = vpop.f32.mrf.mxu0
      %v1290 = vpop.f32.mrf.mxu0
      %1291 = vdwg.mxu0
      %1292 = vrot.lane.b32.xlu0 %v958, 80
      %v1293 = vpop.permute.xlu0 %1292
      %1294 = vrot.lane.b32.xlu0 %v958, 16
      %v1295 = vpop.permute.xlu0 %1294
      %v1297 = vsel %vm963, %v1293, 0
      %v1300 = vsel %vm963, %v1295, 0
      %1302 = vmatprep.subr.bf16.mxu0 0
      %1303 = vmatpush1.bf16.xpose.msra.mxu0 0
      %1304 = vmatprep.subr.bf16.mxu0 0
      %1305 = vmatpush1.bf16.xpose.msra.mxu0 0
      %1306 = vmatprep.subr.bf16.mxu0 0
      %1307 = vmatpush1.bf16.xpose.msra.mxu0 0
      %1308 = vmatprep.subr.bf16.mxu0 0
      %1309 = vmatpush1.bf16.xpose.msra.mxu0 0
      %1310 = vmatprep.subr.bf16.mxu0 0
      %1311 = vmatpush1.bf16.xpose.msra.mxu0 0
      %1312 = vmatprep.subr.bf16.mxu0 0
      %1313 = vmatpush1.bf16.xpose.msra.mxu0 0
      %1314 = vmatprep.subr.bf16.mxu0 0
      %1315 = vmatpush1.bf16.xpose.msra.mxu0 0
      %1316 = vmatprep.subr.bf16.mxu0 0
      %1317 = vmatpush1.bf16.xpose.msra.mxu0 %v1300
      %1318 = vmatprep.subr.bf16.mxu0 0
      %1319 = vmatpush2.bf16.xpose.msra.mxu0 0
      %1320 = vmatprep.subr.bf16.mxu0 0
      %1321 = vmatpush2.bf16.xpose.msra.mxu0 0
      %1322 = vmatprep.subr.bf16.mxu0 0
      %1323 = vmatpush2.bf16.xpose.msra.mxu0 0
      %1324 = vmatprep.subr.bf16.mxu0 0
      %1325 = vmatpush2.bf16.xpose.msra.mxu0 0
      %1326 = vmatprep.subr.bf16.mxu0 0
      %1327 = vmatpush2.bf16.xpose.msra.mxu0 0
      %1328 = vmatprep.subr.bf16.mxu0 0
      %1329 = vmatpush2.bf16.xpose.msra.mxu0 0
      %1330 = vmatprep.subr.bf16.mxu0 0
      %1331 = vmatpush2.bf16.xpose.msra.mxu0 0
      %1332 = vmatprep.subr.bf16.mxu0 0
      %1333 = vmatpush2.bf16.xpose.msra.mxu0 0
      %1334 = vmatprep.mubr.bf16.mxu0 0
      %1335 = vmatmul.mubr.bf16.gmra.mxu0 %v1297
      %v1336 = vpop.f32.mrf.mxu0
      %v1337 = vadd.f32 0.0, %v1336
      %v1338 = vpop.f32.mrf.mxu0
      %v1339 = vpop.f32.mrf.mxu0
      %v1340 = vpop.f32.mrf.mxu0
      %1341 = vdwg.mxu0
      %v1342 = vsel %vm1010, %v1337, -inf
      %1343 = vmax.xlane.f32.xlu0 %v1342
      %v1344 = vpop.xlane.xlu0 %1343
      %v1345 = vsub.f32 %v1337, %v1344
      %v1346 = vmul.f32 %v1345, 1.442695
      %v1347 = vpow.pop %v1346
      %v1348 = vsel %vm1010, %v1347, 0.0
      %1349 = vadd.xlane.f32.xlu0 %v1348
      %v1350 = vpop.xlane.xlu0 %1349
      %v1351 = vrcp.pop %v1350
      %v1352 = vmul.f32 %v1347, %v1351
      %v1353 = vpack.c.bf16 %v1352, %v1352
      %1354 = vrot.lane.b32.xlu0 %v959, 80
      %v1355 = vpop.permute.xlu0 %1354
      %v1357 = vsel %vm1023, %v1353, 0
      %v1360 = vsel %vm1027, %v1355, 0
      %1362 = vmatprep.subr.bf16.mxu0 0
      %1363 = vmatpush1.bf16.msra.mxu0 0
      %1364 = vmatprep.subr.bf16.mxu0 0
      %1365 = vmatpush1.bf16.msra.mxu0 0
      %1366 = vmatprep.subr.bf16.mxu0 0
      %1367 = vmatpush1.bf16.msra.mxu0 0
      %1368 = vmatprep.subr.bf16.mxu0 0
      %1369 = vmatpush1.bf16.msra.mxu0 0
      %1370 = vmatprep.subr.bf16.mxu0 0
      %1371 = vmatpush1.bf16.msra.mxu0 0
      %1372 = vmatprep.subr.bf16.mxu0 0
      %1373 = vmatpush1.bf16.msra.mxu0 0
      %1374 = vmatprep.subr.bf16.mxu0 0
      %1375 = vmatpush1.bf16.msra.mxu0 0
      %1376 = vmatprep.subr.bf16.mxu0 0
      %1377 = vmatpush1.bf16.msra.mxu0 %v1360
      %1378 = vmatprep.subr.bf16.mxu0 0
      %1379 = vmatpush2.bf16.msra.mxu0 0
      %1380 = vmatprep.subr.bf16.mxu0 0
      %1381 = vmatpush2.bf16.msra.mxu0 0
      %1382 = vmatprep.subr.bf16.mxu0 0
      %1383 = vmatpush2.bf16.msra.mxu0 0
      %1384 = vmatprep.subr.bf16.mxu0 0
      %1385 = vmatpush2.bf16.msra.mxu0 0
      %1386 = vmatprep.subr.bf16.mxu0 0
      %1387 = vmatpush2.bf16.msra.mxu0 0
      %1388 = vmatprep.subr.bf16.mxu0 0
      %1389 = vmatpush2.bf16.msra.mxu0 0
      %1390 = vmatprep.subr.bf16.mxu0 0
      %1391 = vmatpush2.bf16.msra.mxu0 0
      %1392 = vmatprep.subr.bf16.mxu0 0
      %1393 = vmatpush2.bf16.msra.mxu0 0
      %1394 = vmatprep.mubr.bf16.mxu0 0
      %1395 = vmatmul.mubr.bf16.gmra.mxu0 %v1357
      %v1396 = vpop.f32.mrf.mxu0
      %v1397 = vadd.f32 0.0, %v1396
      %v1398 = vpop.f32.mrf.mxu0
      %v1399 = vpop.f32.mrf.mxu0
      %v1400 = vpop.f32.mrf.mxu0
      %1401 = vdwg.mxu0
      %1403 = vrot.lane.b32.xlu0 %v1177, 16
      %v1404 = vpop.permute.xlu0 %1403
      %1407 = vrot.lane.b32.xlu0 %v1287, 32
      %v1408 = vpop.permute.xlu0 %1407
      %1411 = vrot.lane.b32.xlu0 %v1397, 48
      %v1412 = vpop.permute.xlu0 %1411
      %v1414 = vsel %vm963, %v1066, %v1404
      %vm1415 = vcmask 261120
      %v1416 = vsel %vm1415, %v1414, %v1408
      %vm1417 = vcmask 392192
      %v1418 = vsel %vm1417, %v1416, %v1412
      %v1419 = vpack.c.bf16 %v1418, %v1418
      %v1420 = vld [vmem:[%s669] sm:$0xf]
      %v1421 = vld [vmem:[%s669 + $0x4] sm:$0xf]
      %v1422 = vld [vmem:[%s669 + $0x8] sm:$0xf]
      %v1423 = vld [vmem:[%s669 + $0xc] sm:$0xf]
      %v1424 = vld [vmem:[%s669 + $0x10] sm:$0xf]
      %v1425 = vld [vmem:[%s669 + $0x14] sm:$0xf]
      %v1426 = vld [vmem:[%s669 + $0x18] sm:$0xf]
      %v1427 = vld [vmem:[%s669 + $0x1c] sm:$0xf]
      %v1428 = vld [vmem:[%s672] sm:$0x1]
      %v1430 = vlaneseq
      %v1431 = vshrl.u32 %v1430, 7
      %v1432 = vsub.s32 0, %v1431
      %v1433 = vrot.slane %v1428, %v1432
      %v1443 = vunpack.c.l.b16 %v1420
      %v1444 = vunpack.c.l.b16 %v1421
      %v1445 = vunpack.c.l.b16 %v1422
      %v1446 = vunpack.c.l.b16 %v1423
      %v1447 = vunpack.c.l.b16 %v1424
      %v1448 = vunpack.c.l.b16 %v1425
      %v1449 = vunpack.c.l.b16 %v1426
      %v1450 = vunpack.c.l.b16 %v1427
      %v1451 = vpack.c.b16 %v1444, %v1443
      %v1452 = vpack.c.b16 %v1446, %v1445
      %v1453 = vpack.c.b16 %v1448, %v1447
      %v1454 = vpack.c.b16 %v1450, %v1449
      %v1460 = vsel %vm913, %v1419, 0
      %1462 = vmatprep.subr.bf16.mxu0 0
      %1463 = vmatpush1.bf16.msra.mxu0 0
      %1464 = vmatprep.subr.bf16.mxu0 0
      %1465 = vmatpush1.bf16.msra.mxu0 0
      %1466 = vmatprep.subr.bf16.mxu0 0
      %1467 = vmatpush1.bf16.msra.mxu0 0
      %1468 = vmatprep.subr.bf16.mxu0 0
      %1469 = vmatpush1.bf16.msra.mxu0 0
      %1470 = vmatprep.subr.bf16.mxu0 0
      %1471 = vmatpush1.bf16.msra.mxu0 %v1454
      %1472 = vmatprep.subr.bf16.mxu0 0
      %1473 = vmatpush1.bf16.msra.mxu0 %v1453
      %1474 = vmatprep.subr.bf16.mxu0 0
      %1475 = vmatpush1.bf16.msra.mxu0 %v1452
      %1476 = vmatprep.subr.bf16.mxu0 0
      %1477 = vmatpush1.bf16.msra.mxu0 %v1451
      %1478 = vmatprep.subr.bf16.mxu0 0
      %1479 = vmatpush2.bf16.msra.mxu0 0
      %1480 = vmatprep.subr.bf16.mxu0 0
      %1481 = vmatpush2.bf16.msra.mxu0 0
      %1482 = vmatprep.subr.bf16.mxu0 0
      %1483 = vmatpush2.bf16.msra.mxu0 0
      %1484 = vmatprep.subr.bf16.mxu0 0
      %1485 = vmatpush2.bf16.msra.mxu0 0
      %1486 = vmatprep.subr.bf16.mxu0 0
      %1487 = vmatpush2.bf16.msra.mxu0 0
      %1488 = vmatprep.subr.bf16.mxu0 0
      %1489 = vmatpush2.bf16.msra.mxu0 0
      %1490 = vmatprep.subr.bf16.mxu0 0
      %1491 = vmatpush2.bf16.msra.mxu0 0
      %1492 = vmatprep.subr.bf16.mxu0 0
      %1493 = vmatpush2.bf16.msra.mxu0 0
      %1494 = vmatprep.mubr.bf16.mxu0 0
      %1495 = vmatmul.mubr.bf16.gmra.mxu0 %v1460
      %v1496 = vpop.f32.mrf.mxu0
      %v1497 = vadd.f32 %v1433, %v1496
      %v1498 = vpop.f32.mrf.mxu0
      %v1499 = vpop.f32.mrf.mxu0
      %v1500 = vpop.f32.mrf.mxu0
      %1501 = vdwg.mxu0
      %v1502 = vadd.f32 %v820, %v1497
      %v1503 = vld [vmem:[%s675] sm:$0x1]
      %v1504 = vld [vmem:[%s678] sm:$0x1]
      %v1505 = vsel %vm823, %v1502, 0.0
      %1506 = vadd.xlane.f32.xlu0 %v1505
      %v1507 = vpop.xlane.xlu0 %1506
      %v1508 = vmul.f32 %v1507, %v827
      %v1509 = vsub.f32 %v1502, %v1508
      %v1510 = vmul.f32 %v1509, %v1509
      %v1511 = vsel %vm823, %v1510, 0.0
      %1512 = vadd.xlane.f32.xlu0 %v1511
      %v1513 = vpop.xlane.xlu0 %1512
      %v1514 = vmul.f32 %v1513, %v827
      %v1515 = vadd.f32 %v1514, 1e-05
      %v1516 = vrsqrt.pop %v1515
      %v1517 = vmul.f32 %v1509, %v1516
      %v1519 = vlaneseq
      %v1520 = vshrl.u32 %v1519, 7
      %v1521 = vsub.s32 0, %v1520
      %v1522 = vrot.slane %v1503, %v1521
      %v1524 = vmul.f32 %v1517, %v1522
      %v1526 = vlaneseq
      %v1527 = vshrl.u32 %v1526, 7
      %v1528 = vsub.s32 0, %v1527
      %v1529 = vrot.slane %v1504, %v1528
      %v1531 = vadd.f32 %v1524, %v1529
      %v1532 = vpack.c.bf16 %v1531, %v1531
      %v1533 = vld [vmem:[%s683] sm:$0xff]
      %v1534 = vld [vmem:[%s683 + $0x8] sm:$0xff]
      %v1535 = vld [vmem:[%s683 + $0x10] sm:$0xff]
      %v1536 = vld [vmem:[%s683 + $0x18] sm:$0xff]
      %v1537 = vld [vmem:[%s683 + $0x20] sm:$0xff]
      %v1538 = vld [vmem:[%s683 + $0x28] sm:$0xff]
      %v1539 = vld [vmem:[%s683 + $0x30] sm:$0xff]
      %v1540 = vld [vmem:[%s683 + $0x38] sm:$0xff]
      %v1541 = vld [vmem:[%s687] sm:$0x3]
      %v1543 = vlaneseq
      %v1544 = vshrl.u32 %v1543, 7
      %v1545 = vsub.s32 0, %v1544
      %v1546 = vrot.slane %v1541, %v1545
      %v1547 = vlaneseq
      %v1548 = vshrl.u32 %v1547, 7
      %v1549 = vsub.s32 1, %v1548
      %v1550 = vrot.slane %v1541, %v1549
      %v1561 = vunpack.c.l.b16 %v1533
      %v1562 = vunpack.c.h.b16 %v1533
      %v1563 = vunpack.c.l.b16 %v1534
      %v1564 = vunpack.c.h.b16 %v1534
      %v1565 = vunpack.c.l.b16 %v1535
      %v1566 = vunpack.c.h.b16 %v1535
      %v1567 = vunpack.c.l.b16 %v1536
      %v1568 = vunpack.c.h.b16 %v1536
      %v1569 = vunpack.c.l.b16 %v1537
      %v1570 = vunpack.c.h.b16 %v1537
      %v1571 = vunpack.c.l.b16 %v1538
      %v1572 = vunpack.c.h.b16 %v1538
      %v1573 = vunpack.c.l.b16 %v1539
      %v1574 = vunpack.c.h.b16 %v1539
      %v1575 = vunpack.c.l.b16 %v1540
      %v1576 = vunpack.c.h.b16 %v1540
      %v1577 = vpack.c.b16 %v1563, %v1561
      %v1578 = vpack.c.b16 %v1564, %v1562
      %v1579 = vpack.c.b16 %v1567, %v1565
      %v1580 = vpack.c.b16 %v1568, %v1566
      %v1581 = vpack.c.b16 %v1571, %v1569
      %v1582 = vpack.c.b16 %v1572, %v1570
      %v1583 = vpack.c.b16 %v1575, %v1573
      %v1584 = vpack.c.b16 %v1576, %v1574
      %v1594 = vsel %vm913, %v1532, 0
      %1596 = vmatprep.subr.bf16.mxu0 0
      %1597 = vmatpush1.bf16.msra.mxu0 0
      %1598 = vmatprep.subr.bf16.mxu0 0
      %1599 = vmatpush1.bf16.msra.mxu0 0
      %1600 = vmatprep.subr.bf16.mxu0 0
      %1601 = vmatpush1.bf16.msra.mxu0 0
      %1602 = vmatprep.subr.bf16.mxu0 0
      %1603 = vmatpush1.bf16.msra.mxu0 0
      %1604 = vmatprep.subr.bf16.mxu0 %v1584
      %1605 = vmatpush1.bf16.msra.mxu0 %v1583
      %1606 = vmatprep.subr.bf16.mxu0 %v1582
      %1607 = vmatpush1.bf16.msra.mxu0 %v1581
      %1608 = vmatprep.subr.bf16.mxu0 %v1580
      %1609 = vmatpush1.bf16.msra.mxu0 %v1579
      %1610 = vmatprep.subr.bf16.mxu0 %v1578
      %1611 = vmatpush1.bf16.msra.mxu0 %v1577
      %1612 = vmatprep.subr.bf16.mxu0 0
      %1613 = vmatpush2.bf16.msra.mxu0 0
      %1614 = vmatprep.subr.bf16.mxu0 0
      %1615 = vmatpush2.bf16.msra.mxu0 0
      %1616 = vmatprep.subr.bf16.mxu0 0
      %1617 = vmatpush2.bf16.msra.mxu0 0
      %1618 = vmatprep.subr.bf16.mxu0 0
      %1619 = vmatpush2.bf16.msra.mxu0 0
      %1620 = vmatprep.subr.bf16.mxu0 0
      %1621 = vmatpush2.bf16.msra.mxu0 0
      %1622 = vmatprep.subr.bf16.mxu0 0
      %1623 = vmatpush2.bf16.msra.mxu0 0
      %1624 = vmatprep.subr.bf16.mxu0 0
      %1625 = vmatpush2.bf16.msra.mxu0 0
      %1626 = vmatprep.subr.bf16.mxu0 0
      %1627 = vmatpush2.bf16.msra.mxu0 0
      %1628 = vmatprep.mubr.bf16.mxu0 0
      %1629 = vmatmul.mubr.bf16.gmra.mxu0 %v1594
      %v1630 = vpop.f32.mrf.mxu0
      %v1631 = vadd.f32 %v1546, %v1630
      %v1632 = vpop.f32.mrf.mxu0
      %v1633 = vadd.f32 %v1550, %v1632
      %v1634 = vpop.f32.mrf.mxu0
      %v1635 = vpop.f32.mrf.mxu0
      %1636 = vdwg.mxu0
      %v1637 = vmul.f32 %v1631, %v1631
      %v1638 = vmul.f32 %v1633, %v1633
      %v1639 = vmul.f32 %v1631, %v1637
      %v1640 = vmul.f32 %v1633, %v1638
      %v1641 = vmul.f32 %v1639, 0.044715
      %v1642 = vmul.f32 %v1640, 0.044715
      %v1643 = vadd.f32 %v1631, %v1641
      %v1644 = vadd.f32 %v1633, %v1642
      %v1645 = vmul.f32 %v1643, 0.7978846
      %v1646 = vmul.f32 %v1644, 0.7978846
      %v1647 = vtanh.pop %v1645
      %v1648 = vtanh.pop %v1646
      %v1649 = vadd.f32 %v1647, 1.0
      %v1650 = vadd.f32 %v1648, 1.0
      %v1651 = vmul.f32 %v1649, 0.5
      %v1652 = vmul.f32 %v1650, 0.5
      %v1653 = vmul.f32 %v1631, %v1651
      %v1654 = vmul.f32 %v1633, %v1652
      %v1655 = vpack.c.bf16 %v1653, %v1653
      %v1656 = vpack.c.bf16 %v1654, %v1654
      %v1657 = vld [vmem:[%s692] sm:$0xf]
      %v1658 = vld [vmem:[%s692 + $0x4] sm:$0xf]
      %v1659 = vld [vmem:[%s692 + $0x8] sm:$0xf]
      %v1660 = vld [vmem:[%s692 + $0xc] sm:$0xf]
      %v1661 = vld [vmem:[%s692 + $0x10] sm:$0xf]
      %v1662 = vld [vmem:[%s692 + $0x14] sm:$0xf]
      %v1663 = vld [vmem:[%s692 + $0x18] sm:$0xf]
      %v1664 = vld [vmem:[%s692 + $0x1c] sm:$0xf]
      %v1665 = vld [vmem:[%s692 + $0x20] sm:$0xf]
      %v1666 = vld [vmem:[%s692 + $0x24] sm:$0xf]
      %v1667 = vld [vmem:[%s692 + $0x28] sm:$0xf]
      %v1668 = vld [vmem:[%s692 + $0x2c] sm:$0xf]
      %v1669 = vld [vmem:[%s692 + $0x30] sm:$0xf]
      %v1670 = vld [vmem:[%s692 + $0x34] sm:$0xf]
      %v1671 = vld [vmem:[%s692 + $0x38] sm:$0xf]
      %v1672 = vld [vmem:[%s692 + $0x3c] sm:$0xf]
      %v1673 = vld [vmem:[%s692 + $0x40] sm:$0xf]
      %v1674 = vld [vmem:[%s692 + $0x44] sm:$0xf]
      %v1675 = vld [vmem:[%s692 + $0x48] sm:$0xf]
      %v1676 = vld [vmem:[%s692 + $0x4c] sm:$0xf]
      %v1677 = vld [vmem:[%s692 + $0x50] sm:$0xf]
      %v1678 = vld [vmem:[%s692 + $0x54] sm:$0xf]
      %v1679 = vld [vmem:[%s692 + $0x58] sm:$0xf]
      %v1680 = vld [vmem:[%s692 + $0x5c] sm:$0xf]
      %v1681 = vld [vmem:[%s692 + $0x60] sm:$0xf]
      %v1682 = vld [vmem:[%s692 + $0x64] sm:$0xf]
      %v1683 = vld [vmem:[%s692 + $0x68] sm:$0xf]
      %v1684 = vld [vmem:[%s692 + $0x6c] sm:$0xf]
      %v1685 = vld [vmem:[%s692 + $0x70] sm:$0xf]
      %v1686 = vld [vmem:[%s692 + $0x74] sm:$0xf]
      %v1687 = vld [vmem:[%s692 + $0x78] sm:$0xf]
      %v1688 = vld [vmem:[%s692 + $0x7c] sm:$0xf]
      %v1689 = vld [vmem:[%s695] sm:$0x1]
      %v1691 = vlaneseq
      %v1692 = vshrl.u32 %v1691, 7
      %v1693 = vsub.s32 0, %v1692
      %v1694 = vrot.slane %v1689, %v1693
      %v1728 = vunpack.c.l.b16 %v1657
      %v1729 = vunpack.c.l.b16 %v1658
      %v1730 = vunpack.c.l.b16 %v1659
      %v1731 = vunpack.c.l.b16 %v1660
      %v1732 = vunpack.c.l.b16 %v1661
      %v1733 = vunpack.c.l.b16 %v1662
      %v1734 = vunpack.c.l.b16 %v1663
      %v1735 = vunpack.c.l.b16 %v1664
      %v1736 = vunpack.c.l.b16 %v1665
      %v1737 = vunpack.c.l.b16 %v1666
      %v1738 = vunpack.c.l.b16 %v1667
      %v1739 = vunpack.c.l.b16 %v1668
      %v1740 = vunpack.c.l.b16 %v1669
      %v1741 = vunpack.c.l.b16 %v1670
      %v1742 = vunpack.c.l.b16 %v1671
      %v1743 = vunpack.c.l.b16 %v1672
      %v1744 = vunpack.c.l.b16 %v1673
      %v1745 = vunpack.c.l.b16 %v1674
      %v1746 = vunpack.c.l.b16 %v1675
      %v1747 = vunpack.c.l.b16 %v1676
      %v1748 = vunpack.c.l.b16 %v1677
      %v1749 = vunpack.c.l.b16 %v1678
      %v1750 = vunpack.c.l.b16 %v1679
      %v1751 = vunpack.c.l.b16 %v1680
      %v1752 = vunpack.c.l.b16 %v1681
      %v1753 = vunpack.c.l.b16 %v1682
      %v1754 = vunpack.c.l.b16 %v1683
      %v1755 = vunpack.c.l.b16 %v1684
      %v1756 = vunpack.c.l.b16 %v1685
      %v1757 = vunpack.c.l.b16 %v1686
      %v1758 = vunpack.c.l.b16 %v1687
      %v1759 = vunpack.c.l.b16 %v1688
      %v1760 = vpack.c.b16 %v1729, %v1728
      %v1761 = vpack.c.b16 %v1731, %v1730
      %v1762 = vpack.c.b16 %v1733, %v1732
      %v1763 = vpack.c.b16 %v1735, %v1734
      %v1764 = vpack.c.b16 %v1737, %v1736
      %v1765 = vpack.c.b16 %v1739, %v1738
      %v1766 = vpack.c.b16 %v1741, %v1740
      %v1767 = vpack.c.b16 %v1743, %v1742
      %v1768 = vpack.c.b16 %v1745, %v1744
      %v1769 = vpack.c.b16 %v1747, %v1746
      %v1770 = vpack.c.b16 %v1749, %v1748
      %v1771 = vpack.c.b16 %v1751, %v1750
      %v1772 = vpack.c.b16 %v1753, %v1752
      %v1773 = vpack.c.b16 %v1755, %v1754
      %v1774 = vpack.c.b16 %v1757, %v1756
      %v1775 = vpack.c.b16 %v1759, %v1758
      %1792 = vmatprep.subr.bf16.mxu0 0
      %1793 = vmatpush1.bf16.msra.mxu0 %v1767
      %1794 = vmatprep.subr.bf16.mxu0 0
      %1795 = vmatpush1.bf16.msra.mxu0 %v1766
      %1796 = vmatprep.subr.bf16.mxu0 0
      %1797 = vmatpush1.bf16.msra.mxu0 %v1765
      %1798 = vmatprep.subr.bf16.mxu0 0
      %1799 = vmatpush1.bf16.msra.mxu0 %v1764
      %1800 = vmatprep.subr.bf16.mxu0 0
      %1801 = vmatpush1.bf16.msra.mxu0 %v1763
      %1802 = vmatprep.subr.bf16.mxu0 0
      %1803 = vmatpush1.bf16.msra.mxu0 %v1762
      %1804 = vmatprep.subr.bf16.mxu0 0
      %1805 = vmatpush1.bf16.msra.mxu0 %v1761
      %1806 = vmatprep.subr.bf16.mxu0 0
      %1807 = vmatpush1.bf16.msra.mxu0 %v1760
      %1808 = vmatprep.subr.bf16.mxu0 0
      %1809 = vmatpush2.bf16.msra.mxu0 %v1775
      %1810 = vmatprep.subr.bf16.mxu0 0
      %1811 = vmatpush2.bf16.msra.mxu0 %v1774
      %1812 = vmatprep.subr.bf16.mxu0 0
      %1813 = vmatpush2.bf16.msra.mxu0 %v1773
      %1814 = vmatprep.subr.bf16.mxu0 0
      %1815 = vmatpush2.bf16.msra.mxu0 %v1772
      %1816 = vmatprep.subr.bf16.mxu0 0
      %1817 = vmatpush2.bf16.msra.mxu0 %v1771
      %1818 = vmatprep.subr.bf16.mxu0 0
      %1819 = vmatpush2.bf16.msra.mxu0 %v1770
      %1820 = vmatprep.subr.bf16.mxu0 0
      %1821 = vmatpush2.bf16.msra.mxu0 %v1769
      %1822 = vmatprep.subr.bf16.mxu0 0
      %1823 = vmatpush2.bf16.msra.mxu0 %v1768
      %1824 = vmatprep.mubr.bf16.mxu0 %v1656
      %1825 = vmatmul.mubr.bf16.gmra.mxu0 %v1655
      %v1826 = vpop.f32.mrf.mxu0
      %v1827 = vadd.f32 %v1694, %v1826
      %v1828 = vpop.f32.mrf.mxu0
      %v1829 = vpop.f32.mrf.mxu0
      %v1830 = vpop.f32.mrf.mxu0
      %1831 = vdwg.mxu0
      %v1832 = vadd.f32 %v1502, %v1827
      %1833 = vst.msk [vmem:[%s699] sm:$0xf] %vm823, %v1832
      %p1834 = scmp.lt.s32.totalorder %s30, 1
      %s1835 = scalar_select %p1834, %s30, 1
      %s1836 = smul.addr %s1835, 4
      %s1837 = scalar_lea.vmem %s15, %s1836
      // Predicated region
      $region85: #{_lambda_.7} parent=79 // pred_check
        %p1838 = pneg %p436
      $region86: #{_lambda_.7} parent=79 // pred_check_branch
        %1840 = sbr.rel (%p1838) target = $region88
      $region87: #{_lambda_.7} parent=79 // pred_region
        _
      $region88: #{_lambda_.7} parent=79 // pred_fallthru
        _
    $region80: #{_lambda_.7} parent=5 // pred_fallthru
      _
    %p1841 = scmp.le.s32.totalorder 2, %s21
    // Predicated region
    $region89: #{_lambda_.7} parent=5 // pred_check
      %p1842 = pneg %p1841
    $region90: #{_lambda_.7} parent=5 // pred_check_branch
      %1844 = sbr.rel (%p1842) target = $region92
    $region91: #{_lambda_.7} parent=5 // pred_region
      %s1845 = ssub.s32 %s21, 2
      // Predicated region
      $region93: #{_lambda_.7} parent=91 // pred_check
        %p1846 = pneg %p442
      $region94: #{_lambda_.7} parent=91 // pred_check_branch
        %1848 = sbr.rel (%p1846) target = $region96
      $region95: #{_lambda_.7} parent=91 // pred_region
        %p1849 = scmp.lt.s32.totalorder %s32, 1
        %s1850 = scalar_select %p1849, %s32, 1
        %s1851 = smul.addr %s1850, 4
        %s1852 = scalar_lea.vmem %s15, %s1851
      $region96: #{_lambda_.7} parent=91 // pred_fallthru
        _
    $region92: #{_lambda_.7} parent=5 // pred_fallthru
      _
  $region6: #{_lambda_.7} parent=0 // loop_footer
    %s25 = sadd.s32 1, %s21
  $region7: #{_lambda_.7} parent=0 // loop_footer_branch
    %20 = sbr.rel target = $region3
  $region8: #{_lambda_.7} parent=0 // loop_exit
    _

// kernel: _lambda_.9
$region0: #{_lambda_.9}
  #allocation0 [shape = 'u32[]', space=smem, size = 0x4, offset = 0x4, fixed_abs, tag = 'smem constant byte address 0x4 - core index']
  #allocation1 [shape = 'u32[144,128]{1,0:T(1,128)}', space=vmem, size = 0x12000, scoped, tag = 'internal scratch']
  %s0 = inlined_call_operand.vmem [shape: f32[2,1,128], index: 0, kind: input, shape index: {}]
  %s1 = inlined_call_operand.vmem [shape: f32[1,128], index: 1, kind: input, shape index: {}]
  %s2 = inlined_call_operand.vmem [shape: f32[1,128], index: 2, kind: input, shape index: {}]
  %s3 = inlined_call_operand.vmem [shape: bf16[128,1024], index: 3, kind: input, shape index: {}]
  %s4 = inlined_call_operand.vmem [shape: f32[1,1024], index: 4, kind: input, shape index: {}]
  %s5 = inlined_call_operand.vmem [shape: f32[2,1,1024], index: 5, kind: output, shape index: {}]
  %s6 = sld [smem:[#allocation0]]
  $region53: #{_lambda_.9} parent=0
    _
  %s8 = ssub.s32 1, %s6
  %s9 = scalar_select 0, %s8, %s6
  loop: start=0, step=1, limit=4
  $region2: #{_lambda_.9} parent=0 // loop_pre_header
    _
  $region3: #{_lambda_.9} parent=0 // loop_header
    %s11 = sphi 0, %s15
    %p12 = scmp.ge.s32.totalorder %s11, 4
    %s21 = sphi 0, %s23
    %s24 = sphi 0, %s21
    %s25 = sphi 0, %s24
    %s41 = sphi 0, %s25
    %s45 = sphi 0, %s45
    %s47 = sphi 0, %s45
    %s48 = sphi 0, %s47
    %s62 = sphi 0, %s48
    %s66 = sphi 0, %s66
    %s68 = sphi 0, %s66
    %s69 = sphi 0, %s68
    %s83 = sphi 0, %s69
    %s87 = sphi 0, %s87
    %s89 = sphi 0, %s87
    %s90 = sphi 0, %s89
    %s104 = sphi 0, %s90
    %s108 = sphi 0, %s108
    %s110 = sphi 0, %s108
    %s111 = sphi 0, %s110
    %s125 = sphi 0, %s111
    %s131 = sphi 0, %s133
    %s134 = sphi 0, %s131
    %s135 = sphi 0, %s134
    %s151 = sphi 0, %s135
  $region4: #{_lambda_.9} parent=0 // loop_header_branch
    %14 = sbr.rel (%p12) target = $region8
  $region5: #{_lambda_.9} parent=0 // loop_body
    %s16 = ssub.s32 %s11, 1
    %s17 = ssub.s32 %s11, 2
    %s18 = sadd.s32 %s11, 1
    %s19 = ssub.s32 %s11, %s18
    %p20 = scmp.eq.s32.totalorder %s19, 0
    %s22 = sadd.s32 %s21, 1
    %s23 = scalar_select %p20, %s21, %s22
    %p26 = pneg %p20
    %p27 = scmp.eq.s32.totalorder %s11, 1
    %p28 = por %p26, %p27
    %p29 = scmp.ne.s32.totalorder %s21, %s24
    %p30 = scmp.eq.s32.totalorder %s11, 0
    %p31 = por %p29, %p30
    %p32 = scmp.ne.s32.totalorder %s21, %s24
    %p33 = scmp.eq.s32.totalorder %s16, 1
    %p34 = por %p32, %p33
    %p35 = scmp.ne.s32.totalorder %s24, %s25
    %p36 = scmp.eq.s32.totalorder %s16, 0
    %p37 = por %p35, %p36
    %p38 = scmp.ne.s32.totalorder %s24, %s25
    %p39 = scmp.eq.s32.totalorder %s17, 1
    %p40 = por %p38, %p39
    %p42 = scmp.ne.s32.totalorder %s25, %s41
    %p43 = scmp.eq.s32.totalorder %s17, 0
    %p44 = por %p42, %p43
    %s46 = sadd.s32 %s45, 1
    %p49 = scmp.eq.s32.totalorder %s11, 1
    %p50 = scmp.ne.s32.totalorder %s45, %s47
    %p51 = scmp.eq.s32.totalorder %s11, 0
    %p52 = por %p50, %p51
    %p53 = scmp.ne.s32.totalorder %s45, %s47
    %p54 = scmp.eq.s32.totalorder %s16, 1
    %p55 = por %p53, %p54
    %p56 = scmp.ne.s32.totalorder %s47, %s48
    %p57 = scmp.eq.s32.totalorder %s16, 0
    %p58 = por %p56, %p57
    %p59 = scmp.ne.s32.totalorder %s47, %s48
    %p60 = scmp.eq.s32.totalorder %s17, 1
    %p61 = por %p59, %p60
    %p63 = scmp.ne.s32.totalorder %s48, %s62
    %p64 = scmp.eq.s32.totalorder %s17, 0
    %p65 = por %p63, %p64
    %s67 = sadd.s32 %s66, 1
    %p70 = scmp.eq.s32.totalorder %s11, 1
    %p71 = scmp.ne.s32.totalorder %s66, %s68
    %p72 = scmp.eq.s32.totalorder %s11, 0
    %p73 = por %p71, %p72
    %p74 = scmp.ne.s32.totalorder %s66, %s68
    %p75 = scmp.eq.s32.totalorder %s16, 1
    %p76 = por %p74, %p75
    %p77 = scmp.ne.s32.totalorder %s68, %s69
    %p78 = scmp.eq.s32.totalorder %s16, 0
    %p79 = por %p77, %p78
    %p80 = scmp.ne.s32.totalorder %s68, %s69
    %p81 = scmp.eq.s32.totalorder %s17, 1
    %p82 = por %p80, %p81
    %p84 = scmp.ne.s32.totalorder %s69, %s83
    %p85 = scmp.eq.s32.totalorder %s17, 0
    %p86 = por %p84, %p85
    %s88 = sadd.s32 %s87, 1
    %p91 = scmp.eq.s32.totalorder %s11, 1
    %p92 = scmp.ne.s32.totalorder %s87, %s89
    %p93 = scmp.eq.s32.totalorder %s11, 0
    %p94 = por %p92, %p93
    %p95 = scmp.ne.s32.totalorder %s87, %s89
    %p96 = scmp.eq.s32.totalorder %s16, 1
    %p97 = por %p95, %p96
    %p98 = scmp.ne.s32.totalorder %s89, %s90
    %p99 = scmp.eq.s32.totalorder %s16, 0
    %p100 = por %p98, %p99
    %p101 = scmp.ne.s32.totalorder %s89, %s90
    %p102 = scmp.eq.s32.totalorder %s17, 1
    %p103 = por %p101, %p102
    %p105 = scmp.ne.s32.totalorder %s90, %s104
    %p106 = scmp.eq.s32.totalorder %s17, 0
    %p107 = por %p105, %p106
    %s109 = sadd.s32 %s108, 1
    %p112 = scmp.eq.s32.totalorder %s11, 1
    %p113 = scmp.ne.s32.totalorder %s108, %s110
    %p114 = scmp.eq.s32.totalorder %s11, 0
    %p115 = por %p113, %p114
    %p116 = scmp.ne.s32.totalorder %s108, %s110
    %p117 = scmp.eq.s32.totalorder %s16, 1
    %p118 = por %p116, %p117
    %p119 = scmp.ne.s32.totalorder %s110, %s111
    %p120 = scmp.eq.s32.totalorder %s16, 0
    %p121 = por %p119, %p120
    %p122 = scmp.ne.s32.totalorder %s110, %s111
    %p123 = scmp.eq.s32.totalorder %s17, 1
    %p124 = por %p122, %p123
    %p126 = scmp.ne.s32.totalorder %s111, %s125
    %p127 = scmp.eq.s32.totalorder %s17, 0
    %p128 = por %p126, %p127
    %s129 = ssub.s32 %s11, %s18
    %p130 = scmp.eq.s32.totalorder %s129, 0
    %s132 = sadd.s32 %s131, 1
    %s133 = scalar_select %p130, %s131, %s132
    %p136 = pneg %p130
    %p137 = scmp.eq.s32.totalorder %s11, 1
    %p138 = por %p136, %p137
    %p139 = scmp.ne.s32.totalorder %s131, %s134
    %p140 = scmp.eq.s32.totalorder %s11, 0
    %p141 = por %p139, %p140
    %p142 = scmp.ne.s32.totalorder %s131, %s134
    %p143 = scmp.eq.s32.totalorder %s16, 1
    %p144 = por %p142, %p143
    %p145 = scmp.ne.s32.totalorder %s134, %s135
    %p146 = scmp.eq.s32.totalorder %s16, 0
    %p147 = por %p145, %p146
    %p148 = scmp.ne.s32.totalorder %s134, %s135
    %p149 = scmp.eq.s32.totalorder %s17, 1
    %p150 = por %p148, %p149
    %p152 = scmp.ne.s32.totalorder %s135, %s151
    %p153 = scmp.eq.s32.totalorder %s17, 0
    %p154 = por %p152, %p153
    %p155 = scmp.le.s32.totalorder 1, %s11
    %p156 = scmp.lt.s32.totalorder %s11, 3
    %p157 = pnand %p155, %p156
    %p158 = pneg %p157
    // Predicated region
    $region9: #{_lambda_.9} parent=5 // pred_check
      _
    $region10: #{_lambda_.9} parent=5 // pred_check_branch
      %160 = sbr.rel (%p157) target = $region12
    $region11: #{_lambda_.9} parent=5 // pred_region
      %s161 = ssub.s32 %s11, 1
      // Predicated region
      $region13: #{_lambda_.9} parent=11 // pred_check
        %p162 = pneg %p58
      $region14: #{_lambda_.9} parent=11 // pred_check_branch
        %164 = sbr.rel (%p162) target = $region16
      $region15: #{_lambda_.9} parent=11 // pred_region
        _
      $region16: #{_lambda_.9} parent=11 // pred_fallthru
        _
      // Predicated region
      $region17: #{_lambda_.9} parent=11 // pred_check
        %p165 = pneg %p79
      $region18: #{_lambda_.9} parent=11 // pred_check_branch
        %167 = sbr.rel (%p165) target = $region20
      $region19: #{_lambda_.9} parent=11 // pred_region
        _
      $region20: #{_lambda_.9} parent=11 // pred_fallthru
        _
      // Predicated region
      $region21: #{_lambda_.9} parent=11 // pred_check
        %p168 = pneg %p100
      $region22: #{_lambda_.9} parent=11 // pred_check_branch
        %170 = sbr.rel (%p168) target = $region24
      $region23: #{_lambda_.9} parent=11 // pred_region
        _
      $region24: #{_lambda_.9} parent=11 // pred_fallthru
        _
      // Predicated region
      $region25: #{_lambda_.9} parent=11 // pred_check
        %p171 = pneg %p121
      $region26: #{_lambda_.9} parent=11 // pred_check_branch
        %173 = sbr.rel (%p171) target = $region28
      $region27: #{_lambda_.9} parent=11 // pred_region
        _
      $region28: #{_lambda_.9} parent=11 // pred_fallthru
        _
    $region12: #{_lambda_.9} parent=5 // pred_fallthru
      _
    %p174 = scmp.lt.s32.totalorder %s11, 2
    // Predicated region
    $region29: #{_lambda_.9} parent=5 // pred_check
      %p175 = pneg %p174
    $region30: #{_lambda_.9} parent=5 // pred_check_branch
      %177 = sbr.rel (%p175) target = $region32
    $region31: #{_lambda_.9} parent=5 // pred_region
      // Predicated region
      $region33: #{_lambda_.9} parent=31 // pred_check
        %p178 = pneg %p31
      $region34: #{_lambda_.9} parent=31 // pred_check_branch
        %180 = sbr.rel (%p178) target = $region36
      $region35: #{_lambda_.9} parent=31 // pred_region
        %p181 = scmp.lt.s32.totalorder %s11, 1
        %s182 = scalar_select %p181, %s11, 1
        %s183 = scalar_lea.vmem %s0, %s182
      $region36: #{_lambda_.9} parent=31 // pred_fallthru
        _
    $region32: #{_lambda_.9} parent=5 // pred_fallthru
      _
    %p184 = scmp.le.s32.totalorder 1, %s11
    %p185 = scmp.lt.s32.totalorder %s11, 3
    %p186 = pnand %p184, %p185
    %p187 = pneg %p186
    // Predicated region
    $region37: #{_lambda_.9} parent=5 // pred_check
      _
    $region38: #{_lambda_.9} parent=5 // pred_check_branch
      %189 = sbr.rel (%p186) target = $region40
    $region39: #{_lambda_.9} parent=5 // pred_region
      %s190 = ssub.s32 %s11, 1
      %p191 = scmp.lt.s32.totalorder %s16, 1
      %s192 = scalar_select %p191, %s16, 1
      %s193 = scalar_lea.vmem %s0, %s192
      %p194 = pneg %p37
      %p195 = pneg %p34
      %p196 = pneg %p58
      %p197 = pneg %p55
      %p198 = pneg %p79
      %p199 = pneg %p76
      %p200 = pneg %p100
      %p201 = pneg %p97
      %p202 = pneg %p121
      %p203 = pneg %p118
      %p204 = pneg %p147
      %p205 = pneg %p144
      %p206 = scmp.lt.s32.totalorder %s16, 1
      %s207 = scalar_select %p206, %s16, 1
      %s208 = smul.addr %s207, 8
      %s209 = scalar_lea.vmem %s5, %s208
      %p210 = scmp.lt.s32.totalorder %s16, 1
      %s211 = scalar_select %p210, %s16, 1
      %s212 = scalar_lea.vmem %s0, %s211
      %p213 = scmp.lt.s32.totalorder %s16, 1
      %s214 = scalar_select %p213, %s16, 1
      %s215 = smul.addr %s214, 8
      %s216 = scalar_lea.vmem %s5, %s215
      %v218 = vld [vmem:[%s212] sm:$0x1]
      %v219 = vld [vmem:[%s1] sm:$0x1]
      %v220 = vld [vmem:[%s2] sm:$0x1]
      %vm221 = vcmask 1040384
      %v222 = vsel %vm221, %v218, 0.0
      %223 = vadd.xlane.f32.xlu0 %v222
      %v224 = vpop.xlane.xlu0 %223
      %v225 = vrcp.pop 128.0
      %v226 = vmul.f32 %v224, %v225
      %v227 = vsub.f32 %v218, %v226
      %v228 = vmul.f32 %v227, %v227
      %v229 = vsel %vm221, %v228, 0.0
      %230 = vadd.xlane.f32.xlu0 %v229
      %v231 = vpop.xlane.xlu0 %230
      %v232 = vmul.f32 %v231, %v225
      %v233 = vadd.f32 %v232, 1e-05
      %v234 = vrsqrt.pop %v233
      %v235 = vmul.f32 %v227, %v234
      %v236 = vmul.f32 %v235, %v219
      %v237 = vadd.f32 %v236, %v220
      %v238 = vadd.f32 %v237, 0.0
      %v239 = vpack.c.bf16 %v238, %v238
      %v240 = vld [vmem:[%s3] sm:$0xff]
      %v241 = vld [vmem:[%s3 + $0x8] sm:$0xff]
      %v242 = vld [vmem:[%s3 + $0x10] sm:$0xff]
      %v243 = vld [vmem:[%s3 + $0x18] sm:$0xff]
      %v244 = vld [vmem:[%s3 + $0x20] sm:$0xff]
      %v245 = vld [vmem:[%s3 + $0x28] sm:$0xff]
      %v246 = vld [vmem:[%s3 + $0x30] sm:$0xff]
      %v247 = vld [vmem:[%s3 + $0x38] sm:$0xff]
      %v248 = vld [vmem:[%s3 + $0x40] sm:$0xff]
      %v249 = vld [vmem:[%s3 + $0x48] sm:$0xff]
      %v250 = vld [vmem:[%s3 + $0x50] sm:$0xff]
      %v251 = vld [vmem:[%s3 + $0x58] sm:$0xff]
      %v252 = vld [vmem:[%s3 + $0x60] sm:$0xff]
      %v253 = vld [vmem:[%s3 + $0x68] sm:$0xff]
      %v254 = vld [vmem:[%s3 + $0x70] sm:$0xff]
      %v255 = vld [vmem:[%s3 + $0x78] sm:$0xff]
      %v256 = vld [vmem:[%s3 + $0x80] sm:$0xff]
      %v257 = vld [vmem:[%s3 + $0x88] sm:$0xff]
      %v258 = vld [vmem:[%s3 + $0x90] sm:$0xff]
      %v259 = vld [vmem:[%s3 + $0x98] sm:$0xff]
      %v260 = vld [vmem:[%s3 + $0xa0] sm:$0xff]
      %v261 = vld [vmem:[%s3 + $0xa8] sm:$0xff]
      %v262 = vld [vmem:[%s3 + $0xb0] sm:$0xff]
      %v263 = vld [vmem:[%s3 + $0xb8] sm:$0xff]
      %v264 = vld [vmem:[%s3 + $0xc0] sm:$0xff]
      %v265 = vld [vmem:[%s3 + $0xc8] sm:$0xff]
      %v266 = vld [vmem:[%s3 + $0xd0] sm:$0xff]
      %v267 = vld [vmem:[%s3 + $0xd8] sm:$0xff]
      %v268 = vld [vmem:[%s3 + $0xe0] sm:$0xff]
      %v269 = vld [vmem:[%s3 + $0xe8] sm:$0xff]
      %v270 = vld [vmem:[%s3 + $0xf0] sm:$0xff]
      %v271 = vld [vmem:[%s3 + $0xf8] sm:$0xff]
      %v272 = vld [vmem:[%s3 + $0x100] sm:$0xff]
      %v273 = vld [vmem:[%s3 + $0x108] sm:$0xff]
      %v274 = vld [vmem:[%s3 + $0x110] sm:$0xff]
      %v275 = vld [vmem:[%s3 + $0x118] sm:$0xff]
      %v276 = vld [vmem:[%s3 + $0x120] sm:$0xff]
      %v277 = vld [vmem:[%s3 + $0x128] sm:$0xff]
      %v278 = vld [vmem:[%s3 + $0x130] sm:$0xff]
      %v279 = vld [vmem:[%s3 + $0x138] sm:$0xff]
      %v280 = vld [vmem:[%s3 + $0x140] sm:$0xff]
      %v281 = vld [vmem:[%s3 + $0x148] sm:$0xff]
      %v282 = vld [vmem:[%s3 + $0x150] sm:$0xff]
      %v283 = vld [vmem:[%s3 + $0x158] sm:$0xff]
      %v284 = vld [vmem:[%s3 + $0x160] sm:$0xff]
      %v285 = vld [vmem:[%s3 + $0x168] sm:$0xff]
      %v286 = vld [vmem:[%s3 + $0x170] sm:$0xff]
      %v287 = vld [vmem:[%s3 + $0x178] sm:$0xff]
      %v288 = vld [vmem:[%s3 + $0x180] sm:$0xff]
      %v289 = vld [vmem:[%s3 + $0x188] sm:$0xff]
      %v290 = vld [vmem:[%s3 + $0x190] sm:$0xff]
      %v291 = vld [vmem:[%s3 + $0x198] sm:$0xff]
      %v292 = vld [vmem:[%s3 + $0x1a0] sm:$0xff]
      %v293 = vld [vmem:[%s3 + $0x1a8] sm:$0xff]
      %v294 = vld [vmem:[%s3 + $0x1b0] sm:$0xff]
      %v295 = vld [vmem:[%s3 + $0x1b8] sm:$0xff]
      %v296 = vld [vmem:[%s3 + $0x1c0] sm:$0xff]
      %v297 = vld [vmem:[%s3 + $0x1c8] sm:$0xff]
      %v298 = vld [vmem:[%s3 + $0x1d0] sm:$0xff]
      %v299 = vld [vmem:[%s3 + $0x1d8] sm:$0xff]
      %v300 = vld [vmem:[%s3 + $0x1e0] sm:$0xff]
      %v301 = vld [vmem:[%s3 + $0x1e8] sm:$0xff]
      %v302 = vld [vmem:[%s3 + $0x1f0] sm:$0xff]
      %v303 = vld [vmem:[%s3 + $0x1f8] sm:$0xff]
      %v304 = vld [vmem:[%s4] sm:$0xff]
      %v369 = vunpack.c.l.b16 %v240
      %v370 = vunpack.c.h.b16 %v240
      %v371 = vunpack.c.l.b16 %v241
      %v372 = vunpack.c.h.b16 %v241
      %v373 = vunpack.c.l.b16 %v242
      %v374 = vunpack.c.h.b16 %v242
      %v375 = vunpack.c.l.b16 %v243
      %v376 = vunpack.c.h.b16 %v243
      %v377 = vunpack.c.l.b16 %v244
      %v378 = vunpack.c.h.b16 %v244
      %v379 = vunpack.c.l.b16 %v245
      %v380 = vunpack.c.h.b16 %v245
      %v381 = vunpack.c.l.b16 %v246
      %v382 = vunpack.c.h.b16 %v246
      %v383 = vunpack.c.l.b16 %v247
      %v384 = vunpack.c.h.b16 %v247
      %v385 = vunpack.c.l.b16 %v248
      %v386 = vunpack.c.h.b16 %v248
      %v387 = vunpack.c.l.b16 %v249
      %v388 = vunpack.c.h.b16 %v249
      %v389 = vunpack.c.l.b16 %v250
      %v390 = vunpack.c.h.b16 %v250
      %v391 = vunpack.c.l.b16 %v251
      %v392 = vunpack.c.h.b16 %v251
      %v393 = vunpack.c.l.b16 %v252
      %v394 = vunpack.c.h.b16 %v252
      %v395 = vunpack.c.l.b16 %v253
      %v396 = vunpack.c.h.b16 %v253
      %v397 = vunpack.c.l.b16 %v254
      %v398 = vunpack.c.h.b16 %v254
      %v399 = vunpack.c.l.b16 %v255
      %v400 = vunpack.c.h.b16 %v255
      %v401 = vunpack.c.l.b16 %v256
      %v402 = vunpack.c.h.b16 %v256
      %v403 = vunpack.c.l.b16 %v257
      %v404 = vunpack.c.h.b16 %v257
      %v405 = vunpack.c.l.b16 %v258
      %v406 = vunpack.c.h.b16 %v258
      %v407 = vunpack.c.l.b16 %v259
      %v408 = vunpack.c.h.b16 %v259
      %v409 = vunpack.c.l.b16 %v260
      %v410 = vunpack.c.h.b16 %v260
      %v411 = vunpack.c.l.b16 %v261
      %v412 = vunpack.c.h.b16 %v261
      %v413 = vunpack.c.l.b16 %v262
      %v414 = vunpack.c.h.b16 %v262
      %v415 = vunpack.c.l.b16 %v263
      %v416 = vunpack.c.h.b16 %v263
      %v417 = vunpack.c.l.b16 %v264
      %v418 = vunpack.c.h.b16 %v264
      %v419 = vunpack.c.l.b16 %v265
      %v420 = vunpack.c.h.b16 %v265
      %v421 = vunpack.c.l.b16 %v266
      %v422 = vunpack.c.h.b16 %v266
      %v423 = vunpack.c.l.b16 %v267
      %v424 = vunpack.c.h.b16 %v267
      %v425 = vunpack.c.l.b16 %v268
      %v426 = vunpack.c.h.b16 %v268
      %v427 = vunpack.c.l.b16 %v269
      %v428 = vunpack.c.h.b16 %v269
      %v429 = vunpack.c.l.b16 %v270
      %v430 = vunpack.c.h.b16 %v270
      %v431 = vunpack.c.l.b16 %v271
      %v432 = vunpack.c.h.b16 %v271
      %v433 = vunpack.c.l.b16 %v272
      %v434 = vunpack.c.h.b16 %v272
      %v435 = vunpack.c.l.b16 %v273
      %v436 = vunpack.c.h.b16 %v273
      %v437 = vunpack.c.l.b16 %v274
      %v438 = vunpack.c.h.b16 %v274
      %v439 = vunpack.c.l.b16 %v275
      %v440 = vunpack.c.h.b16 %v275
      %v441 = vunpack.c.l.b16 %v276
      %v442 = vunpack.c.h.b16 %v276
      %v443 = vunpack.c.l.b16 %v277
      %v444 = vunpack.c.h.b16 %v277
      %v445 = vunpack.c.l.b16 %v278
      %v446 = vunpack.c.h.b16 %v278
      %v447 = vunpack.c.l.b16 %v279
      %v448 = vunpack.c.h.b16 %v279
      %v449 = vunpack.c.l.b16 %v280
      %v450 = vunpack.c.h.b16 %v280
      %v451 = vunpack.c.l.b16 %v281
      %v452 = vunpack.c.h.b16 %v281
      %v453 = vunpack.c.l.b16 %v282
      %v454 = vunpack.c.h.b16 %v282
      %v455 = vunpack.c.l.b16 %v283
      %v456 = vunpack.c.h.b16 %v283
      %v457 = vunpack.c.l.b16 %v284
      %v458 = vunpack.c.h.b16 %v284
      %v459 = vunpack.c.l.b16 %v285
      %v460 = vunpack.c.h.b16 %v285
      %v461 = vunpack.c.l.b16 %v286
      %v462 = vunpack.c.h.b16 %v286
      %v463 = vunpack.c.l.b16 %v287
      %v464 = vunpack.c.h.b16 %v287
      %v465 = vunpack.c.l.b16 %v288
      %v466 = vunpack.c.h.b16 %v288
      %v467 = vunpack.c.l.b16 %v289
      %v468 = vunpack.c.h.b16 %v289
      %v469 = vunpack.c.l.b16 %v290
      %v470 = vunpack.c.h.b16 %v290
      %v471 = vunpack.c.l.b16 %v291
      %v472 = vunpack.c.h.b16 %v291
      %v473 = vunpack.c.l.b16 %v292
      %v474 = vunpack.c.h.b16 %v292
      %v475 = vunpack.c.l.b16 %v293
      %v476 = vunpack.c.h.b16 %v293
      %v477 = vunpack.c.l.b16 %v294
      %v478 = vunpack.c.h.b16 %v294
      %v479 = vunpack.c.l.b16 %v295
      %v480 = vunpack.c.h.b16 %v295
      %v481 = vunpack.c.l.b16 %v296
      %v482 = vunpack.c.h.b16 %v296
      %v483 = vunpack.c.l.b16 %v297
      %v484 = vunpack.c.h.b16 %v297
      %v485 = vunpack.c.l.b16 %v298
      %v486 = vunpack.c.h.b16 %v298
      %v487 = vunpack.c.l.b16 %v299
      %v488 = vunpack.c.h.b16 %v299
      %v489 = vunpack.c.l.b16 %v300
      %v490 = vunpack.c.h.b16 %v300
      %v491 = vunpack.c.l.b16 %v301
      %v492 = vunpack.c.h.b16 %v301
      %v493 = vunpack.c.l.b16 %v302
      %v494 = vunpack.c.h.b16 %v302
      %v495 = vunpack.c.l.b16 %v303
      %v496 = vunpack.c.h.b16 %v303
      %v497 = vpack.c.b16 %v377, %v369
      %v498 = vpack.c.b16 %v378, %v370
      %v499 = vpack.c.b16 %v379, %v371
      %v500 = vpack.c.b16 %v380, %v372
      %v501 = vpack.c.b16 %v381, %v373
      %v502 = vpack.c.b16 %v382, %v374
      %v503 = vpack.c.b16 %v383, %v375
      %v504 = vpack.c.b16 %v384, %v376
      %v505 = vpack.c.b16 %v393, %v385
      %v506 = vpack.c.b16 %v394, %v386
      %v507 = vpack.c.b16 %v395, %v387
      %v508 = vpack.c.b16 %v396, %v388
      %v509 = vpack.c.b16 %v397, %v389
      %v510 = vpack.c.b16 %v398, %v390
      %v511 = vpack.c.b16 %v399, %v391
      %v512 = vpack.c.b16 %v400, %v392
      %v513 = vpack.c.b16 %v409, %v401
      %v514 = vpack.c.b16 %v410, %v402
      %v515 = vpack.c.b16 %v411, %v403
      %v516 = vpack.c.b16 %v412, %v404
      %v517 = vpack.c.b16 %v413, %v405
      %v518 = vpack.c.b16 %v414, %v406
      %v519 = vpack.c.b16 %v415, %v407
      %v520 = vpack.c.b16 %v416, %v408
      %v521 = vpack.c.b16 %v425, %v417
      %v522 = vpack.c.b16 %v426, %v418
      %v523 = vpack.c.b16 %v427, %v419
      %v524 = vpack.c.b16 %v428, %v420
      %v525 = vpack.c.b16 %v429, %v421
      %v526 = vpack.c.b16 %v430, %v422
      %v527 = vpack.c.b16 %v431, %v423
      %v528 = vpack.c.b16 %v432, %v424
      %v529 = vpack.c.b16 %v441, %v433
      %v530 = vpack.c.b16 %v442, %v434
      %v531 = vpack.c.b16 %v443, %v435
      %v532 = vpack.c.b16 %v444, %v436
      %v533 = vpack.c.b16 %v445, %v437
      %v534 = vpack.c.b16 %v446, %v438
      %v535 = vpack.c.b16 %v447, %v439
      %v536 = vpack.c.b16 %v448, %v440
      %v537 = vpack.c.b16 %v457, %v449
      %v538 = vpack.c.b16 %v458, %v450
      %v539 = vpack.c.b16 %v459, %v451
      %v540 = vpack.c.b16 %v460, %v452
      %v541 = vpack.c.b16 %v461, %v453
      %v542 = vpack.c.b16 %v462, %v454
      %v543 = vpack.c.b16 %v463, %v455
      %v544 = vpack.c.b16 %v464, %v456
      %v545 = vpack.c.b16 %v473, %v465
      %v546 = vpack.c.b16 %v474, %v466
      %v547 = vpack.c.b16 %v475, %v467
      %v548 = vpack.c.b16 %v476, %v468
      %v549 = vpack.c.b16 %v477, %v469
      %v550 = vpack.c.b16 %v478, %v470
      %v551 = vpack.c.b16 %v479, %v471
      %v552 = vpack.c.b16 %v480, %v472
      %v553 = vpack.c.b16 %v489, %v481
      %v554 = vpack.c.b16 %v490, %v482
      %v555 = vpack.c.b16 %v491, %v483
      %v556 = vpack.c.b16 %v492, %v484
      %v557 = vpack.c.b16 %v493, %v485
      %v558 = vpack.c.b16 %v494, %v486
      %v559 = vpack.c.b16 %v495, %v487
      %v560 = vpack.c.b16 %v496, %v488
      %v626 = vlaneseq
      %v627 = vshrl.u32 %v626, 7
      %v628 = vsub.s32 0, %v627
      %v629 = vrot.slane %v304, %v628
      %v630 = vlaneseq
      %v631 = vshrl.u32 %v630, 7
      %v632 = vsub.s32 1, %v631
      %v633 = vrot.slane %v304, %v632
      %v634 = vlaneseq
      %v635 = vshrl.u32 %v634, 7
      %v636 = vsub.s32 2, %v635
      %v637 = vrot.slane %v304, %v636
      %v638 = vlaneseq
      %v639 = vshrl.u32 %v638, 7
      %v640 = vsub.s32 3, %v639
      %v641 = vrot.slane %v304, %v640
      %v642 = vlaneseq
      %v643 = vshrl.u32 %v642, 7
      %v644 = vsub.s32 4, %v643
      %v645 = vrot.slane %v304, %v644
      %v646 = vlaneseq
      %v647 = vshrl.u32 %v646, 7
      %v648 = vsub.s32 5, %v647
      %v649 = vrot.slane %v304, %v648
      %v650 = vlaneseq
      %v651 = vshrl.u32 %v650, 7
      %v652 = vsub.s32 6, %v651
      %v653 = vrot.slane %v304, %v652
      %v654 = vlaneseq
      %v655 = vshrl.u32 %v654, 7
      %v656 = vsub.s32 7, %v655
      %v657 = vrot.slane %v304, %v656
      %666 = vmatprep.subr.bf16.mxu0 %v554
      %667 = vmatpush1.bf16.msra.mxu0 %v553
      %668 = vmatprep.subr.bf16.mxu0 %v546
      %669 = vmatpush1.bf16.msra.mxu0 %v545
      %670 = vmatprep.subr.bf16.mxu0 %v538
      %671 = vmatpush1.bf16.msra.mxu0 %v537
      %672 = vmatprep.subr.bf16.mxu0 %v530
      %673 = vmatpush1.bf16.msra.mxu0 %v529
      %674 = vmatprep.subr.bf16.mxu0 %v522
      %675 = vmatpush1.bf16.msra.mxu0 %v521
      %676 = vmatprep.subr.bf16.mxu0 %v514
      %677 = vmatpush1.bf16.msra.mxu0 %v513
      %678 = vmatprep.subr.bf16.mxu0 %v506
      %679 = vmatpush1.bf16.msra.mxu0 %v505
      %680 = vmatprep.subr.bf16.mxu0 %v498
      %681 = vmatpush1.bf16.msra.mxu0 %v497
      %682 = vmatprep.subr.bf16.mxu0 0
      %683 = vmatpush2.bf16.msra.mxu0 0
      %684 = vmatprep.subr.bf16.mxu0 0
      %685 = vmatpush2.bf16.msra.mxu0 0
      %686 = vmatprep.subr.bf16.mxu0 0
      %687 = vmatpush2.bf16.msra.mxu0 0
      %688 = vmatprep.subr.bf16.mxu0 0
      %689 = vmatpush2.bf16.msra.mxu0 0
      %690 = vmatprep.subr.bf16.mxu0 0
      %691 = vmatpush2.bf16.msra.mxu0 0
      %692 = vmatprep.subr.bf16.mxu0 0
      %693 = vmatpush2.bf16.msra.mxu0 0
      %694 = vmatprep.subr.bf16.mxu0 0
      %695 = vmatpush2.bf16.msra.mxu0 0
      %696 = vmatprep.subr.bf16.mxu0 0
      %697 = vmatpush2.bf16.msra.mxu0 0
      %698 = vmatprep.mubr.bf16.mxu0 0
      %699 = vmatmul.mubr.bf16.gmra.mxu0 %v239
      %v700 = vpop.f32.mrf.mxu0
      %v701 = vadd.f32 %v629, %v700
      %v702 = vpop.f32.mrf.mxu0
      %v703 = vadd.f32 %v633, %v702
      %v704 = vpop.f32.mrf.mxu0
      %v705 = vpop.f32.mrf.mxu0
      %706 = vdwg.mxu0
      %707 = vmatprep.subr.bf16.mxu0 %v556
      %708 = vmatpush1.bf16.msra.mxu0 %v555
      %709 = vmatprep.subr.bf16.mxu0 %v548
      %710 = vmatpush1.bf16.msra.mxu0 %v547
      %711 = vmatprep.subr.bf16.mxu0 %v540
      %712 = vmatpush1.bf16.msra.mxu0 %v539
      %713 = vmatprep.subr.bf16.mxu0 %v532
      %714 = vmatpush1.bf16.msra.mxu0 %v531
      %715 = vmatprep.subr.bf16.mxu0 %v524
      %716 = vmatpush1.bf16.msra.mxu0 %v523
      %717 = vmatprep.subr.bf16.mxu0 %v516
      %718 = vmatpush1.bf16.msra.mxu0 %v515
      %719 = vmatprep.subr.bf16.mxu0 %v508
      %720 = vmatpush1.bf16.msra.mxu0 %v507
      %721 = vmatprep.subr.bf16.mxu0 %v500
      %722 = vmatpush1.bf16.msra.mxu0 %v499
      %723 = vmatprep.subr.bf16.mxu0 0
      %724 = vmatpush2.bf16.msra.mxu0 0
      %725 = vmatprep.subr.bf16.mxu0 0
      %726 = vmatpush2.bf16.msra.mxu0 0
      %727 = vmatprep.subr.bf16.mxu0 0
      %728 = vmatpush2.bf16.msra.mxu0 0
      %729 = vmatprep.subr.bf16.mxu0 0
      %730 = vmatpush2.bf16.msra.mxu0 0
      %731 = vmatprep.subr.bf16.mxu0 0
      %732 = vmatpush2.bf16.msra.mxu0 0
      %733 = vmatprep.subr.bf16.mxu0 0
      %734 = vmatpush2.bf16.msra.mxu0 0
      %735 = vmatprep.subr.bf16.mxu0 0
      %736 = vmatpush2.bf16.msra.mxu0 0
      %737 = vmatprep.subr.bf16.mxu0 0
      %738 = vmatpush2.bf16.msra.mxu0 0
      %739 = vmatprep.mubr.bf16.mxu0 0
      %740 = vmatmul.mubr.bf16.gmra.mxu0 %v239
      %v741 = vpop.f32.mrf.mxu0
      %v742 = vadd.f32 %v637, %v741
      %v743 = vpop.f32.mrf.mxu0
      %v744 = vadd.f32 %v641, %v743
      %v745 = vpop.f32.mrf.mxu0
      %v746 = vpop.f32.mrf.mxu0
      %747 = vdwg.mxu0
      %748 = vmatprep.subr.bf16.mxu0 %v558
      %749 = vmatpush1.bf16.msra.mxu0 %v557
      %750 = vmatprep.subr.bf16.mxu0 %v550
      %751 = vmatpush1.bf16.msra.mxu0 %v549
      %752 = vmatprep.subr.bf16.mxu0 %v542
      %753 = vmatpush1.bf16.msra.mxu0 %v541
      %754 = vmatprep.subr.bf16.mxu0 %v534
      %755 = vmatpush1.bf16.msra.mxu0 %v533
      %756 = vmatprep.subr.bf16.mxu0 %v526
      %757 = vmatpush1.bf16.msra.mxu0 %v525
      %758 = vmatprep.subr.bf16.mxu0 %v518
      %759 = vmatpush1.bf16.msra.mxu0 %v517
      %760 = vmatprep.subr.bf16.mxu0 %v510
      %761 = vmatpush1.bf16.msra.mxu0 %v509
      %762 = vmatprep.subr.bf16.mxu0 %v502
      %763 = vmatpush1.bf16.msra.mxu0 %v501
      %764 = vmatprep.subr.bf16.mxu0 0
      %765 = vmatpush2.bf16.msra.mxu0 0
      %766 = vmatprep.subr.bf16.mxu0 0
      %767 = vmatpush2.bf16.msra.mxu0 0
      %768 = vmatprep.subr.bf16.mxu0 0
      %769 = vmatpush2.bf16.msra.mxu0 0
      %770 = vmatprep.subr.bf16.mxu0 0
      %771 = vmatpush2.bf16.msra.mxu0 0
      %772 = vmatprep.subr.bf16.mxu0 0
      %773 = vmatpush2.bf16.msra.mxu0 0
      %774 = vmatprep.subr.bf16.mxu0 0
      %775 = vmatpush2.bf16.msra.mxu0 0
      %776 = vmatprep.subr.bf16.mxu0 0
      %777 = vmatpush2.bf16.msra.mxu0 0
      %778 = vmatprep.subr.bf16.mxu0 0
      %779 = vmatpush2.bf16.msra.mxu0 0
      %780 = vmatprep.mubr.bf16.mxu0 0
      %781 = vmatmul.mubr.bf16.gmra.mxu0 %v239
      %v782 = vpop.f32.mrf.mxu0
      %v783 = vadd.f32 %v645, %v782
      %v784 = vpop.f32.mrf.mxu0
      %v785 = vadd.f32 %v649, %v784
      %v786 = vpop.f32.mrf.mxu0
      %v787 = vpop.f32.mrf.mxu0
      %788 = vdwg.mxu0
      %789 = vmatprep.subr.bf16.mxu0 %v560
      %790 = vmatpush1.bf16.msra.mxu0 %v559
      %791 = vmatprep.subr.bf16.mxu0 %v552
      %792 = vmatpush1.bf16.msra.mxu0 %v551
      %793 = vmatprep.subr.bf16.mxu0 %v544
      %794 = vmatpush1.bf16.msra.mxu0 %v543
      %795 = vmatprep.subr.bf16.mxu0 %v536
      %796 = vmatpush1.bf16.msra.mxu0 %v535
      %797 = vmatprep.subr.bf16.mxu0 %v528
      %798 = vmatpush1.bf16.msra.mxu0 %v527
      %799 = vmatprep.subr.bf16.mxu0 %v520
      %800 = vmatpush1.bf16.msra.mxu0 %v519
      %801 = vmatprep.subr.bf16.mxu0 %v512
      %802 = vmatpush1.bf16.msra.mxu0 %v511
      %803 = vmatprep.subr.bf16.mxu0 %v504
      %804 = vmatpush1.bf16.msra.mxu0 %v503
      %805 = vmatprep.subr.bf16.mxu0 0
      %806 = vmatpush2.bf16.msra.mxu0 0
      %807 = vmatprep.subr.bf16.mxu0 0
      %808 = vmatpush2.bf16.msra.mxu0 0
      %809 = vmatprep.subr.bf16.mxu0 0
      %810 = vmatpush2.bf16.msra.mxu0 0
      %811 = vmatprep.subr.bf16.mxu0 0
      %812 = vmatpush2.bf16.msra.mxu0 0
      %813 = vmatprep.subr.bf16.mxu0 0
      %814 = vmatpush2.bf16.msra.mxu0 0
      %815 = vmatprep.subr.bf16.mxu0 0
      %816 = vmatpush2.bf16.msra.mxu0 0
      %817 = vmatprep.subr.bf16.mxu0 0
      %818 = vmatpush2.bf16.msra.mxu0 0
      %819 = vmatprep.subr.bf16.mxu0 0
      %820 = vmatpush2.bf16.msra.mxu0 0
      %821 = vmatprep.mubr.bf16.mxu0 0
      %822 = vmatmul.mubr.bf16.gmra.mxu0 %v239
      %v823 = vpop.f32.mrf.mxu0
      %v824 = vadd.f32 %v653, %v823
      %v825 = vpop.f32.mrf.mxu0
      %v826 = vadd.f32 %v657, %v825
      %v827 = vpop.f32.mrf.mxu0
      %v828 = vpop.f32.mrf.mxu0
      %829 = vdwg.mxu0
      %v838 = vcombine.low %v701, %v703
      %v839 = vcombine.low %v742, %v744
      %v840 = vcombine.low %v783, %v785
      %v841 = vcombine.low %v824, %v826
      %v843 = vunpack.c.l.s4 1966171168
      %v844 = vunpack.c.0.s8 %v843
      %v845 = vlaneseq
      %v846 = vshrl.u32 %v845, 7
      %v847 = vsub.s32 %v844, %v846
      %v848 = vrot.slane %v838, %v847
      %v850 = vunpack.c.l.s4 1966171168
      %v851 = vunpack.c.0.s8 %v850
      %v852 = vlaneseq
      %v853 = vshrl.u32 %v852, 7
      %v854 = vsub.s32 %v851, %v853
      %v855 = vrot.slane %v839, %v854
      %v857 = vunpack.c.l.s4 1966171168
      %v858 = vunpack.c.0.s8 %v857
      %v859 = vlaneseq
      %v860 = vshrl.u32 %v859, 7
      %v861 = vsub.s32 %v858, %v860
      %v862 = vrot.slane %v840, %v861
      %v864 = vunpack.c.l.s4 1966171168
      %v865 = vunpack.c.0.s8 %v864
      %v866 = vlaneseq
      %v867 = vshrl.u32 %v866, 7
      %v868 = vsub.s32 %v865, %v867
      %v869 = vrot.slane %v841, %v868
      %v870 = vcombine.low %v848, %v855
      %v871 = vcombine.low %v862, %v869
      %v873 = vunpack.c.l.s4 1966171168
      %v874 = vunpack.c.0.s8 %v873
      %v875 = vlaneseq
      %v876 = vshrl.u32 %v875, 7
      %v877 = vsub.s32 %v874, %v876
      %v878 = vrot.slane %v870, %v877
      %v880 = vunpack.c.l.s4 1966171168
      %v881 = vunpack.c.0.s8 %v880
      %v882 = vlaneseq
      %v883 = vshrl.u32 %v882, 7
      %v884 = vsub.s32 %v881, %v883
      %v885 = vrot.slane %v871, %v884
      %v886 = vcombine.low %v878, %v885
      %888 = vst [vmem:[%s216] sm:$0xff] %v886
      %p889 = scmp.lt.s32.totalorder %s16, 1
      %s890 = scalar_select %p889, %s16, 1
      %s891 = smul.addr %s890, 8
      %s892 = scalar_lea.vmem %s5, %s891
      // Predicated region
      $region41: #{_lambda_.9} parent=39 // pred_check
        %p893 = pneg %p144
      $region42: #{_lambda_.9} parent=39 // pred_check_branch
        %895 = sbr.rel (%p893) target = $region44
      $region43: #{_lambda_.9} parent=39 // pred_region
        _
      $region44: #{_lambda_.9} parent=39 // pred_fallthru
        _
    $region40: #{_lambda_.9} parent=5 // pred_fallthru
      _
    %p896 = scmp.le.s32.totalorder 2, %s11
    // Predicated region
    $region45: #{_lambda_.9} parent=5 // pred_check
      %p897 = pneg %p896
    $region46: #{_lambda_.9} parent=5 // pred_check_branch
      %899 = sbr.rel (%p897) target = $region48
    $region47: #{_lambda_.9} parent=5 // pred_region
      %s900 = ssub.s32 %s11, 2
      // Predicated region
      $region49: #{_lambda_.9} parent=47 // pred_check
        %p901 = pneg %p150
      $region50: #{_lambda_.9} parent=47 // pred_check_branch
        %903 = sbr.rel (%p901) target = $region52
      $region51: #{_lambda_.9} parent=47 // pred_region
        %p904 = scmp.lt.s32.totalorder %s17, 1
        %s905 = scalar_select %p904, %s17, 1
        %s906 = smul.addr %s905, 8
        %s907 = scalar_lea.vmem %s5, %s906
      $region52: #{_lambda_.9} parent=47 // pred_fallthru
        _
    $region48: #{_lambda_.9} parent=5 // pred_fallthru
      _
  $region6: #{_lambda_.9} parent=0 // loop_footer
    %s15 = sadd.s32 1, %s11
  $region7: #{_lambda_.9} parent=0 // loop_footer_branch
    %10 = sbr.rel target = $region3
  $region8: #{_lambda_.9} parent=0 // loop_exit
    _

// kernel: _lambda_.8
$region0: #{_lambda_.8}
  #allocation0 [shape = 'u32[]', space=smem, size = 0x4, offset = 0x4, fixed_abs, tag = 'smem constant byte address 0x4 - core index']
  #allocation1 [shape = 'u32[144,128]{1,0:T(1,128)}', space=vmem, size = 0x12000, scoped, tag = 'internal scratch']
  %s0 = inlined_call_operand.vmem [shape: f32[2,1,256], index: 0, kind: input, shape index: {}]
  %s1 = inlined_call_operand.vmem [shape: bf16[256,128], index: 1, kind: input, shape index: {}]
  %s2 = inlined_call_operand.vmem [shape: f32[1,128], index: 2, kind: input, shape index: {}]
  %s3 = inlined_call_operand.vmem [shape: f32[2,1,128], index: 3, kind: input, shape index: {}]
  %s4 = inlined_call_operand.vmem [shape: f32[2,1,128], index: 4, kind: input, shape index: {}]
  %s5 = inlined_call_operand.vmem [shape: bf16[2,128,384], index: 5, kind: input, shape index: {}]
  %s6 = inlined_call_operand.vmem [shape: f32[2,1,384], index: 6, kind: input, shape index: {}]
  %s7 = inlined_call_operand.vmem [shape: bf16[2,128,128], index: 7, kind: input, shape index: {}]
  %s8 = inlined_call_operand.vmem [shape: f32[2,1,128], index: 8, kind: input, shape index: {}]
  %s9 = inlined_call_operand.vmem [shape: f32[2,1,128], index: 9, kind: input, shape index: {}]
  %s10 = inlined_call_operand.vmem [shape: f32[2,1,128], index: 10, kind: input, shape index: {}]
  %s11 = inlined_call_operand.vmem [shape: bf16[2,128,512], index: 11, kind: input, shape index: {}]
  %s12 = inlined_call_operand.vmem [shape: f32[2,1,512], index: 12, kind: input, shape index: {}]
  %s13 = inlined_call_operand.vmem [shape: bf16[2,512,128], index: 13, kind: input, shape index: {}]
  %s14 = inlined_call_operand.hbm [shape: f32[2,1,128], index: 14, kind: input, shape index: {}]
  %s15 = inlined_call_operand.vmem [shape: f32[2,1,128], index: 15, kind: output, shape index: {}]
  %s16 = sld [smem:[#allocation0]]
  $region101: #{_lambda_.8} parent=0
    _
  %s18 = ssub.s32 1, %s16
  %s19 = scalar_select 0, %s18, %s16
  $region1: #{_lambda_.8} parent=0
    #allocation2 [shape = 'u8[1024]{0}', space=vmem, size = 0x400, scoped, tag = 'input window, operand 14']
    #allocation3 [shape = 's32[2]{0}', space=sflag, size = 0x8, scoped, tag = 'scoped memory for _lambda_.8']
    %20 = vsyncpa [#allocation3], 0
    %s21 = scalar_lea.sflag [#allocation3], 1
    %22 = vsyncpa %s21, 0
    loop: start=0, step=1, limit=6
    $region2: #{_lambda_.8} parent=1 // loop_pre_header
      _
    $region3: #{_lambda_.8} parent=1 // loop_header
      %s24 = sphi 0, %s28
      %p25 = scmp.ge.s32.totalorder %s24, 6
      %s31 = sphi 0, %s43
      %s32 = sphi 0, %s39
      %s33 = sphi 0, %s31
      %s34 = sphi 0, %s32
      %s35 = sphi 0, %s33
      %s36 = sphi 0, %s34
      %s46 = sphi 0, %s48
      %s49 = sphi 0, %s46
      %s50 = sphi 0, %s49
      %s66 = sphi 0, %s50
      %s70 = sphi 0, %s70
      %s72 = sphi 0, %s70
      %s73 = sphi 0, %s72
      %s87 = sphi 0, %s73
      %s91 = sphi 0, %s91
      %s93 = sphi 0, %s91
      %s94 = sphi 0, %s93
      %s108 = sphi 0, %s94
      %s114 = sphi 0, %s116
      %s117 = sphi 0, %s114
      %s118 = sphi 0, %s117
      %s134 = sphi 0, %s118
      %s140 = sphi 0, %s142
      %s143 = sphi 0, %s140
      %s144 = sphi 0, %s143
      %s160 = sphi 0, %s144
      %s166 = sphi 0, %s168
      %s169 = sphi 0, %s166
      %s170 = sphi 0, %s169
      %s186 = sphi 0, %s170
      %s192 = sphi 0, %s194
      %s195 = sphi 0, %s192
      %s196 = sphi 0, %s195
      %s212 = sphi 0, %s196
      %s218 = sphi 0, %s220
      %s221 = sphi 0, %s218
      %s222 = sphi 0, %s221
      %s238 = sphi 0, %s222
      %s244 = sphi 0, %s246
      %s247 = sphi 0, %s244
      %s248 = sphi 0, %s247
      %s264 = sphi 0, %s248
      %s270 = sphi 0, %s272
      %s273 = sphi 0, %s270
      %s274 = sphi 0, %s273
      %s290 = sphi 0, %s274
      %s296 = sphi 0, %s298
      %s299 = sphi 0, %s296
      %s300 = sphi 0, %s299
      %s316 = sphi 0, %s300
      %s322 = sphi 0, %s324
      %s325 = sphi 0, %s322
      %s326 = sphi 0, %s325
      %s342 = sphi 0, %s326
      %s348 = sphi 0, %s350
      %s351 = sphi 0, %s348
      %s352 = sphi 0, %s351
      %s368 = sphi 0, %s352
      %s374 = sphi 0, %s376
      %s377 = sphi 0, %s374
      %s378 = sphi 0, %s377
      %s394 = sphi 0, %s378
      %s400 = sphi 0, %s402
      %s403 = sphi 0, %s400
      %s404 = sphi 0, %s403
      %s420 = sphi 0, %s404
      %s426 = sphi 0, %s428
      %s429 = sphi 0, %s426
      %s430 = sphi 0, %s429
      %s446 = sphi 0, %s430
    $region4: #{_lambda_.8} parent=1 // loop_header_branch
      %27 = sbr.rel (%p25) target = $region8
    $region5: #{_lambda_.8} parent=1 // loop_body
      %s29 = ssub.s32 %s24, 1
      %s30 = ssub.s32 %s24, 2
      %s37 = sadd.s32 1, %s32
      %p38 = scmp.ge.s32.totalorder %s37, 2
      %s39 = scalar_select %p38, 0, %s37
      %s40 = sadd.s32 1, %s31
      %s41 = scalar_select %p38, %s40, %s31
      %p42 = scmp.ge.s32.totalorder %s41, 2
      %s43 = scalar_select %p42, 0, %s41
      %s44 = ssub.s32 %s31, %s43
      %p45 = scmp.eq.s32.totalorder %s44, 0
      %s47 = sadd.s32 %s46, 1
      %s48 = scalar_select %p45, %s46, %s47
      %p51 = pneg %p45
      %p52 = scmp.eq.s32.totalorder %s24, 3
      %p53 = por %p51, %p52
      %p54 = scmp.ne.s32.totalorder %s46, %s49
      %p55 = scmp.eq.s32.totalorder %s24, 0
      %p56 = por %p54, %p55
      %p57 = scmp.ne.s32.totalorder %s46, %s49
      %p58 = scmp.eq.s32.totalorder %s29, 3
      %p59 = por %p57, %p58
      %p60 = scmp.ne.s32.totalorder %s49, %s50
      %p61 = scmp.eq.s32.totalorder %s29, 0
      %p62 = por %p60, %p61
      %p63 = scmp.ne.s32.totalorder %s49, %s50
      %p64 = scmp.eq.s32.totalorder %s30, 3
      %p65 = por %p63, %p64
      %p67 = scmp.ne.s32.totalorder %s50, %s66
      %p68 = scmp.eq.s32.totalorder %s30, 0
      %p69 = por %p67, %p68
      %s71 = sadd.s32 %s70, 1
      %p74 = scmp.eq.s32.totalorder %s24, 3
      %p75 = scmp.ne.s32.totalorder %s70, %s72
      %p76 = scmp.eq.s32.totalorder %s24, 0
      %p77 = por %p75, %p76
      %p78 = scmp.ne.s32.totalorder %s70, %s72
      %p79 = scmp.eq.s32.totalorder %s29, 3
      %p80 = por %p78, %p79
      %p81 = scmp.ne.s32.totalorder %s72, %s73
      %p82 = scmp.eq.s32.totalorder %s29, 0
      %p83 = por %p81, %p82
      %p84 = scmp.ne.s32.totalorder %s72, %s73
      %p85 = scmp.eq.s32.totalorder %s30, 3
      %p86 = por %p84, %p85
      %p88 = scmp.ne.s32.totalorder %s73, %s87
      %p89 = scmp.eq.s32.totalorder %s30, 0
      %p90 = por %p88, %p89
      %s92 = sadd.s32 %s91, 1
      %p95 = scmp.eq.s32.totalorder %s24, 3
      %p96 = scmp.ne.s32.totalorder %s91, %s93
      %p97 = scmp.eq.s32.totalorder %s24, 0
      %p98 = por %p96, %p97
      %p99 = scmp.ne.s32.totalorder %s91, %s93
      %p100 = scmp.eq.s32.totalorder %s29, 3
      %p101 = por %p99, %p100
      %p102 = scmp.ne.s32.totalorder %s93, %s94
      %p103 = scmp.eq.s32.totalorder %s29, 0
      %p104 = por %p102, %p103
      %p105 = scmp.ne.s32.totalorder %s93, %s94
      %p106 = scmp.eq.s32.totalorder %s30, 3
      %p107 = por %p105, %p106
      %p109 = scmp.ne.s32.totalorder %s94, %s108
      %p110 = scmp.eq.s32.totalorder %s30, 0
      %p111 = por %p109, %p110
      %s112 = ssub.s32 %s32, %s39
      %p113 = scmp.eq.s32.totalorder %s112, 0
      %s115 = sadd.s32 %s114, 1
      %s116 = scalar_select %p113, %s114, %s115
      %p119 = pneg %p113
      %p120 = scmp.eq.s32.totalorder %s24, 3
      %p121 = por %p119, %p120
      %p122 = scmp.ne.s32.totalorder %s114, %s117
      %p123 = scmp.eq.s32.totalorder %s24, 0
      %p124 = por %p122, %p123
      %p125 = scmp.ne.s32.totalorder %s114, %s117
      %p126 = scmp.eq.s32.totalorder %s29, 3
      %p127 = por %p125, %p126
      %p128 = scmp.ne.s32.totalorder %s117, %s118
      %p129 = scmp.eq.s32.totalorder %s29, 0
      %p130 = por %p128, %p129
      %p131 = scmp.ne.s32.totalorder %s117, %s118
      %p132 = scmp.eq.s32.totalorder %s30, 3
      %p133 = por %p131, %p132
      %p135 = scmp.ne.s32.totalorder %s118, %s134
      %p136 = scmp.eq.s32.totalorder %s30, 0
      %p137 = por %p135, %p136
      %s138 = ssub.s32 %s32, %s39
      %p139 = scmp.eq.s32.totalorder %s138, 0
      %s141 = sadd.s32 %s140, 1
      %s142 = scalar_select %p139, %s140, %s141
      %p145 = pneg %p139
      %p146 = scmp.eq.s32.totalorder %s24, 3
      %p147 = por %p145, %p146
      %p148 = scmp.ne.s32.totalorder %s140, %s143
      %p149 = scmp.eq.s32.totalorder %s24, 0
      %p150 = por %p148, %p149
      %p151 = scmp.ne.s32.totalorder %s140, %s143
      %p152 = scmp.eq.s32.totalorder %s29, 3
      %p153 = por %p151, %p152
      %p154 = scmp.ne.s32.totalorder %s143, %s144
      %p155 = scmp.eq.s32.totalorder %s29, 0
      %p156 = por %p154, %p155
      %p157 = scmp.ne.s32.totalorder %s143, %s144
      %p158 = scmp.eq.s32.totalorder %s30, 3
      %p159 = por %p157, %p158
      %p161 = scmp.ne.s32.totalorder %s144, %s160
      %p162 = scmp.eq.s32.totalorder %s30, 0
      %p163 = por %p161, %p162
      %s164 = ssub.s32 %s32, %s39
      %p165 = scmp.eq.s32.totalorder %s164, 0
      %s167 = sadd.s32 %s166, 1
      %s168 = scalar_select %p165, %s166, %s167
      %p171 = pneg %p165
      %p172 = scmp.eq.s32.totalorder %s24, 3
      %p173 = por %p171, %p172
      %p174 = scmp.ne.s32.totalorder %s166, %s169
      %p175 = scmp.eq.s32.totalorder %s24, 0
      %p176 = por %p174, %p175
      %p177 = scmp.ne.s32.totalorder %s166, %s169
      %p178 = scmp.eq.s32.totalorder %s29, 3
      %p179 = por %p177, %p178
      %p180 = scmp.ne.s32.totalorder %s169, %s170
      %p181 = scmp.eq.s32.totalorder %s29, 0
      %p182 = por %p180, %p181
      %p183 = scmp.ne.s32.totalorder %s169, %s170
      %p184 = scmp.eq.s32.totalorder %s30, 3
      %p185 = por %p183, %p184
      %p187 = scmp.ne.s32.totalorder %s170, %s186
      %p188 = scmp.eq.s32.totalorder %s30, 0
      %p189 = por %p187, %p188
      %s190 = ssub.s32 %s32, %s39
      %p191 = scmp.eq.s32.totalorder %s190, 0
      %s193 = sadd.s32 %s192, 1
      %s194 = scalar_select %p191, %s192, %s193
      %p197 = pneg %p191
      %p198 = scmp.eq.s32.totalorder %s24, 3
      %p199 = por %p197, %p198
      %p200 = scmp.ne.s32.totalorder %s192, %s195
      %p201 = scmp.eq.s32.totalorder %s24, 0
      %p202 = por %p200, %p201
      %p203 = scmp.ne.s32.totalorder %s192, %s195
      %p204 = scmp.eq.s32.totalorder %s29, 3
      %p205 = por %p203, %p204
      %p206 = scmp.ne.s32.totalorder %s195, %s196
      %p207 = scmp.eq.s32.totalorder %s29, 0
      %p208 = por %p206, %p207
      %p209 = scmp.ne.s32.totalorder %s195, %s196
      %p210 = scmp.eq.s32.totalorder %s30, 3
      %p211 = por %p209, %p210
      %p213 = scmp.ne.s32.totalorder %s196, %s212
      %p214 = scmp.eq.s32.totalorder %s30, 0
      %p215 = por %p213, %p214
      %s216 = ssub.s32 %s32, %s39
      %p217 = scmp.eq.s32.totalorder %s216, 0
      %s219 = sadd.s32 %s218, 1
      %s220 = scalar_select %p217, %s218, %s219
      %p223 = pneg %p217
      %p224 = scmp.eq.s32.totalorder %s24, 3
      %p225 = por %p223, %p224
      %p226 = scmp.ne.s32.totalorder %s218, %s221
      %p227 = scmp.eq.s32.totalorder %s24, 0
      %p228 = por %p226, %p227
      %p229 = scmp.ne.s32.totalorder %s218, %s221
      %p230 = scmp.eq.s32.totalorder %s29, 3
      %p231 = por %p229, %p230
      %p232 = scmp.ne.s32.totalorder %s221, %s222
      %p233 = scmp.eq.s32.totalorder %s29, 0
      %p234 = por %p232, %p233
      %p235 = scmp.ne.s32.totalorder %s221, %s222
      %p236 = scmp.eq.s32.totalorder %s30, 3
      %p237 = por %p235, %p236
      %p239 = scmp.ne.s32.totalorder %s222, %s238
      %p240 = scmp.eq.s32.totalorder %s30, 0
      %p241 = por %p239, %p240
      %s242 = ssub.s32 %s32, %s39
      %p243 = scmp.eq.s32.totalorder %s242, 0
      %s245 = sadd.s32 %s244, 1
      %s246 = scalar_select %p243, %s244, %s245
      %p249 = pneg %p243
      %p250 = scmp.eq.s32.totalorder %s24, 3
      %p251 = por %p249, %p250
      %p252 = scmp.ne.s32.totalorder %s244, %s247
      %p253 = scmp.eq.s32.totalorder %s24, 0
      %p254 = por %p252, %p253
      %p255 = scmp.ne.s32.totalorder %s244, %s247
      %p256 = scmp.eq.s32.totalorder %s29, 3
      %p257 = por %p255, %p256
      %p258 = scmp.ne.s32.totalorder %s247, %s248
      %p259 = scmp.eq.s32.totalorder %s29, 0
      %p260 = por %p258, %p259
      %p261 = scmp.ne.s32.totalorder %s247, %s248
      %p262 = scmp.eq.s32.totalorder %s30, 3
      %p263 = por %p261, %p262
      %p265 = scmp.ne.s32.totalorder %s248, %s264
      %p266 = scmp.eq.s32.totalorder %s30, 0
      %p267 = por %p265, %p266
      %s268 = ssub.s32 %s32, %s39
      %p269 = scmp.eq.s32.totalorder %s268, 0
      %s271 = sadd.s32 %s270, 1
      %s272 = scalar_select %p269, %s270, %s271
      %p275 = pneg %p269
      %p276 = scmp.eq.s32.totalorder %s24, 3
      %p277 = por %p275, %p276
      %p278 = scmp.ne.s32.totalorder %s270, %s273
      %p279 = scmp.eq.s32.totalorder %s24, 0
      %p280 = por %p278, %p279
      %p281 = scmp.ne.s32.totalorder %s270, %s273
      %p282 = scmp.eq.s32.totalorder %s29, 3
      %p283 = por %p281, %p282
      %p284 = scmp.ne.s32.totalorder %s273, %s274
      %p285 = scmp.eq.s32.totalorder %s29, 0
      %p286 = por %p284, %p285
      %p287 = scmp.ne.s32.totalorder %s273, %s274
      %p288 = scmp.eq.s32.totalorder %s30, 3
      %p289 = por %p287, %p288
      %p291 = scmp.ne.s32.totalorder %s274, %s290
      %p292 = scmp.eq.s32.totalorder %s30, 0
      %p293 = por %p291, %p292
      %s294 = ssub.s32 %s32, %s39
      %p295 = scmp.eq.s32.totalorder %s294, 0
      %s297 = sadd.s32 %s296, 1
      %s298 = scalar_select %p295, %s296, %s297
      %p301 = pneg %p295
      %p302 = scmp.eq.s32.totalorder %s24, 3
      %p303 = por %p301, %p302
      %p304 = scmp.ne.s32.totalorder %s296, %s299
      %p305 = scmp.eq.s32.totalorder %s24, 0
      %p306 = por %p304, %p305
      %p307 = scmp.ne.s32.totalorder %s296, %s299
      %p308 = scmp.eq.s32.totalorder %s29, 3
      %p309 = por %p307, %p308
      %p310 = scmp.ne.s32.totalorder %s299, %s300
      %p311 = scmp.eq.s32.totalorder %s29, 0
      %p312 = por %p310, %p311
      %p313 = scmp.ne.s32.totalorder %s299, %s300
      %p314 = scmp.eq.s32.totalorder %s30, 3
      %p315 = por %p313, %p314
      %p317 = scmp.ne.s32.totalorder %s300, %s316
      %p318 = scmp.eq.s32.totalorder %s30, 0
      %p319 = por %p317, %p318
      %s320 = ssub.s32 %s32, %s39
      %p321 = scmp.eq.s32.totalorder %s320, 0
      %s323 = sadd.s32 %s322, 1
      %s324 = scalar_select %p321, %s322, %s323
      %p327 = pneg %p321
      %p328 = scmp.eq.s32.totalorder %s24, 3
      %p329 = por %p327, %p328
      %p330 = scmp.ne.s32.totalorder %s322, %s325
      %p331 = scmp.eq.s32.totalorder %s24, 0
      %p332 = por %p330, %p331
      %p333 = scmp.ne.s32.totalorder %s322, %s325
      %p334 = scmp.eq.s32.totalorder %s29, 3
      %p335 = por %p333, %p334
      %p336 = scmp.ne.s32.totalorder %s325, %s326
      %p337 = scmp.eq.s32.totalorder %s29, 0
      %p338 = por %p336, %p337
      %p339 = scmp.ne.s32.totalorder %s325, %s326
      %p340 = scmp.eq.s32.totalorder %s30, 3
      %p341 = por %p339, %p340
      %p343 = scmp.ne.s32.totalorder %s326, %s342
      %p344 = scmp.eq.s32.totalorder %s30, 0
      %p345 = por %p343, %p344
      %s346 = ssub.s32 %s32, %s39
      %p347 = scmp.eq.s32.totalorder %s346, 0
      %s349 = sadd.s32 %s348, 1
      %s350 = scalar_select %p347, %s348, %s349
      %p353 = pneg %p347
      %p354 = scmp.eq.s32.totalorder %s24, 3
      %p355 = por %p353, %p354
      %p356 = scmp.ne.s32.totalorder %s348, %s351
      %p357 = scmp.eq.s32.totalorder %s24, 0
      %p358 = por %p356, %p357
      %p359 = scmp.ne.s32.totalorder %s348, %s351
      %p360 = scmp.eq.s32.totalorder %s29, 3
      %p361 = por %p359, %p360
      %p362 = scmp.ne.s32.totalorder %s351, %s352
      %p363 = scmp.eq.s32.totalorder %s29, 0
      %p364 = por %p362, %p363
      %p365 = scmp.ne.s32.totalorder %s351, %s352
      %p366 = scmp.eq.s32.totalorder %s30, 3
      %p367 = por %p365, %p366
      %p369 = scmp.ne.s32.totalorder %s352, %s368
      %p370 = scmp.eq.s32.totalorder %s30, 0
      %p371 = por %p369, %p370
      %s372 = ssub.s32 %s32, %s39
      %p373 = scmp.eq.s32.totalorder %s372, 0
      %s375 = sadd.s32 %s374, 1
      %s376 = scalar_select %p373, %s374, %s375
      %p379 = pneg %p373
      %p380 = scmp.eq.s32.totalorder %s24, 3
      %p381 = por %p379, %p380
      %p382 = scmp.ne.s32.totalorder %s374, %s377
      %p383 = scmp.eq.s32.totalorder %s24, 0
      %p384 = por %p382, %p383
      %p385 = scmp.ne.s32.totalorder %s374, %s377
      %p386 = scmp.eq.s32.totalorder %s29, 3
      %p387 = por %p385, %p386
      %p388 = scmp.ne.s32.totalorder %s377, %s378
      %p389 = scmp.eq.s32.totalorder %s29, 0
      %p390 = por %p388, %p389
      %p391 = scmp.ne.s32.totalorder %s377, %s378
      %p392 = scmp.eq.s32.totalorder %s30, 3
      %p393 = por %p391, %p392
      %p395 = scmp.ne.s32.totalorder %s378, %s394
      %p396 = scmp.eq.s32.totalorder %s30, 0
      %p397 = por %p395, %p396
      %s398 = ssub.s32 %s32, %s39
      %p399 = scmp.eq.s32.totalorder %s398, 0
      %s401 = sadd.s32 %s400, 1
      %s402 = scalar_select %p399, %s400, %s401
      %p405 = pneg %p399
      %p406 = scmp.eq.s32.totalorder %s24, 3
      %p407 = por %p405, %p406
      %p408 = scmp.ne.s32.totalorder %s400, %s403
      %p409 = scmp.eq.s32.totalorder %s24, 0
      %p410 = por %p408, %p409
      %p411 = scmp.ne.s32.totalorder %s400, %s403
      %p412 = scmp.eq.s32.totalorder %s29, 3
      %p413 = por %p411, %p412
      %p414 = scmp.ne.s32.totalorder %s403, %s404
      %p415 = scmp.eq.s32.totalorder %s29, 0
      %p416 = por %p414, %p415
      %p417 = scmp.ne.s32.totalorder %s403, %s404
      %p418 = scmp.eq.s32.totalorder %s30, 3
      %p419 = por %p417, %p418
      %p421 = scmp.ne.s32.totalorder %s404, %s420
      %p422 = scmp.eq.s32.totalorder %s30, 0
      %p423 = por %p421, %p422
      %s424 = ssub.s32 %s31, %s43
      %p425 = scmp.eq.s32.totalorder %s424, 0
      %s427 = sadd.s32 %s426, 1
      %s428 = scalar_select %p425, %s426, %s427
      %p431 = pneg %p425
      %p432 = scmp.eq.s32.totalorder %s24, 3
      %p433 = por %p431, %p432
      %p434 = scmp.ne.s32.totalorder %s426, %s429
      %p435 = scmp.eq.s32.totalorder %s24, 0
      %p436 = por %p434, %p435
      %p437 = scmp.ne.s32.totalorder %s426, %s429
      %p438 = scmp.eq.s32.totalorder %s29, 3
      %p439 = por %p437, %p438
      %p440 = scmp.ne.s32.totalorder %s429, %s430
      %p441 = scmp.eq.s32.totalorder %s29, 0
      %p442 = por %p440, %p441
      %p443 = scmp.ne.s32.totalorder %s429, %s430
      %p444 = scmp.eq.s32.totalorder %s30, 3
      %p445 = por %p443, %p444
      %p447 = scmp.ne.s32.totalorder %s430, %s446
      %p448 = scmp.eq.s32.totalorder %s30, 0
      %p449 = por %p447, %p448
      %p450 = scmp.le.s32.totalorder 1, %s24
      %p451 = scmp.lt.s32.totalorder %s24, 5
      %p452 = pnand %p450, %p451
      %p453 = pneg %p452
      // Predicated region
      $region9: #{_lambda_.8} parent=5 // pred_check
        _
      $region10: #{_lambda_.8} parent=5 // pred_check_branch
        %455 = sbr.rel (%p452) target = $region12
      $region11: #{_lambda_.8} parent=5 // pred_region
        %s456 = ssub.s32 %s24, 1
        // Predicated region
        $region13: #{_lambda_.8} parent=11 // pred_check
          %p457 = pneg %p83
        $region14: #{_lambda_.8} parent=11 // pred_check_branch
          %459 = sbr.rel (%p457) target = $region16
        $region15: #{_lambda_.8} parent=11 // pred_region
          _
        $region16: #{_lambda_.8} parent=11 // pred_fallthru
          _
        // Predicated region
        $region17: #{_lambda_.8} parent=11 // pred_check
          %p460 = pneg %p104
        $region18: #{_lambda_.8} parent=11 // pred_check_branch
          %462 = sbr.rel (%p460) target = $region20
        $region19: #{_lambda_.8} parent=11 // pred_region
          _
        $region20: #{_lambda_.8} parent=11 // pred_fallthru
          _
      $region12: #{_lambda_.8} parent=5 // pred_fallthru
        _
      %p463 = scmp.lt.s32.totalorder %s24, 4
      // Predicated region
      $region21: #{_lambda_.8} parent=5 // pred_check
        %p464 = pneg %p463
      $region22: #{_lambda_.8} parent=5 // pred_check_branch
        %466 = sbr.rel (%p464) target = $region24
      $region23: #{_lambda_.8} parent=5 // pred_region
        // Predicated region
        $region25: #{_lambda_.8} parent=23 // pred_check
          %p467 = pneg %p56
        $region26: #{_lambda_.8} parent=23 // pred_check_branch
          %469 = sbr.rel (%p467) target = $region28
        $region27: #{_lambda_.8} parent=23 // pred_region
          %p470 = scmp.lt.s32.totalorder %s31, 1
          %s471 = scalar_select %p470, %s31, 1
          %s472 = smul.addr %s471, 2
          %s473 = scalar_lea.vmem %s0, %s472
        $region28: #{_lambda_.8} parent=23 // pred_fallthru
          _
        // Predicated region
        $region29: #{_lambda_.8} parent=23 // pred_check
          %p474 = pneg %p124
        $region30: #{_lambda_.8} parent=23 // pred_check_branch
          %476 = sbr.rel (%p474) target = $region32
        $region31: #{_lambda_.8} parent=23 // pred_region
          %p477 = scmp.lt.s32.totalorder %s32, 1
          %s478 = scalar_select %p477, %s32, 1
          %s479 = scalar_lea.vmem %s3, %s478
        $region32: #{_lambda_.8} parent=23 // pred_fallthru
          _
        // Predicated region
        $region33: #{_lambda_.8} parent=23 // pred_check
          %p480 = pneg %p150
        $region34: #{_lambda_.8} parent=23 // pred_check_branch
          %482 = sbr.rel (%p480) target = $region36
        $region35: #{_lambda_.8} parent=23 // pred_region
          %p483 = scmp.lt.s32.totalorder %s32, 1
          %s484 = scalar_select %p483, %s32, 1
          %s485 = scalar_lea.vmem %s4, %s484
        $region36: #{_lambda_.8} parent=23 // pred_fallthru
          _
        // Predicated region
        $region37: #{_lambda_.8} parent=23 // pred_check
          %p486 = pneg %p176
        $region38: #{_lambda_.8} parent=23 // pred_check_branch
          %488 = sbr.rel (%p486) target = $region40
        $region39: #{_lambda_.8} parent=23 // pred_region
          %p489 = scmp.lt.s32.totalorder %s32, 1
          %s490 = scalar_select %p489, %s32, 1
          %s491 = smul.addr %s490, 48
          %s492 = smul.addr %s491, 4
          %s493 = scalar_lea.vmem %s5, %s492
        $region40: #{_lambda_.8} parent=23 // pred_fallthru
          _
        // Predicated region
        $region41: #{_lambda_.8} parent=23 // pred_check
          %p494 = pneg %p202
        $region42: #{_lambda_.8} parent=23 // pred_check_branch
          %496 = sbr.rel (%p494) target = $region44
        $region43: #{_lambda_.8} parent=23 // pred_region
          %p497 = scmp.lt.s32.totalorder %s32, 1
          %s498 = scalar_select %p497, %s32, 1
          %s499 = smul.addr %s498, 3
          %s500 = scalar_lea.vmem %s6, %s499
        $region44: #{_lambda_.8} parent=23 // pred_fallthru
          _
        // Predicated region
        $region45: #{_lambda_.8} parent=23 // pred_check
          %p501 = pneg %p228
        $region46: #{_lambda_.8} parent=23 // pred_check_branch
          %503 = sbr.rel (%p501) target = $region48
        $region47: #{_lambda_.8} parent=23 // pred_region
          %p504 = scmp.lt.s32.totalorder %s32, 1
          %s505 = scalar_select %p504, %s32, 1
          %s506 = smul.addr %s505, 16
          %s507 = smul.addr %s506, 4
          %s508 = scalar_lea.vmem %s7, %s507
        $region48: #{_lambda_.8} parent=23 // pred_fallthru
          _
        // Predicated region
        $region49: #{_lambda_.8} parent=23 // pred_check
          %p509 = pneg %p254
        $region50: #{_lambda_.8} parent=23 // pred_check_branch
          %511 = sbr.rel (%p509) target = $region52
        $region51: #{_lambda_.8} parent=23 // pred_region
          %p512 = scmp.lt.s32.totalorder %s32, 1
          %s513 = scalar_select %p512, %s32, 1
          %s514 = scalar_lea.vmem %s8, %s513
        $region52: #{_lambda_.8} parent=23 // pred_fallthru
          _
        // Predicated region
        $region53: #{_lambda_.8} parent=23 // pred_check
          %p515 = pneg %p280
        $region54: #{_lambda_.8} parent=23 // pred_check_branch
          %517 = sbr.rel (%p515) target = $region56
        $region55: #{_lambda_.8} parent=23 // pred_region
          %p518 = scmp.lt.s32.totalorder %s32, 1
          %s519 = scalar_select %p518, %s32, 1
          %s520 = scalar_lea.vmem %s9, %s519
        $region56: #{_lambda_.8} parent=23 // pred_fallthru
          _
        // Predicated region
        $region57: #{_lambda_.8} parent=23 // pred_check
          %p521 = pneg %p306
        $region58: #{_lambda_.8} parent=23 // pred_check_branch
          %523 = sbr.rel (%p521) target = $region60
        $region59: #{_lambda_.8} parent=23 // pred_region
          %p524 = scmp.lt.s32.totalorder %s32, 1
          %s525 = scalar_select %p524, %s32, 1
          %s526 = scalar_lea.vmem %s10, %s525
        $region60: #{_lambda_.8} parent=23 // pred_fallthru
          _
        // Predicated region
        $region61: #{_lambda_.8} parent=23 // pred_check
          %p527 = pneg %p332
        $region62: #{_lambda_.8} parent=23 // pred_check_branch
          %529 = sbr.rel (%p527) target = $region64
        $region63: #{_lambda_.8} parent=23 // pred_region
          %p530 = scmp.lt.s32.totalorder %s32, 1
          %s531 = scalar_select %p530, %s32, 1
          %s532 = smul.addr %s531, 64
          %s533 = smul.addr %s532, 4
          %s534 = scalar_lea.vmem %s11, %s533
        $region64: #{_lambda_.8} parent=23 // pred_fallthru
          _
        // Predicated region
        $region65: #{_lambda_.8} parent=23 // pred_check
          %p535 = pneg %p358
        $region66: #{_lambda_.8} parent=23 // pred_check_branch
          %537 = sbr.rel (%p535) target = $region68
        $region67: #{_lambda_.8} parent=23 // pred_region
          %p538 = scmp.lt.s32.totalorder %s32, 1
          %s539 = scalar_select %p538, %s32, 1
          %s540 = smul.addr %s539, 4
          %s541 = scalar_lea.vmem %s12, %s540
        $region68: #{_lambda_.8} parent=23 // pred_fallthru
          _
        // Predicated region
        $region69: #{_lambda_.8} parent=23 // pred_check
          %p542 = pneg %p384
        $region70: #{_lambda_.8} parent=23 // pred_check_branch
          %544 = sbr.rel (%p542) target = $region72
        $region71: #{_lambda_.8} parent=23 // pred_region
          %p545 = scmp.lt.s32.totalorder %s32, 1
          %s546 = scalar_select %p545, %s32, 1
          %s547 = smul.addr %s546, 64
          %s548 = smul.addr %s547, 4
          %s549 = scalar_lea.vmem %s13, %s548
        $region72: #{_lambda_.8} parent=23 // pred_fallthru
          _
        // Predicated region
        $region73: #{_lambda_.8} parent=23 // pred_check
          %p550 = pneg %p410
        $region74: #{_lambda_.8} parent=23 // pred_check_branch
          %552 = sbr.rel (%p550) target = $region76
        $region75: #{_lambda_.8} parent=23 // pred_region
          %s553 = sand.u32 %s400, 1
          %s554 = scalar_lea.sflag [#allocation3], %s553
          %s555 = sand.u32 %s400, 1
          %s556 = scalar_lea.vmem [#allocation2], %s555
          %s558 = ssub.s32 16, 16
          %559 = vsyncadd %s554, %s558
          %s560 = smul.addr %s32, 16
          %s561 = scalar_lea.hbm %s14, %s560
          %s563 = sshll.u32 %s556, 4
          %s564 = int_to_ptr.vmem [resolvable:$true] %s563
          %566 = dma.hbm_to_vmem [thread:$0]  %s561, 16, %s564, %s554
        $region76: #{_lambda_.8} parent=23 // pred_fallthru
          _
      $region24: #{_lambda_.8} parent=5 // pred_fallthru
        _
      %p567 = scmp.le.s32.totalorder 1, %s24
      %p568 = scmp.lt.s32.totalorder %s24, 5
      %p569 = pnand %p567, %p568
      %p570 = pneg %p569
      // Predicated region
      $region77: #{_lambda_.8} parent=5 // pred_check
        _
      $region78: #{_lambda_.8} parent=5 // pred_check_branch
        %572 = sbr.rel (%p569) target = $region80
      $region79: #{_lambda_.8} parent=5 // pred_region
        %s573 = ssub.s32 %s24, 1
        %s574 = sand.u32 %s403, 1
        %s575 = scalar_lea.sflag [#allocation3], %s574
        %s576 = sand.u32 %s403, 1
        %s577 = scalar_lea.vmem [#allocation2], %s576
        // Predicated region
        $region81: #{_lambda_.8} parent=79 // pred_check
          %p578 = pneg %p416
        $region82: #{_lambda_.8} parent=79 // pred_check_branch
          %580 = sbr.rel (%p578) target = $region84
        $region83: #{_lambda_.8} parent=79 // pred_region
          %581 = dma.done %s575, 16
        $region84: #{_lambda_.8} parent=79 // pred_fallthru
          _
        %p582 = scmp.lt.s32.totalorder %s33, 1
        %s583 = scalar_select %p582, %s33, 1
        %s584 = smul.addr %s583, 2
        %s585 = scalar_lea.vmem %s0, %s584
        %p586 = pneg %p62
        %p587 = pneg %p59
        %p588 = pneg %p83
        %p589 = pneg %p80
        %p590 = pneg %p104
        %p591 = pneg %p101
        %p592 = scmp.lt.s32.totalorder %s34, 1
        %s593 = scalar_select %p592, %s34, 1
        %s594 = scalar_lea.vmem %s3, %s593
        %p595 = pneg %p130
        %p596 = pneg %p127
        %p597 = scmp.lt.s32.totalorder %s34, 1
        %s598 = scalar_select %p597, %s34, 1
        %s599 = scalar_lea.vmem %s4, %s598
        %p600 = pneg %p156
        %p601 = pneg %p153
        %p602 = scmp.lt.s32.totalorder %s34, 1
        %s603 = scalar_select %p602, %s34, 1
        %s604 = smul.addr %s603, 48
        %s605 = smul.addr %s604, 4
        %s606 = scalar_lea.vmem %s5, %s605
        %p607 = pneg %p182
        %p608 = pneg %p179
        %p609 = scmp.lt.s32.totalorder %s34, 1
        %s610 = scalar_select %p609, %s34, 1
        %s611 = smul.addr %s610, 3
        %s612 = scalar_lea.vmem %s6, %s611
        %p613 = pneg %p208
        %p614 = pneg %p205
        %p615 = scmp.lt.s32.totalorder %s34, 1
        %s616 = scalar_select %p615, %s34, 1
        %s617 = smul.addr %s616, 16
        %s618 = smul.addr %s617, 4
        %s619 = scalar_lea.vmem %s7, %s618
        %p620 = pneg %p234
        %p621 = pneg %p231
        %p622 = scmp.lt.s32.totalorder %s34, 1
        %s623 = scalar_select %p622, %s34, 1
        %s624 = scalar_lea.vmem %s8, %s623
        %p625 = pneg %p260
        %p626 = pneg %p257
        %p627 = scmp.lt.s32.totalorder %s34, 1
        %s628 = scalar_select %p627, %s34, 1
        %s629 = scalar_lea.vmem %s9, %s628
        %p630 = pneg %p286
        %p631 = pneg %p283
        %p632 = scmp.lt.s32.totalorder %s34, 1
        %s633 = scalar_select %p632, %s34, 1
        %s634 = scalar_lea.vmem %s10, %s633
        %p635 = pneg %p312
        %p636 = pneg %p309
        %p637 = scmp.lt.s32.totalorder %s34, 1
        %s638 = scalar_select %p637, %s34, 1
        %s639 = smul.addr %s638, 64
        %s640 = smul.addr %s639, 4
        %s641 = scalar_lea.vmem %s11, %s640
        %p642 = pneg %p338
        %p643 = pneg %p335
        %p644 = scmp.lt.s32.totalorder %s34, 1
        %s645 = scalar_select %p644, %s34, 1
        %s646 = smul.addr %s645, 4
        %s647 = scalar_lea.vmem %s12, %s646
        %p648 = pneg %p364
        %p649 = pneg %p361
        %p650 = scmp.lt.s32.totalorder %s34, 1
        %s651 = scalar_select %p650, %s34, 1
        %s652 = smul.addr %s651, 64
        %s653 = smul.addr %s652, 4
        %s654 = scalar_lea.vmem %s13, %s653
        %p655 = pneg %p390
        %p656 = pneg %p387
        %s657 = sand.u32 %s403, 1
        %s658 = scalar_lea.sflag [#allocation3], %s657
        %s659 = sand.u32 %s403, 1
        %s660 = scalar_lea.vmem [#allocation2], %s659
        %p661 = pneg %p416
        %p662 = pneg %p413
        %p663 = pneg %p442
        %p664 = pneg %p439
        %p665 = scmp.lt.s32.totalorder %s33, 1
        %s666 = scalar_select %p665, %s33, 1
        %s667 = scalar_lea.vmem %s15, %s666
        %p668 = scmp.lt.s32.totalorder %s33, 1
        %s669 = scalar_select %p668, %s33, 1
        %s670 = smul.addr %s669, 2
        %s671 = scalar_lea.vmem %s0, %s670
        %p672 = scmp.lt.s32.totalorder %s34, 1
        %s673 = scalar_select %p672, %s34, 1
        %s674 = scalar_lea.vmem %s3, %s673
        %p675 = scmp.lt.s32.totalorder %s34, 1
        %s676 = scalar_select %p675, %s34, 1
        %s677 = scalar_lea.vmem %s4, %s676
        %p678 = scmp.lt.s32.totalorder %s34, 1
        %s679 = scalar_select %p678, %s34, 1
        %s680 = smul.addr %s679, 48
        %s681 = smul.addr %s680, 4
        %s682 = scalar_lea.vmem %s5, %s681
        %p683 = scmp.lt.s32.totalorder %s34, 1
        %s684 = scalar_select %p683, %s34, 1
        %s685 = smul.addr %s684, 3
        %s686 = scalar_lea.vmem %s6, %s685
        %p687 = scmp.lt.s32.totalorder %s34, 1
        %s688 = scalar_select %p687, %s34, 1
        %s689 = smul.addr %s688, 16
        %s690 = smul.addr %s689, 4
        %s691 = scalar_lea.vmem %s7, %s690
        %p692 = scmp.lt.s32.totalorder %s34, 1
        %s693 = scalar_select %p692, %s34, 1
        %s694 = scalar_lea.vmem %s8, %s693
        %p695 = scmp.lt.s32.totalorder %s34, 1
        %s696 = scalar_select %p695, %s34, 1
        %s697 = scalar_lea.vmem %s9, %s696
        %p698 = scmp.lt.s32.totalorder %s34, 1
        %s699 = scalar_select %p698, %s34, 1
        %s700 = scalar_lea.vmem %s10, %s699
        %p701 = scmp.lt.s32.totalorder %s34, 1
        %s702 = scalar_select %p701, %s34, 1
        %s703 = smul.addr %s702, 64
        %s704 = smul.addr %s703, 4
        %s705 = scalar_lea.vmem %s11, %s704
        %p706 = scmp.lt.s32.totalorder %s34, 1
        %s707 = scalar_select %p706, %s34, 1
        %s708 = smul.addr %s707, 4
        %s709 = scalar_lea.vmem %s12, %s708
        %p710 = scmp.lt.s32.totalorder %s34, 1
        %s711 = scalar_select %p710, %s34, 1
        %s712 = smul.addr %s711, 64
        %s713 = smul.addr %s712, 4
        %s714 = scalar_lea.vmem %s13, %s713
        %p715 = scmp.lt.s32.totalorder %s33, 1
        %s716 = scalar_select %p715, %s33, 1
        %s717 = scalar_lea.vmem %s15, %s716
        %p719 = scmp.eq.s32.totalorder %s34, 0
        // Predicated region
        $region85: #{_lambda_.8} parent=79 // pred_check
          %p720 = pneg %p719
        $region86: #{_lambda_.8} parent=79 // pred_check_branch
          %722 = sbr.rel (%p720) target = $region88
        $region87: #{_lambda_.8} parent=79 // pred_region
          %v723 = vld [vmem:[%s671] sm:$0x3]
          %v725 = vlaneseq
          %v726 = vshrl.u32 %v725, 7
          %v727 = vsub.s32 0, %v726
          %v728 = vrot.slane %v723, %v727
          %v729 = vlaneseq
          %v730 = vshrl.u32 %v729, 7
          %v731 = vsub.s32 1, %v730
          %v732 = vrot.slane %v723, %v731
          %v735 = vpack.c.bf16 %v728, %v728
          %v736 = vpack.c.bf16 %v732, %v732
          %v737 = vld [vmem:[%s1] sm:$0xf]
          %v738 = vld [vmem:[%s1 + $0x4] sm:$0xf]
          %v739 = vld [vmem:[%s1 + $0x8] sm:$0xf]
          %v740 = vld [vmem:[%s1 + $0xc] sm:$0xf]
          %v741 = vld [vmem:[%s1 + $0x10] sm:$0xf]
          %v742 = vld [vmem:[%s1 + $0x14] sm:$0xf]
          %v743 = vld [vmem:[%s1 + $0x18] sm:$0xf]
          %v744 = vld [vmem:[%s1 + $0x1c] sm:$0xf]
          %v745 = vld [vmem:[%s1 + $0x20] sm:$0xf]
          %v746 = vld [vmem:[%s1 + $0x24] sm:$0xf]
          %v747 = vld [vmem:[%s1 + $0x28] sm:$0xf]
          %v748 = vld [vmem:[%s1 + $0x2c] sm:$0xf]
          %v749 = vld [vmem:[%s1 + $0x30] sm:$0xf]
          %v750 = vld [vmem:[%s1 + $0x34] sm:$0xf]
          %v751 = vld [vmem:[%s1 + $0x38] sm:$0xf]
          %v752 = vld [vmem:[%s1 + $0x3c] sm:$0xf]
          %v753 = vld [vmem:[%s1 + $0x40] sm:$0xf]
          %v754 = vld [vmem:[%s1 + $0x44] sm:$0xf]
          %v755 = vld [vmem:[%s1 + $0x48] sm:$0xf]
          %v756 = vld [vmem:[%s1 + $0x4c] sm:$0xf]
          %v757 = vld [vmem:[%s1 + $0x50] sm:$0xf]
          %v758 = vld [vmem:[%s1 + $0x54] sm:$0xf]
          %v759 = vld [vmem:[%s1 + $0x58] sm:$0xf]
          %v760 = vld [vmem:[%s1 + $0x5c] sm:$0xf]
          %v761 = vld [vmem:[%s1 + $0x60] sm:$0xf]
          %v762 = vld [vmem:[%s1 + $0x64] sm:$0xf]
          %v763 = vld [vmem:[%s1 + $0x68] sm:$0xf]
          %v764 = vld [vmem:[%s1 + $0x6c] sm:$0xf]
          %v765 = vld [vmem:[%s1 + $0x70] sm:$0xf]
          %v766 = vld [vmem:[%s1 + $0x74] sm:$0xf]
          %v767 = vld [vmem:[%s1 + $0x78] sm:$0xf]
          %v768 = vld [vmem:[%s1 + $0x7c] sm:$0xf]
          %v769 = vld [vmem:[%s2] sm:$0x1]
          %v802 = vunpack.c.l.b16 %v737
          %v803 = vunpack.c.l.b16 %v738
          %v804 = vunpack.c.l.b16 %v739
          %v805 = vunpack.c.l.b16 %v740
          %v806 = vunpack.c.l.b16 %v741
          %v807 = vunpack.c.l.b16 %v742
          %v808 = vunpack.c.l.b16 %v743
          %v809 = vunpack.c.l.b16 %v744
          %v810 = vunpack.c.l.b16 %v745
          %v811 = vunpack.c.l.b16 %v746
          %v812 = vunpack.c.l.b16 %v747
          %v813 = vunpack.c.l.b16 %v748
          %v814 = vunpack.c.l.b16 %v749
          %v815 = vunpack.c.l.b16 %v750
          %v816 = vunpack.c.l.b16 %v751
          %v817 = vunpack.c.l.b16 %v752
          %v818 = vunpack.c.l.b16 %v753
          %v819 = vunpack.c.l.b16 %v754
          %v820 = vunpack.c.l.b16 %v755
          %v821 = vunpack.c.l.b16 %v756
          %v822 = vunpack.c.l.b16 %v757
          %v823 = vunpack.c.l.b16 %v758
          %v824 = vunpack.c.l.b16 %v759
          %v825 = vunpack.c.l.b16 %v760
          %v826 = vunpack.c.l.b16 %v761
          %v827 = vunpack.c.l.b16 %v762
          %v828 = vunpack.c.l.b16 %v763
          %v829 = vunpack.c.l.b16 %v764
          %v830 = vunpack.c.l.b16 %v765
          %v831 = vunpack.c.l.b16 %v766
          %v832 = vunpack.c.l.b16 %v767
          %v833 = vunpack.c.l.b16 %v768
          %v834 = vpack.c.b16 %v803, %v802
          %v835 = vpack.c.b16 %v805, %v804
          %v836 = vpack.c.b16 %v807, %v806
          %v837 = vpack.c.b16 %v809, %v808
          %v838 = vpack.c.b16 %v811, %v810
          %v839 = vpack.c.b16 %v813, %v812
          %v840 = vpack.c.b16 %v815, %v814
          %v841 = vpack.c.b16 %v817, %v816
          %v842 = vpack.c.b16 %v819, %v818
          %v843 = vpack.c.b16 %v821, %v820
          %v844 = vpack.c.b16 %v823, %v822
          %v845 = vpack.c.b16 %v825, %v824
          %v846 = vpack.c.b16 %v827, %v826
          %v847 = vpack.c.b16 %v829, %v828
          %v848 = vpack.c.b16 %v831, %v830
          %v849 = vpack.c.b16 %v833, %v832
          %866 = vmatprep.subr.bf16.mxu0 0
          %867 = vmatpush1.bf16.msra.mxu0 %v841
          %868 = vmatprep.subr.bf16.mxu0 0
          %869 = vmatpush1.bf16.msra.mxu0 %v840
          %870 = vmatprep.subr.bf16.mxu0 0
          %871 = vmatpush1.bf16.msra.mxu0 %v839
          %872 = vmatprep.subr.bf16.mxu0 0
          %873 = vmatpush1.bf16.msra.mxu0 %v838
          %874 = vmatprep.subr.bf16.mxu0 0
          %875 = vmatpush1.bf16.msra.mxu0 %v837
          %876 = vmatprep.subr.bf16.mxu0 0
          %877 = vmatpush1.bf16.msra.mxu0 %v836
          %878 = vmatprep.subr.bf16.mxu0 0
          %879 = vmatpush1.bf16.msra.mxu0 %v835
          %880 = vmatprep.subr.bf16.mxu0 0
          %881 = vmatpush1.bf16.msra.mxu0 %v834
          %882 = vmatprep.subr.bf16.mxu0 0
          %883 = vmatpush2.bf16.msra.mxu0 %v849
          %884 = vmatprep.subr.bf16.mxu0 0
          %885 = vmatpush2.bf16.msra.mxu0 %v848
          %886 = vmatprep.subr.bf16.mxu0 0
          %887 = vmatpush2.bf16.msra.mxu0 %v847
          %888 = vmatprep.subr.bf16.mxu0 0
          %889 = vmatpush2.bf16.msra.mxu0 %v846
          %890 = vmatprep.subr.bf16.mxu0 0
          %891 = vmatpush2.bf16.msra.mxu0 %v845
          %892 = vmatprep.subr.bf16.mxu0 0
          %893 = vmatpush2.bf16.msra.mxu0 %v844
          %894 = vmatprep.subr.bf16.mxu0 0
          %895 = vmatpush2.bf16.msra.mxu0 %v843
          %896 = vmatprep.subr.bf16.mxu0 0
          %897 = vmatpush2.bf16.msra.mxu0 %v842
          %898 = vmatprep.mubr.bf16.mxu0 %v736
          %899 = vmatmul.mubr.bf16.gmra.mxu0 %v735
          %v900 = vpop.f32.mrf.mxu0
          %v901 = vadd.f32 %v769, %v900
          %v902 = vpop.f32.mrf.mxu0
          %v903 = vpop.f32.mrf.mxu0
          %v904 = vpop.f32.mrf.mxu0
          %905 = vdwg.mxu0
          %906 = vst [vmem:[%s717] sm:$0x1] %v901
        $region88: #{_lambda_.8} parent=79 // pred_fallthru
          _
        %v907 = vld [vmem:[%s717] sm:$0x1]
        %v908 = vld [vmem:[%s674] sm:$0x1]
        %v909 = vld [vmem:[%s677] sm:$0x1]
        %vm910 = vcmask 1040384
        %v911 = vsel %vm910, %v907, 0.0
        %912 = vadd.xlane.f32.xlu0 %v911
        %v913 = vpop.xlane.xlu0 %912
        %v914 = vrcp.pop 128.0
        %v915 = vmul.f32 %v913, %v914
        %v916 = vsub.f32 %v907, %v915
        %v917 = vmul.f32 %v916, %v916
        %v918 = vsel %vm910, %v917, 0.0
        %919 = vadd.xlane.f32.xlu0 %v918
        %v920 = vpop.xlane.xlu0 %919
        %v921 = vmul.f32 %v920, %v914
        %v922 = vadd.f32 %v921, 1e-05
        %v923 = vrsqrt.pop %v922
        %v924 = vmul.f32 %v916, %v923
        %v925 = vmul.f32 %v924, %v908
        %v926 = vadd.f32 %v925, %v909
        %v927 = vpack.c.bf16 %v926, %v926
        %v928 = vld [vmem:[%s682] sm:$0xff]
        %v929 = vld [vmem:[%s682 + $0x8] sm:$0xf]
        %v930 = vld [vmem:[%s682 + $0xc] sm:$0xff]
        %v931 = vld [vmem:[%s682 + $0x14] sm:$0xf]
        %v932 = vld [vmem:[%s682 + $0x18] sm:$0xff]
        %v933 = vld [vmem:[%s682 + $0x20] sm:$0xf]
        %v934 = vld [vmem:[%s682 + $0x24] sm:$0xff]
        %v935 = vld [vmem:[%s682 + $0x2c] sm:$0xf]
        %v936 = vld [vmem:[%s682 + $0x30] sm:$0xff]
        %v937 = vld [vmem:[%s682 + $0x38] sm:$0xf]
        %v938 = vld [vmem:[%s682 + $0x3c] sm:$0xff]
        %v939 = vld [vmem:[%s682 + $0x44] sm:$0xf]
        %v940 = vld [vmem:[%s682 + $0x48] sm:$0xff]
        %v941 = vld [vmem:[%s682 + $0x50] sm:$0xf]
        %v942 = vld [vmem:[%s682 + $0x54] sm:$0xff]
        %v943 = vld [vmem:[%s682 + $0x5c] sm:$0xf]
        %v944 = vld [vmem:[%s682 + $0x60] sm:$0xff]
        %v945 = vld [vmem:[%s682 + $0x68] sm:$0xf]
        %v946 = vld [vmem:[%s682 + $0x6c] sm:$0xff]
        %v947 = vld [vmem:[%s682 + $0x74] sm:$0xf]
        %v948 = vld [vmem:[%s682 + $0x78] sm:$0xff]
        %v949 = vld [vmem:[%s682 + $0x80] sm:$0xf]
        %v950 = vld [vmem:[%s682 + $0x84] sm:$0xff]
        %v951 = vld [vmem:[%s682 + $0x8c] sm:$0xf]
        %v952 = vld [vmem:[%s682 + $0x90] sm:$0xff]
        %v953 = vld [vmem:[%s682 + $0x98] sm:$0xf]
        %v954 = vld [vmem:[%s682 + $0x9c] sm:$0xff]
        %v955 = vld [vmem:[%s682 + $0xa4] sm:$0xf]
        %v956 = vld [vmem:[%s682 + $0xa8] sm:$0xff]
        %v957 = vld [vmem:[%s682 + $0xb0] sm:$0xf]
        %v958 = vld [vmem:[%s682 + $0xb4] sm:$0xff]
        %v959 = vld [vmem:[%s682 + $0xbc] sm:$0xf]
        %v960 = vld [vmem:[%s686] sm:$0x7]
        %v993 = vunpack.c.l.b16 %v928
        %v994 = vunpack.c.h.b16 %v928
        %v995 = vunpack.c.l.b16 %v929
        %v996 = vunpack.c.l.b16 %v930
        %v997 = vunpack.c.h.b16 %v930
        %v998 = vunpack.c.l.b16 %v931
        %v999 = vunpack.c.l.b16 %v932
        %v1000 = vunpack.c.h.b16 %v932
        %v1001 = vunpack.c.l.b16 %v933
        %v1002 = vunpack.c.l.b16 %v934
        %v1003 = vunpack.c.h.b16 %v934
        %v1004 = vunpack.c.l.b16 %v935
        %v1005 = vunpack.c.l.b16 %v936
        %v1006 = vunpack.c.h.b16 %v936
        %v1007 = vunpack.c.l.b16 %v937
        %v1008 = vunpack.c.l.b16 %v938
        %v1009 = vunpack.c.h.b16 %v938
        %v1010 = vunpack.c.l.b16 %v939
        %v1011 = vunpack.c.l.b16 %v940
        %v1012 = vunpack.c.h.b16 %v940
        %v1013 = vunpack.c.l.b16 %v941
        %v1014 = vunpack.c.l.b16 %v942
        %v1015 = vunpack.c.h.b16 %v942
        %v1016 = vunpack.c.l.b16 %v943
        %v1017 = vunpack.c.l.b16 %v944
        %v1018 = vunpack.c.h.b16 %v944
        %v1019 = vunpack.c.l.b16 %v945
        %v1020 = vunpack.c.l.b16 %v946
        %v1021 = vunpack.c.h.b16 %v946
        %v1022 = vunpack.c.l.b16 %v947
        %v1023 = vunpack.c.l.b16 %v948
        %v1024 = vunpack.c.h.b16 %v948
        %v1025 = vunpack.c.l.b16 %v949
        %v1026 = vunpack.c.l.b16 %v950
        %v1027 = vunpack.c.h.b16 %v950
        %v1028 = vunpack.c.l.b16 %v951
        %v1029 = vunpack.c.l.b16 %v952
        %v1030 = vunpack.c.h.b16 %v952
        %v1031 = vunpack.c.l.b16 %v953
        %v1032 = vunpack.c.l.b16 %v954
        %v1033 = vunpack.c.h.b16 %v954
        %v1034 = vunpack.c.l.b16 %v955
        %v1035 = vunpack.c.l.b16 %v956
        %v1036 = vunpack.c.h.b16 %v956
        %v1037 = vunpack.c.l.b16 %v957
        %v1038 = vunpack.c.l.b16 %v958
        %v1039 = vunpack.c.h.b16 %v958
        %v1040 = vunpack.c.l.b16 %v959
        %v1041 = vpack.c.b16 %v996, %v993
        %v1042 = vpack.c.b16 %v997, %v994
        %v1043 = vpack.c.b16 %v998, %v995
        %v1044 = vpack.c.b16 %v1002, %v999
        %v1045 = vpack.c.b16 %v1003, %v1000
        %v1046 = vpack.c.b16 %v1004, %v1001
        %v1047 = vpack.c.b16 %v1008, %v1005
        %v1048 = vpack.c.b16 %v1009, %v1006
        %v1049 = vpack.c.b16 %v1010, %v1007
        %v1050 = vpack.c.b16 %v1014, %v1011
        %v1051 = vpack.c.b16 %v1015, %v1012
        %v1052 = vpack.c.b16 %v1016, %v1013
        %v1053 = vpack.c.b16 %v1020, %v1017
        %v1054 = vpack.c.b16 %v1021, %v1018
        %v1055 = vpack.c.b16 %v1022, %v1019
        %v1056 = vpack.c.b16 %v1026, %v1023
        %v1057 = vpack.c.b16 %v1027, %v1024
        %v1058 = vpack.c.b16 %v1028, %v1025
        %v1059 = vpack.c.b16 %v1032, %v1029
        %v1060 = vpack.c.b16 %v1033, %v1030
        %v1061 = vpack.c.b16 %v1034, %v1031
        %v1062 = vpack.c.b16 %v1038, %v1035
        %v1063 = vpack.c.b16 %v1039, %v1036
        %v1064 = vpack.c.b16 %v1040, %v1037
        %v1090 = vlaneseq
        %v1091 = vshrl.u32 %v1090, 7
        %v1092 = vsub.s32 0, %v1091
        %v1093 = vrot.slane %v960, %v1092
        %v1094 = vlaneseq
        %v1095 = vshrl.u32 %v1094, 7
        %v1096 = vsub.s32 1, %v1095
        %v1097 = vrot.slane %v960, %v1096
        %v1098 = vlaneseq
        %v1099 = vshrl.u32 %v1098, 7
        %v1100 = vsub.s32 2, %v1099
        %v1101 = vrot.slane %v960, %v1100
        %1105 = vmatprep.subr.bf16.mxu0 %v1063
        %1106 = vmatpush1.bf16.msra.mxu0 %v1062
        %1107 = vmatprep.subr.bf16.mxu0 %v1060
        %1108 = vmatpush1.bf16.msra.mxu0 %v1059
        %1109 = vmatprep.subr.bf16.mxu0 %v1057
        %1110 = vmatpush1.bf16.msra.mxu0 %v1056
        %1111 = vmatprep.subr.bf16.mxu0 %v1054
        %1112 = vmatpush1.bf16.msra.mxu0 %v1053
        %1113 = vmatprep.subr.bf16.mxu0 %v1051
        %1114 = vmatpush1.bf16.msra.mxu0 %v1050
        %1115 = vmatprep.subr.bf16.mxu0 %v1048
        %1116 = vmatpush1.bf16.msra.mxu0 %v1047
        %1117 = vmatprep.subr.bf16.mxu0 %v1045
        %1118 = vmatpush1.bf16.msra.mxu0 %v1044
        %1119 = vmatprep.subr.bf16.mxu0 %v1042
        %1120 = vmatpush1.bf16.msra.mxu0 %v1041
        %1121 = vmatprep.subr.bf16.mxu0 0
        %1122 = vmatpush2.bf16.msra.mxu0 0
        %1123 = vmatprep.subr.bf16.mxu0 0
        %1124 = vmatpush2.bf16.msra.mxu0 0
        %1125 = vmatprep.subr.bf16.mxu0 0
        %1126 = vmatpush2.bf16.msra.mxu0 0
        %1127 = vmatprep.subr.bf16.mxu0 0
        %1128 = vmatpush2.bf16.msra.mxu0 0
        %1129 = vmatprep.subr.bf16.mxu0 0
        %1130 = vmatpush2.bf16.msra.mxu0 0
        %1131 = vmatprep.subr.bf16.mxu0 0
        %1132 = vmatpush2.bf16.msra.mxu0 0
        %1133 = vmatprep.subr.bf16.mxu0 0
        %1134 = vmatpush2.bf16.msra.mxu0 0
        %1135 = vmatprep.subr.bf16.mxu0 0
        %1136 = vmatpush2.bf16.msra.mxu0 0
        %1137 = vmatprep.mubr.bf16.mxu0 0
        %1138 = vmatmul.mubr.bf16.gmra.mxu0 %v927
        %v1139 = vpop.f32.mrf.mxu0
        %v1140 = vadd.f32 %v1093, %v1139
        %v1141 = vpop.f32.mrf.mxu0
        %v1142 = vadd.f32 %v1097, %v1141
        %v1143 = vpop.f32.mrf.mxu0
        %v1144 = vpop.f32.mrf.mxu0
        %1145 = vdwg.mxu0
        %1146 = vmatprep.subr.bf16.mxu0 0
        %1147 = vmatpush1.bf16.msra.mxu0 %v1064
        %1148 = vmatprep.subr.bf16.mxu0 0
        %1149 = vmatpush1.bf16.msra.mxu0 %v1061
        %1150 = vmatprep.subr.bf16.mxu0 0
        %1151 = vmatpush1.bf16.msra.mxu0 %v1058
        %1152 = vmatprep.subr.bf16.mxu0 0
        %1153 = vmatpush1.bf16.msra.mxu0 %v1055
        %1154 = vmatprep.subr.bf16.mxu0 0
        %1155 = vmatpush1.bf16.msra.mxu0 %v1052
        %1156 = vmatprep.subr.bf16.mxu0 0
        %1157 = vmatpush1.bf16.msra.mxu0 %v1049
        %1158 = vmatprep.subr.bf16.mxu0 0
        %1159 = vmatpush1.bf16.msra.mxu0 %v1046
        %1160 = vmatprep.subr.bf16.mxu0 0
        %1161 = vmatpush1.bf16.msra.mxu0 %v1043
        %1162 = vmatprep.subr.bf16.mxu0 0
        %1163 = vmatpush2.bf16.msra.mxu0 0
        %1164 = vmatprep.subr.bf16.mxu0 0
        %1165 = vmatpush2.bf16.msra.mxu0 0
        %1166 = vmatprep.subr.bf16.mxu0 0
        %1167 = vmatpush2.bf16.msra.mxu0 0
        %1168 = vmatprep.subr.bf16.mxu0 0
        %1169 = vmatpush2.bf16.msra.mxu0 0
        %1170 = vmatprep.subr.bf16.mxu0 0
        %1171 = vmatpush2.bf16.msra.mxu0 0
        %1172 = vmatprep.subr.bf16.mxu0 0
        %1173 = vmatpush2.bf16.msra.mxu0 0
        %1174 = vmatprep.subr.bf16.mxu0 0
        %1175 = vmatpush2.bf16.msra.mxu0 0
        %1176 = vmatprep.subr.bf16.mxu0 0
        %1177 = vmatpush2.bf16.msra.mxu0 0
        %1178 = vmatprep.mubr.bf16.mxu0 0
        %1179 = vmatmul.mubr.bf16.gmra.mxu0 %v927
        %v1180 = vpop.f32.mrf.mxu0
        %v1181 = vadd.f32 %v1101, %v1180
        %v1182 = vpop.f32.mrf.mxu0
        %v1183 = vpop.f32.mrf.mxu0
        %v1184 = vpop.f32.mrf.mxu0
        %1185 = vdwg.mxu0
        %v1186 = vpack.c.bf16 %v1140, %v1140
        %v1187 = vpack.c.bf16 %v1142, %v1142
        %v1188 = vpack.c.bf16 %v1181, %v1181
        %v1189 = vunpack.c.l.bf16 %v1186
        %v1190 = vunpack.c.l.bf16 %v1187
        %v1191 = vmul.f32 %v1189, %v1190
        %vm1192 = vcmask 122880
        %v1193 = vsel %vm1192, %v1191, 0.0
        %1194 = vadd.xlane.f32.xlu0 %v1193
        %v1195 = vpop.xlane.xlu0 %1194
        %v1196 = vsub.f32 %v1195, %v1195
        %v1197 = vmul.f32 %v1196, 1.442695
        %v1198 = vpow.pop %v1197
        %v1199 = vadd.f32 %v1198, 0.0
        %v1200 = vrcp.pop %v1199
        %v1201 = vmul.f32 %v1198, %v1200
        %v1202 = vpack.c.bf16 %v1201, %v1201
        %vm1203 = vcmask 7168
        %v1205 = vsel %vm1203, %v1202, 0
        %v1207 = vsel 0, 4294967295, 65535
        %v1208 = vsel %vm910, %v1207, 0
        %v1210 = vand.u32 %v1188, %v1208
        %1212 = vmatprep.subr.bf16.mxu0 0
        %1213 = vmatpush1.bf16.msra.mxu0 0
        %1214 = vmatprep.subr.bf16.mxu0 0
        %1215 = vmatpush1.bf16.msra.mxu0 0
        %1216 = vmatprep.subr.bf16.mxu0 0
        %1217 = vmatpush1.bf16.msra.mxu0 0
        %1218 = vmatprep.subr.bf16.mxu0 0
        %1219 = vmatpush1.bf16.msra.mxu0 0
        %1220 = vmatprep.subr.bf16.mxu0 0
        %1221 = vmatpush1.bf16.msra.mxu0 0
        %1222 = vmatprep.subr.bf16.mxu0 0
        %1223 = vmatpush1.bf16.msra.mxu0 0
        %1224 = vmatprep.subr.bf16.mxu0 0
        %1225 = vmatpush1.bf16.msra.mxu0 0
        %1226 = vmatprep.subr.bf16.mxu0 0
        %1227 = vmatpush1.bf16.msra.mxu0 %v1210
        %1228 = vmatprep.subr.bf16.mxu0 0
        %1229 = vmatpush2.bf16.msra.mxu0 0
        %1230 = vmatprep.subr.bf16.mxu0 0
        %1231 = vmatpush2.bf16.msra.mxu0 0
        %1232 = vmatprep.subr.bf16.mxu0 0
        %1233 = vmatpush2.bf16.msra.mxu0 0
        %1234 = vmatprep.subr.bf16.mxu0 0
        %1235 = vmatpush2.bf16.msra.mxu0 0
        %1236 = vmatprep.subr.bf16.mxu0 0
        %1237 = vmatpush2.bf16.msra.mxu0 0
        %1238 = vmatprep.subr.bf16.mxu0 0
        %1239 = vmatpush2.bf16.msra.mxu0 0
        %1240 = vmatprep.subr.bf16.mxu0 0
        %1241 = vmatpush2.bf16.msra.mxu0 0
        %1242 = vmatprep.subr.bf16.mxu0 0
        %1243 = vmatpush2.bf16.msra.mxu0 0
        %1244 = vmatprep.mubr.bf16.mxu0 0
        %1245 = vmatmul.mubr.bf16.gmra.mxu0 %v1205
        %v1246 = vpop.f32.mrf.mxu0
        %v1247 = vadd.f32 0.0, %v1246
        %v1248 = vpop.f32.mrf.mxu0
        %v1249 = vpop.f32.mrf.mxu0
        %v1250 = vpop.f32.mrf.mxu0
        %1251 = vdwg.mxu0
        %1253 = vrot.lane.b32.xlu0 %v1191, 112
        %v1254 = vpop.permute.xlu0 %1253
        %v1256 = vsel %vm1192, %v1254, 0.0
        %1257 = vadd.xlane.f32.xlu0 %v1256
        %v1258 = vpop.xlane.xlu0 %1257
        %v1259 = vsub.f32 %v1258, %v1258
        %v1260 = vmul.f32 %v1259, 1.442695
        %v1261 = vpow.pop %v1260
        %v1262 = vadd.f32 %v1261, 0.0
        %v1263 = vrcp.pop %v1262
        %v1264 = vmul.f32 %v1261, %v1263
        %v1265 = vpack.c.bf16 %v1264, %v1264
        %1267 = vrot.lane.b32.xlu0 %v1188, 112
        %v1268 = vpop.permute.xlu0 %1267
        %v1270 = vsel %vm1203, %v1265, 0
        %v1273 = vand.u32 %v1268, %v1208
        %1275 = vmatprep.subr.bf16.mxu0 0
        %1276 = vmatpush1.bf16.msra.mxu0 0
        %1277 = vmatprep.subr.bf16.mxu0 0
        %1278 = vmatpush1.bf16.msra.mxu0 0
        %1279 = vmatprep.subr.bf16.mxu0 0
        %1280 = vmatpush1.bf16.msra.mxu0 0
        %1281 = vmatprep.subr.bf16.mxu0 0
        %1282 = vmatpush1.bf16.msra.mxu0 0
        %1283 = vmatprep.subr.bf16.mxu0 0
        %1284 = vmatpush1.bf16.msra.mxu0 0
        %1285 = vmatprep.subr.bf16.mxu0 0
        %1286 = vmatpush1.bf16.msra.mxu0 0
        %1287 = vmatprep.subr.bf16.mxu0 0
        %1288 = vmatpush1.bf16.msra.mxu0 0
        %1289 = vmatprep.subr.bf16.mxu0 0
        %1290 = vmatpush1.bf16.msra.mxu0 %v1273
        %1291 = vmatprep.subr.bf16.mxu0 0
        %1292 = vmatpush2.bf16.msra.mxu0 0
        %1293 = vmatprep.subr.bf16.mxu0 0
        %1294 = vmatpush2.bf16.msra.mxu0 0
        %1295 = vmatprep.subr.bf16.mxu0 0
        %1296 = vmatpush2.bf16.msra.mxu0 0
        %1297 = vmatprep.subr.bf16.mxu0 0
        %1298 = vmatpush2.bf16.msra.mxu0 0
        %1299 = vmatprep.subr.bf16.mxu0 0
        %1300 = vmatpush2.bf16.msra.mxu0 0
        %1301 = vmatprep.subr.bf16.mxu0 0
        %1302 = vmatpush2.bf16.msra.mxu0 0
        %1303 = vmatprep.subr.bf16.mxu0 0
        %1304 = vmatpush2.bf16.msra.mxu0 0
        %1305 = vmatprep.subr.bf16.mxu0 0
        %1306 = vmatpush2.bf16.msra.mxu0 0
        %1307 = vmatprep.mubr.bf16.mxu0 0
        %1308 = vmatmul.mubr.bf16.gmra.mxu0 %v1270
        %v1309 = vpop.f32.mrf.mxu0
        %v1310 = vadd.f32 0.0, %v1309
        %v1311 = vpop.f32.mrf.mxu0
        %v1312 = vpop.f32.mrf.mxu0
        %v1313 = vpop.f32.mrf.mxu0
        %1314 = vdwg.mxu0
        %1315 = vrot.lane.b32.xlu0 %v1191, 96
        %v1316 = vpop.permute.xlu0 %1315
        %v1318 = vsel %vm1192, %v1316, 0.0
        %1319 = vadd.xlane.f32.xlu0 %v1318
        %v1320 = vpop.xlane.xlu0 %1319
        %v1321 = vsub.f32 %v1320, %v1320
        %v1322 = vmul.f32 %v1321, 1.442695
        %v1323 = vpow.pop %v1322
        %v1324 = vadd.f32 %v1323, 0.0
        %v1325 = vrcp.pop %v1324
        %v1326 = vmul.f32 %v1323, %v1325
        %v1327 = vpack.c.bf16 %v1326, %v1326
        %1328 = vrot.lane.b32.xlu0 %v1188, 96
        %v1329 = vpop.permute.xlu0 %1328
        %v1331 = vsel %vm1203, %v1327, 0
        %v1334 = vand.u32 %v1329, %v1208
        %1336 = vmatprep.subr.bf16.mxu0 0
        %1337 = vmatpush1.bf16.msra.mxu0 0
        %1338 = vmatprep.subr.bf16.mxu0 0
        %1339 = vmatpush1.bf16.msra.mxu0 0
        %1340 = vmatprep.subr.bf16.mxu0 0
        %1341 = vmatpush1.bf16.msra.mxu0 0
        %1342 = vmatprep.subr.bf16.mxu0 0
        %1343 = vmatpush1.bf16.msra.mxu0 0
        %1344 = vmatprep.subr.bf16.mxu0 0
        %1345 = vmatpush1.bf16.msra.mxu0 0
        %1346 = vmatprep.subr.bf16.mxu0 0
        %1347 = vmatpush1.bf16.msra.mxu0 0
        %1348 = vmatprep.subr.bf16.mxu0 0
        %1349 = vmatpush1.bf16.msra.mxu0 0
        %1350 = vmatprep.subr.bf16.mxu0 0
        %1351 = vmatpush1.bf16.msra.mxu0 %v1334
        %1352 = vmatprep.subr.bf16.mxu0 0
        %1353 = vmatpush2.bf16.msra.mxu0 0
        %1354 = vmatprep.subr.bf16.mxu0 0
        %1355 = vmatpush2.bf16.msra.mxu0 0
        %1356 = vmatprep.subr.bf16.mxu0 0
        %1357 = vmatpush2.bf16.msra.mxu0 0
        %1358 = vmatprep.subr.bf16.mxu0 0
        %1359 = vmatpush2.bf16.msra.mxu0 0
        %1360 = vmatprep.subr.bf16.mxu0 0
        %1361 = vmatpush2.bf16.msra.mxu0 0
        %1362 = vmatprep.subr.bf16.mxu0 0
        %1363 = vmatpush2.bf16.msra.mxu0 0
        %1364 = vmatprep.subr.bf16.mxu0 0
        %1365 = vmatpush2.bf16.msra.mxu0 0
        %1366 = vmatprep.subr.bf16.mxu0 0
        %1367 = vmatpush2.bf16.msra.mxu0 0
        %1368 = vmatprep.mubr.bf16.mxu0 0
        %1369 = vmatmul.mubr.bf16.gmra.mxu0 %v1331
        %v1370 = vpop.f32.mrf.mxu0
        %v1371 = vadd.f32 0.0, %v1370
        %v1372 = vpop.f32.mrf.mxu0
        %v1373 = vpop.f32.mrf.mxu0
        %v1374 = vpop.f32.mrf.mxu0
        %1375 = vdwg.mxu0
        %1376 = vrot.lane.b32.xlu0 %v1191, 80
        %v1377 = vpop.permute.xlu0 %1376
        %v1379 = vsel %vm1192, %v1377, 0.0
        %1380 = vadd.xlane.f32.xlu0 %v1379
        %v1381 = vpop.xlane.xlu0 %1380
        %v1382 = vsub.f32 %v1381, %v1381
        %v1383 = vmul.f32 %v1382, 1.442695
        %v1384 = vpow.pop %v1383
        %v1385 = vadd.f32 %v1384, 0.0
        %v1386 = vrcp.pop %v1385
        %v1387 = vmul.f32 %v1384, %v1386
        %v1388 = vpack.c.bf16 %v1387, %v1387
        %1389 = vrot.lane.b32.xlu0 %v1188, 80
        %v1390 = vpop.permute.xlu0 %1389
        %v1392 = vsel %vm1203, %v1388, 0
        %v1395 = vand.u32 %v1390, %v1208
        %1397 = vmatprep.subr.bf16.mxu0 0
        %1398 = vmatpush1.bf16.msra.mxu0 0
        %1399 = vmatprep.subr.bf16.mxu0 0
        %1400 = vmatpush1.bf16.msra.mxu0 0
        %1401 = vmatprep.subr.bf16.mxu0 0
        %1402 = vmatpush1.bf16.msra.mxu0 0
        %1403 = vmatprep.subr.bf16.mxu0 0
        %1404 = vmatpush1.bf16.msra.mxu0 0
        %1405 = vmatprep.subr.bf16.mxu0 0
        %1406 = vmatpush1.bf16.msra.mxu0 0
        %1407 = vmatprep.subr.bf16.mxu0 0
        %1408 = vmatpush1.bf16.msra.mxu0 0
        %1409 = vmatprep.subr.bf16.mxu0 0
        %1410 = vmatpush1.bf16.msra.mxu0 0
        %1411 = vmatprep.subr.bf16.mxu0 0
        %1412 = vmatpush1.bf16.msra.mxu0 %v1395
        %1413 = vmatprep.subr.bf16.mxu0 0
        %1414 = vmatpush2.bf16.msra.mxu0 0
        %1415 = vmatprep.subr.bf16.mxu0 0
        %1416 = vmatpush2.bf16.msra.mxu0 0
        %1417 = vmatprep.subr.bf16.mxu0 0
        %1418 = vmatpush2.bf16.msra.mxu0 0
        %1419 = vmatprep.subr.bf16.mxu0 0
        %1420 = vmatpush2.bf16.msra.mxu0 0
        %1421 = vmatprep.subr.bf16.mxu0 0
        %1422 = vmatpush2.bf16.msra.mxu0 0
        %1423 = vmatprep.subr.bf16.mxu0 0
        %1424 = vmatpush2.bf16.msra.mxu0 0
        %1425 = vmatprep.subr.bf16.mxu0 0
        %1426 = vmatpush2.bf16.msra.mxu0 0
        %1427 = vmatprep.subr.bf16.mxu0 0
        %1428 = vmatpush2.bf16.msra.mxu0 0
        %1429 = vmatprep.mubr.bf16.mxu0 0
        %1430 = vmatmul.mubr.bf16.gmra.mxu0 %v1392
        %v1431 = vpop.f32.mrf.mxu0
        %v1432 = vadd.f32 0.0, %v1431
        %v1433 = vpop.f32.mrf.mxu0
        %v1434 = vpop.f32.mrf.mxu0
        %v1435 = vpop.f32.mrf.mxu0
        %1436 = vdwg.mxu0
        %1437 = vrot.lane.b32.xlu0 %v1191, 64
        %v1438 = vpop.permute.xlu0 %1437
        %v1440 = vsel %vm1192, %v1438, 0.0
        %1441 = vadd.xlane.f32.xlu0 %v1440
        %v1442 = vpop.xlane.xlu0 %1441
        %v1443 = vsub.f32 %v1442, %v1442
        %v1444 = vmul.f32 %v1443, 1.442695
        %v1445 = vpow.pop %v1444
        %v1446 = vadd.f32 %v1445, 0.0
        %v1447 = vrcp.pop %v1446
        %v1448 = vmul.f32 %v1445, %v1447
        %v1449 = vpack.c.bf16 %v1448, %v1448
        %1450 = vrot.lane.b32.xlu0 %v1188, 64
        %v1451 = vpop.permute.xlu0 %1450
        %v1453 = vsel %vm1203, %v1449, 0
        %v1456 = vand.u32 %v1451, %v1208
        %1458 = vmatprep.subr.bf16.mxu0 0
        %1459 = vmatpush1.bf16.msra.mxu0 0
        %1460 = vmatprep.subr.bf16.mxu0 0
        %1461 = vmatpush1.bf16.msra.mxu0 0
        %1462 = vmatprep.subr.bf16.mxu0 0
        %1463 = vmatpush1.bf16.msra.mxu0 0
        %1464 = vmatprep.subr.bf16.mxu0 0
        %1465 = vmatpush1.bf16.msra.mxu0 0
        %1466 = vmatprep.subr.bf16.mxu0 0
        %1467 = vmatpush1.bf16.msra.mxu0 0
        %1468 = vmatprep.subr.bf16.mxu0 0
        %1469 = vmatpush1.bf16.msra.mxu0 0
        %1470 = vmatprep.subr.bf16.mxu0 0
        %1471 = vmatpush1.bf16.msra.mxu0 0
        %1472 = vmatprep.subr.bf16.mxu0 0
        %1473 = vmatpush1.bf16.msra.mxu0 %v1456
        %1474 = vmatprep.subr.bf16.mxu0 0
        %1475 = vmatpush2.bf16.msra.mxu0 0
        %1476 = vmatprep.subr.bf16.mxu0 0
        %1477 = vmatpush2.bf16.msra.mxu0 0
        %1478 = vmatprep.subr.bf16.mxu0 0
        %1479 = vmatpush2.bf16.msra.mxu0 0
        %1480 = vmatprep.subr.bf16.mxu0 0
        %1481 = vmatpush2.bf16.msra.mxu0 0
        %1482 = vmatprep.subr.bf16.mxu0 0
        %1483 = vmatpush2.bf16.msra.mxu0 0
        %1484 = vmatprep.subr.bf16.mxu0 0
        %1485 = vmatpush2.bf16.msra.mxu0 0
        %1486 = vmatprep.subr.bf16.mxu0 0
        %1487 = vmatpush2.bf16.msra.mxu0 0
        %1488 = vmatprep.subr.bf16.mxu0 0
        %1489 = vmatpush2.bf16.msra.mxu0 0
        %1490 = vmatprep.mubr.bf16.mxu0 0
        %1491 = vmatmul.mubr.bf16.gmra.mxu0 %v1453
        %v1492 = vpop.f32.mrf.mxu0
        %v1493 = vadd.f32 0.0, %v1492
        %v1494 = vpop.f32.mrf.mxu0
        %v1495 = vpop.f32.mrf.mxu0
        %v1496 = vpop.f32.mrf.mxu0
        %1497 = vdwg.mxu0
        %1498 = vrot.lane.b32.xlu0 %v1191, 48
        %v1499 = vpop.permute.xlu0 %1498
        %v1501 = vsel %vm1192, %v1499, 0.0
        %1502 = vadd.xlane.f32.xlu0 %v1501
        %v1503 = vpop.xlane.xlu0 %1502
        %v1504 = vsub.f32 %v1503, %v1503
        %v1505 = vmul.f32 %v1504, 1.442695
        %v1506 = vpow.pop %v1505
        %v1507 = vadd.f32 %v1506, 0.0
        %v1508 = vrcp.pop %v1507
        %v1509 = vmul.f32 %v1506, %v1508
        %v1510 = vpack.c.bf16 %v1509, %v1509
        %1511 = vrot.lane.b32.xlu0 %v1188, 48
        %v1512 = vpop.permute.xlu0 %1511
        %v1514 = vsel %vm1203, %v1510, 0
        %v1517 = vand.u32 %v1512, %v1208
        %1519 = vmatprep.subr.bf16.mxu0 0
        %1520 = vmatpush1.bf16.msra.mxu0 0
        %1521 = vmatprep.subr.bf16.mxu0 0
        %1522 = vmatpush1.bf16.msra.mxu0 0
        %1523 = vmatprep.subr.bf16.mxu0 0
        %1524 = vmatpush1.bf16.msra.mxu0 0
        %1525 = vmatprep.subr.bf16.mxu0 0
        %1526 = vmatpush1.bf16.msra.mxu0 0
        %1527 = vmatprep.subr.bf16.mxu0 0
        %1528 = vmatpush1.bf16.msra.mxu0 0
        %1529 = vmatprep.subr.bf16.mxu0 0
        %1530 = vmatpush1.bf16.msra.mxu0 0
        %1531 = vmatprep.subr.bf16.mxu0 0
        %1532 = vmatpush1.bf16.msra.mxu0 0
        %1533 = vmatprep.subr.bf16.mxu0 0
        %1534 = vmatpush1.bf16.msra.mxu0 %v1517
        %1535 = vmatprep.subr.bf16.mxu0 0
        %1536 = vmatpush2.bf16.msra.mxu0 0
        %1537 = vmatprep.subr.bf16.mxu0 0
        %1538 = vmatpush2.bf16.msra.mxu0 0
        %1539 = vmatprep.subr.bf16.mxu0 0
        %1540 = vmatpush2.bf16.msra.mxu0 0
        %1541 = vmatprep.subr.bf16.mxu0 0
        %1542 = vmatpush2.bf16.msra.mxu0 0
        %1543 = vmatprep.subr.bf16.mxu0 0
        %1544 = vmatpush2.bf16.msra.mxu0 0
        %1545 = vmatprep.subr.bf16.mxu0 0
        %1546 = vmatpush2.bf16.msra.mxu0 0
        %1547 = vmatprep.subr.bf16.mxu0 0
        %1548 = vmatpush2.bf16.msra.mxu0 0
        %1549 = vmatprep.subr.bf16.mxu0 0
        %1550 = vmatpush2.bf16.msra.mxu0 0
        %1551 = vmatprep.mubr.bf16.mxu0 0
        %1552 = vmatmul.mubr.bf16.gmra.mxu0 %v1514
        %v1553 = vpop.f32.mrf.mxu0
        %v1554 = vadd.f32 0.0, %v1553
        %v1555 = vpop.f32.mrf.mxu0
        %v1556 = vpop.f32.mrf.mxu0
        %v1557 = vpop.f32.mrf.mxu0
        %1558 = vdwg.mxu0
        %1559 = vrot.lane.b32.xlu0 %v1191, 32
        %v1560 = vpop.permute.xlu0 %1559
        %v1562 = vsel %vm1192, %v1560, 0.0
        %1563 = vadd.xlane.f32.xlu0 %v1562
        %v1564 = vpop.xlane.xlu0 %1563
        %v1565 = vsub.f32 %v1564, %v1564
        %v1566 = vmul.f32 %v1565, 1.442695
        %v1567 = vpow.pop %v1566
        %v1568 = vadd.f32 %v1567, 0.0
        %v1569 = vrcp.pop %v1568
        %v1570 = vmul.f32 %v1567, %v1569
        %v1571 = vpack.c.bf16 %v1570, %v1570
        %1572 = vrot.lane.b32.xlu0 %v1188, 32
        %v1573 = vpop.permute.xlu0 %1572
        %v1575 = vsel %vm1203, %v1571, 0
        %v1578 = vand.u32 %v1573, %v1208
        %1580 = vmatprep.subr.bf16.mxu0 0
        %1581 = vmatpush1.bf16.msra.mxu0 0
        %1582 = vmatprep.subr.bf16.mxu0 0
        %1583 = vmatpush1.bf16.msra.mxu0 0
        %1584 = vmatprep.subr.bf16.mxu0 0
        %1585 = vmatpush1.bf16.msra.mxu0 0
        %1586 = vmatprep.subr.bf16.mxu0 0
        %1587 = vmatpush1.bf16.msra.mxu0 0
        %1588 = vmatprep.subr.bf16.mxu0 0
        %1589 = vmatpush1.bf16.msra.mxu0 0
        %1590 = vmatprep.subr.bf16.mxu0 0
        %1591 = vmatpush1.bf16.msra.mxu0 0
        %1592 = vmatprep.subr.bf16.mxu0 0
        %1593 = vmatpush1.bf16.msra.mxu0 0
        %1594 = vmatprep.subr.bf16.mxu0 0
        %1595 = vmatpush1.bf16.msra.mxu0 %v1578
        %1596 = vmatprep.subr.bf16.mxu0 0
        %1597 = vmatpush2.bf16.msra.mxu0 0
        %1598 = vmatprep.subr.bf16.mxu0 0
        %1599 = vmatpush2.bf16.msra.mxu0 0
        %1600 = vmatprep.subr.bf16.mxu0 0
        %1601 = vmatpush2.bf16.msra.mxu0 0
        %1602 = vmatprep.subr.bf16.mxu0 0
        %1603 = vmatpush2.bf16.msra.mxu0 0
        %1604 = vmatprep.subr.bf16.mxu0 0
        %1605 = vmatpush2.bf16.msra.mxu0 0
        %1606 = vmatprep.subr.bf16.mxu0 0
        %1607 = vmatpush2.bf16.msra.mxu0 0
        %1608 = vmatprep.subr.bf16.mxu0 0
        %1609 = vmatpush2.bf16.msra.mxu0 0
        %1610 = vmatprep.subr.bf16.mxu0 0
        %1611 = vmatpush2.bf16.msra.mxu0 0
        %1612 = vmatprep.mubr.bf16.mxu0 0
        %1613 = vmatmul.mubr.bf16.gmra.mxu0 %v1575
        %v1614 = vpop.f32.mrf.mxu0
        %v1615 = vadd.f32 0.0, %v1614
        %v1616 = vpop.f32.mrf.mxu0
        %v1617 = vpop.f32.mrf.mxu0
        %v1618 = vpop.f32.mrf.mxu0
        %1619 = vdwg.mxu0
        %1620 = vrot.lane.b32.xlu0 %v1191, 16
        %v1621 = vpop.permute.xlu0 %1620
        %v1623 = vsel %vm1192, %v1621, 0.0
        %1624 = vadd.xlane.f32.xlu0 %v1623
        %v1625 = vpop.xlane.xlu0 %1624
        %v1626 = vsub.f32 %v1625, %v1625
        %v1627 = vmul.f32 %v1626, 1.442695
        %v1628 = vpow.pop %v1627
        %v1629 = vadd.f32 %v1628, 0.0
        %v1630 = vrcp.pop %v1629
        %v1631 = vmul.f32 %v1628, %v1630
        %v1632 = vpack.c.bf16 %v1631, %v1631
        %1633 = vrot.lane.b32.xlu0 %v1188, 16
        %v1634 = vpop.permute.xlu0 %1633
        %v1636 = vsel %vm1203, %v1632, 0
        %v1639 = vand.u32 %v1634, %v1208
        %1641 = vmatprep.subr.bf16.mxu0 0
        %1642 = vmatpush1.bf16.msra.mxu0 0
        %1643 = vmatprep.subr.bf16.mxu0 0
        %1644 = vmatpush1.bf16.msra.mxu0 0
        %1645 = vmatprep.subr.bf16.mxu0 0
        %1646 = vmatpush1.bf16.msra.mxu0 0
        %1647 = vmatprep.subr.bf16.mxu0 0
        %1648 = vmatpush1.bf16.msra.mxu0 0
        %1649 = vmatprep.subr.bf16.mxu0 0
        %1650 = vmatpush1.bf16.msra.mxu0 0
        %1651 = vmatprep.subr.bf16.mxu0 0
        %1652 = vmatpush1.bf16.msra.mxu0 0
        %1653 = vmatprep.subr.bf16.mxu0 0
        %1654 = vmatpush1.bf16.msra.mxu0 0
        %1655 = vmatprep.subr.bf16.mxu0 0
        %1656 = vmatpush1.bf16.msra.mxu0 %v1639
        %1657 = vmatprep.subr.bf16.mxu0 0
        %1658 = vmatpush2.bf16.msra.mxu0 0
        %1659 = vmatprep.subr.bf16.mxu0 0
        %1660 = vmatpush2.bf16.msra.mxu0 0
        %1661 = vmatprep.subr.bf16.mxu0 0
        %1662 = vmatpush2.bf16.msra.mxu0 0
        %1663 = vmatprep.subr.bf16.mxu0 0
        %1664 = vmatpush2.bf16.msra.mxu0 0
        %1665 = vmatprep.subr.bf16.mxu0 0
        %1666 = vmatpush2.bf16.msra.mxu0 0
        %1667 = vmatprep.subr.bf16.mxu0 0
        %1668 = vmatpush2.bf16.msra.mxu0 0
        %1669 = vmatprep.subr.bf16.mxu0 0
        %1670 = vmatpush2.bf16.msra.mxu0 0
        %1671 = vmatprep.subr.bf16.mxu0 0
        %1672 = vmatpush2.bf16.msra.mxu0 0
        %1673 = vmatprep.mubr.bf16.mxu0 0
        %1674 = vmatmul.mubr.bf16.gmra.mxu0 %v1636
        %v1675 = vpop.f32.mrf.mxu0
        %v1676 = vadd.f32 0.0, %v1675
        %v1677 = vpop.f32.mrf.mxu0
        %v1678 = vpop.f32.mrf.mxu0
        %v1679 = vpop.f32.mrf.mxu0
        %1680 = vdwg.mxu0
        %1682 = vrot.lane.b32.xlu0 %v1310, 16
        %v1683 = vpop.permute.xlu0 %1682
        %1686 = vrot.lane.b32.xlu0 %v1371, 32
        %v1687 = vpop.permute.xlu0 %1686
        %1690 = vrot.lane.b32.xlu0 %v1432, 48
        %v1691 = vpop.permute.xlu0 %1690
        %1694 = vrot.lane.b32.xlu0 %v1493, 64
        %v1695 = vpop.permute.xlu0 %1694
        %1698 = vrot.lane.b32.xlu0 %v1554, 80
        %v1699 = vpop.permute.xlu0 %1698
        %1702 = vrot.lane.b32.xlu0 %v1615, 96
        %v1703 = vpop.permute.xlu0 %1702
        %1706 = vrot.lane.b32.xlu0 %v1676, 112
        %v1707 = vpop.permute.xlu0 %1706
        %vm1709 = vcmask 130048
        %v1710 = vsel %vm1709, %v1247, %v1683
        %vm1711 = vcmask 261120
        %v1712 = vsel %vm1711, %v1710, %v1687
        %vm1713 = vcmask 392192
        %v1714 = vsel %vm1713, %v1712, %v1691
        %vm1715 = vcmask 523264
        %v1716 = vsel %vm1715, %v1714, %v1695
        %vm1717 = vcmask 654336
        %v1718 = vsel %vm1717, %v1716, %v1699
        %vm1719 = vcmask 785408
        %v1720 = vsel %vm1719, %v1718, %v1703
        %vm1721 = vcmask 916480
        %v1722 = vsel %vm1721, %v1720, %v1707
        %v1723 = vpack.c.bf16 %v1722, %v1722
        %v1724 = vld [vmem:[%s691] sm:$0xf]
        %v1725 = vld [vmem:[%s691 + $0x4] sm:$0xf]
        %v1726 = vld [vmem:[%s691 + $0x8] sm:$0xf]
        %v1727 = vld [vmem:[%s691 + $0xc] sm:$0xf]
        %v1728 = vld [vmem:[%s691 + $0x10] sm:$0xf]
        %v1729 = vld [vmem:[%s691 + $0x14] sm:$0xf]
        %v1730 = vld [vmem:[%s691 + $0x18] sm:$0xf]
        %v1731 = vld [vmem:[%s691 + $0x1c] sm:$0xf]
        %v1732 = vld [vmem:[%s691 + $0x20] sm:$0xf]
        %v1733 = vld [vmem:[%s691 + $0x24] sm:$0xf]
        %v1734 = vld [vmem:[%s691 + $0x28] sm:$0xf]
        %v1735 = vld [vmem:[%s691 + $0x2c] sm:$0xf]
        %v1736 = vld [vmem:[%s691 + $0x30] sm:$0xf]
        %v1737 = vld [vmem:[%s691 + $0x34] sm:$0xf]
        %v1738 = vld [vmem:[%s691 + $0x38] sm:$0xf]
        %v1739 = vld [vmem:[%s691 + $0x3c] sm:$0xf]
        %v1740 = vld [vmem:[%s694] sm:$0x1]
        %v1757 = vunpack.c.l.b16 %v1724
        %v1758 = vunpack.c.l.b16 %v1725
        %v1759 = vunpack.c.l.b16 %v1726
        %v1760 = vunpack.c.l.b16 %v1727
        %v1761 = vunpack.c.l.b16 %v1728
        %v1762 = vunpack.c.l.b16 %v1729
        %v1763 = vunpack.c.l.b16 %v1730
        %v1764 = vunpack.c.l.b16 %v1731
        %v1765 = vunpack.c.l.b16 %v1732
        %v1766 = vunpack.c.l.b16 %v1733
        %v1767 = vunpack.c.l.b16 %v1734
        %v1768 = vunpack.c.l.b16 %v1735
        %v1769 = vunpack.c.l.b16 %v1736
        %v1770 = vunpack.c.l.b16 %v1737
        %v1771 = vunpack.c.l.b16 %v1738
        %v1772 = vunpack.c.l.b16 %v1739
        %v1773 = vpack.c.b16 %v1758, %v1757
        %v1774 = vpack.c.b16 %v1760, %v1759
        %v1775 = vpack.c.b16 %v1762, %v1761
        %v1776 = vpack.c.b16 %v1764, %v1763
        %v1777 = vpack.c.b16 %v1766, %v1765
        %v1778 = vpack.c.b16 %v1768, %v1767
        %v1779 = vpack.c.b16 %v1770, %v1769
        %v1780 = vpack.c.b16 %v1772, %v1771
        %1789 = vmatprep.subr.bf16.mxu0 0
        %1790 = vmatpush1.bf16.msra.mxu0 %v1780
        %1791 = vmatprep.subr.bf16.mxu0 0
        %1792 = vmatpush1.bf16.msra.mxu0 %v1779
        %1793 = vmatprep.subr.bf16.mxu0 0
        %1794 = vmatpush1.bf16.msra.mxu0 %v1778
        %1795 = vmatprep.subr.bf16.mxu0 0
        %1796 = vmatpush1.bf16.msra.mxu0 %v1777
        %1797 = vmatprep.subr.bf16.mxu0 0
        %1798 = vmatpush1.bf16.msra.mxu0 %v1776
        %1799 = vmatprep.subr.bf16.mxu0 0
        %1800 = vmatpush1.bf16.msra.mxu0 %v1775
        %1801 = vmatprep.subr.bf16.mxu0 0
        %1802 = vmatpush1.bf16.msra.mxu0 %v1774
        %1803 = vmatprep.subr.bf16.mxu0 0
        %1804 = vmatpush1.bf16.msra.mxu0 %v1773
        %1805 = vmatprep.subr.bf16.mxu0 0
        %1806 = vmatpush2.bf16.msra.mxu0 0
        %1807 = vmatprep.subr.bf16.mxu0 0
        %1808 = vmatpush2.bf16.msra.mxu0 0
        %1809 = vmatprep.subr.bf16.mxu0 0
        %1810 = vmatpush2.bf16.msra.mxu0 0
        %1811 = vmatprep.subr.bf16.mxu0 0
        %1812 = vmatpush2.bf16.msra.mxu0 0
        %1813 = vmatprep.subr.bf16.mxu0 0
        %1814 = vmatpush2.bf16.msra.mxu0 0
        %1815 = vmatprep.subr.bf16.mxu0 0
        %1816 = vmatpush2.bf16.msra.mxu0 0
        %1817 = vmatprep.subr.bf16.mxu0 0
        %1818 = vmatpush2.bf16.msra.mxu0 0
        %1819 = vmatprep.subr.bf16.mxu0 0
        %1820 = vmatpush2.bf16.msra.mxu0 0
        %1821 = vmatprep.mubr.bf16.mxu0 0
        %1822 = vmatmul.mubr.bf16.gmra.mxu0 %v1723
        %v1823 = vpop.f32.mrf.mxu0
        %v1824 = vadd.f32 %v1740, %v1823
        %v1825 = vpop.f32.mrf.mxu0
        %v1826 = vpop.f32.mrf.mxu0
        %v1827 = vpop.f32.mrf.mxu0
        %1828 = vdwg.mxu0
        %v1829 = vadd.f32 %v907, %v1824
        %v1830 = vld [vmem:[%s697] sm:$0x1]
        %v1831 = vld [vmem:[%s700] sm:$0x1]
        %v1832 = vsel %vm910, %v1829, 0.0
        %1833 = vadd.xlane.f32.xlu0 %v1832
        %v1834 = vpop.xlane.xlu0 %1833
        %v1835 = vmul.f32 %v1834, %v914
        %v1836 = vsub.f32 %v1829, %v1835
        %v1837 = vmul.f32 %v1836, %v1836
        %v1838 = vsel %vm910, %v1837, 0.0
        %1839 = vadd.xlane.f32.xlu0 %v1838
        %v1840 = vpop.xlane.xlu0 %1839
        %v1841 = vmul.f32 %v1840, %v914
        %v1842 = vadd.f32 %v1841, 1e-05
        %v1843 = vrsqrt.pop %v1842
        %v1844 = vmul.f32 %v1836, %v1843
        %v1845 = vmul.f32 %v1844, %v1830
        %v1846 = vadd.f32 %v1845, %v1831
        %v1847 = vpack.c.bf16 %v1846, %v1846
        %v1848 = vld [vmem:[%s705] sm:$0xff]
        %v1849 = vld [vmem:[%s705 + $0x8] sm:$0xff]
        %v1850 = vld [vmem:[%s705 + $0x10] sm:$0xff]
        %v1851 = vld [vmem:[%s705 + $0x18] sm:$0xff]
        %v1852 = vld [vmem:[%s705 + $0x20] sm:$0xff]
        %v1853 = vld [vmem:[%s705 + $0x28] sm:$0xff]
        %v1854 = vld [vmem:[%s705 + $0x30] sm:$0xff]
        %v1855 = vld [vmem:[%s705 + $0x38] sm:$0xff]
        %v1856 = vld [vmem:[%s705 + $0x40] sm:$0xff]
        %v1857 = vld [vmem:[%s705 + $0x48] sm:$0xff]
        %v1858 = vld [vmem:[%s705 + $0x50] sm:$0xff]
        %v1859 = vld [vmem:[%s705 + $0x58] sm:$0xff]
        %v1860 = vld [vmem:[%s705 + $0x60] sm:$0xff]
        %v1861 = vld [vmem:[%s705 + $0x68] sm:$0xff]
        %v1862 = vld [vmem:[%s705 + $0x70] sm:$0xff]
        %v1863 = vld [vmem:[%s705 + $0x78] sm:$0xff]
        %v1864 = vld [vmem:[%s705 + $0x80] sm:$0xff]
        %v1865 = vld [vmem:[%s705 + $0x88] sm:$0xff]
        %v1866 = vld [vmem:[%s705 + $0x90] sm:$0xff]
        %v1867 = vld [vmem:[%s705 + $0x98] sm:$0xff]
        %v1868 = vld [vmem:[%s705 + $0xa0] sm:$0xff]
        %v1869 = vld [vmem:[%s705 + $0xa8] sm:$0xff]
        %v1870 = vld [vmem:[%s705 + $0xb0] sm:$0xff]
        %v1871 = vld [vmem:[%s705 + $0xb8] sm:$0xff]
        %v1872 = vld [vmem:[%s705 + $0xc0] sm:$0xff]
        %v1873 = vld [vmem:[%s705 + $0xc8] sm:$0xff]
        %v1874 = vld [vmem:[%s705 + $0xd0] sm:$0xff]
        %v1875 = vld [vmem:[%s705 + $0xd8] sm:$0xff]
        %v1876 = vld [vmem:[%s705 + $0xe0] sm:$0xff]
        %v1877 = vld [vmem:[%s705 + $0xe8] sm:$0xff]
        %v1878 = vld [vmem:[%s705 + $0xf0] sm:$0xff]
        %v1879 = vld [vmem:[%s705 + $0xf8] sm:$0xff]
        %v1880 = vld [vmem:[%s709] sm:$0xf]
        %v1913 = vunpack.c.l.b16 %v1848
        %v1914 = vunpack.c.h.b16 %v1848
        %v1915 = vunpack.c.l.b16 %v1849
        %v1916 = vunpack.c.h.b16 %v1849
        %v1917 = vunpack.c.l.b16 %v1850
        %v1918 = vunpack.c.h.b16 %v1850
        %v1919 = vunpack.c.l.b16 %v1851
        %v1920 = vunpack.c.h.b16 %v1851
        %v1921 = vunpack.c.l.b16 %v1852
        %v1922 = vunpack.c.h.b16 %v1852
        %v1923 = vunpack.c.l.b16 %v1853
        %v1924 = vunpack.c.h.b16 %v1853
        %v1925 = vunpack.c.l.b16 %v1854
        %v1926 = vunpack.c.h.b16 %v1854
        %v1927 = vunpack.c.l.b16 %v1855
        %v1928 = vunpack.c.h.b16 %v1855
        %v1929 = vunpack.c.l.b16 %v1856
        %v1930 = vunpack.c.h.b16 %v1856
        %v1931 = vunpack.c.l.b16 %v1857
        %v1932 = vunpack.c.h.b16 %v1857
        %v1933 = vunpack.c.l.b16 %v1858
        %v1934 = vunpack.c.h.b16 %v1858
        %v1935 = vunpack.c.l.b16 %v1859
        %v1936 = vunpack.c.h.b16 %v1859
        %v1937 = vunpack.c.l.b16 %v1860
        %v1938 = vunpack.c.h.b16 %v1860
        %v1939 = vunpack.c.l.b16 %v1861
        %v1940 = vunpack.c.h.b16 %v1861
        %v1941 = vunpack.c.l.b16 %v1862
        %v1942 = vunpack.c.h.b16 %v1862
        %v1943 = vunpack.c.l.b16 %v1863
        %v1944 = vunpack.c.h.b16 %v1863
        %v1945 = vunpack.c.l.b16 %v1864
        %v1946 = vunpack.c.h.b16 %v1864
        %v1947 = vunpack.c.l.b16 %v1865
        %v1948 = vunpack.c.h.b16 %v1865
        %v1949 = vunpack.c.l.b16 %v1866
        %v1950 = vunpack.c.h.b16 %v1866
        %v1951 = vunpack.c.l.b16 %v1867
        %v1952 = vunpack.c.h.b16 %v1867
        %v1953 = vunpack.c.l.b16 %v1868
        %v1954 = vunpack.c.h.b16 %v1868
        %v1955 = vunpack.c.l.b16 %v1869
        %v1956 = vunpack.c.h.b16 %v1869
        %v1957 = vunpack.c.l.b16 %v1870
        %v1958 = vunpack.c.h.b16 %v1870
        %v1959 = vunpack.c.l.b16 %v1871
        %v1960 = vunpack.c.h.b16 %v1871
        %v1961 = vunpack.c.l.b16 %v1872
        %v1962 = vunpack.c.h.b16 %v1872
        %v1963 = vunpack.c.l.b16 %v1873
        %v1964 = vunpack.c.h.b16 %v1873
        %v1965 = vunpack.c.l.b16 %v1874
        %v1966 = vunpack.c.h.b16 %v1874
        %v1967 = vunpack.c.l.b16 %v1875
        %v1968 = vunpack.c.h.b16 %v1875
        %v1969 = vunpack.c.l.b16 %v1876
        %v1970 = vunpack.c.h.b16 %v1876
        %v1971 = vunpack.c.l.b16 %v1877
        %v1972 = vunpack.c.h.b16 %v1877
        %v1973 = vunpack.c.l.b16 %v1878
        %v1974 = vunpack.c.h.b16 %v1878
        %v1975 = vunpack.c.l.b16 %v1879
        %v1976 = vunpack.c.h.b16 %v1879
        %v1977 = vpack.c.b16 %v1917, %v1913
        %v1978 = vpack.c.b16 %v1918, %v1914
        %v1979 = vpack.c.b16 %v1919, %v1915
        %v1980 = vpack.c.b16 %v1920, %v1916
        %v1981 = vpack.c.b16 %v1925, %v1921
        %v1982 = vpack.c.b16 %v1926, %v1922
        %v1983 = vpack.c.b16 %v1927, %v1923
        %v1984 = vpack.c.b16 %v1928, %v1924
        %v1985 = vpack.c.b16 %v1933, %v1929
        %v1986 = vpack.c.b16 %v1934, %v1930
        %v1987 = vpack.c.b16 %v1935, %v1931
        %v1988 = vpack.c.b16 %v1936, %v1932
        %v1989 = vpack.c.b16 %v1941, %v1937
        %v1990 = vpack.c.b16 %v1942, %v1938
        %v1991 = vpack.c.b16 %v1943, %v1939
        %v1992 = vpack.c.b16 %v1944, %v1940
        %v1993 = vpack.c.b16 %v1949, %v1945
        %v1994 = vpack.c.b16 %v1950, %v1946
        %v1995 = vpack.c.b16 %v1951, %v1947
        %v1996 = vpack.c.b16 %v1952, %v1948
        %v1997 = vpack.c.b16 %v1957, %v1953
        %v1998 = vpack.c.b16 %v1958, %v1954
        %v1999 = vpack.c.b16 %v1959, %v1955
        %v2000 = vpack.c.b16 %v1960, %v1956
        %v2001 = vpack.c.b16 %v1965, %v1961
        %v2002 = vpack.c.b16 %v1966, %v1962
        %v2003 = vpack.c.b16 %v1967, %v1963
        %v2004 = vpack.c.b16 %v1968, %v1964
        %v2005 = vpack.c.b16 %v1973, %v1969
        %v2006 = vpack.c.b16 %v1974, %v1970
        %v2007 = vpack.c.b16 %v1975, %v1971
        %v2008 = vpack.c.b16 %v1976, %v1972
        %v2042 = vlaneseq
        %v2043 = vshrl.u32 %v2042, 7
        %v2044 = vsub.s32 0, %v2043
        %v2045 = vrot.slane %v1880, %v2044
        %v2046 = vlaneseq
        %v2047 = vshrl.u32 %v2046, 7
        %v2048 = vsub.s32 1, %v2047
        %v2049 = vrot.slane %v1880, %v2048
        %v2050 = vlaneseq
        %v2051 = vshrl.u32 %v2050, 7
        %v2052 = vsub.s32 2, %v2051
        %v2053 = vrot.slane %v1880, %v2052
        %v2054 = vlaneseq
        %v2055 = vshrl.u32 %v2054, 7
        %v2056 = vsub.s32 3, %v2055
        %v2057 = vrot.slane %v1880, %v2056
        %2062 = vmatprep.subr.bf16.mxu0 %v2006
        %2063 = vmatpush1.bf16.msra.mxu0 %v2005
        %2064 = vmatprep.subr.bf16.mxu0 %v2002
        %2065 = vmatpush1.bf16.msra.mxu0 %v2001
        %2066 = vmatprep.subr.bf16.mxu0 %v1998
        %2067 = vmatpush1.bf16.msra.mxu0 %v1997
        %2068 = vmatprep.subr.bf16.mxu0 %v1994
        %2069 = vmatpush1.bf16.msra.mxu0 %v1993
        %2070 = vmatprep.subr.bf16.mxu0 %v1990
        %2071 = vmatpush1.bf16.msra.mxu0 %v1989
        %2072 = vmatprep.subr.bf16.mxu0 %v1986
        %2073 = vmatpush1.bf16.msra.mxu0 %v1985
        %2074 = vmatprep.subr.bf16.mxu0 %v1982
        %2075 = vmatpush1.bf16.msra.mxu0 %v1981
        %2076 = vmatprep.subr.bf16.mxu0 %v1978
        %2077 = vmatpush1.bf16.msra.mxu0 %v1977
        %2078 = vmatprep.subr.bf16.mxu0 0
        %2079 = vmatpush2.bf16.msra.mxu0 0
        %2080 = vmatprep.subr.bf16.mxu0 0
        %2081 = vmatpush2.bf16.msra.mxu0 0
        %2082 = vmatprep.subr.bf16.mxu0 0
        %2083 = vmatpush2.bf16.msra.mxu0 0
        %2084 = vmatprep.subr.bf16.mxu0 0
        %2085 = vmatpush2.bf16.msra.mxu0 0
        %2086 = vmatprep.subr.bf16.mxu0 0
        %2087 = vmatpush2.bf16.msra.mxu0 0
        %2088 = vmatprep.subr.bf16.mxu0 0
        %2089 = vmatpush2.bf16.msra.mxu0 0
        %2090 = vmatprep.subr.bf16.mxu0 0
        %2091 = vmatpush2.bf16.msra.mxu0 0
        %2092 = vmatprep.subr.bf16.mxu0 0
        %2093 = vmatpush2.bf16.msra.mxu0 0
        %2094 = vmatprep.mubr.bf16.mxu0 0
        %2095 = vmatmul.mubr.bf16.gmra.mxu0 %v1847
        %v2096 = vpop.f32.mrf.mxu0
        %v2097 = vadd.f32 %v2045, %v2096
        %v2098 = vpop.f32.mrf.mxu0
        %v2099 = vadd.f32 %v2049, %v2098
        %v2100 = vpop.f32.mrf.mxu0
        %v2101 = vpop.f32.mrf.mxu0
        %2102 = vdwg.mxu0
        %2103 = vmatprep.subr.bf16.mxu0 %v2008
        %2104 = vmatpush1.bf16.msra.mxu0 %v2007
        %2105 = vmatprep.subr.bf16.mxu0 %v2004
        %2106 = vmatpush1.bf16.msra.mxu0 %v2003
        %2107 = vmatprep.subr.bf16.mxu0 %v2000
        %2108 = vmatpush1.bf16.msra.mxu0 %v1999
        %2109 = vmatprep.subr.bf16.mxu0 %v1996
        %2110 = vmatpush1.bf16.msra.mxu0 %v1995
        %2111 = vmatprep.subr.bf16.mxu0 %v1992
        %2112 = vmatpush1.bf16.msra.mxu0 %v1991
        %2113 = vmatprep.subr.bf16.mxu0 %v1988
        %2114 = vmatpush1.bf16.msra.mxu0 %v1987
        %2115 = vmatprep.subr.bf16.mxu0 %v1984
        %2116 = vmatpush1.bf16.msra.mxu0 %v1983
        %2117 = vmatprep.subr.bf16.mxu0 %v1980
        %2118 = vmatpush1.bf16.msra.mxu0 %v1979
        %2119 = vmatprep.subr.bf16.mxu0 0
        %2120 = vmatpush2.bf16.msra.mxu0 0
        %2121 = vmatprep.subr.bf16.mxu0 0
        %2122 = vmatpush2.bf16.msra.mxu0 0
        %2123 = vmatprep.subr.bf16.mxu0 0
        %2124 = vmatpush2.bf16.msra.mxu0 0
        %2125 = vmatprep.subr.bf16.mxu0 0
        %2126 = vmatpush2.bf16.msra.mxu0 0
        %2127 = vmatprep.subr.bf16.mxu0 0
        %2128 = vmatpush2.bf16.msra.mxu0 0
        %2129 = vmatprep.subr.bf16.mxu0 0
        %2130 = vmatpush2.bf16.msra.mxu0 0
        %2131 = vmatprep.subr.bf16.mxu0 0
        %2132 = vmatpush2.bf16.msra.mxu0 0
        %2133 = vmatprep.subr.bf16.mxu0 0
        %2134 = vmatpush2.bf16.msra.mxu0 0
        %2135 = vmatprep.mubr.bf16.mxu0 0
        %2136 = vmatmul.mubr.bf16.gmra.mxu0 %v1847
        %v2137 = vpop.f32.mrf.mxu0
        %v2138 = vadd.f32 %v2053, %v2137
        %v2139 = vpop.f32.mrf.mxu0
        %v2140 = vadd.f32 %v2057, %v2139
        %v2141 = vpop.f32.mrf.mxu0
        %v2142 = vpop.f32.mrf.mxu0
        %2143 = vdwg.mxu0
        %v2144 = vmul.f32 %v2097, %v2097
        %v2145 = vmul.f32 %v2099, %v2099
        %v2146 = vmul.f32 %v2138, %v2138
        %v2147 = vmul.f32 %v2140, %v2140
        %v2148 = vmul.f32 %v2097, %v2144
        %v2149 = vmul.f32 %v2099, %v2145
        %v2150 = vmul.f32 %v2138, %v2146
        %v2151 = vmul.f32 %v2140, %v2147
        %v2152 = vmul.f32 %v2148, 0.044715
        %v2153 = vmul.f32 %v2149, 0.044715
        %v2154 = vmul.f32 %v2150, 0.044715
        %v2155 = vmul.f32 %v2151, 0.044715
        %v2156 = vadd.f32 %v2097, %v2152
        %v2157 = vadd.f32 %v2099, %v2153
        %v2158 = vadd.f32 %v2138, %v2154
        %v2159 = vadd.f32 %v2140, %v2155
        %v2160 = vmul.f32 %v2156, 0.7978846
        %v2161 = vmul.f32 %v2157, 0.7978846
        %v2162 = vmul.f32 %v2158, 0.7978846
        %v2163 = vmul.f32 %v2159, 0.7978846
        %v2164 = vtanh.pop %v2160
        %v2165 = vtanh.pop %v2161
        %v2166 = vtanh.pop %v2162
        %v2167 = vtanh.pop %v2163
        %v2168 = vadd.f32 %v2164, 1.0
        %v2169 = vadd.f32 %v2165, 1.0
        %v2170 = vadd.f32 %v2166, 1.0
        %v2171 = vadd.f32 %v2167, 1.0
        %v2172 = vmul.f32 %v2168, 0.5
        %v2173 = vmul.f32 %v2169, 0.5
        %v2174 = vmul.f32 %v2170, 0.5
        %v2175 = vmul.f32 %v2171, 0.5
        %v2176 = vmul.f32 %v2097, %v2172
        %v2177 = vmul.f32 %v2099, %v2173
        %v2178 = vmul.f32 %v2138, %v2174
        %v2179 = vmul.f32 %v2140, %v2175
        %v2180 = vpack.c.bf16 %v2176, %v2176
        %v2181 = vpack.c.bf16 %v2177, %v2177
        %v2182 = vpack.c.bf16 %v2178, %v2178
        %v2183 = vpack.c.bf16 %v2179, %v2179
        %v2184 = vld [vmem:[%s714] sm:$0xf]
        %v2185 = vld [vmem:[%s714 + $0x4] sm:$0xf]
        %v2186 = vld [vmem:[%s714 + $0x8] sm:$0xf]
        %v2187 = vld [vmem:[%s714 + $0xc] sm:$0xf]
        %v2188 = vld [vmem:[%s714 + $0x10] sm:$0xf]
        %v2189 = vld [vmem:[%s714 + $0x14] sm:$0xf]
        %v2190 = vld [vmem:[%s714 + $0x18] sm:$0xf]
        %v2191 = vld [vmem:[%s714 + $0x1c] sm:$0xf]
        %v2192 = vld [vmem:[%s714 + $0x20] sm:$0xf]
        %v2193 = vld [vmem:[%s714 + $0x24] sm:$0xf]
        %v2194 = vld [vmem:[%s714 + $0x28] sm:$0xf]
        %v2195 = vld [vmem:[%s714 + $0x2c] sm:$0xf]
        %v2196 = vld [vmem:[%s714 + $0x30] sm:$0xf]
        %v2197 = vld [vmem:[%s714 + $0x34] sm:$0xf]
        %v2198 = vld [vmem:[%s714 + $0x38] sm:$0xf]
        %v2199 = vld [vmem:[%s714 + $0x3c] sm:$0xf]
        %v2200 = vld [vmem:[%s714 + $0x40] sm:$0xf]
        %v2201 = vld [vmem:[%s714 + $0x44] sm:$0xf]
        %v2202 = vld [vmem:[%s714 + $0x48] sm:$0xf]
        %v2203 = vld [vmem:[%s714 + $0x4c] sm:$0xf]
        %v2204 = vld [vmem:[%s714 + $0x50] sm:$0xf]
        %v2205 = vld [vmem:[%s714 + $0x54] sm:$0xf]
        %v2206 = vld [vmem:[%s714 + $0x58] sm:$0xf]
        %v2207 = vld [vmem:[%s714 + $0x5c] sm:$0xf]
        %v2208 = vld [vmem:[%s714 + $0x60] sm:$0xf]
        %v2209 = vld [vmem:[%s714 + $0x64] sm:$0xf]
        %v2210 = vld [vmem:[%s714 + $0x68] sm:$0xf]
        %v2211 = vld [vmem:[%s714 + $0x6c] sm:$0xf]
        %v2212 = vld [vmem:[%s714 + $0x70] sm:$0xf]
        %v2213 = vld [vmem:[%s714 + $0x74] sm:$0xf]
        %v2214 = vld [vmem:[%s714 + $0x78] sm:$0xf]
        %v2215 = vld [vmem:[%s714 + $0x7c] sm:$0xf]
        %v2216 = vld [vmem:[%s714 + $0x80] sm:$0xf]
        %v2217 = vld [vmem:[%s714 + $0x84] sm:$0xf]
        %v2218 = vld [vmem:[%s714 + $0x88] sm:$0xf]
        %v2219 = vld [vmem:[%s714 + $0x8c] sm:$0xf]
        %v2220 = vld [vmem:[%s714 + $0x90] sm:$0xf]
        %v2221 = vld [vmem:[%s714 + $0x94] sm:$0xf]
        %v2222 = vld [vmem:[%s714 + $0x98] sm:$0xf]
        %v2223 = vld [vmem:[%s714 + $0x9c] sm:$0xf]
        %v2224 = vld [vmem:[%s714 + $0xa0] sm:$0xf]
        %v2225 = vld [vmem:[%s714 + $0xa4] sm:$0xf]
        %v2226 = vld [vmem:[%s714 + $0xa8] sm:$0xf]
        %v2227 = vld [vmem:[%s714 + $0xac] sm:$0xf]
        %v2228 = vld [vmem:[%s714 + $0xb0] sm:$0xf]
        %v2229 = vld [vmem:[%s714 + $0xb4] sm:$0xf]
        %v2230 = vld [vmem:[%s714 + $0xb8] sm:$0xf]
        %v2231 = vld [vmem:[%s714 + $0xbc] sm:$0xf]
        %v2232 = vld [vmem:[%s714 + $0xc0] sm:$0xf]
        %v2233 = vld [vmem:[%s714 + $0xc4] sm:$0xf]
        %v2234 = vld [vmem:[%s714 + $0xc8] sm:$0xf]
        %v2235 = vld [vmem:[%s714 + $0xcc] sm:$0xf]
        %v2236 = vld [vmem:[%s714 + $0xd0] sm:$0xf]
        %v2237 = vld [vmem:[%s714 + $0xd4] sm:$0xf]
        %v2238 = vld [vmem:[%s714 + $0xd8] sm:$0xf]
        %v2239 = vld [vmem:[%s714 + $0xdc] sm:$0xf]
        %v2240 = vld [vmem:[%s714 + $0xe0] sm:$0xf]
        %v2241 = vld [vmem:[%s714 + $0xe4] sm:$0xf]
        %v2242 = vld [vmem:[%s714 + $0xe8] sm:$0xf]
        %v2243 = vld [vmem:[%s714 + $0xec] sm:$0xf]
        %v2244 = vld [vmem:[%s714 + $0xf0] sm:$0xf]
        %v2245 = vld [vmem:[%s714 + $0xf4] sm:$0xf]
        %v2246 = vld [vmem:[%s714 + $0xf8] sm:$0xf]
        %v2247 = vld [vmem:[%s714 + $0xfc] sm:$0xf]
        %v2248 = vld [vmem:[%s577] sm:$0x1]
        %v2313 = vunpack.c.l.b16 %v2184
        %v2314 = vunpack.c.l.b16 %v2185
        %v2315 = vunpack.c.l.b16 %v2186
        %v2316 = vunpack.c.l.b16 %v2187
        %v2317 = vunpack.c.l.b16 %v2188
        %v2318 = vunpack.c.l.b16 %v2189
        %v2319 = vunpack.c.l.b16 %v2190
        %v2320 = vunpack.c.l.b16 %v2191
        %v2321 = vunpack.c.l.b16 %v2192
        %v2322 = vunpack.c.l.b16 %v2193
        %v2323 = vunpack.c.l.b16 %v2194
        %v2324 = vunpack.c.l.b16 %v2195
        %v2325 = vunpack.c.l.b16 %v2196
        %v2326 = vunpack.c.l.b16 %v2197
        %v2327 = vunpack.c.l.b16 %v2198
        %v2328 = vunpack.c.l.b16 %v2199
        %v2329 = vunpack.c.l.b16 %v2200
        %v2330 = vunpack.c.l.b16 %v2201
        %v2331 = vunpack.c.l.b16 %v2202
        %v2332 = vunpack.c.l.b16 %v2203
        %v2333 = vunpack.c.l.b16 %v2204
        %v2334 = vunpack.c.l.b16 %v2205
        %v2335 = vunpack.c.l.b16 %v2206
        %v2336 = vunpack.c.l.b16 %v2207
        %v2337 = vunpack.c.l.b16 %v2208
        %v2338 = vunpack.c.l.b16 %v2209
        %v2339 = vunpack.c.l.b16 %v2210
        %v2340 = vunpack.c.l.b16 %v2211
        %v2341 = vunpack.c.l.b16 %v2212
        %v2342 = vunpack.c.l.b16 %v2213
        %v2343 = vunpack.c.l.b16 %v2214
        %v2344 = vunpack.c.l.b16 %v2215
        %v2345 = vunpack.c.l.b16 %v2216
        %v2346 = vunpack.c.l.b16 %v2217
        %v2347 = vunpack.c.l.b16 %v2218
        %v2348 = vunpack.c.l.b16 %v2219
        %v2349 = vunpack.c.l.b16 %v2220
        %v2350 = vunpack.c.l.b16 %v2221
        %v2351 = vunpack.c.l.b16 %v2222
        %v2352 = vunpack.c.l.b16 %v2223
        %v2353 = vunpack.c.l.b16 %v2224
        %v2354 = vunpack.c.l.b16 %v2225
        %v2355 = vunpack.c.l.b16 %v2226
        %v2356 = vunpack.c.l.b16 %v2227
        %v2357 = vunpack.c.l.b16 %v2228
        %v2358 = vunpack.c.l.b16 %v2229
        %v2359 = vunpack.c.l.b16 %v2230
        %v2360 = vunpack.c.l.b16 %v2231
        %v2361 = vunpack.c.l.b16 %v2232
        %v2362 = vunpack.c.l.b16 %v2233
        %v2363 = vunpack.c.l.b16 %v2234
        %v2364 = vunpack.c.l.b16 %v2235
        %v2365 = vunpack.c.l.b16 %v2236
        %v2366 = vunpack.c.l.b16 %v2237
        %v2367 = vunpack.c.l.b16 %v2238
        %v2368 = vunpack.c.l.b16 %v2239
        %v2369 = vunpack.c.l.b16 %v2240
        %v2370 = vunpack.c.l.b16 %v2241
        %v2371 = vunpack.c.l.b16 %v2242
        %v2372 = vunpack.c.l.b16 %v2243
        %v2373 = vunpack.c.l.b16 %v2244
        %v2374 = vunpack.c.l.b16 %v2245
        %v2375 = vunpack.c.l.b16 %v2246
        %v2376 = vunpack.c.l.b16 %v2247
        %v2377 = vpack.c.b16 %v2314, %v2313
        %v2378 = vpack.c.b16 %v2316, %v2315
        %v2379 = vpack.c.b16 %v2318, %v2317
        %v2380 = vpack.c.b16 %v2320, %v2319
        %v2381 = vpack.c.b16 %v2322, %v2321
        %v2382 = vpack.c.b16 %v2324, %v2323
        %v2383 = vpack.c.b16 %v2326, %v2325
        %v2384 = vpack.c.b16 %v2328, %v2327
        %v2385 = vpack.c.b16 %v2330, %v2329
        %v2386 = vpack.c.b16 %v2332, %v2331
        %v2387 = vpack.c.b16 %v2334, %v2333
        %v2388 = vpack.c.b16 %v2336, %v2335
        %v2389 = vpack.c.b16 %v2338, %v2337
        %v2390 = vpack.c.b16 %v2340, %v2339
        %v2391 = vpack.c.b16 %v2342, %v2341
        %v2392 = vpack.c.b16 %v2344, %v2343
        %v2393 = vpack.c.b16 %v2346, %v2345
        %v2394 = vpack.c.b16 %v2348, %v2347
        %v2395 = vpack.c.b16 %v2350, %v2349
        %v2396 = vpack.c.b16 %v2352, %v2351
        %v2397 = vpack.c.b16 %v2354, %v2353
        %v2398 = vpack.c.b16 %v2356, %v2355
        %v2399 = vpack.c.b16 %v2358, %v2357
        %v2400 = vpack.c.b16 %v2360, %v2359
        %v2401 = vpack.c.b16 %v2362, %v2361
        %v2402 = vpack.c.b16 %v2364, %v2363
        %v2403 = vpack.c.b16 %v2366, %v2365
        %v2404 = vpack.c.b16 %v2368, %v2367
        %v2405 = vpack.c.b16 %v2370, %v2369
        %v2406 = vpack.c.b16 %v2372, %v2371
        %v2407 = vpack.c.b16 %v2374, %v2373
        %v2408 = vpack.c.b16 %v2376, %v2375
        %2441 = vmatprep.subr.bf16.mxu0 0
        %2442 = vmatpush1.bf16.msra.mxu0 %v2384
        %2443 = vmatprep.subr.bf16.mxu0 0
        %2444 = vmatpush1.bf16.msra.mxu0 %v2383
        %2445 = vmatprep.subr.bf16.mxu0 0
        %2446 = vmatpush1.bf16.msra.mxu0 %v2382
        %2447 = vmatprep.subr.bf16.mxu0 0
        %2448 = vmatpush1.bf16.msra.mxu0 %v2381
        %2449 = vmatprep.subr.bf16.mxu0 0
        %2450 = vmatpush1.bf16.msra.mxu0 %v2380
        %2451 = vmatprep.subr.bf16.mxu0 0
        %2452 = vmatpush1.bf16.msra.mxu0 %v2379
        %2453 = vmatprep.subr.bf16.mxu0 0
        %2454 = vmatpush1.bf16.msra.mxu0 %v2378
        %2455 = vmatprep.subr.bf16.mxu0 0
        %2456 = vmatpush1.bf16.msra.mxu0 %v2377
        %2457 = vmatprep.subr.bf16.mxu0 0
        %2458 = vmatpush2.bf16.msra.mxu0 %v2392
        %2459 = vmatprep.subr.bf16.mxu0 0
        %2460 = vmatpush2.bf16.msra.mxu0 %v2391
        %2461 = vmatprep.subr.bf16.mxu0 0
        %2462 = vmatpush2.bf16.msra.mxu0 %v2390
        %2463 = vmatprep.subr.bf16.mxu0 0
        %2464 = vmatpush2.bf16.msra.mxu0 %v2389
        %2465 = vmatprep.subr.bf16.mxu0 0
        %2466 = vmatpush2.bf16.msra.mxu0 %v2388
        %2467 = vmatprep.subr.bf16.mxu0 0
        %2468 = vmatpush2.bf16.msra.mxu0 %v2387
        %2469 = vmatprep.subr.bf16.mxu0 0
        %2470 = vmatpush2.bf16.msra.mxu0 %v2386
        %2471 = vmatprep.subr.bf16.mxu0 0
        %2472 = vmatpush2.bf16.msra.mxu0 %v2385
        %2473 = vmatprep.mubr.bf16.mxu0 %v2181
        %2474 = vmatmul.mubr.bf16.gmra.mxu0 %v2180
        %v2475 = vpop.f32.mrf.mxu0
        %v2476 = vadd.f32 %v2248, %v2475
        %v2477 = vpop.f32.mrf.mxu0
        %v2478 = vpop.f32.mrf.mxu0
        %v2479 = vpop.f32.mrf.mxu0
        %2480 = vdwg.mxu0
        %2481 = vmatprep.subr.bf16.mxu0 0
        %2482 = vmatpush1.bf16.msra.mxu0 %v2400
        %2483 = vmatprep.subr.bf16.mxu0 0
        %2484 = vmatpush1.bf16.msra.mxu0 %v2399
        %2485 = vmatprep.subr.bf16.mxu0 0
        %2486 = vmatpush1.bf16.msra.mxu0 %v2398
        %2487 = vmatprep.subr.bf16.mxu0 0
        %2488 = vmatpush1.bf16.msra.mxu0 %v2397
        %2489 = vmatprep.subr.bf16.mxu0 0
        %2490 = vmatpush1.bf16.msra.mxu0 %v2396
        %2491 = vmatprep.subr.bf16.mxu0 0
        %2492 = vmatpush1.bf16.msra.mxu0 %v2395
        %2493 = vmatprep.subr.bf16.mxu0 0
        %2494 = vmatpush1.bf16.msra.mxu0 %v2394
        %2495 = vmatprep.subr.bf16.mxu0 0
        %2496 = vmatpush1.bf16.msra.mxu0 %v2393
        %2497 = vmatprep.subr.bf16.mxu0 0
        %2498 = vmatpush2.bf16.msra.mxu0 %v2408
        %2499 = vmatprep.subr.bf16.mxu0 0
        %2500 = vmatpush2.bf16.msra.mxu0 %v2407
        %2501 = vmatprep.subr.bf16.mxu0 0
        %2502 = vmatpush2.bf16.msra.mxu0 %v2406
        %2503 = vmatprep.subr.bf16.mxu0 0
        %2504 = vmatpush2.bf16.msra.mxu0 %v2405
        %2505 = vmatprep.subr.bf16.mxu0 0
        %2506 = vmatpush2.bf16.msra.mxu0 %v2404
        %2507 = vmatprep.subr.bf16.mxu0 0
        %2508 = vmatpush2.bf16.msra.mxu0 %v2403
        %2509 = vmatprep.subr.bf16.mxu0 0
        %2510 = vmatpush2.bf16.msra.mxu0 %v2402
        %2511 = vmatprep.subr.bf16.mxu0 0
        %2512 = vmatpush2.bf16.msra.mxu0 %v2401
        %2513 = vmatprep.mubr.bf16.mxu0 %v2183
        %2514 = vmatmul.mubr.bf16.gmra.mxu0 %v2182
        %v2515 = vpop.f32.mrf.mxu0
        %v2516 = vadd.f32 %v2476, %v2515
        %v2517 = vpop.f32.mrf.mxu0
        %v2518 = vpop.f32.mrf.mxu0
        %v2519 = vpop.f32.mrf.mxu0
        %2520 = vdwg.mxu0
        %v2521 = vadd.f32 %v1829, %v2516
        %2522 = vst [vmem:[%s717] sm:$0x1] %v2521
        %p2523 = scmp.lt.s32.totalorder %s33, 1
        %s2524 = scalar_select %p2523, %s33, 1
        %s2525 = scalar_lea.vmem %s15, %s2524
        // Predicated region
        $region89: #{_lambda_.8} parent=79 // pred_check
          %p2526 = pneg %p439
        $region90: #{_lambda_.8} parent=79 // pred_check_branch
          %2528 = sbr.rel (%p2526) target = $region92
        $region91: #{_lambda_.8} parent=79 // pred_region
          _
        $region92: #{_lambda_.8} parent=79 // pred_fallthru
          _
      $region80: #{_lambda_.8} parent=5 // pred_fallthru
        _
      %p2529 = scmp.le.s32.totalorder 2, %s24
      // Predicated region
      $region93: #{_lambda_.8} parent=5 // pred_check
        %p2530 = pneg %p2529
      $region94: #{_lambda_.8} parent=5 // pred_check_branch
        %2532 = sbr.rel (%p2530) target = $region96
      $region95: #{_lambda_.8} parent=5 // pred_region
        %s2533 = ssub.s32 %s24, 2
        // Predicated region
        $region97: #{_lambda_.8} parent=95 // pred_check
          %p2534 = pneg %p445
        $region98: #{_lambda_.8} parent=95 // pred_check_branch
          %2536 = sbr.rel (%p2534) target = $region100
        $region99: #{_lambda_.8} parent=95 // pred_region
          %p2537 = scmp.lt.s32.totalorder %s35, 1
          %s2538 = scalar_select %p2537, %s35, 1
          %s2539 = scalar_lea.vmem %s15, %s2538
        $region100: #{_lambda_.8} parent=95 // pred_fallthru
          _
      $region96: #{_lambda_.8} parent=5 // pred_fallthru
        _
    $region6: #{_lambda_.8} parent=1 // loop_footer
      %s28 = sadd.s32 1, %s24
    $region7: #{_lambda_.8} parent=1 // loop_footer_branch
      %23 = sbr.rel target = $region3
    $region8: #{_lambda_.8} parent=1 // loop_exit
      _
    %2540 = vsyncpa [#allocation3], 1
    %s2541 = scalar_lea.sflag [#allocation3], 1
    %2542 = vsyncpa %s2541, 1

</llo_original>
